<compile_context>
chip_gen: v7x
topology: tpu7x:2x2x1
jax: 0.10.0
libtpu: 0.0.40
codegen_flags: <defaults>
</compile_context>

<pallas_src>
import functools

import jax
import jax.numpy as jnp
from jax.experimental import pallas as pl
from jax.experimental.pallas import tpu as pltpu

C_FEAT = 1280      # feature_adaptor in/out width (nn.Linear(1280, 1280))
C_OUT = 4          # decoder output channels (3 rgb + 1 mask)
C_OUT_PAD = 128    # lane-dense padded head width for the kernel output
TM_MAX = 512       # max token tile (multiple of 256; ~1.25 MiB bf16 per input tile)
K_CHUNK = 256
N_CHUNKS = C_FEAT // K_CHUNK


def sae_head_kernel(feat_ref, wa_ref, ba_ref, wd_ref, bd_ref, out_ref):
    """Fused: feature_adaptor (Linear 1280->1280) + decoder channel head (1280->128pad).

    feat_ref: (TM, 1280) bf16 tokens x channels
    wa_ref:   (1280, 1280) bf16 adaptor weight, pre-transposed so y = x @ wa + ba
    ba_ref:   (1, 1280) f32
    wd_ref:   (1280, 128) bf16 decoder head weight, zero-padded past column 4
    bd_ref:   (1, 128) f32 zero-padded past column 4
    out_ref:  (TM, 128) f32
    """
    x = feat_ref[...]                               # (TM, 1280) bf16
    acc = jnp.zeros(out_ref.shape, jnp.float32)     # (TM, 128) f32 accumulator

    # K-chunk the adaptor output dim and immediately contract each partial y
    # with the matching 256-row slab of wd -> no (TM, 1280) f32 intermediate.
    # Fully unrolled (5 static iterations) for LLO scheduling visibility.
    for n in range(N_CHUNKS):
        lo = n * K_CHUNK
        hi = lo + K_CHUNK
        y = jnp.dot(x, wa_ref[:, lo:hi],
                    preferred_element_type=jnp.float32)          # (TM, 256) f32
        y = y + ba_ref[:, lo:hi]                                  # bias in f32 (VPU, hidden under MXU)
        acc = acc + jnp.dot(y.astype(jnp.bfloat16), wd_ref[lo:hi, :],
                            preferred_element_type=jnp.float32)   # (TM, 128) f32
    out_ref[...] = acc + bd_ref[...]


def _choose_tm(m: int) -> int:
    """Token tile: multiple of 256 (MXU-friendly), capped at TM_MAX."""
    m_aligned = ((m + 255) // 256) * 256
    return min(TM_MAX, m_aligned)


@functools.partial(jax.jit, donate_argnums=())
def simple_sae_forward(features_nchw, wa_t, ba, wd_t, bd):
    """features_nchw: [B, 1280, H, W] f32 (output of the frozen backbone)."""
    B, C, H, W = features_nchw.shape
    assert C == C_FEAT
    M = B * H * W
    tm = _choose_tm(M)
    M_pad = ((M + tm - 1) // tm) * tm

    # permute(0, 2, 3, 1) then flatten tokens — glue in plain JAX (jit-fused).
    x_tokens = jnp.transpose(features_nchw, (0, 2, 3, 1)).reshape(M, C)
    x_tokens = x_tokens.astype(jnp.bfloat16)
    if M_pad != M:
        x_tokens = jnp.pad(x_tokens, ((0, M_pad - M), (0, 0)))

    # bf16 matmul operands, f32 biases; pad the 4-wide head to 128 lanes.
    wa_bf = wa_t.astype(jnp.bfloat16)
    ba_f32 = ba.astype(jnp.float32)
    wd_pad = jnp.pad(wd_t.astype(jnp.bfloat16), ((0, 0), (0, C_OUT_PAD - C_OUT)))
    bd_pad = jnp.pad(bd.astype(jnp.float32), ((0, 0), (0, C_OUT_PAD - C_OUT)))

    cost = pl.CostEstimate(
        flops=2 * M_pad * C_FEAT * C_FEAT + 2 * M_pad * C_FEAT * C_OUT_PAD,
        transcendentals=0,
        bytes_accessed=(M_pad * C_FEAT * 2 + C_FEAT * C_FEAT * 2
                        + C_FEAT * C_OUT_PAD * 2 + M_pad * C_OUT_PAD * 4),
    )

    grid = (M_pad // tm,)
    out_tokens = pl.pallas_call(
        sae_head_kernel,
        out_shape=jax.ShapeDtypeStruct((M_pad, C_OUT_PAD), jnp.float32),
        grid_spec=pl.GridSpec(
            grid=grid,
            in_specs=[
                pl.BlockSpec((tm, C_FEAT), lambda i: (i, 0)),          # tokens: tiled over M
                pl.BlockSpec((C_FEAT, C_FEAT), lambda i: (0, 0)),      # wa: VMEM-resident
                pl.BlockSpec((1, C_FEAT), lambda i: (0, 0)),           # ba
                pl.BlockSpec((C_FEAT, C_OUT_PAD), lambda i: (0, 0)),   # wd
                pl.BlockSpec((1, C_OUT_PAD), lambda i: (0, 0)),        # bd
            ],
            out_specs=pl.BlockSpec((tm, C_OUT_PAD), lambda i: (i, 0)),
        ),
        compiler_params=pltpu.CompilerParams(
            dimension_semantics=("parallel",),
        ),
        cost_estimate=cost,
    )(x_tokens, wa_bf, ba_f32, wd_pad, bd_pad)

    # drop padding, back to NCHW, then split: x = out[:, 0:3], mask = out[:, 3]
    out = out_tokens[:M, :C_OUT]
    out_nchw = out.reshape(B, H, W, C_OUT).transpose(0, 3, 1, 2)
    rgb = out_nchw[:, 0:3]
    mask = out_nchw[:, 3]
    return rgb, mask


def reference_forward(features_nchw, wa_t, ba, wd_t, bd):
    """Pure-JAX f32 reference for correctness checking."""
    x = jnp.transpose(features_nchw, (0, 2, 3, 1))            # NHWC
    y = x @ wa_t + ba[0]                                       # feature_adaptor
    z = y @ wd_t + bd[0]                                       # decoder head
    z = jnp.transpose(z, (0, 3, 1, 2))                         # NCHW
    return z[:, 0:3], z[:, 3]


if __name__ == "__main__":
    key = jax.random.PRNGKey(0)
    k_feat, k_wa, k_ba, k_wd, k_bd = jax.random.split(key, 5)

    # Small shapes consistent with the module: EfficientNet-V2-S features have
    # 1280 channels; pick batch=2 and a tiny 2x2 spatial map.
    B, H, W = 2, 2, 2
    features = jax.random.normal(k_feat, (B, C_FEAT, H, W), dtype=jnp.float32)

    # Deterministic parameter init (nn.Linear-like scale), pre-transposed so
    # the kernel computes x @ W (== x @ W_pt^T).
    scale_a = 1.0 / jnp.sqrt(jnp.float32(C_FEAT))
    wa_t = jax.random.uniform(k_wa, (C_FEAT, C_FEAT), jnp.float32, -scale_a, scale_a)
    ba = jax.random.uniform(k_ba, (1, C_FEAT), jnp.float32, -scale_a, scale_a)
    wd_t = jax.random.uniform(k_wd, (C_FEAT, C_OUT), jnp.float32, -scale_a, scale_a)
    bd = jax.random.uniform(k_bd, (1, C_OUT), jnp.float32, -scale_a, scale_a)

    rgb, mask = simple_sae_forward(features, wa_t, ba, wd_t, bd)
    jax.block_until_ready((rgb, mask))

    rgb_ref, mask_ref = reference_forward(features, wa_t, ba, wd_t, bd)
    assert rgb.shape == (B, 3, H, W), rgb.shape
    assert mask.shape == (B, H, W), mask.shape
    # bf16 matmul operands with f32 accumulation -> slightly looser tolerance.
    assert jnp.allclose(rgb, rgb_ref, atol=2e-2, rtol=2e-2)
    assert jnp.allclose(mask, mask_ref, atol=2e-2, rtol=2e-2)

    print("KERNEL_OK")
</pallas_src>

<mosaic_0001>
module attributes {stable_mosaic.version = 11 : i64} {
  func.func @sae_head_kernel(%arg0: i32, %arg1: memref<256x1280xbf16, #tpu.memory_space<vmem>>, %arg2: memref<1280x1280xbf16, #tpu.memory_space<vmem>>, %arg3: memref<1x1280xf32, #tpu.memory_space<vmem>>, %arg4: memref<1280x128xbf16, #tpu.memory_space<vmem>>, %arg5: memref<1x128xf32, #tpu.memory_space<vmem>>, %arg6: memref<256x128xf32, #tpu.memory_space<vmem>>) attributes {dimension_semantics = [#tpu.dimension_semantics<parallel>], iteration_bounds = array<i64: 1>, scalar_prefetch = 0 : i64, scratch_operands = 0 : i64, tpu.core_type = #tpu.core_type<tc>, window_params = [{transform_indices = @transform_0, window_bounds = array<i64: 256, 1280>}, {pipeline_mode = #tpu.pipeline_mode<synchronous>, transform_indices = @transform_1, window_bounds = array<i64: 1280, 1280>}, {pipeline_mode = #tpu.pipeline_mode<synchronous>, transform_indices = @transform_2, window_bounds = array<i64: 1, 1280>}, {pipeline_mode = #tpu.pipeline_mode<synchronous>, transform_indices = @transform_3, window_bounds = array<i64: 1280, 128>}, {pipeline_mode = #tpu.pipeline_mode<synchronous>, transform_indices = @transform_4, window_bounds = array<i64: 1, 128>}, {transform_indices = @transform_5, window_bounds = array<i64: 256, 128>}]} {
    %c0 = arith.constant 0 : index
    %c0_0 = arith.constant 0 : index
    %0 = vector.load %arg1[%c0, %c0_0] : memref<256x1280xbf16, #tpu.memory_space<vmem>>, vector<256x1280xbf16>
    %cst = arith.constant 0.000000e+00 : f32
    %1 = vector.broadcast %cst : f32 to vector<256x128xf32>
    %c0_1 = arith.constant 0 : index
    %c0_2 = arith.constant 0 : index
    %2 = vector.load %arg2[%c0_1, %c0_2] : memref<1280x1280xbf16, #tpu.memory_space<vmem>>, vector<1280x256xbf16>
    %cst_3 = arith.constant dense<0.000000e+00> : vector<256x256xf32>
    %3 = tpu.matmul %0, %2, %cst_3 {dimension_numbers = #tpu.dot_dimension_numbers<[1], [0], [0], [1], [0, 0, 1, 1], [], []>} : vector<256x1280xbf16>, vector<1280x256xbf16>, vector<256x256xf32> -> vector<256x256xf32>
    %c0_4 = arith.constant 0 : index
    %c0_5 = arith.constant 0 : index
    %4 = vector.load %arg3[%c0_4, %c0_5] : memref<1x1280xf32, #tpu.memory_space<vmem>>, vector<1x256xf32>
    %5 = vector.broadcast %4 : vector<1x256xf32> to vector<256x256xf32>
    %6 = arith.addf %3, %5 : vector<256x256xf32>
    %7 = arith.truncf %6 : vector<256x256xf32> to vector<256x256xbf16>
    %c0_6 = arith.constant 0 : index
    %c0_7 = arith.constant 0 : index
    %8 = vector.load %arg4[%c0_6, %c0_7] : memref<1280x128xbf16, #tpu.memory_space<vmem>>, vector<256x128xbf16>
    %cst_8 = arith.constant dense<0.000000e+00> : vector<256x128xf32>
    %9 = tpu.matmul %7, %8, %cst_8 {dimension_numbers = #tpu.dot_dimension_numbers<[1], [0], [0], [1], [0, 0, 1, 1], [], []>} : vector<256x256xbf16>, vector<256x128xbf16>, vector<256x128xf32> -> vector<256x128xf32>
    %10 = arith.addf %1, %9 : vector<256x128xf32>
    %c0_9 = arith.constant 0 : index
    %c256 = arith.constant 256 : index
    %11 = vector.load %arg2[%c0_9, %c256] : memref<1280x1280xbf16, #tpu.memory_space<vmem>>, vector<1280x256xbf16>
    %cst_10 = arith.constant dense<0.000000e+00> : vector<256x256xf32>
    %12 = tpu.matmul %0, %11, %cst_10 {dimension_numbers = #tpu.dot_dimension_numbers<[1], [0], [0], [1], [0, 0, 1, 1], [], []>} : vector<256x1280xbf16>, vector<1280x256xbf16>, vector<256x256xf32> -> vector<256x256xf32>
    %c0_11 = arith.constant 0 : index
    %c256_12 = arith.constant 256 : index
    %13 = vector.load %arg3[%c0_11, %c256_12] : memref<1x1280xf32, #tpu.memory_space<vmem>>, vector<1x256xf32>
    %14 = vector.broadcast %13 : vector<1x256xf32> to vector<256x256xf32>
    %15 = arith.addf %12, %14 : vector<256x256xf32>
    %16 = arith.truncf %15 : vector<256x256xf32> to vector<256x256xbf16>
    %c256_13 = arith.constant 256 : index
    %c0_14 = arith.constant 0 : index
    %17 = vector.load %arg4[%c256_13, %c0_14] : memref<1280x128xbf16, #tpu.memory_space<vmem>>, vector<256x128xbf16>
    %cst_15 = arith.constant dense<0.000000e+00> : vector<256x128xf32>
    %18 = tpu.matmul %16, %17, %cst_15 {dimension_numbers = #tpu.dot_dimension_numbers<[1], [0], [0], [1], [0, 0, 1, 1], [], []>} : vector<256x256xbf16>, vector<256x128xbf16>, vector<256x128xf32> -> vector<256x128xf32>
    %19 = arith.addf %10, %18 : vector<256x128xf32>
    %c0_16 = arith.constant 0 : index
    %c512 = arith.constant 512 : index
    %20 = vector.load %arg2[%c0_16, %c512] : memref<1280x1280xbf16, #tpu.memory_space<vmem>>, vector<1280x256xbf16>
    %cst_17 = arith.constant dense<0.000000e+00> : vector<256x256xf32>
    %21 = tpu.matmul %0, %20, %cst_17 {dimension_numbers = #tpu.dot_dimension_numbers<[1], [0], [0], [1], [0, 0, 1, 1], [], []>} : vector<256x1280xbf16>, vector<1280x256xbf16>, vector<256x256xf32> -> vector<256x256xf32>
    %c0_18 = arith.constant 0 : index
    %c512_19 = arith.constant 512 : index
    %22 = vector.load %arg3[%c0_18, %c512_19] : memref<1x1280xf32, #tpu.memory_space<vmem>>, vector<1x256xf32>
    %23 = vector.broadcast %22 : vector<1x256xf32> to vector<256x256xf32>
    %24 = arith.addf %21, %23 : vector<256x256xf32>
    %25 = arith.truncf %24 : vector<256x256xf32> to vector<256x256xbf16>
    %c512_20 = arith.constant 512 : index
    %c0_21 = arith.constant 0 : index
    %26 = vector.load %arg4[%c512_20, %c0_21] : memref<1280x128xbf16, #tpu.memory_space<vmem>>, vector<256x128xbf16>
    %cst_22 = arith.constant dense<0.000000e+00> : vector<256x128xf32>
    %27 = tpu.matmul %25, %26, %cst_22 {dimension_numbers = #tpu.dot_dimension_numbers<[1], [0], [0], [1], [0, 0, 1, 1], [], []>} : vector<256x256xbf16>, vector<256x128xbf16>, vector<256x128xf32> -> vector<256x128xf32>
    %28 = arith.addf %19, %27 : vector<256x128xf32>
    %c0_23 = arith.constant 0 : index
    %c768 = arith.constant 768 : index
    %29 = vector.load %arg2[%c0_23, %c768] : memref<1280x1280xbf16, #tpu.memory_space<vmem>>, vector<1280x256xbf16>
    %cst_24 = arith.constant dense<0.000000e+00> : vector<256x256xf32>
    %30 = tpu.matmul %0, %29, %cst_24 {dimension_numbers = #tpu.dot_dimension_numbers<[1], [0], [0], [1], [0, 0, 1, 1], [], []>} : vector<256x1280xbf16>, vector<1280x256xbf16>, vector<256x256xf32> -> vector<256x256xf32>
    %c0_25 = arith.constant 0 : index
    %c768_26 = arith.constant 768 : index
    %31 = vector.load %arg3[%c0_25, %c768_26] : memref<1x1280xf32, #tpu.memory_space<vmem>>, vector<1x256xf32>
    %32 = vector.broadcast %31 : vector<1x256xf32> to vector<256x256xf32>
    %33 = arith.addf %30, %32 : vector<256x256xf32>
    %34 = arith.truncf %33 : vector<256x256xf32> to vector<256x256xbf16>
    %c768_27 = arith.constant 768 : index
    %c0_28 = arith.constant 0 : index
    %35 = vector.load %arg4[%c768_27, %c0_28] : memref<1280x128xbf16, #tpu.memory_space<vmem>>, vector<256x128xbf16>
    %cst_29 = arith.constant dense<0.000000e+00> : vector<256x128xf32>
    %36 = tpu.matmul %34, %35, %cst_29 {dimension_numbers = #tpu.dot_dimension_numbers<[1], [0], [0], [1], [0, 0, 1, 1], [], []>} : vector<256x256xbf16>, vector<256x128xbf16>, vector<256x128xf32> -> vector<256x128xf32>
    %37 = arith.addf %28, %36 : vector<256x128xf32>
    %c0_30 = arith.constant 0 : index
    %c1024 = arith.constant 1024 : index
    %38 = vector.load %arg2[%c0_30, %c1024] : memref<1280x1280xbf16, #tpu.memory_space<vmem>>, vector<1280x256xbf16>
    %cst_31 = arith.constant dense<0.000000e+00> : vector<256x256xf32>
    %39 = tpu.matmul %0, %38, %cst_31 {dimension_numbers = #tpu.dot_dimension_numbers<[1], [0], [0], [1], [0, 0, 1, 1], [], []>} : vector<256x1280xbf16>, vector<1280x256xbf16>, vector<256x256xf32> -> vector<256x256xf32>
    %c0_32 = arith.constant 0 : index
    %c1024_33 = arith.constant 1024 : index
    %40 = vector.load %arg3[%c0_32, %c1024_33] : memref<1x1280xf32, #tpu.memory_space<vmem>>, vector<1x256xf32>
    %41 = vector.broadcast %40 : vector<1x256xf32> to vector<256x256xf32>
    %42 = arith.addf %39, %41 : vector<256x256xf32>
    %43 = arith.truncf %42 : vector<256x256xf32> to vector<256x256xbf16>
    %c1024_34 = arith.constant 1024 : index
    %c0_35 = arith.constant 0 : index
    %44 = vector.load %arg4[%c1024_34, %c0_35] : memref<1280x128xbf16, #tpu.memory_space<vmem>>, vector<256x128xbf16>
    %cst_36 = arith.constant dense<0.000000e+00> : vector<256x128xf32>
    %45 = tpu.matmul %43, %44, %cst_36 {dimension_numbers = #tpu.dot_dimension_numbers<[1], [0], [0], [1], [0, 0, 1, 1], [], []>} : vector<256x256xbf16>, vector<256x128xbf16>, vector<256x128xf32> -> vector<256x128xf32>
    %46 = arith.addf %37, %45 : vector<256x128xf32>
    %c0_37 = arith.constant 0 : index
    %c0_38 = arith.constant 0 : index
    %47 = vector.load %arg5[%c0_37, %c0_38] : memref<1x128xf32, #tpu.memory_space<vmem>>, vector<1x128xf32>
    %48 = vector.broadcast %47 : vector<1x128xf32> to vector<256x128xf32>
    %49 = arith.addf %46, %48 : vector<256x128xf32>
    %c0_39 = arith.constant 0 : index
    %c0_40 = arith.constant 0 : index
    %50 = vector.load %arg6[%c0_39, %c0_40] : memref<256x128xf32, #tpu.memory_space<vmem>>, vector<256x128xf32>
    tpu.vector_store %arg6[%c0_39, %c0_40], %49 {strides = array<i32>} : memref<256x128xf32, #tpu.memory_space<vmem>>, vector<256x128xf32>,
    return
  }
  func.func @transform_0(%arg0: i32) -> (i32, i32) {
    %c0_i32 = arith.constant 0 : i32
    %c0_i32_0 = arith.constant 0 : i32
    return %arg0, %c0_i32 : i32, i32
  }
  func.func @transform_1(%arg0: i32) -> (i32, i32) {
    %c0_i32 = arith.constant 0 : i32
    %c0_i32_0 = arith.constant 0 : i32
    %c0_i32_1 = arith.constant 0 : i32
    return %c0_i32, %c0_i32_0 : i32, i32
  }
  func.func @transform_2(%arg0: i32) -> (i32, i32) {
    %c0_i32 = arith.constant 0 : i32
    %c0_i32_0 = arith.constant 0 : i32
    %c0_i32_1 = arith.constant 0 : i32
    return %c0_i32, %c0_i32_0 : i32, i32
  }
  func.func @transform_3(%arg0: i32) -> (i32, i32) {
    %c0_i32 = arith.constant 0 : i32
    %c0_i32_0 = arith.constant 0 : i32
    %c0_i32_1 = arith.constant 0 : i32
    return %c0_i32, %c0_i32_0 : i32, i32
  }
  func.func @transform_4(%arg0: i32) -> (i32, i32) {
    %c0_i32 = arith.constant 0 : i32
    %c0_i32_0 = arith.constant 0 : i32
    %c0_i32_1 = arith.constant 0 : i32
    return %c0_i32, %c0_i32_0 : i32, i32
  }
  func.func @transform_5(%arg0: i32) -> (i32, i32) {
    %c0_i32 = arith.constant 0 : i32
    %c0_i32_0 = arith.constant 0 : i32
    return %arg0, %c0_i32 : i32, i32
  }
}

</mosaic_0001>

<llo_original>
// kernel: simple_sae_forward.1
$region0: #{simple_sae_forward.1}
  #allocation0 [shape = 'u32[]', space=smem, size = 0x4, offset = 0x4, fixed_abs, tag = 'smem constant byte address 0x4 - core index']
  #allocation1 [shape = 'u32[144,128]{1,0:T(1,128)}', space=vmem, size = 0x12000, scoped, tag = 'internal scratch']
  %s0 = inlined_call_operand.vmem [shape: bf16[256,1280], index: 0, kind: input, shape index: {}]
  %s1 = inlined_call_operand.vmem [shape: bf16[1280,1280], index: 1, kind: input, shape index: {}]
  %s2 = inlined_call_operand.vmem [shape: f32[1,1280], index: 2, kind: input, shape index: {}]
  %s3 = inlined_call_operand.vmem [shape: bf16[1280,128], index: 3, kind: input, shape index: {}]
  %s4 = inlined_call_operand.vmem [shape: f32[1,128], index: 4, kind: input, shape index: {}]
  %s5 = inlined_call_operand.vmem [shape: f32[256,128], index: 5, kind: output, shape index: {}]
  %s6 = sld [smem:[#allocation0]]
  $region30: #{simple_sae_forward.1} parent=0
    _
  %s8 = ssub.s32 1, %s6
  %s9 = scalar_select 0, %s8, %s6
  // Predicated region
  $region2: #{simple_sae_forward.1} parent=0 // pred_check
    _
  $region3: #{simple_sae_forward.1} parent=0 // pred_check_branch
    %11 = sbr.rel (0) target = $region5
  $region4: #{simple_sae_forward.1} parent=0 // pred_region
    _
  $region5: #{simple_sae_forward.1} parent=0 // pred_fallthru
    _
  // Predicated region
  $region6: #{simple_sae_forward.1} parent=0 // pred_check
    _
  $region7: #{simple_sae_forward.1} parent=0 // pred_check_branch
    %13 = sbr.rel (0) target = $region9
  $region8: #{simple_sae_forward.1} parent=0 // pred_region
    _
  $region9: #{simple_sae_forward.1} parent=0 // pred_fallthru
    _
  // Predicated region
  $region10: #{simple_sae_forward.1} parent=0 // pred_check
    _
  $region11: #{simple_sae_forward.1} parent=0 // pred_check_branch
    %15 = sbr.rel (0) target = $region13
  $region12: #{simple_sae_forward.1} parent=0 // pred_region
    _
  $region13: #{simple_sae_forward.1} parent=0 // pred_fallthru
    _
  // Predicated region
  $region14: #{simple_sae_forward.1} parent=0 // pred_check
    _
  $region15: #{simple_sae_forward.1} parent=0 // pred_check_branch
    %17 = sbr.rel (0) target = $region17
  $region16: #{simple_sae_forward.1} parent=0 // pred_region
    _
  $region17: #{simple_sae_forward.1} parent=0 // pred_fallthru
    _
  // Predicated region
  $region18: #{simple_sae_forward.1} parent=0 // pred_check
    _
  $region19: #{simple_sae_forward.1} parent=0 // pred_check_branch
    %19 = sbr.rel (0) target = $region21
  $region20: #{simple_sae_forward.1} parent=0 // pred_region
    _
  $region21: #{simple_sae_forward.1} parent=0 // pred_fallthru
    _
  %v21 = vld [vmem:[%s0] sm:$0xff]
  %v22 = vld [vmem:[%s0 + $0x8] sm:$0xff]
  %v23 = vld [vmem:[%s0 + $0x10] sm:$0xff]
  %v24 = vld [vmem:[%s0 + $0x18] sm:$0xff]
  %v25 = vld [vmem:[%s0 + $0x20] sm:$0xff]
  %v26 = vld [vmem:[%s0 + $0x28] sm:$0xff]
  %v27 = vld [vmem:[%s0 + $0x30] sm:$0xff]
  %v28 = vld [vmem:[%s0 + $0x38] sm:$0xff]
  %v29 = vld [vmem:[%s0 + $0x40] sm:$0xff]
  %v30 = vld [vmem:[%s0 + $0x48] sm:$0xff]
  %v31 = vld [vmem:[%s0 + $0x50] sm:$0xff]
  %v32 = vld [vmem:[%s0 + $0x58] sm:$0xff]
  %v33 = vld [vmem:[%s0 + $0x60] sm:$0xff]
  %v34 = vld [vmem:[%s0 + $0x68] sm:$0xff]
  %v35 = vld [vmem:[%s0 + $0x70] sm:$0xff]
  %v36 = vld [vmem:[%s0 + $0x78] sm:$0xff]
  %v37 = vld [vmem:[%s0 + $0x80] sm:$0xff]
  %v38 = vld [vmem:[%s0 + $0x88] sm:$0xff]
  %v39 = vld [vmem:[%s0 + $0x90] sm:$0xff]
  %v40 = vld [vmem:[%s0 + $0x98] sm:$0xff]
  %v41 = vld [vmem:[%s0 + $0xa0] sm:$0xff]
  %v42 = vld [vmem:[%s0 + $0xa8] sm:$0xff]
  %v43 = vld [vmem:[%s0 + $0xb0] sm:$0xff]
  %v44 = vld [vmem:[%s0 + $0xb8] sm:$0xff]
  %v45 = vld [vmem:[%s0 + $0xc0] sm:$0xff]
  %v46 = vld [vmem:[%s0 + $0xc8] sm:$0xff]
  %v47 = vld [vmem:[%s0 + $0xd0] sm:$0xff]
  %v48 = vld [vmem:[%s0 + $0xd8] sm:$0xff]
  %v49 = vld [vmem:[%s0 + $0xe0] sm:$0xff]
  %v50 = vld [vmem:[%s0 + $0xe8] sm:$0xff]
  %v51 = vld [vmem:[%s0 + $0xf0] sm:$0xff]
  %v52 = vld [vmem:[%s0 + $0xf8] sm:$0xff]
  %v53 = vld [vmem:[%s0 + $0x100] sm:$0xff]
  %v54 = vld [vmem:[%s0 + $0x108] sm:$0xff]
  %v55 = vld [vmem:[%s0 + $0x110] sm:$0xff]
  %v56 = vld [vmem:[%s0 + $0x118] sm:$0xff]
  %v57 = vld [vmem:[%s0 + $0x120] sm:$0xff]
  %v58 = vld [vmem:[%s0 + $0x128] sm:$0xff]
  %v59 = vld [vmem:[%s0 + $0x130] sm:$0xff]
  %v60 = vld [vmem:[%s0 + $0x138] sm:$0xff]
  %v61 = vld [vmem:[%s0 + $0x140] sm:$0xff]
  %v62 = vld [vmem:[%s0 + $0x148] sm:$0xff]
  %v63 = vld [vmem:[%s0 + $0x150] sm:$0xff]
  %v64 = vld [vmem:[%s0 + $0x158] sm:$0xff]
  %v65 = vld [vmem:[%s0 + $0x160] sm:$0xff]
  %v66 = vld [vmem:[%s0 + $0x168] sm:$0xff]
  %v67 = vld [vmem:[%s0 + $0x170] sm:$0xff]
  %v68 = vld [vmem:[%s0 + $0x178] sm:$0xff]
  %v69 = vld [vmem:[%s0 + $0x180] sm:$0xff]
  %v70 = vld [vmem:[%s0 + $0x188] sm:$0xff]
  %v71 = vld [vmem:[%s0 + $0x190] sm:$0xff]
  %v72 = vld [vmem:[%s0 + $0x198] sm:$0xff]
  %v73 = vld [vmem:[%s0 + $0x1a0] sm:$0xff]
  %v74 = vld [vmem:[%s0 + $0x1a8] sm:$0xff]
  %v75 = vld [vmem:[%s0 + $0x1b0] sm:$0xff]
  %v76 = vld [vmem:[%s0 + $0x1b8] sm:$0xff]
  %v77 = vld [vmem:[%s0 + $0x1c0] sm:$0xff]
  %v78 = vld [vmem:[%s0 + $0x1c8] sm:$0xff]
  %v79 = vld [vmem:[%s0 + $0x1d0] sm:$0xff]
  %v80 = vld [vmem:[%s0 + $0x1d8] sm:$0xff]
  %v81 = vld [vmem:[%s0 + $0x1e0] sm:$0xff]
  %v82 = vld [vmem:[%s0 + $0x1e8] sm:$0xff]
  %v83 = vld [vmem:[%s0 + $0x1f0] sm:$0xff]
  %v84 = vld [vmem:[%s0 + $0x1f8] sm:$0xff]
  %v85 = vld [vmem:[%s0 + $0x200] sm:$0xff]
  %v86 = vld [vmem:[%s0 + $0x208] sm:$0xff]
  %v87 = vld [vmem:[%s0 + $0x210] sm:$0xff]
  %v88 = vld [vmem:[%s0 + $0x218] sm:$0xff]
  %v89 = vld [vmem:[%s0 + $0x220] sm:$0xff]
  %v90 = vld [vmem:[%s0 + $0x228] sm:$0xff]
  %v91 = vld [vmem:[%s0 + $0x230] sm:$0xff]
  %v92 = vld [vmem:[%s0 + $0x238] sm:$0xff]
  %v93 = vld [vmem:[%s0 + $0x240] sm:$0xff]
  %v94 = vld [vmem:[%s0 + $0x248] sm:$0xff]
  %v95 = vld [vmem:[%s0 + $0x250] sm:$0xff]
  %v96 = vld [vmem:[%s0 + $0x258] sm:$0xff]
  %v97 = vld [vmem:[%s0 + $0x260] sm:$0xff]
  %v98 = vld [vmem:[%s0 + $0x268] sm:$0xff]
  %v99 = vld [vmem:[%s0 + $0x270] sm:$0xff]
  %v100 = vld [vmem:[%s0 + $0x278] sm:$0xff]
  %v101 = vld [vmem:[%s0 + $0x280] sm:$0xff]
  %v102 = vld [vmem:[%s0 + $0x288] sm:$0xff]
  %v103 = vld [vmem:[%s0 + $0x290] sm:$0xff]
  %v104 = vld [vmem:[%s0 + $0x298] sm:$0xff]
  %v105 = vld [vmem:[%s0 + $0x2a0] sm:$0xff]
  %v106 = vld [vmem:[%s0 + $0x2a8] sm:$0xff]
  %v107 = vld [vmem:[%s0 + $0x2b0] sm:$0xff]
  %v108 = vld [vmem:[%s0 + $0x2b8] sm:$0xff]
  %v109 = vld [vmem:[%s0 + $0x2c0] sm:$0xff]
  %v110 = vld [vmem:[%s0 + $0x2c8] sm:$0xff]
  %v111 = vld [vmem:[%s0 + $0x2d0] sm:$0xff]
  %v112 = vld [vmem:[%s0 + $0x2d8] sm:$0xff]
  %v113 = vld [vmem:[%s0 + $0x2e0] sm:$0xff]
  %v114 = vld [vmem:[%s0 + $0x2e8] sm:$0xff]
  %v115 = vld [vmem:[%s0 + $0x2f0] sm:$0xff]
  %v116 = vld [vmem:[%s0 + $0x2f8] sm:$0xff]
  %v117 = vld [vmem:[%s0 + $0x300] sm:$0xff]
  %v118 = vld [vmem:[%s0 + $0x308] sm:$0xff]
  %v119 = vld [vmem:[%s0 + $0x310] sm:$0xff]
  %v120 = vld [vmem:[%s0 + $0x318] sm:$0xff]
  %v121 = vld [vmem:[%s0 + $0x320] sm:$0xff]
  %v122 = vld [vmem:[%s0 + $0x328] sm:$0xff]
  %v123 = vld [vmem:[%s0 + $0x330] sm:$0xff]
  %v124 = vld [vmem:[%s0 + $0x338] sm:$0xff]
  %v125 = vld [vmem:[%s0 + $0x340] sm:$0xff]
  %v126 = vld [vmem:[%s0 + $0x348] sm:$0xff]
  %v127 = vld [vmem:[%s0 + $0x350] sm:$0xff]
  %v128 = vld [vmem:[%s0 + $0x358] sm:$0xff]
  %v129 = vld [vmem:[%s0 + $0x360] sm:$0xff]
  %v130 = vld [vmem:[%s0 + $0x368] sm:$0xff]
  %v131 = vld [vmem:[%s0 + $0x370] sm:$0xff]
  %v132 = vld [vmem:[%s0 + $0x378] sm:$0xff]
  %v133 = vld [vmem:[%s0 + $0x380] sm:$0xff]
  %v134 = vld [vmem:[%s0 + $0x388] sm:$0xff]
  %v135 = vld [vmem:[%s0 + $0x390] sm:$0xff]
  %v136 = vld [vmem:[%s0 + $0x398] sm:$0xff]
  %v137 = vld [vmem:[%s0 + $0x3a0] sm:$0xff]
  %v138 = vld [vmem:[%s0 + $0x3a8] sm:$0xff]
  %v139 = vld [vmem:[%s0 + $0x3b0] sm:$0xff]
  %v140 = vld [vmem:[%s0 + $0x3b8] sm:$0xff]
  %v141 = vld [vmem:[%s0 + $0x3c0] sm:$0xff]
  %v142 = vld [vmem:[%s0 + $0x3c8] sm:$0xff]
  %v143 = vld [vmem:[%s0 + $0x3d0] sm:$0xff]
  %v144 = vld [vmem:[%s0 + $0x3d8] sm:$0xff]
  %v145 = vld [vmem:[%s0 + $0x3e0] sm:$0xff]
  %v146 = vld [vmem:[%s0 + $0x3e8] sm:$0xff]
  %v147 = vld [vmem:[%s0 + $0x3f0] sm:$0xff]
  %v148 = vld [vmem:[%s0 + $0x3f8] sm:$0xff]
  %v149 = vld [vmem:[%s0 + $0x400] sm:$0xff]
  %v150 = vld [vmem:[%s0 + $0x408] sm:$0xff]
  %v151 = vld [vmem:[%s0 + $0x410] sm:$0xff]
  %v152 = vld [vmem:[%s0 + $0x418] sm:$0xff]
  %v153 = vld [vmem:[%s0 + $0x420] sm:$0xff]
  %v154 = vld [vmem:[%s0 + $0x428] sm:$0xff]
  %v155 = vld [vmem:[%s0 + $0x430] sm:$0xff]
  %v156 = vld [vmem:[%s0 + $0x438] sm:$0xff]
  %v157 = vld [vmem:[%s0 + $0x440] sm:$0xff]
  %v158 = vld [vmem:[%s0 + $0x448] sm:$0xff]
  %v159 = vld [vmem:[%s0 + $0x450] sm:$0xff]
  %v160 = vld [vmem:[%s0 + $0x458] sm:$0xff]
  %v161 = vld [vmem:[%s0 + $0x460] sm:$0xff]
  %v162 = vld [vmem:[%s0 + $0x468] sm:$0xff]
  %v163 = vld [vmem:[%s0 + $0x470] sm:$0xff]
  %v164 = vld [vmem:[%s0 + $0x478] sm:$0xff]
  %v165 = vld [vmem:[%s0 + $0x480] sm:$0xff]
  %v166 = vld [vmem:[%s0 + $0x488] sm:$0xff]
  %v167 = vld [vmem:[%s0 + $0x490] sm:$0xff]
  %v168 = vld [vmem:[%s0 + $0x498] sm:$0xff]
  %v169 = vld [vmem:[%s0 + $0x4a0] sm:$0xff]
  %v170 = vld [vmem:[%s0 + $0x4a8] sm:$0xff]
  %v171 = vld [vmem:[%s0 + $0x4b0] sm:$0xff]
  %v172 = vld [vmem:[%s0 + $0x4b8] sm:$0xff]
  %v173 = vld [vmem:[%s0 + $0x4c0] sm:$0xff]
  %v174 = vld [vmem:[%s0 + $0x4c8] sm:$0xff]
  %v175 = vld [vmem:[%s0 + $0x4d0] sm:$0xff]
  %v176 = vld [vmem:[%s0 + $0x4d8] sm:$0xff]
  %v177 = vld [vmem:[%s0 + $0x4e0] sm:$0xff]
  %v178 = vld [vmem:[%s0 + $0x4e8] sm:$0xff]
  %v179 = vld [vmem:[%s0 + $0x4f0] sm:$0xff]
  %v180 = vld [vmem:[%s0 + $0x4f8] sm:$0xff]
  %v181 = vld [vmem:[%s1] sm:$0xff]
  %v182 = vld [vmem:[%s1 + $0x28] sm:$0xff]
  %v183 = vld [vmem:[%s1 + $0x50] sm:$0xff]
  %v184 = vld [vmem:[%s1 + $0x78] sm:$0xff]
  %v185 = vld [vmem:[%s1 + $0xa0] sm:$0xff]
  %v186 = vld [vmem:[%s1 + $0xc8] sm:$0xff]
  %v187 = vld [vmem:[%s1 + $0xf0] sm:$0xff]
  %v188 = vld [vmem:[%s1 + $0x118] sm:$0xff]
  %v189 = vld [vmem:[%s1 + $0x140] sm:$0xff]
  %v190 = vld [vmem:[%s1 + $0x168] sm:$0xff]
  %v191 = vld [vmem:[%s1 + $0x190] sm:$0xff]
  %v192 = vld [vmem:[%s1 + $0x1b8] sm:$0xff]
  %v193 = vld [vmem:[%s1 + $0x1e0] sm:$0xff]
  %v194 = vld [vmem:[%s1 + $0x208] sm:$0xff]
  %v195 = vld [vmem:[%s1 + $0x230] sm:$0xff]
  %v196 = vld [vmem:[%s1 + $0x258] sm:$0xff]
  %v197 = vld [vmem:[%s1 + $0x280] sm:$0xff]
  %v198 = vld [vmem:[%s1 + $0x2a8] sm:$0xff]
  %v199 = vld [vmem:[%s1 + $0x2d0] sm:$0xff]
  %v200 = vld [vmem:[%s1 + $0x2f8] sm:$0xff]
  %v201 = vld [vmem:[%s1 + $0x320] sm:$0xff]
  %v202 = vld [vmem:[%s1 + $0x348] sm:$0xff]
  %v203 = vld [vmem:[%s1 + $0x370] sm:$0xff]
  %v204 = vld [vmem:[%s1 + $0x398] sm:$0xff]
  %v205 = vld [vmem:[%s1 + $0x3c0] sm:$0xff]
  %v206 = vld [vmem:[%s1 + $0x3e8] sm:$0xff]
  %v207 = vld [vmem:[%s1 + $0x410] sm:$0xff]
  %v208 = vld [vmem:[%s1 + $0x438] sm:$0xff]
  %v209 = vld [vmem:[%s1 + $0x460] sm:$0xff]
  %v210 = vld [vmem:[%s1 + $0x488] sm:$0xff]
  %v211 = vld [vmem:[%s1 + $0x4b0] sm:$0xff]
  %v212 = vld [vmem:[%s1 + $0x4d8] sm:$0xff]
  %v213 = vld [vmem:[%s1 + $0x500] sm:$0xff]
  %v214 = vld [vmem:[%s1 + $0x528] sm:$0xff]
  %v215 = vld [vmem:[%s1 + $0x550] sm:$0xff]
  %v216 = vld [vmem:[%s1 + $0x578] sm:$0xff]
  %v217 = vld [vmem:[%s1 + $0x5a0] sm:$0xff]
  %v218 = vld [vmem:[%s1 + $0x5c8] sm:$0xff]
  %v219 = vld [vmem:[%s1 + $0x5f0] sm:$0xff]
  %v220 = vld [vmem:[%s1 + $0x618] sm:$0xff]
  %v221 = vld [vmem:[%s1 + $0x640] sm:$0xff]
  %v222 = vld [vmem:[%s1 + $0x668] sm:$0xff]
  %v223 = vld [vmem:[%s1 + $0x690] sm:$0xff]
  %v224 = vld [vmem:[%s1 + $0x6b8] sm:$0xff]
  %v225 = vld [vmem:[%s1 + $0x6e0] sm:$0xff]
  %v226 = vld [vmem:[%s1 + $0x708] sm:$0xff]
  %v227 = vld [vmem:[%s1 + $0x730] sm:$0xff]
  %v228 = vld [vmem:[%s1 + $0x758] sm:$0xff]
  %v229 = vld [vmem:[%s1 + $0x780] sm:$0xff]
  %v230 = vld [vmem:[%s1 + $0x7a8] sm:$0xff]
  %v231 = vld [vmem:[%s1 + $0x7d0] sm:$0xff]
  %v232 = vld [vmem:[%s1 + $0x7f8] sm:$0xff]
  %v233 = vld [vmem:[%s1 + $0x820] sm:$0xff]
  %v234 = vld [vmem:[%s1 + $0x848] sm:$0xff]
  %v235 = vld [vmem:[%s1 + $0x870] sm:$0xff]
  %v236 = vld [vmem:[%s1 + $0x898] sm:$0xff]
  %v237 = vld [vmem:[%s1 + $0x8c0] sm:$0xff]
  %v238 = vld [vmem:[%s1 + $0x8e8] sm:$0xff]
  %v239 = vld [vmem:[%s1 + $0x910] sm:$0xff]
  %v240 = vld [vmem:[%s1 + $0x938] sm:$0xff]
  %v241 = vld [vmem:[%s1 + $0x960] sm:$0xff]
  %v242 = vld [vmem:[%s1 + $0x988] sm:$0xff]
  %v243 = vld [vmem:[%s1 + $0x9b0] sm:$0xff]
  %v244 = vld [vmem:[%s1 + $0x9d8] sm:$0xff]
  %v245 = vld [vmem:[%s1 + $0xa00] sm:$0xff]
  %v246 = vld [vmem:[%s1 + $0xa28] sm:$0xff]
  %v247 = vld [vmem:[%s1 + $0xa50] sm:$0xff]
  %v248 = vld [vmem:[%s1 + $0xa78] sm:$0xff]
  %v249 = vld [vmem:[%s1 + $0xaa0] sm:$0xff]
  %v250 = vld [vmem:[%s1 + $0xac8] sm:$0xff]
  %v251 = vld [vmem:[%s1 + $0xaf0] sm:$0xff]
  %v252 = vld [vmem:[%s1 + $0xb18] sm:$0xff]
  %v253 = vld [vmem:[%s1 + $0xb40] sm:$0xff]
  %v254 = vld [vmem:[%s1 + $0xb68] sm:$0xff]
  %v255 = vld [vmem:[%s1 + $0xb90] sm:$0xff]
  %v256 = vld [vmem:[%s1 + $0xbb8] sm:$0xff]
  %v257 = vld [vmem:[%s1 + $0xbe0] sm:$0xff]
  %v258 = vld [vmem:[%s1 + $0xc08] sm:$0xff]
  %v259 = vld [vmem:[%s1 + $0xc30] sm:$0xff]
  %v260 = vld [vmem:[%s1 + $0xc58] sm:$0xff]
  %v261 = vld [vmem:[%s1 + $0xc80] sm:$0xff]
  %v262 = vld [vmem:[%s1 + $0xca8] sm:$0xff]
  %v263 = vld [vmem:[%s1 + $0xcd0] sm:$0xff]
  %v264 = vld [vmem:[%s1 + $0xcf8] sm:$0xff]
  %v265 = vld [vmem:[%s1 + $0xd20] sm:$0xff]
  %v266 = vld [vmem:[%s1 + $0xd48] sm:$0xff]
  %v267 = vld [vmem:[%s1 + $0xd70] sm:$0xff]
  %v268 = vld [vmem:[%s1 + $0xd98] sm:$0xff]
  %v269 = vld [vmem:[%s1 + $0xdc0] sm:$0xff]
  %v270 = vld [vmem:[%s1 + $0xde8] sm:$0xff]
  %v271 = vld [vmem:[%s1 + $0xe10] sm:$0xff]
  %v272 = vld [vmem:[%s1 + $0xe38] sm:$0xff]
  %v273 = vld [vmem:[%s1 + $0xe60] sm:$0xff]
  %v274 = vld [vmem:[%s1 + $0xe88] sm:$0xff]
  %v275 = vld [vmem:[%s1 + $0xeb0] sm:$0xff]
  %v276 = vld [vmem:[%s1 + $0xed8] sm:$0xff]
  %v277 = vld [vmem:[%s1 + $0xf00] sm:$0xff]
  %v278 = vld [vmem:[%s1 + $0xf28] sm:$0xff]
  %v279 = vld [vmem:[%s1 + $0xf50] sm:$0xff]
  %v280 = vld [vmem:[%s1 + $0xf78] sm:$0xff]
  %v281 = vld [vmem:[%s1 + $0xfa0] sm:$0xff]
  %v282 = vld [vmem:[%s1 + $0xfc8] sm:$0xff]
  %v283 = vld [vmem:[%s1 + $0xff0] sm:$0xff]
  %v284 = vld [vmem:[%s1 + $0x1018] sm:$0xff]
  %v285 = vld [vmem:[%s1 + $0x1040] sm:$0xff]
  %v286 = vld [vmem:[%s1 + $0x1068] sm:$0xff]
  %v287 = vld [vmem:[%s1 + $0x1090] sm:$0xff]
  %v288 = vld [vmem:[%s1 + $0x10b8] sm:$0xff]
  %v289 = vld [vmem:[%s1 + $0x10e0] sm:$0xff]
  %v290 = vld [vmem:[%s1 + $0x1108] sm:$0xff]
  %v291 = vld [vmem:[%s1 + $0x1130] sm:$0xff]
  %v292 = vld [vmem:[%s1 + $0x1158] sm:$0xff]
  %v293 = vld [vmem:[%s1 + $0x1180] sm:$0xff]
  %v294 = vld [vmem:[%s1 + $0x11a8] sm:$0xff]
  %v295 = vld [vmem:[%s1 + $0x11d0] sm:$0xff]
  %v296 = vld [vmem:[%s1 + $0x11f8] sm:$0xff]
  %v297 = vld [vmem:[%s1 + $0x1220] sm:$0xff]
  %v298 = vld [vmem:[%s1 + $0x1248] sm:$0xff]
  %v299 = vld [vmem:[%s1 + $0x1270] sm:$0xff]
  %v300 = vld [vmem:[%s1 + $0x1298] sm:$0xff]
  %v301 = vld [vmem:[%s1 + $0x12c0] sm:$0xff]
  %v302 = vld [vmem:[%s1 + $0x12e8] sm:$0xff]
  %v303 = vld [vmem:[%s1 + $0x1310] sm:$0xff]
  %v304 = vld [vmem:[%s1 + $0x1338] sm:$0xff]
  %v305 = vld [vmem:[%s1 + $0x1360] sm:$0xff]
  %v306 = vld [vmem:[%s1 + $0x1388] sm:$0xff]
  %v307 = vld [vmem:[%s1 + $0x13b0] sm:$0xff]
  %v308 = vld [vmem:[%s1 + $0x13d8] sm:$0xff]
  %v309 = vld [vmem:[%s1 + $0x1400] sm:$0xff]
  %v310 = vld [vmem:[%s1 + $0x1428] sm:$0xff]
  %v311 = vld [vmem:[%s1 + $0x1450] sm:$0xff]
  %v312 = vld [vmem:[%s1 + $0x1478] sm:$0xff]
  %v313 = vld [vmem:[%s1 + $0x14a0] sm:$0xff]
  %v314 = vld [vmem:[%s1 + $0x14c8] sm:$0xff]
  %v315 = vld [vmem:[%s1 + $0x14f0] sm:$0xff]
  %v316 = vld [vmem:[%s1 + $0x1518] sm:$0xff]
  %v317 = vld [vmem:[%s1 + $0x1540] sm:$0xff]
  %v318 = vld [vmem:[%s1 + $0x1568] sm:$0xff]
  %v319 = vld [vmem:[%s1 + $0x1590] sm:$0xff]
  %v320 = vld [vmem:[%s1 + $0x15b8] sm:$0xff]
  %v321 = vld [vmem:[%s1 + $0x15e0] sm:$0xff]
  %v322 = vld [vmem:[%s1 + $0x1608] sm:$0xff]
  %v323 = vld [vmem:[%s1 + $0x1630] sm:$0xff]
  %v324 = vld [vmem:[%s1 + $0x1658] sm:$0xff]
  %v325 = vld [vmem:[%s1 + $0x1680] sm:$0xff]
  %v326 = vld [vmem:[%s1 + $0x16a8] sm:$0xff]
  %v327 = vld [vmem:[%s1 + $0x16d0] sm:$0xff]
  %v328 = vld [vmem:[%s1 + $0x16f8] sm:$0xff]
  %v329 = vld [vmem:[%s1 + $0x1720] sm:$0xff]
  %v330 = vld [vmem:[%s1 + $0x1748] sm:$0xff]
  %v331 = vld [vmem:[%s1 + $0x1770] sm:$0xff]
  %v332 = vld [vmem:[%s1 + $0x1798] sm:$0xff]
  %v333 = vld [vmem:[%s1 + $0x17c0] sm:$0xff]
  %v334 = vld [vmem:[%s1 + $0x17e8] sm:$0xff]
  %v335 = vld [vmem:[%s1 + $0x1810] sm:$0xff]
  %v336 = vld [vmem:[%s1 + $0x1838] sm:$0xff]
  %v337 = vld [vmem:[%s1 + $0x1860] sm:$0xff]
  %v338 = vld [vmem:[%s1 + $0x1888] sm:$0xff]
  %v339 = vld [vmem:[%s1 + $0x18b0] sm:$0xff]
  %v340 = vld [vmem:[%s1 + $0x18d8] sm:$0xff]
  %v341 = vld [vmem:[%s2] sm:$0x3]
  %v343 = vlaneseq
  %v344 = vshrl.u32 %v343, 7
  %v345 = vsub.s32 0, %v344
  %v346 = vrot.slane %v341, %v345
  %v347 = vlaneseq
  %v348 = vshrl.u32 %v347, 7
  %v349 = vsub.s32 1, %v348
  %v350 = vrot.slane %v341, %v349
  %v513 = vunpack.c.l.b16 %v21
  %v514 = vunpack.c.h.b16 %v21
  %v515 = vunpack.c.l.b16 %v22
  %v516 = vunpack.c.h.b16 %v22
  %v517 = vunpack.c.l.b16 %v23
  %v518 = vunpack.c.h.b16 %v23
  %v519 = vunpack.c.l.b16 %v24
  %v520 = vunpack.c.h.b16 %v24
  %v521 = vunpack.c.l.b16 %v25
  %v522 = vunpack.c.h.b16 %v25
  %v523 = vunpack.c.l.b16 %v26
  %v524 = vunpack.c.h.b16 %v26
  %v525 = vunpack.c.l.b16 %v27
  %v526 = vunpack.c.h.b16 %v27
  %v527 = vunpack.c.l.b16 %v28
  %v528 = vunpack.c.h.b16 %v28
  %v529 = vunpack.c.l.b16 %v29
  %v530 = vunpack.c.h.b16 %v29
  %v531 = vunpack.c.l.b16 %v30
  %v532 = vunpack.c.h.b16 %v30
  %v533 = vunpack.c.l.b16 %v31
  %v534 = vunpack.c.h.b16 %v31
  %v535 = vunpack.c.l.b16 %v32
  %v536 = vunpack.c.h.b16 %v32
  %v537 = vunpack.c.l.b16 %v33
  %v538 = vunpack.c.h.b16 %v33
  %v539 = vunpack.c.l.b16 %v34
  %v540 = vunpack.c.h.b16 %v34
  %v541 = vunpack.c.l.b16 %v35
  %v542 = vunpack.c.h.b16 %v35
  %v543 = vunpack.c.l.b16 %v36
  %v544 = vunpack.c.h.b16 %v36
  %v545 = vunpack.c.l.b16 %v37
  %v546 = vunpack.c.h.b16 %v37
  %v547 = vunpack.c.l.b16 %v38
  %v548 = vunpack.c.h.b16 %v38
  %v549 = vunpack.c.l.b16 %v39
  %v550 = vunpack.c.h.b16 %v39
  %v551 = vunpack.c.l.b16 %v40
  %v552 = vunpack.c.h.b16 %v40
  %v553 = vunpack.c.l.b16 %v41
  %v554 = vunpack.c.h.b16 %v41
  %v555 = vunpack.c.l.b16 %v42
  %v556 = vunpack.c.h.b16 %v42
  %v557 = vunpack.c.l.b16 %v43
  %v558 = vunpack.c.h.b16 %v43
  %v559 = vunpack.c.l.b16 %v44
  %v560 = vunpack.c.h.b16 %v44
  %v561 = vunpack.c.l.b16 %v45
  %v562 = vunpack.c.h.b16 %v45
  %v563 = vunpack.c.l.b16 %v46
  %v564 = vunpack.c.h.b16 %v46
  %v565 = vunpack.c.l.b16 %v47
  %v566 = vunpack.c.h.b16 %v47
  %v567 = vunpack.c.l.b16 %v48
  %v568 = vunpack.c.h.b16 %v48
  %v569 = vunpack.c.l.b16 %v49
  %v570 = vunpack.c.h.b16 %v49
  %v571 = vunpack.c.l.b16 %v50
  %v572 = vunpack.c.h.b16 %v50
  %v573 = vunpack.c.l.b16 %v51
  %v574 = vunpack.c.h.b16 %v51
  %v575 = vunpack.c.l.b16 %v52
  %v576 = vunpack.c.h.b16 %v52
  %v577 = vunpack.c.l.b16 %v53
  %v578 = vunpack.c.h.b16 %v53
  %v579 = vunpack.c.l.b16 %v54
  %v580 = vunpack.c.h.b16 %v54
  %v581 = vunpack.c.l.b16 %v55
  %v582 = vunpack.c.h.b16 %v55
  %v583 = vunpack.c.l.b16 %v56
  %v584 = vunpack.c.h.b16 %v56
  %v585 = vunpack.c.l.b16 %v57
  %v586 = vunpack.c.h.b16 %v57
  %v587 = vunpack.c.l.b16 %v58
  %v588 = vunpack.c.h.b16 %v58
  %v589 = vunpack.c.l.b16 %v59
  %v590 = vunpack.c.h.b16 %v59
  %v591 = vunpack.c.l.b16 %v60
  %v592 = vunpack.c.h.b16 %v60
  %v593 = vunpack.c.l.b16 %v61
  %v594 = vunpack.c.h.b16 %v61
  %v595 = vunpack.c.l.b16 %v62
  %v596 = vunpack.c.h.b16 %v62
  %v597 = vunpack.c.l.b16 %v63
  %v598 = vunpack.c.h.b16 %v63
  %v599 = vunpack.c.l.b16 %v64
  %v600 = vunpack.c.h.b16 %v64
  %v601 = vunpack.c.l.b16 %v65
  %v602 = vunpack.c.h.b16 %v65
  %v603 = vunpack.c.l.b16 %v66
  %v604 = vunpack.c.h.b16 %v66
  %v605 = vunpack.c.l.b16 %v67
  %v606 = vunpack.c.h.b16 %v67
  %v607 = vunpack.c.l.b16 %v68
  %v608 = vunpack.c.h.b16 %v68
  %v609 = vunpack.c.l.b16 %v69
  %v610 = vunpack.c.h.b16 %v69
  %v611 = vunpack.c.l.b16 %v70
  %v612 = vunpack.c.h.b16 %v70
  %v613 = vunpack.c.l.b16 %v71
  %v614 = vunpack.c.h.b16 %v71
  %v615 = vunpack.c.l.b16 %v72
  %v616 = vunpack.c.h.b16 %v72
  %v617 = vunpack.c.l.b16 %v73
  %v618 = vunpack.c.h.b16 %v73
  %v619 = vunpack.c.l.b16 %v74
  %v620 = vunpack.c.h.b16 %v74
  %v621 = vunpack.c.l.b16 %v75
  %v622 = vunpack.c.h.b16 %v75
  %v623 = vunpack.c.l.b16 %v76
  %v624 = vunpack.c.h.b16 %v76
  %v625 = vunpack.c.l.b16 %v77
  %v626 = vunpack.c.h.b16 %v77
  %v627 = vunpack.c.l.b16 %v78
  %v628 = vunpack.c.h.b16 %v78
  %v629 = vunpack.c.l.b16 %v79
  %v630 = vunpack.c.h.b16 %v79
  %v631 = vunpack.c.l.b16 %v80
  %v632 = vunpack.c.h.b16 %v80
  %v633 = vunpack.c.l.b16 %v81
  %v634 = vunpack.c.h.b16 %v81
  %v635 = vunpack.c.l.b16 %v82
  %v636 = vunpack.c.h.b16 %v82
  %v637 = vunpack.c.l.b16 %v83
  %v638 = vunpack.c.h.b16 %v83
  %v639 = vunpack.c.l.b16 %v84
  %v640 = vunpack.c.h.b16 %v84
  %v641 = vunpack.c.l.b16 %v85
  %v642 = vunpack.c.h.b16 %v85
  %v643 = vunpack.c.l.b16 %v86
  %v644 = vunpack.c.h.b16 %v86
  %v645 = vunpack.c.l.b16 %v87
  %v646 = vunpack.c.h.b16 %v87
  %v647 = vunpack.c.l.b16 %v88
  %v648 = vunpack.c.h.b16 %v88
  %v649 = vunpack.c.l.b16 %v89
  %v650 = vunpack.c.h.b16 %v89
  %v651 = vunpack.c.l.b16 %v90
  %v652 = vunpack.c.h.b16 %v90
  %v653 = vunpack.c.l.b16 %v91
  %v654 = vunpack.c.h.b16 %v91
  %v655 = vunpack.c.l.b16 %v92
  %v656 = vunpack.c.h.b16 %v92
  %v657 = vunpack.c.l.b16 %v93
  %v658 = vunpack.c.h.b16 %v93
  %v659 = vunpack.c.l.b16 %v94
  %v660 = vunpack.c.h.b16 %v94
  %v661 = vunpack.c.l.b16 %v95
  %v662 = vunpack.c.h.b16 %v95
  %v663 = vunpack.c.l.b16 %v96
  %v664 = vunpack.c.h.b16 %v96
  %v665 = vunpack.c.l.b16 %v97
  %v666 = vunpack.c.h.b16 %v97
  %v667 = vunpack.c.l.b16 %v98
  %v668 = vunpack.c.h.b16 %v98
  %v669 = vunpack.c.l.b16 %v99
  %v670 = vunpack.c.h.b16 %v99
  %v671 = vunpack.c.l.b16 %v100
  %v672 = vunpack.c.h.b16 %v100
  %v673 = vunpack.c.l.b16 %v101
  %v674 = vunpack.c.h.b16 %v101
  %v675 = vunpack.c.l.b16 %v102
  %v676 = vunpack.c.h.b16 %v102
  %v677 = vunpack.c.l.b16 %v103
  %v678 = vunpack.c.h.b16 %v103
  %v679 = vunpack.c.l.b16 %v104
  %v680 = vunpack.c.h.b16 %v104
  %v681 = vunpack.c.l.b16 %v105
  %v682 = vunpack.c.h.b16 %v105
  %v683 = vunpack.c.l.b16 %v106
  %v684 = vunpack.c.h.b16 %v106
  %v685 = vunpack.c.l.b16 %v107
  %v686 = vunpack.c.h.b16 %v107
  %v687 = vunpack.c.l.b16 %v108
  %v688 = vunpack.c.h.b16 %v108
  %v689 = vunpack.c.l.b16 %v109
  %v690 = vunpack.c.h.b16 %v109
  %v691 = vunpack.c.l.b16 %v110
  %v692 = vunpack.c.h.b16 %v110
  %v693 = vunpack.c.l.b16 %v111
  %v694 = vunpack.c.h.b16 %v111
  %v695 = vunpack.c.l.b16 %v112
  %v696 = vunpack.c.h.b16 %v112
  %v697 = vunpack.c.l.b16 %v113
  %v698 = vunpack.c.h.b16 %v113
  %v699 = vunpack.c.l.b16 %v114
  %v700 = vunpack.c.h.b16 %v114
  %v701 = vunpack.c.l.b16 %v115
  %v702 = vunpack.c.h.b16 %v115
  %v703 = vunpack.c.l.b16 %v116
  %v704 = vunpack.c.h.b16 %v116
  %v705 = vunpack.c.l.b16 %v117
  %v706 = vunpack.c.h.b16 %v117
  %v707 = vunpack.c.l.b16 %v118
  %v708 = vunpack.c.h.b16 %v118
  %v709 = vunpack.c.l.b16 %v119
  %v710 = vunpack.c.h.b16 %v119
  %v711 = vunpack.c.l.b16 %v120
  %v712 = vunpack.c.h.b16 %v120
  %v713 = vunpack.c.l.b16 %v121
  %v714 = vunpack.c.h.b16 %v121
  %v715 = vunpack.c.l.b16 %v122
  %v716 = vunpack.c.h.b16 %v122
  %v717 = vunpack.c.l.b16 %v123
  %v718 = vunpack.c.h.b16 %v123
  %v719 = vunpack.c.l.b16 %v124
  %v720 = vunpack.c.h.b16 %v124
  %v721 = vunpack.c.l.b16 %v125
  %v722 = vunpack.c.h.b16 %v125
  %v723 = vunpack.c.l.b16 %v126
  %v724 = vunpack.c.h.b16 %v126
  %v725 = vunpack.c.l.b16 %v127
  %v726 = vunpack.c.h.b16 %v127
  %v727 = vunpack.c.l.b16 %v128
  %v728 = vunpack.c.h.b16 %v128
  %v729 = vunpack.c.l.b16 %v129
  %v730 = vunpack.c.h.b16 %v129
  %v731 = vunpack.c.l.b16 %v130
  %v732 = vunpack.c.h.b16 %v130
  %v733 = vunpack.c.l.b16 %v131
  %v734 = vunpack.c.h.b16 %v131
  %v735 = vunpack.c.l.b16 %v132
  %v736 = vunpack.c.h.b16 %v132
  %v737 = vunpack.c.l.b16 %v133
  %v738 = vunpack.c.h.b16 %v133
  %v739 = vunpack.c.l.b16 %v134
  %v740 = vunpack.c.h.b16 %v134
  %v741 = vunpack.c.l.b16 %v135
  %v742 = vunpack.c.h.b16 %v135
  %v743 = vunpack.c.l.b16 %v136
  %v744 = vunpack.c.h.b16 %v136
  %v745 = vunpack.c.l.b16 %v137
  %v746 = vunpack.c.h.b16 %v137
  %v747 = vunpack.c.l.b16 %v138
  %v748 = vunpack.c.h.b16 %v138
  %v749 = vunpack.c.l.b16 %v139
  %v750 = vunpack.c.h.b16 %v139
  %v751 = vunpack.c.l.b16 %v140
  %v752 = vunpack.c.h.b16 %v140
  %v753 = vunpack.c.l.b16 %v141
  %v754 = vunpack.c.h.b16 %v141
  %v755 = vunpack.c.l.b16 %v142
  %v756 = vunpack.c.h.b16 %v142
  %v757 = vunpack.c.l.b16 %v143
  %v758 = vunpack.c.h.b16 %v143
  %v759 = vunpack.c.l.b16 %v144
  %v760 = vunpack.c.h.b16 %v144
  %v761 = vunpack.c.l.b16 %v145
  %v762 = vunpack.c.h.b16 %v145
  %v763 = vunpack.c.l.b16 %v146
  %v764 = vunpack.c.h.b16 %v146
  %v765 = vunpack.c.l.b16 %v147
  %v766 = vunpack.c.h.b16 %v147
  %v767 = vunpack.c.l.b16 %v148
  %v768 = vunpack.c.h.b16 %v148
  %v769 = vunpack.c.l.b16 %v149
  %v770 = vunpack.c.h.b16 %v149
  %v771 = vunpack.c.l.b16 %v150
  %v772 = vunpack.c.h.b16 %v150
  %v773 = vunpack.c.l.b16 %v151
  %v774 = vunpack.c.h.b16 %v151
  %v775 = vunpack.c.l.b16 %v152
  %v776 = vunpack.c.h.b16 %v152
  %v777 = vunpack.c.l.b16 %v153
  %v778 = vunpack.c.h.b16 %v153
  %v779 = vunpack.c.l.b16 %v154
  %v780 = vunpack.c.h.b16 %v154
  %v781 = vunpack.c.l.b16 %v155
  %v782 = vunpack.c.h.b16 %v155
  %v783 = vunpack.c.l.b16 %v156
  %v784 = vunpack.c.h.b16 %v156
  %v785 = vunpack.c.l.b16 %v157
  %v786 = vunpack.c.h.b16 %v157
  %v787 = vunpack.c.l.b16 %v158
  %v788 = vunpack.c.h.b16 %v158
  %v789 = vunpack.c.l.b16 %v159
  %v790 = vunpack.c.h.b16 %v159
  %v791 = vunpack.c.l.b16 %v160
  %v792 = vunpack.c.h.b16 %v160
  %v793 = vunpack.c.l.b16 %v161
  %v794 = vunpack.c.h.b16 %v161
  %v795 = vunpack.c.l.b16 %v162
  %v796 = vunpack.c.h.b16 %v162
  %v797 = vunpack.c.l.b16 %v163
  %v798 = vunpack.c.h.b16 %v163
  %v799 = vunpack.c.l.b16 %v164
  %v800 = vunpack.c.h.b16 %v164
  %v801 = vunpack.c.l.b16 %v165
  %v802 = vunpack.c.h.b16 %v165
  %v803 = vunpack.c.l.b16 %v166
  %v804 = vunpack.c.h.b16 %v166
  %v805 = vunpack.c.l.b16 %v167
  %v806 = vunpack.c.h.b16 %v167
  %v807 = vunpack.c.l.b16 %v168
  %v808 = vunpack.c.h.b16 %v168
  %v809 = vunpack.c.l.b16 %v169
  %v810 = vunpack.c.h.b16 %v169
  %v811 = vunpack.c.l.b16 %v170
  %v812 = vunpack.c.h.b16 %v170
  %v813 = vunpack.c.l.b16 %v171
  %v814 = vunpack.c.h.b16 %v171
  %v815 = vunpack.c.l.b16 %v172
  %v816 = vunpack.c.h.b16 %v172
  %v817 = vunpack.c.l.b16 %v173
  %v818 = vunpack.c.h.b16 %v173
  %v819 = vunpack.c.l.b16 %v174
  %v820 = vunpack.c.h.b16 %v174
  %v821 = vunpack.c.l.b16 %v175
  %v822 = vunpack.c.h.b16 %v175
  %v823 = vunpack.c.l.b16 %v176
  %v824 = vunpack.c.h.b16 %v176
  %v825 = vunpack.c.l.b16 %v177
  %v826 = vunpack.c.h.b16 %v177
  %v827 = vunpack.c.l.b16 %v178
  %v828 = vunpack.c.h.b16 %v178
  %v829 = vunpack.c.l.b16 %v179
  %v830 = vunpack.c.h.b16 %v179
  %v831 = vunpack.c.l.b16 %v180
  %v832 = vunpack.c.h.b16 %v180
  %v833 = vpack.c.b16 %v523, %v513
  %v834 = vpack.c.b16 %v524, %v514
  %v835 = vpack.c.b16 %v525, %v515
  %v836 = vpack.c.b16 %v526, %v516
  %v837 = vpack.c.b16 %v527, %v517
  %v838 = vpack.c.b16 %v528, %v518
  %v839 = vpack.c.b16 %v529, %v519
  %v840 = vpack.c.b16 %v530, %v520
  %v841 = vpack.c.b16 %v531, %v521
  %v842 = vpack.c.b16 %v532, %v522
  %v843 = vpack.c.b16 %v543, %v533
  %v844 = vpack.c.b16 %v544, %v534
  %v845 = vpack.c.b16 %v545, %v535
  %v846 = vpack.c.b16 %v546, %v536
  %v847 = vpack.c.b16 %v547, %v537
  %v848 = vpack.c.b16 %v548, %v538
  %v849 = vpack.c.b16 %v549, %v539
  %v850 = vpack.c.b16 %v550, %v540
  %v851 = vpack.c.b16 %v551, %v541
  %v852 = vpack.c.b16 %v552, %v542
  %v853 = vpack.c.b16 %v563, %v553
  %v854 = vpack.c.b16 %v564, %v554
  %v855 = vpack.c.b16 %v565, %v555
  %v856 = vpack.c.b16 %v566, %v556
  %v857 = vpack.c.b16 %v567, %v557
  %v858 = vpack.c.b16 %v568, %v558
  %v859 = vpack.c.b16 %v569, %v559
  %v860 = vpack.c.b16 %v570, %v560
  %v861 = vpack.c.b16 %v571, %v561
  %v862 = vpack.c.b16 %v572, %v562
  %v863 = vpack.c.b16 %v583, %v573
  %v864 = vpack.c.b16 %v584, %v574
  %v865 = vpack.c.b16 %v585, %v575
  %v866 = vpack.c.b16 %v586, %v576
  %v867 = vpack.c.b16 %v587, %v577
  %v868 = vpack.c.b16 %v588, %v578
  %v869 = vpack.c.b16 %v589, %v579
  %v870 = vpack.c.b16 %v590, %v580
  %v871 = vpack.c.b16 %v591, %v581
  %v872 = vpack.c.b16 %v592, %v582
  %v873 = vpack.c.b16 %v603, %v593
  %v874 = vpack.c.b16 %v604, %v594
  %v875 = vpack.c.b16 %v605, %v595
  %v876 = vpack.c.b16 %v606, %v596
  %v877 = vpack.c.b16 %v607, %v597
  %v878 = vpack.c.b16 %v608, %v598
  %v879 = vpack.c.b16 %v609, %v599
  %v880 = vpack.c.b16 %v610, %v600
  %v881 = vpack.c.b16 %v611, %v601
  %v882 = vpack.c.b16 %v612, %v602
  %v883 = vpack.c.b16 %v623, %v613
  %v884 = vpack.c.b16 %v624, %v614
  %v885 = vpack.c.b16 %v625, %v615
  %v886 = vpack.c.b16 %v626, %v616
  %v887 = vpack.c.b16 %v627, %v617
  %v888 = vpack.c.b16 %v628, %v618
  %v889 = vpack.c.b16 %v629, %v619
  %v890 = vpack.c.b16 %v630, %v620
  %v891 = vpack.c.b16 %v631, %v621
  %v892 = vpack.c.b16 %v632, %v622
  %v893 = vpack.c.b16 %v643, %v633
  %v894 = vpack.c.b16 %v644, %v634
  %v895 = vpack.c.b16 %v645, %v635
  %v896 = vpack.c.b16 %v646, %v636
  %v897 = vpack.c.b16 %v647, %v637
  %v898 = vpack.c.b16 %v648, %v638
  %v899 = vpack.c.b16 %v649, %v639
  %v900 = vpack.c.b16 %v650, %v640
  %v901 = vpack.c.b16 %v651, %v641
  %v902 = vpack.c.b16 %v652, %v642
  %v903 = vpack.c.b16 %v663, %v653
  %v904 = vpack.c.b16 %v664, %v654
  %v905 = vpack.c.b16 %v665, %v655
  %v906 = vpack.c.b16 %v666, %v656
  %v907 = vpack.c.b16 %v667, %v657
  %v908 = vpack.c.b16 %v668, %v658
  %v909 = vpack.c.b16 %v669, %v659
  %v910 = vpack.c.b16 %v670, %v660
  %v911 = vpack.c.b16 %v671, %v661
  %v912 = vpack.c.b16 %v672, %v662
  %v913 = vpack.c.b16 %v683, %v673
  %v914 = vpack.c.b16 %v684, %v674
  %v915 = vpack.c.b16 %v685, %v675
  %v916 = vpack.c.b16 %v686, %v676
  %v917 = vpack.c.b16 %v687, %v677
  %v918 = vpack.c.b16 %v688, %v678
  %v919 = vpack.c.b16 %v689, %v679
  %v920 = vpack.c.b16 %v690, %v680
  %v921 = vpack.c.b16 %v691, %v681
  %v922 = vpack.c.b16 %v692, %v682
  %v923 = vpack.c.b16 %v703, %v693
  %v924 = vpack.c.b16 %v704, %v694
  %v925 = vpack.c.b16 %v705, %v695
  %v926 = vpack.c.b16 %v706, %v696
  %v927 = vpack.c.b16 %v707, %v697
  %v928 = vpack.c.b16 %v708, %v698
  %v929 = vpack.c.b16 %v709, %v699
  %v930 = vpack.c.b16 %v710, %v700
  %v931 = vpack.c.b16 %v711, %v701
  %v932 = vpack.c.b16 %v712, %v702
  %v933 = vpack.c.b16 %v723, %v713
  %v934 = vpack.c.b16 %v724, %v714
  %v935 = vpack.c.b16 %v725, %v715
  %v936 = vpack.c.b16 %v726, %v716
  %v937 = vpack.c.b16 %v727, %v717
  %v938 = vpack.c.b16 %v728, %v718
  %v939 = vpack.c.b16 %v729, %v719
  %v940 = vpack.c.b16 %v730, %v720
  %v941 = vpack.c.b16 %v731, %v721
  %v942 = vpack.c.b16 %v732, %v722
  %v943 = vpack.c.b16 %v743, %v733
  %v944 = vpack.c.b16 %v744, %v734
  %v945 = vpack.c.b16 %v745, %v735
  %v946 = vpack.c.b16 %v746, %v736
  %v947 = vpack.c.b16 %v747, %v737
  %v948 = vpack.c.b16 %v748, %v738
  %v949 = vpack.c.b16 %v749, %v739
  %v950 = vpack.c.b16 %v750, %v740
  %v951 = vpack.c.b16 %v751, %v741
  %v952 = vpack.c.b16 %v752, %v742
  %v953 = vpack.c.b16 %v763, %v753
  %v954 = vpack.c.b16 %v764, %v754
  %v955 = vpack.c.b16 %v765, %v755
  %v956 = vpack.c.b16 %v766, %v756
  %v957 = vpack.c.b16 %v767, %v757
  %v958 = vpack.c.b16 %v768, %v758
  %v959 = vpack.c.b16 %v769, %v759
  %v960 = vpack.c.b16 %v770, %v760
  %v961 = vpack.c.b16 %v771, %v761
  %v962 = vpack.c.b16 %v772, %v762
  %v963 = vpack.c.b16 %v783, %v773
  %v964 = vpack.c.b16 %v784, %v774
  %v965 = vpack.c.b16 %v785, %v775
  %v966 = vpack.c.b16 %v786, %v776
  %v967 = vpack.c.b16 %v787, %v777
  %v968 = vpack.c.b16 %v788, %v778
  %v969 = vpack.c.b16 %v789, %v779
  %v970 = vpack.c.b16 %v790, %v780
  %v971 = vpack.c.b16 %v791, %v781
  %v972 = vpack.c.b16 %v792, %v782
  %v973 = vpack.c.b16 %v803, %v793
  %v974 = vpack.c.b16 %v804, %v794
  %v975 = vpack.c.b16 %v805, %v795
  %v976 = vpack.c.b16 %v806, %v796
  %v977 = vpack.c.b16 %v807, %v797
  %v978 = vpack.c.b16 %v808, %v798
  %v979 = vpack.c.b16 %v809, %v799
  %v980 = vpack.c.b16 %v810, %v800
  %v981 = vpack.c.b16 %v811, %v801
  %v982 = vpack.c.b16 %v812, %v802
  %v983 = vpack.c.b16 %v823, %v813
  %v984 = vpack.c.b16 %v824, %v814
  %v985 = vpack.c.b16 %v825, %v815
  %v986 = vpack.c.b16 %v826, %v816
  %v987 = vpack.c.b16 %v827, %v817
  %v988 = vpack.c.b16 %v828, %v818
  %v989 = vpack.c.b16 %v829, %v819
  %v990 = vpack.c.b16 %v830, %v820
  %v991 = vpack.c.b16 %v831, %v821
  %v992 = vpack.c.b16 %v832, %v822
  %v1313 = vunpack.c.l.b16 %v181
  %v1314 = vunpack.c.h.b16 %v181
  %v1315 = vunpack.c.l.b16 %v182
  %v1316 = vunpack.c.h.b16 %v182
  %v1317 = vunpack.c.l.b16 %v183
  %v1318 = vunpack.c.h.b16 %v183
  %v1319 = vunpack.c.l.b16 %v184
  %v1320 = vunpack.c.h.b16 %v184
  %v1321 = vunpack.c.l.b16 %v185
  %v1322 = vunpack.c.h.b16 %v185
  %v1323 = vunpack.c.l.b16 %v186
  %v1324 = vunpack.c.h.b16 %v186
  %v1325 = vunpack.c.l.b16 %v187
  %v1326 = vunpack.c.h.b16 %v187
  %v1327 = vunpack.c.l.b16 %v188
  %v1328 = vunpack.c.h.b16 %v188
  %v1329 = vunpack.c.l.b16 %v189
  %v1330 = vunpack.c.h.b16 %v189
  %v1331 = vunpack.c.l.b16 %v190
  %v1332 = vunpack.c.h.b16 %v190
  %v1333 = vunpack.c.l.b16 %v191
  %v1334 = vunpack.c.h.b16 %v191
  %v1335 = vunpack.c.l.b16 %v192
  %v1336 = vunpack.c.h.b16 %v192
  %v1337 = vunpack.c.l.b16 %v193
  %v1338 = vunpack.c.h.b16 %v193
  %v1339 = vunpack.c.l.b16 %v194
  %v1340 = vunpack.c.h.b16 %v194
  %v1341 = vunpack.c.l.b16 %v195
  %v1342 = vunpack.c.h.b16 %v195
  %v1343 = vunpack.c.l.b16 %v196
  %v1344 = vunpack.c.h.b16 %v196
  %v1345 = vunpack.c.l.b16 %v197
  %v1346 = vunpack.c.h.b16 %v197
  %v1347 = vunpack.c.l.b16 %v198
  %v1348 = vunpack.c.h.b16 %v198
  %v1349 = vunpack.c.l.b16 %v199
  %v1350 = vunpack.c.h.b16 %v199
  %v1351 = vunpack.c.l.b16 %v200
  %v1352 = vunpack.c.h.b16 %v200
  %v1353 = vunpack.c.l.b16 %v201
  %v1354 = vunpack.c.h.b16 %v201
  %v1355 = vunpack.c.l.b16 %v202
  %v1356 = vunpack.c.h.b16 %v202
  %v1357 = vunpack.c.l.b16 %v203
  %v1358 = vunpack.c.h.b16 %v203
  %v1359 = vunpack.c.l.b16 %v204
  %v1360 = vunpack.c.h.b16 %v204
  %v1361 = vunpack.c.l.b16 %v205
  %v1362 = vunpack.c.h.b16 %v205
  %v1363 = vunpack.c.l.b16 %v206
  %v1364 = vunpack.c.h.b16 %v206
  %v1365 = vunpack.c.l.b16 %v207
  %v1366 = vunpack.c.h.b16 %v207
  %v1367 = vunpack.c.l.b16 %v208
  %v1368 = vunpack.c.h.b16 %v208
  %v1369 = vunpack.c.l.b16 %v209
  %v1370 = vunpack.c.h.b16 %v209
  %v1371 = vunpack.c.l.b16 %v210
  %v1372 = vunpack.c.h.b16 %v210
  %v1373 = vunpack.c.l.b16 %v211
  %v1374 = vunpack.c.h.b16 %v211
  %v1375 = vunpack.c.l.b16 %v212
  %v1376 = vunpack.c.h.b16 %v212
  %v1377 = vunpack.c.l.b16 %v213
  %v1378 = vunpack.c.h.b16 %v213
  %v1379 = vunpack.c.l.b16 %v214
  %v1380 = vunpack.c.h.b16 %v214
  %v1381 = vunpack.c.l.b16 %v215
  %v1382 = vunpack.c.h.b16 %v215
  %v1383 = vunpack.c.l.b16 %v216
  %v1384 = vunpack.c.h.b16 %v216
  %v1385 = vunpack.c.l.b16 %v217
  %v1386 = vunpack.c.h.b16 %v217
  %v1387 = vunpack.c.l.b16 %v218
  %v1388 = vunpack.c.h.b16 %v218
  %v1389 = vunpack.c.l.b16 %v219
  %v1390 = vunpack.c.h.b16 %v219
  %v1391 = vunpack.c.l.b16 %v220
  %v1392 = vunpack.c.h.b16 %v220
  %v1393 = vunpack.c.l.b16 %v221
  %v1394 = vunpack.c.h.b16 %v221
  %v1395 = vunpack.c.l.b16 %v222
  %v1396 = vunpack.c.h.b16 %v222
  %v1397 = vunpack.c.l.b16 %v223
  %v1398 = vunpack.c.h.b16 %v223
  %v1399 = vunpack.c.l.b16 %v224
  %v1400 = vunpack.c.h.b16 %v224
  %v1401 = vunpack.c.l.b16 %v225
  %v1402 = vunpack.c.h.b16 %v225
  %v1403 = vunpack.c.l.b16 %v226
  %v1404 = vunpack.c.h.b16 %v226
  %v1405 = vunpack.c.l.b16 %v227
  %v1406 = vunpack.c.h.b16 %v227
  %v1407 = vunpack.c.l.b16 %v228
  %v1408 = vunpack.c.h.b16 %v228
  %v1409 = vunpack.c.l.b16 %v229
  %v1410 = vunpack.c.h.b16 %v229
  %v1411 = vunpack.c.l.b16 %v230
  %v1412 = vunpack.c.h.b16 %v230
  %v1413 = vunpack.c.l.b16 %v231
  %v1414 = vunpack.c.h.b16 %v231
  %v1415 = vunpack.c.l.b16 %v232
  %v1416 = vunpack.c.h.b16 %v232
  %v1417 = vunpack.c.l.b16 %v233
  %v1418 = vunpack.c.h.b16 %v233
  %v1419 = vunpack.c.l.b16 %v234
  %v1420 = vunpack.c.h.b16 %v234
  %v1421 = vunpack.c.l.b16 %v235
  %v1422 = vunpack.c.h.b16 %v235
  %v1423 = vunpack.c.l.b16 %v236
  %v1424 = vunpack.c.h.b16 %v236
  %v1425 = vunpack.c.l.b16 %v237
  %v1426 = vunpack.c.h.b16 %v237
  %v1427 = vunpack.c.l.b16 %v238
  %v1428 = vunpack.c.h.b16 %v238
  %v1429 = vunpack.c.l.b16 %v239
  %v1430 = vunpack.c.h.b16 %v239
  %v1431 = vunpack.c.l.b16 %v240
  %v1432 = vunpack.c.h.b16 %v240
  %v1433 = vunpack.c.l.b16 %v241
  %v1434 = vunpack.c.h.b16 %v241
  %v1435 = vunpack.c.l.b16 %v242
  %v1436 = vunpack.c.h.b16 %v242
  %v1437 = vunpack.c.l.b16 %v243
  %v1438 = vunpack.c.h.b16 %v243
  %v1439 = vunpack.c.l.b16 %v244
  %v1440 = vunpack.c.h.b16 %v244
  %v1441 = vunpack.c.l.b16 %v245
  %v1442 = vunpack.c.h.b16 %v245
  %v1443 = vunpack.c.l.b16 %v246
  %v1444 = vunpack.c.h.b16 %v246
  %v1445 = vunpack.c.l.b16 %v247
  %v1446 = vunpack.c.h.b16 %v247
  %v1447 = vunpack.c.l.b16 %v248
  %v1448 = vunpack.c.h.b16 %v248
  %v1449 = vunpack.c.l.b16 %v249
  %v1450 = vunpack.c.h.b16 %v249
  %v1451 = vunpack.c.l.b16 %v250
  %v1452 = vunpack.c.h.b16 %v250
  %v1453 = vunpack.c.l.b16 %v251
  %v1454 = vunpack.c.h.b16 %v251
  %v1455 = vunpack.c.l.b16 %v252
  %v1456 = vunpack.c.h.b16 %v252
  %v1457 = vunpack.c.l.b16 %v253
  %v1458 = vunpack.c.h.b16 %v253
  %v1459 = vunpack.c.l.b16 %v254
  %v1460 = vunpack.c.h.b16 %v254
  %v1461 = vunpack.c.l.b16 %v255
  %v1462 = vunpack.c.h.b16 %v255
  %v1463 = vunpack.c.l.b16 %v256
  %v1464 = vunpack.c.h.b16 %v256
  %v1465 = vunpack.c.l.b16 %v257
  %v1466 = vunpack.c.h.b16 %v257
  %v1467 = vunpack.c.l.b16 %v258
  %v1468 = vunpack.c.h.b16 %v258
  %v1469 = vunpack.c.l.b16 %v259
  %v1470 = vunpack.c.h.b16 %v259
  %v1471 = vunpack.c.l.b16 %v260
  %v1472 = vunpack.c.h.b16 %v260
  %v1473 = vunpack.c.l.b16 %v261
  %v1474 = vunpack.c.h.b16 %v261
  %v1475 = vunpack.c.l.b16 %v262
  %v1476 = vunpack.c.h.b16 %v262
  %v1477 = vunpack.c.l.b16 %v263
  %v1478 = vunpack.c.h.b16 %v263
  %v1479 = vunpack.c.l.b16 %v264
  %v1480 = vunpack.c.h.b16 %v264
  %v1481 = vunpack.c.l.b16 %v265
  %v1482 = vunpack.c.h.b16 %v265
  %v1483 = vunpack.c.l.b16 %v266
  %v1484 = vunpack.c.h.b16 %v266
  %v1485 = vunpack.c.l.b16 %v267
  %v1486 = vunpack.c.h.b16 %v267
  %v1487 = vunpack.c.l.b16 %v268
  %v1488 = vunpack.c.h.b16 %v268
  %v1489 = vunpack.c.l.b16 %v269
  %v1490 = vunpack.c.h.b16 %v269
  %v1491 = vunpack.c.l.b16 %v270
  %v1492 = vunpack.c.h.b16 %v270
  %v1493 = vunpack.c.l.b16 %v271
  %v1494 = vunpack.c.h.b16 %v271
  %v1495 = vunpack.c.l.b16 %v272
  %v1496 = vunpack.c.h.b16 %v272
  %v1497 = vunpack.c.l.b16 %v273
  %v1498 = vunpack.c.h.b16 %v273
  %v1499 = vunpack.c.l.b16 %v274
  %v1500 = vunpack.c.h.b16 %v274
  %v1501 = vunpack.c.l.b16 %v275
  %v1502 = vunpack.c.h.b16 %v275
  %v1503 = vunpack.c.l.b16 %v276
  %v1504 = vunpack.c.h.b16 %v276
  %v1505 = vunpack.c.l.b16 %v277
  %v1506 = vunpack.c.h.b16 %v277
  %v1507 = vunpack.c.l.b16 %v278
  %v1508 = vunpack.c.h.b16 %v278
  %v1509 = vunpack.c.l.b16 %v279
  %v1510 = vunpack.c.h.b16 %v279
  %v1511 = vunpack.c.l.b16 %v280
  %v1512 = vunpack.c.h.b16 %v280
  %v1513 = vunpack.c.l.b16 %v281
  %v1514 = vunpack.c.h.b16 %v281
  %v1515 = vunpack.c.l.b16 %v282
  %v1516 = vunpack.c.h.b16 %v282
  %v1517 = vunpack.c.l.b16 %v283
  %v1518 = vunpack.c.h.b16 %v283
  %v1519 = vunpack.c.l.b16 %v284
  %v1520 = vunpack.c.h.b16 %v284
  %v1521 = vunpack.c.l.b16 %v285
  %v1522 = vunpack.c.h.b16 %v285
  %v1523 = vunpack.c.l.b16 %v286
  %v1524 = vunpack.c.h.b16 %v286
  %v1525 = vunpack.c.l.b16 %v287
  %v1526 = vunpack.c.h.b16 %v287
  %v1527 = vunpack.c.l.b16 %v288
  %v1528 = vunpack.c.h.b16 %v288
  %v1529 = vunpack.c.l.b16 %v289
  %v1530 = vunpack.c.h.b16 %v289
  %v1531 = vunpack.c.l.b16 %v290
  %v1532 = vunpack.c.h.b16 %v290
  %v1533 = vunpack.c.l.b16 %v291
  %v1534 = vunpack.c.h.b16 %v291
  %v1535 = vunpack.c.l.b16 %v292
  %v1536 = vunpack.c.h.b16 %v292
  %v1537 = vunpack.c.l.b16 %v293
  %v1538 = vunpack.c.h.b16 %v293
  %v1539 = vunpack.c.l.b16 %v294
  %v1540 = vunpack.c.h.b16 %v294
  %v1541 = vunpack.c.l.b16 %v295
  %v1542 = vunpack.c.h.b16 %v295
  %v1543 = vunpack.c.l.b16 %v296
  %v1544 = vunpack.c.h.b16 %v296
  %v1545 = vunpack.c.l.b16 %v297
  %v1546 = vunpack.c.h.b16 %v297
  %v1547 = vunpack.c.l.b16 %v298
  %v1548 = vunpack.c.h.b16 %v298
  %v1549 = vunpack.c.l.b16 %v299
  %v1550 = vunpack.c.h.b16 %v299
  %v1551 = vunpack.c.l.b16 %v300
  %v1552 = vunpack.c.h.b16 %v300
  %v1553 = vunpack.c.l.b16 %v301
  %v1554 = vunpack.c.h.b16 %v301
  %v1555 = vunpack.c.l.b16 %v302
  %v1556 = vunpack.c.h.b16 %v302
  %v1557 = vunpack.c.l.b16 %v303
  %v1558 = vunpack.c.h.b16 %v303
  %v1559 = vunpack.c.l.b16 %v304
  %v1560 = vunpack.c.h.b16 %v304
  %v1561 = vunpack.c.l.b16 %v305
  %v1562 = vunpack.c.h.b16 %v305
  %v1563 = vunpack.c.l.b16 %v306
  %v1564 = vunpack.c.h.b16 %v306
  %v1565 = vunpack.c.l.b16 %v307
  %v1566 = vunpack.c.h.b16 %v307
  %v1567 = vunpack.c.l.b16 %v308
  %v1568 = vunpack.c.h.b16 %v308
  %v1569 = vunpack.c.l.b16 %v309
  %v1570 = vunpack.c.h.b16 %v309
  %v1571 = vunpack.c.l.b16 %v310
  %v1572 = vunpack.c.h.b16 %v310
  %v1573 = vunpack.c.l.b16 %v311
  %v1574 = vunpack.c.h.b16 %v311
  %v1575 = vunpack.c.l.b16 %v312
  %v1576 = vunpack.c.h.b16 %v312
  %v1577 = vunpack.c.l.b16 %v313
  %v1578 = vunpack.c.h.b16 %v313
  %v1579 = vunpack.c.l.b16 %v314
  %v1580 = vunpack.c.h.b16 %v314
  %v1581 = vunpack.c.l.b16 %v315
  %v1582 = vunpack.c.h.b16 %v315
  %v1583 = vunpack.c.l.b16 %v316
  %v1584 = vunpack.c.h.b16 %v316
  %v1585 = vunpack.c.l.b16 %v317
  %v1586 = vunpack.c.h.b16 %v317
  %v1587 = vunpack.c.l.b16 %v318
  %v1588 = vunpack.c.h.b16 %v318
  %v1589 = vunpack.c.l.b16 %v319
  %v1590 = vunpack.c.h.b16 %v319
  %v1591 = vunpack.c.l.b16 %v320
  %v1592 = vunpack.c.h.b16 %v320
  %v1593 = vunpack.c.l.b16 %v321
  %v1594 = vunpack.c.h.b16 %v321
  %v1595 = vunpack.c.l.b16 %v322
  %v1596 = vunpack.c.h.b16 %v322
  %v1597 = vunpack.c.l.b16 %v323
  %v1598 = vunpack.c.h.b16 %v323
  %v1599 = vunpack.c.l.b16 %v324
  %v1600 = vunpack.c.h.b16 %v324
  %v1601 = vunpack.c.l.b16 %v325
  %v1602 = vunpack.c.h.b16 %v325
  %v1603 = vunpack.c.l.b16 %v326
  %v1604 = vunpack.c.h.b16 %v326
  %v1605 = vunpack.c.l.b16 %v327
  %v1606 = vunpack.c.h.b16 %v327
  %v1607 = vunpack.c.l.b16 %v328
  %v1608 = vunpack.c.h.b16 %v328
  %v1609 = vunpack.c.l.b16 %v329
  %v1610 = vunpack.c.h.b16 %v329
  %v1611 = vunpack.c.l.b16 %v330
  %v1612 = vunpack.c.h.b16 %v330
  %v1613 = vunpack.c.l.b16 %v331
  %v1614 = vunpack.c.h.b16 %v331
  %v1615 = vunpack.c.l.b16 %v332
  %v1616 = vunpack.c.h.b16 %v332
  %v1617 = vunpack.c.l.b16 %v333
  %v1618 = vunpack.c.h.b16 %v333
  %v1619 = vunpack.c.l.b16 %v334
  %v1620 = vunpack.c.h.b16 %v334
  %v1621 = vunpack.c.l.b16 %v335
  %v1622 = vunpack.c.h.b16 %v335
  %v1623 = vunpack.c.l.b16 %v336
  %v1624 = vunpack.c.h.b16 %v336
  %v1625 = vunpack.c.l.b16 %v337
  %v1626 = vunpack.c.h.b16 %v337
  %v1627 = vunpack.c.l.b16 %v338
  %v1628 = vunpack.c.h.b16 %v338
  %v1629 = vunpack.c.l.b16 %v339
  %v1630 = vunpack.c.h.b16 %v339
  %v1631 = vunpack.c.l.b16 %v340
  %v1632 = vunpack.c.h.b16 %v340
  %v1633 = vpack.c.b16 %v1315, %v1313
  %v1634 = vpack.c.b16 %v1316, %v1314
  %v1635 = vpack.c.b16 %v1319, %v1317
  %v1636 = vpack.c.b16 %v1320, %v1318
  %v1637 = vpack.c.b16 %v1323, %v1321
  %v1638 = vpack.c.b16 %v1324, %v1322
  %v1639 = vpack.c.b16 %v1327, %v1325
  %v1640 = vpack.c.b16 %v1328, %v1326
  %v1641 = vpack.c.b16 %v1331, %v1329
  %v1642 = vpack.c.b16 %v1332, %v1330
  %v1643 = vpack.c.b16 %v1335, %v1333
  %v1644 = vpack.c.b16 %v1336, %v1334
  %v1645 = vpack.c.b16 %v1339, %v1337
  %v1646 = vpack.c.b16 %v1340, %v1338
  %v1647 = vpack.c.b16 %v1343, %v1341
  %v1648 = vpack.c.b16 %v1344, %v1342
  %v1649 = vpack.c.b16 %v1347, %v1345
  %v1650 = vpack.c.b16 %v1348, %v1346
  %v1651 = vpack.c.b16 %v1351, %v1349
  %v1652 = vpack.c.b16 %v1352, %v1350
  %v1653 = vpack.c.b16 %v1355, %v1353
  %v1654 = vpack.c.b16 %v1356, %v1354
  %v1655 = vpack.c.b16 %v1359, %v1357
  %v1656 = vpack.c.b16 %v1360, %v1358
  %v1657 = vpack.c.b16 %v1363, %v1361
  %v1658 = vpack.c.b16 %v1364, %v1362
  %v1659 = vpack.c.b16 %v1367, %v1365
  %v1660 = vpack.c.b16 %v1368, %v1366
  %v1661 = vpack.c.b16 %v1371, %v1369
  %v1662 = vpack.c.b16 %v1372, %v1370
  %v1663 = vpack.c.b16 %v1375, %v1373
  %v1664 = vpack.c.b16 %v1376, %v1374
  %v1665 = vpack.c.b16 %v1379, %v1377
  %v1666 = vpack.c.b16 %v1380, %v1378
  %v1667 = vpack.c.b16 %v1383, %v1381
  %v1668 = vpack.c.b16 %v1384, %v1382
  %v1669 = vpack.c.b16 %v1387, %v1385
  %v1670 = vpack.c.b16 %v1388, %v1386
  %v1671 = vpack.c.b16 %v1391, %v1389
  %v1672 = vpack.c.b16 %v1392, %v1390
  %v1673 = vpack.c.b16 %v1395, %v1393
  %v1674 = vpack.c.b16 %v1396, %v1394
  %v1675 = vpack.c.b16 %v1399, %v1397
  %v1676 = vpack.c.b16 %v1400, %v1398
  %v1677 = vpack.c.b16 %v1403, %v1401
  %v1678 = vpack.c.b16 %v1404, %v1402
  %v1679 = vpack.c.b16 %v1407, %v1405
  %v1680 = vpack.c.b16 %v1408, %v1406
  %v1681 = vpack.c.b16 %v1411, %v1409
  %v1682 = vpack.c.b16 %v1412, %v1410
  %v1683 = vpack.c.b16 %v1415, %v1413
  %v1684 = vpack.c.b16 %v1416, %v1414
  %v1685 = vpack.c.b16 %v1419, %v1417
  %v1686 = vpack.c.b16 %v1420, %v1418
  %v1687 = vpack.c.b16 %v1423, %v1421
  %v1688 = vpack.c.b16 %v1424, %v1422
  %v1689 = vpack.c.b16 %v1427, %v1425
  %v1690 = vpack.c.b16 %v1428, %v1426
  %v1691 = vpack.c.b16 %v1431, %v1429
  %v1692 = vpack.c.b16 %v1432, %v1430
  %v1693 = vpack.c.b16 %v1435, %v1433
  %v1694 = vpack.c.b16 %v1436, %v1434
  %v1695 = vpack.c.b16 %v1439, %v1437
  %v1696 = vpack.c.b16 %v1440, %v1438
  %v1697 = vpack.c.b16 %v1443, %v1441
  %v1698 = vpack.c.b16 %v1444, %v1442
  %v1699 = vpack.c.b16 %v1447, %v1445
  %v1700 = vpack.c.b16 %v1448, %v1446
  %v1701 = vpack.c.b16 %v1451, %v1449
  %v1702 = vpack.c.b16 %v1452, %v1450
  %v1703 = vpack.c.b16 %v1455, %v1453
  %v1704 = vpack.c.b16 %v1456, %v1454
  %v1705 = vpack.c.b16 %v1459, %v1457
  %v1706 = vpack.c.b16 %v1460, %v1458
  %v1707 = vpack.c.b16 %v1463, %v1461
  %v1708 = vpack.c.b16 %v1464, %v1462
  %v1709 = vpack.c.b16 %v1467, %v1465
  %v1710 = vpack.c.b16 %v1468, %v1466
  %v1711 = vpack.c.b16 %v1471, %v1469
  %v1712 = vpack.c.b16 %v1472, %v1470
  %v1713 = vpack.c.b16 %v1475, %v1473
  %v1714 = vpack.c.b16 %v1476, %v1474
  %v1715 = vpack.c.b16 %v1479, %v1477
  %v1716 = vpack.c.b16 %v1480, %v1478
  %v1717 = vpack.c.b16 %v1483, %v1481
  %v1718 = vpack.c.b16 %v1484, %v1482
  %v1719 = vpack.c.b16 %v1487, %v1485
  %v1720 = vpack.c.b16 %v1488, %v1486
  %v1721 = vpack.c.b16 %v1491, %v1489
  %v1722 = vpack.c.b16 %v1492, %v1490
  %v1723 = vpack.c.b16 %v1495, %v1493
  %v1724 = vpack.c.b16 %v1496, %v1494
  %v1725 = vpack.c.b16 %v1499, %v1497
  %v1726 = vpack.c.b16 %v1500, %v1498
  %v1727 = vpack.c.b16 %v1503, %v1501
  %v1728 = vpack.c.b16 %v1504, %v1502
  %v1729 = vpack.c.b16 %v1507, %v1505
  %v1730 = vpack.c.b16 %v1508, %v1506
  %v1731 = vpack.c.b16 %v1511, %v1509
  %v1732 = vpack.c.b16 %v1512, %v1510
  %v1733 = vpack.c.b16 %v1515, %v1513
  %v1734 = vpack.c.b16 %v1516, %v1514
  %v1735 = vpack.c.b16 %v1519, %v1517
  %v1736 = vpack.c.b16 %v1520, %v1518
  %v1737 = vpack.c.b16 %v1523, %v1521
  %v1738 = vpack.c.b16 %v1524, %v1522
  %v1739 = vpack.c.b16 %v1527, %v1525
  %v1740 = vpack.c.b16 %v1528, %v1526
  %v1741 = vpack.c.b16 %v1531, %v1529
  %v1742 = vpack.c.b16 %v1532, %v1530
  %v1743 = vpack.c.b16 %v1535, %v1533
  %v1744 = vpack.c.b16 %v1536, %v1534
  %v1745 = vpack.c.b16 %v1539, %v1537
  %v1746 = vpack.c.b16 %v1540, %v1538
  %v1747 = vpack.c.b16 %v1543, %v1541
  %v1748 = vpack.c.b16 %v1544, %v1542
  %v1749 = vpack.c.b16 %v1547, %v1545
  %v1750 = vpack.c.b16 %v1548, %v1546
  %v1751 = vpack.c.b16 %v1551, %v1549
  %v1752 = vpack.c.b16 %v1552, %v1550
  %v1753 = vpack.c.b16 %v1555, %v1553
  %v1754 = vpack.c.b16 %v1556, %v1554
  %v1755 = vpack.c.b16 %v1559, %v1557
  %v1756 = vpack.c.b16 %v1560, %v1558
  %v1757 = vpack.c.b16 %v1563, %v1561
  %v1758 = vpack.c.b16 %v1564, %v1562
  %v1759 = vpack.c.b16 %v1567, %v1565
  %v1760 = vpack.c.b16 %v1568, %v1566
  %v1761 = vpack.c.b16 %v1571, %v1569
  %v1762 = vpack.c.b16 %v1572, %v1570
  %v1763 = vpack.c.b16 %v1575, %v1573
  %v1764 = vpack.c.b16 %v1576, %v1574
  %v1765 = vpack.c.b16 %v1579, %v1577
  %v1766 = vpack.c.b16 %v1580, %v1578
  %v1767 = vpack.c.b16 %v1583, %v1581
  %v1768 = vpack.c.b16 %v1584, %v1582
  %v1769 = vpack.c.b16 %v1587, %v1585
  %v1770 = vpack.c.b16 %v1588, %v1586
  %v1771 = vpack.c.b16 %v1591, %v1589
  %v1772 = vpack.c.b16 %v1592, %v1590
  %v1773 = vpack.c.b16 %v1595, %v1593
  %v1774 = vpack.c.b16 %v1596, %v1594
  %v1775 = vpack.c.b16 %v1599, %v1597
  %v1776 = vpack.c.b16 %v1600, %v1598
  %v1777 = vpack.c.b16 %v1603, %v1601
  %v1778 = vpack.c.b16 %v1604, %v1602
  %v1779 = vpack.c.b16 %v1607, %v1605
  %v1780 = vpack.c.b16 %v1608, %v1606
  %v1781 = vpack.c.b16 %v1611, %v1609
  %v1782 = vpack.c.b16 %v1612, %v1610
  %v1783 = vpack.c.b16 %v1615, %v1613
  %v1784 = vpack.c.b16 %v1616, %v1614
  %v1785 = vpack.c.b16 %v1619, %v1617
  %v1786 = vpack.c.b16 %v1620, %v1618
  %v1787 = vpack.c.b16 %v1623, %v1621
  %v1788 = vpack.c.b16 %v1624, %v1622
  %v1789 = vpack.c.b16 %v1627, %v1625
  %v1790 = vpack.c.b16 %v1628, %v1626
  %v1791 = vpack.c.b16 %v1631, %v1629
  %v1792 = vpack.c.b16 %v1632, %v1630
  %1953 = vmatprep.subr.bf16.mxu0 %v1634
  %1954 = vmatpush1.bf16.msra.mxu0 %v1633
  %1955 = vmatprep.subr.bf16.mxu0 %v1636
  %1956 = vmatpush1.bf16.msra.mxu0 %v1635
  %1957 = vmatprep.subr.bf16.mxu0 %v1638
  %1958 = vmatpush1.bf16.msra.mxu0 %v1637
  %1959 = vmatprep.subr.bf16.mxu0 %v1640
  %1960 = vmatpush1.bf16.msra.mxu0 %v1639
  %1961 = vmatprep.subr.bf16.mxu0 %v1642
  %1962 = vmatpush1.bf16.msra.mxu0 %v1641
  %1963 = vmatprep.subr.bf16.mxu0 %v1644
  %1964 = vmatpush1.bf16.msra.mxu0 %v1643
  %1965 = vmatprep.subr.bf16.mxu0 %v1646
  %1966 = vmatpush1.bf16.msra.mxu0 %v1645
  %1967 = vmatprep.subr.bf16.mxu0 %v1648
  %1968 = vmatpush1.bf16.msra.mxu0 %v1647
  %1969 = vmatprep.subr.bf16.mxu0 %v1650
  %1970 = vmatpush1.bf16.msra.mxu0 %v1649
  %1971 = vmatprep.subr.bf16.mxu0 %v1652
  %1972 = vmatpush1.bf16.msra.mxu0 %v1651
  %1973 = vmatprep.subr.bf16.mxu0 %v1654
  %1974 = vmatpush1.bf16.msra.mxu0 %v1653
  %1975 = vmatprep.subr.bf16.mxu0 %v1656
  %1976 = vmatpush1.bf16.msra.mxu0 %v1655
  %1977 = vmatprep.subr.bf16.mxu0 %v1658
  %1978 = vmatpush1.bf16.msra.mxu0 %v1657
  %1979 = vmatprep.subr.bf16.mxu0 %v1660
  %1980 = vmatpush1.bf16.msra.mxu0 %v1659
  %1981 = vmatprep.subr.bf16.mxu0 %v1662
  %1982 = vmatpush1.bf16.msra.mxu0 %v1661
  %1983 = vmatprep.subr.bf16.mxu0 %v1664
  %1984 = vmatpush1.bf16.msra.mxu0 %v1663
  %1985 = vmatprep.mubr.bf16.mxu0 %v834
  %1986 = vmatmul.mubr.bf16.gmra.mrb[0].mxu0 %v833
  %v1987 = vpop.f32.mrb[0].mxu0
  %v1988 = vadd.f32 %v346, %v1987
  %v1989 = vpop.f32.mrb[0].mxu0
  %v1990 = vadd.f32 %v350, %v1989
  %v1991 = vpop.f32.mrb[0].mxu0
  %v1992 = vadd.f32 %v346, %v1991
  %v1993 = vpop.f32.mrb[0].mxu0
  %v1994 = vadd.f32 %v350, %v1993
  %1995 = vmatprep.mubr.bf16.mxu0 %v844
  %1996 = vmatmul.mubr.bf16.gmra.mrb[0].mxu0 %v843
  %v1997 = vpop.f32.mrb[0].mxu0
  %v1998 = vadd.f32 %v346, %v1997
  %v1999 = vpop.f32.mrb[0].mxu0
  %v2000 = vadd.f32 %v350, %v1999
  %v2001 = vpop.f32.mrb[0].mxu0
  %v2002 = vadd.f32 %v346, %v2001
  %v2003 = vpop.f32.mrb[0].mxu0
  %v2004 = vadd.f32 %v350, %v2003
  %2005 = vmatprep.mubr.bf16.mxu0 %v854
  %2006 = vmatmul.mubr.bf16.gmra.mrb[0].mxu0 %v853
  %v2007 = vpop.f32.mrb[0].mxu0
  %v2008 = vadd.f32 %v346, %v2007
  %v2009 = vpop.f32.mrb[0].mxu0
  %v2010 = vadd.f32 %v350, %v2009
  %v2011 = vpop.f32.mrb[0].mxu0
  %v2012 = vadd.f32 %v346, %v2011
  %v2013 = vpop.f32.mrb[0].mxu0
  %v2014 = vadd.f32 %v350, %v2013
  %2015 = vmatprep.mubr.bf16.mxu0 %v864
  %2016 = vmatmul.mubr.bf16.gmra.mrb[0].mxu0 %v863
  %v2017 = vpop.f32.mrb[0].mxu0
  %v2018 = vadd.f32 %v346, %v2017
  %v2019 = vpop.f32.mrb[0].mxu0
  %v2020 = vadd.f32 %v350, %v2019
  %v2021 = vpop.f32.mrb[0].mxu0
  %v2022 = vadd.f32 %v346, %v2021
  %v2023 = vpop.f32.mrb[0].mxu0
  %v2024 = vadd.f32 %v350, %v2023
  %2025 = vmatprep.mubr.bf16.mxu0 %v874
  %2026 = vmatmul.mubr.bf16.gmra.mrb[0].mxu0 %v873
  %v2027 = vpop.f32.mrb[0].mxu0
  %v2028 = vadd.f32 %v346, %v2027
  %v2029 = vpop.f32.mrb[0].mxu0
  %v2030 = vadd.f32 %v350, %v2029
  %v2031 = vpop.f32.mrb[0].mxu0
  %v2032 = vadd.f32 %v346, %v2031
  %v2033 = vpop.f32.mrb[0].mxu0
  %v2034 = vadd.f32 %v350, %v2033
  %2035 = vmatprep.mubr.bf16.mxu0 %v884
  %2036 = vmatmul.mubr.bf16.gmra.mrb[0].mxu0 %v883
  %v2037 = vpop.f32.mrb[0].mxu0
  %v2038 = vadd.f32 %v346, %v2037
  %v2039 = vpop.f32.mrb[0].mxu0
  %v2040 = vadd.f32 %v350, %v2039
  %v2041 = vpop.f32.mrb[0].mxu0
  %v2042 = vadd.f32 %v346, %v2041
  %v2043 = vpop.f32.mrb[0].mxu0
  %v2044 = vadd.f32 %v350, %v2043
  %2045 = vmatprep.mubr.bf16.mxu0 %v894
  %2046 = vmatmul.mubr.bf16.gmra.mrb[0].mxu0 %v893
  %v2047 = vpop.f32.mrb[0].mxu0
  %v2048 = vadd.f32 %v346, %v2047
  %v2049 = vpop.f32.mrb[0].mxu0
  %v2050 = vadd.f32 %v350, %v2049
  %v2051 = vpop.f32.mrb[0].mxu0
  %v2052 = vadd.f32 %v346, %v2051
  %v2053 = vpop.f32.mrb[0].mxu0
  %v2054 = vadd.f32 %v350, %v2053
  %2055 = vmatprep.mubr.bf16.mxu0 %v904
  %2056 = vmatmul.mubr.bf16.gmra.mrb[0].mxu0 %v903
  %v2057 = vpop.f32.mrb[0].mxu0
  %v2058 = vadd.f32 %v346, %v2057
  %v2059 = vpop.f32.mrb[0].mxu0
  %v2060 = vadd.f32 %v350, %v2059
  %v2061 = vpop.f32.mrb[0].mxu0
  %v2062 = vadd.f32 %v346, %v2061
  %v2063 = vpop.f32.mrb[0].mxu0
  %v2064 = vadd.f32 %v350, %v2063
  %2065 = vmatprep.mubr.bf16.mxu0 %v914
  %2066 = vmatmul.mubr.bf16.gmra.mrb[0].mxu0 %v913
  %v2067 = vpop.f32.mrb[0].mxu0
  %v2068 = vadd.f32 %v346, %v2067
  %v2069 = vpop.f32.mrb[0].mxu0
  %v2070 = vadd.f32 %v350, %v2069
  %v2071 = vpop.f32.mrb[0].mxu0
  %v2072 = vadd.f32 %v346, %v2071
  %v2073 = vpop.f32.mrb[0].mxu0
  %v2074 = vadd.f32 %v350, %v2073
  %2075 = vmatprep.mubr.bf16.mxu0 %v924
  %2076 = vmatmul.mubr.bf16.gmra.mrb[0].mxu0 %v923
  %v2077 = vpop.f32.mrb[0].mxu0
  %v2078 = vadd.f32 %v346, %v2077
  %v2079 = vpop.f32.mrb[0].mxu0
  %v2080 = vadd.f32 %v350, %v2079
  %v2081 = vpop.f32.mrb[0].mxu0
  %v2082 = vadd.f32 %v346, %v2081
  %v2083 = vpop.f32.mrb[0].mxu0
  %v2084 = vadd.f32 %v350, %v2083
  %2085 = vmatprep.mubr.bf16.mxu0 %v934
  %2086 = vmatmul.mubr.bf16.gmra.mrb[0].mxu0 %v933
  %v2087 = vpop.f32.mrb[0].mxu0
  %v2088 = vadd.f32 %v346, %v2087
  %v2089 = vpop.f32.mrb[0].mxu0
  %v2090 = vadd.f32 %v350, %v2089
  %v2091 = vpop.f32.mrb[0].mxu0
  %v2092 = vadd.f32 %v346, %v2091
  %v2093 = vpop.f32.mrb[0].mxu0
  %v2094 = vadd.f32 %v350, %v2093
  %2095 = vmatprep.mubr.bf16.mxu0 %v944
  %2096 = vmatmul.mubr.bf16.gmra.mrb[0].mxu0 %v943
  %v2097 = vpop.f32.mrb[0].mxu0
  %v2098 = vadd.f32 %v346, %v2097
  %v2099 = vpop.f32.mrb[0].mxu0
  %v2100 = vadd.f32 %v350, %v2099
  %v2101 = vpop.f32.mrb[0].mxu0
  %v2102 = vadd.f32 %v346, %v2101
  %v2103 = vpop.f32.mrb[0].mxu0
  %v2104 = vadd.f32 %v350, %v2103
  %2105 = vmatprep.mubr.bf16.mxu0 %v954
  %2106 = vmatmul.mubr.bf16.gmra.mrb[0].mxu0 %v953
  %v2107 = vpop.f32.mrb[0].mxu0
  %v2108 = vadd.f32 %v346, %v2107
  %v2109 = vpop.f32.mrb[0].mxu0
  %v2110 = vadd.f32 %v350, %v2109
  %v2111 = vpop.f32.mrb[0].mxu0
  %v2112 = vadd.f32 %v346, %v2111
  %v2113 = vpop.f32.mrb[0].mxu0
  %v2114 = vadd.f32 %v350, %v2113
  %2115 = vmatprep.mubr.bf16.mxu0 %v964
  %2116 = vmatmul.mubr.bf16.gmra.mrb[0].mxu0 %v963
  %v2117 = vpop.f32.mrb[0].mxu0
  %v2118 = vadd.f32 %v346, %v2117
  %v2119 = vpop.f32.mrb[0].mxu0
  %v2120 = vadd.f32 %v350, %v2119
  %v2121 = vpop.f32.mrb[0].mxu0
  %v2122 = vadd.f32 %v346, %v2121
  %v2123 = vpop.f32.mrb[0].mxu0
  %v2124 = vadd.f32 %v350, %v2123
  %2125 = vmatprep.mubr.bf16.mxu0 %v974
  %2126 = vmatmul.mubr.bf16.gmra.mrb[0].mxu0 %v973
  %v2127 = vpop.f32.mrb[0].mxu0
  %v2128 = vadd.f32 %v346, %v2127
  %v2129 = vpop.f32.mrb[0].mxu0
  %v2130 = vadd.f32 %v350, %v2129
  %v2131 = vpop.f32.mrb[0].mxu0
  %v2132 = vadd.f32 %v346, %v2131
  %v2133 = vpop.f32.mrb[0].mxu0
  %v2134 = vadd.f32 %v350, %v2133
  %2135 = vmatprep.mubr.bf16.mxu0 %v984
  %2136 = vmatmul.mubr.bf16.gmra.mrb[0].mxu0 %v983
  %v2137 = vpop.f32.mrb[0].mxu0
  %v2138 = vadd.f32 %v346, %v2137
  %v2139 = vpop.f32.mrb[0].mxu0
  %v2140 = vadd.f32 %v350, %v2139
  %v2141 = vpop.f32.mrb[0].mxu0
  %v2142 = vadd.f32 %v346, %v2141
  %v2143 = vpop.f32.mrb[0].mxu0
  %v2144 = vadd.f32 %v350, %v2143
  %2145 = vdwg.mxu0
  %2146 = vmatprep.subr.bf16.mxu0 %v1666
  %2147 = vmatpush1.bf16.msra.mxu0 %v1665
  %2148 = vmatprep.subr.bf16.mxu0 %v1668
  %2149 = vmatpush1.bf16.msra.mxu0 %v1667
  %2150 = vmatprep.subr.bf16.mxu0 %v1670
  %2151 = vmatpush1.bf16.msra.mxu0 %v1669
  %2152 = vmatprep.subr.bf16.mxu0 %v1672
  %2153 = vmatpush1.bf16.msra.mxu0 %v1671
  %2154 = vmatprep.subr.bf16.mxu0 %v1674
  %2155 = vmatpush1.bf16.msra.mxu0 %v1673
  %2156 = vmatprep.subr.bf16.mxu0 %v1676
  %2157 = vmatpush1.bf16.msra.mxu0 %v1675
  %2158 = vmatprep.subr.bf16.mxu0 %v1678
  %2159 = vmatpush1.bf16.msra.mxu0 %v1677
  %2160 = vmatprep.subr.bf16.mxu0 %v1680
  %2161 = vmatpush1.bf16.msra.mxu0 %v1679
  %2162 = vmatprep.subr.bf16.mxu0 %v1682
  %2163 = vmatpush1.bf16.msra.mxu0 %v1681
  %2164 = vmatprep.subr.bf16.mxu0 %v1684
  %2165 = vmatpush1.bf16.msra.mxu0 %v1683
  %2166 = vmatprep.subr.bf16.mxu0 %v1686
  %2167 = vmatpush1.bf16.msra.mxu0 %v1685
  %2168 = vmatprep.subr.bf16.mxu0 %v1688
  %2169 = vmatpush1.bf16.msra.mxu0 %v1687
  %2170 = vmatprep.subr.bf16.mxu0 %v1690
  %2171 = vmatpush1.bf16.msra.mxu0 %v1689
  %2172 = vmatprep.subr.bf16.mxu0 %v1692
  %2173 = vmatpush1.bf16.msra.mxu0 %v1691
  %2174 = vmatprep.subr.bf16.mxu0 %v1694
  %2175 = vmatpush1.bf16.msra.mxu0 %v1693
  %2176 = vmatprep.subr.bf16.mxu0 %v1696
  %2177 = vmatpush1.bf16.msra.mxu0 %v1695
  %2178 = vmatprep.mubr.bf16.mxu0 %v836
  %2179 = vmatmul.mubr.bf16.gmra.mrb[0].mxu0 %v835
  %v2180 = vpop.f32.mrb[0].mxu0
  %v2181 = vadd.f32 %v1988, %v2180
  %v2182 = vpop.f32.mrb[0].mxu0
  %v2183 = vadd.f32 %v1990, %v2182
  %v2184 = vpop.f32.mrb[0].mxu0
  %v2185 = vadd.f32 %v1992, %v2184
  %v2186 = vpop.f32.mrb[0].mxu0
  %v2187 = vadd.f32 %v1994, %v2186
  %2188 = vmatprep.mubr.bf16.mxu0 %v846
  %2189 = vmatmul.mubr.bf16.gmra.mrb[0].mxu0 %v845
  %v2190 = vpop.f32.mrb[0].mxu0
  %v2191 = vadd.f32 %v1998, %v2190
  %v2192 = vpop.f32.mrb[0].mxu0
  %v2193 = vadd.f32 %v2000, %v2192
  %v2194 = vpop.f32.mrb[0].mxu0
  %v2195 = vadd.f32 %v2002, %v2194
  %v2196 = vpop.f32.mrb[0].mxu0
  %v2197 = vadd.f32 %v2004, %v2196
  %2198 = vmatprep.mubr.bf16.mxu0 %v856
  %2199 = vmatmul.mubr.bf16.gmra.mrb[0].mxu0 %v855
  %v2200 = vpop.f32.mrb[0].mxu0
  %v2201 = vadd.f32 %v2008, %v2200
  %v2202 = vpop.f32.mrb[0].mxu0
  %v2203 = vadd.f32 %v2010, %v2202
  %v2204 = vpop.f32.mrb[0].mxu0
  %v2205 = vadd.f32 %v2012, %v2204
  %v2206 = vpop.f32.mrb[0].mxu0
  %v2207 = vadd.f32 %v2014, %v2206
  %2208 = vmatprep.mubr.bf16.mxu0 %v866
  %2209 = vmatmul.mubr.bf16.gmra.mrb[0].mxu0 %v865
  %v2210 = vpop.f32.mrb[0].mxu0
  %v2211 = vadd.f32 %v2018, %v2210
  %v2212 = vpop.f32.mrb[0].mxu0
  %v2213 = vadd.f32 %v2020, %v2212
  %v2214 = vpop.f32.mrb[0].mxu0
  %v2215 = vadd.f32 %v2022, %v2214
  %v2216 = vpop.f32.mrb[0].mxu0
  %v2217 = vadd.f32 %v2024, %v2216
  %2218 = vmatprep.mubr.bf16.mxu0 %v876
  %2219 = vmatmul.mubr.bf16.gmra.mrb[0].mxu0 %v875
  %v2220 = vpop.f32.mrb[0].mxu0
  %v2221 = vadd.f32 %v2028, %v2220
  %v2222 = vpop.f32.mrb[0].mxu0
  %v2223 = vadd.f32 %v2030, %v2222
  %v2224 = vpop.f32.mrb[0].mxu0
  %v2225 = vadd.f32 %v2032, %v2224
  %v2226 = vpop.f32.mrb[0].mxu0
  %v2227 = vadd.f32 %v2034, %v2226
  %2228 = vmatprep.mubr.bf16.mxu0 %v886
  %2229 = vmatmul.mubr.bf16.gmra.mrb[0].mxu0 %v885
  %v2230 = vpop.f32.mrb[0].mxu0
  %v2231 = vadd.f32 %v2038, %v2230
  %v2232 = vpop.f32.mrb[0].mxu0
  %v2233 = vadd.f32 %v2040, %v2232
  %v2234 = vpop.f32.mrb[0].mxu0
  %v2235 = vadd.f32 %v2042, %v2234
  %v2236 = vpop.f32.mrb[0].mxu0
  %v2237 = vadd.f32 %v2044, %v2236
  %2238 = vmatprep.mubr.bf16.mxu0 %v896
  %2239 = vmatmul.mubr.bf16.gmra.mrb[0].mxu0 %v895
  %v2240 = vpop.f32.mrb[0].mxu0
  %v2241 = vadd.f32 %v2048, %v2240
  %v2242 = vpop.f32.mrb[0].mxu0
  %v2243 = vadd.f32 %v2050, %v2242
  %v2244 = vpop.f32.mrb[0].mxu0
  %v2245 = vadd.f32 %v2052, %v2244
  %v2246 = vpop.f32.mrb[0].mxu0
  %v2247 = vadd.f32 %v2054, %v2246
  %2248 = vmatprep.mubr.bf16.mxu0 %v906
  %2249 = vmatmul.mubr.bf16.gmra.mrb[0].mxu0 %v905
  %v2250 = vpop.f32.mrb[0].mxu0
  %v2251 = vadd.f32 %v2058, %v2250
  %v2252 = vpop.f32.mrb[0].mxu0
  %v2253 = vadd.f32 %v2060, %v2252
  %v2254 = vpop.f32.mrb[0].mxu0
  %v2255 = vadd.f32 %v2062, %v2254
  %v2256 = vpop.f32.mrb[0].mxu0
  %v2257 = vadd.f32 %v2064, %v2256
  %2258 = vmatprep.mubr.bf16.mxu0 %v916
  %2259 = vmatmul.mubr.bf16.gmra.mrb[0].mxu0 %v915
  %v2260 = vpop.f32.mrb[0].mxu0
  %v2261 = vadd.f32 %v2068, %v2260
  %v2262 = vpop.f32.mrb[0].mxu0
  %v2263 = vadd.f32 %v2070, %v2262
  %v2264 = vpop.f32.mrb[0].mxu0
  %v2265 = vadd.f32 %v2072, %v2264
  %v2266 = vpop.f32.mrb[0].mxu0
  %v2267 = vadd.f32 %v2074, %v2266
  %2268 = vmatprep.mubr.bf16.mxu0 %v926
  %2269 = vmatmul.mubr.bf16.gmra.mrb[0].mxu0 %v925
  %v2270 = vpop.f32.mrb[0].mxu0
  %v2271 = vadd.f32 %v2078, %v2270
  %v2272 = vpop.f32.mrb[0].mxu0
  %v2273 = vadd.f32 %v2080, %v2272
  %v2274 = vpop.f32.mrb[0].mxu0
  %v2275 = vadd.f32 %v2082, %v2274
  %v2276 = vpop.f32.mrb[0].mxu0
  %v2277 = vadd.f32 %v2084, %v2276
  %2278 = vmatprep.mubr.bf16.mxu0 %v936
  %2279 = vmatmul.mubr.bf16.gmra.mrb[0].mxu0 %v935
  %v2280 = vpop.f32.mrb[0].mxu0
  %v2281 = vadd.f32 %v2088, %v2280
  %v2282 = vpop.f32.mrb[0].mxu0
  %v2283 = vadd.f32 %v2090, %v2282
  %v2284 = vpop.f32.mrb[0].mxu0
  %v2285 = vadd.f32 %v2092, %v2284
  %v2286 = vpop.f32.mrb[0].mxu0
  %v2287 = vadd.f32 %v2094, %v2286
  %2288 = vmatprep.mubr.bf16.mxu0 %v946
  %2289 = vmatmul.mubr.bf16.gmra.mrb[0].mxu0 %v945
  %v2290 = vpop.f32.mrb[0].mxu0
  %v2291 = vadd.f32 %v2098, %v2290
  %v2292 = vpop.f32.mrb[0].mxu0
  %v2293 = vadd.f32 %v2100, %v2292
  %v2294 = vpop.f32.mrb[0].mxu0
  %v2295 = vadd.f32 %v2102, %v2294
  %v2296 = vpop.f32.mrb[0].mxu0
  %v2297 = vadd.f32 %v2104, %v2296
  %2298 = vmatprep.mubr.bf16.mxu0 %v956
  %2299 = vmatmul.mubr.bf16.gmra.mrb[0].mxu0 %v955
  %v2300 = vpop.f32.mrb[0].mxu0
  %v2301 = vadd.f32 %v2108, %v2300
  %v2302 = vpop.f32.mrb[0].mxu0
  %v2303 = vadd.f32 %v2110, %v2302
  %v2304 = vpop.f32.mrb[0].mxu0
  %v2305 = vadd.f32 %v2112, %v2304
  %v2306 = vpop.f32.mrb[0].mxu0
  %v2307 = vadd.f32 %v2114, %v2306
  %2308 = vmatprep.mubr.bf16.mxu0 %v966
  %2309 = vmatmul.mubr.bf16.gmra.mrb[0].mxu0 %v965
  %v2310 = vpop.f32.mrb[0].mxu0
  %v2311 = vadd.f32 %v2118, %v2310
  %v2312 = vpop.f32.mrb[0].mxu0
  %v2313 = vadd.f32 %v2120, %v2312
  %v2314 = vpop.f32.mrb[0].mxu0
  %v2315 = vadd.f32 %v2122, %v2314
  %v2316 = vpop.f32.mrb[0].mxu0
  %v2317 = vadd.f32 %v2124, %v2316
  %2318 = vmatprep.mubr.bf16.mxu0 %v976
  %2319 = vmatmul.mubr.bf16.gmra.mrb[0].mxu0 %v975
  %v2320 = vpop.f32.mrb[0].mxu0
  %v2321 = vadd.f32 %v2128, %v2320
  %v2322 = vpop.f32.mrb[0].mxu0
  %v2323 = vadd.f32 %v2130, %v2322
  %v2324 = vpop.f32.mrb[0].mxu0
  %v2325 = vadd.f32 %v2132, %v2324
  %v2326 = vpop.f32.mrb[0].mxu0
  %v2327 = vadd.f32 %v2134, %v2326
  %2328 = vmatprep.mubr.bf16.mxu0 %v986
  %2329 = vmatmul.mubr.bf16.gmra.mrb[0].mxu0 %v985
  %v2330 = vpop.f32.mrb[0].mxu0
  %v2331 = vadd.f32 %v2138, %v2330
  %v2332 = vpop.f32.mrb[0].mxu0
  %v2333 = vadd.f32 %v2140, %v2332
  %v2334 = vpop.f32.mrb[0].mxu0
  %v2335 = vadd.f32 %v2142, %v2334
  %v2336 = vpop.f32.mrb[0].mxu0
  %v2337 = vadd.f32 %v2144, %v2336
  %2338 = vdwg.mxu0
  %2339 = vmatprep.subr.bf16.mxu0 %v1698
  %2340 = vmatpush1.bf16.msra.mxu0 %v1697
  %2341 = vmatprep.subr.bf16.mxu0 %v1700
  %2342 = vmatpush1.bf16.msra.mxu0 %v1699
  %2343 = vmatprep.subr.bf16.mxu0 %v1702
  %2344 = vmatpush1.bf16.msra.mxu0 %v1701
  %2345 = vmatprep.subr.bf16.mxu0 %v1704
  %2346 = vmatpush1.bf16.msra.mxu0 %v1703
  %2347 = vmatprep.subr.bf16.mxu0 %v1706
  %2348 = vmatpush1.bf16.msra.mxu0 %v1705
  %2349 = vmatprep.subr.bf16.mxu0 %v1708
  %2350 = vmatpush1.bf16.msra.mxu0 %v1707
  %2351 = vmatprep.subr.bf16.mxu0 %v1710
  %2352 = vmatpush1.bf16.msra.mxu0 %v1709
  %2353 = vmatprep.subr.bf16.mxu0 %v1712
  %2354 = vmatpush1.bf16.msra.mxu0 %v1711
  %2355 = vmatprep.subr.bf16.mxu0 %v1714
  %2356 = vmatpush1.bf16.msra.mxu0 %v1713
  %2357 = vmatprep.subr.bf16.mxu0 %v1716
  %2358 = vmatpush1.bf16.msra.mxu0 %v1715
  %2359 = vmatprep.subr.bf16.mxu0 %v1718
  %2360 = vmatpush1.bf16.msra.mxu0 %v1717
  %2361 = vmatprep.subr.bf16.mxu0 %v1720
  %2362 = vmatpush1.bf16.msra.mxu0 %v1719
  %2363 = vmatprep.subr.bf16.mxu0 %v1722
  %2364 = vmatpush1.bf16.msra.mxu0 %v1721
  %2365 = vmatprep.subr.bf16.mxu0 %v1724
  %2366 = vmatpush1.bf16.msra.mxu0 %v1723
  %2367 = vmatprep.subr.bf16.mxu0 %v1726
  %2368 = vmatpush1.bf16.msra.mxu0 %v1725
  %2369 = vmatprep.subr.bf16.mxu0 %v1728
  %2370 = vmatpush1.bf16.msra.mxu0 %v1727
  %2371 = vmatprep.mubr.bf16.mxu0 %v838
  %2372 = vmatmul.mubr.bf16.gmra.mrb[0].mxu0 %v837
  %v2373 = vpop.f32.mrb[0].mxu0
  %v2374 = vadd.f32 %v2181, %v2373
  %v2375 = vpop.f32.mrb[0].mxu0
  %v2376 = vadd.f32 %v2183, %v2375
  %v2377 = vpop.f32.mrb[0].mxu0
  %v2378 = vadd.f32 %v2185, %v2377
  %v2379 = vpop.f32.mrb[0].mxu0
  %v2380 = vadd.f32 %v2187, %v2379
  %2381 = vmatprep.mubr.bf16.mxu0 %v848
  %2382 = vmatmul.mubr.bf16.gmra.mrb[0].mxu0 %v847
  %v2383 = vpop.f32.mrb[0].mxu0
  %v2384 = vadd.f32 %v2191, %v2383
  %v2385 = vpop.f32.mrb[0].mxu0
  %v2386 = vadd.f32 %v2193, %v2385
  %v2387 = vpop.f32.mrb[0].mxu0
  %v2388 = vadd.f32 %v2195, %v2387
  %v2389 = vpop.f32.mrb[0].mxu0
  %v2390 = vadd.f32 %v2197, %v2389
  %2391 = vmatprep.mubr.bf16.mxu0 %v858
  %2392 = vmatmul.mubr.bf16.gmra.mrb[0].mxu0 %v857
  %v2393 = vpop.f32.mrb[0].mxu0
  %v2394 = vadd.f32 %v2201, %v2393
  %v2395 = vpop.f32.mrb[0].mxu0
  %v2396 = vadd.f32 %v2203, %v2395
  %v2397 = vpop.f32.mrb[0].mxu0
  %v2398 = vadd.f32 %v2205, %v2397
  %v2399 = vpop.f32.mrb[0].mxu0
  %v2400 = vadd.f32 %v2207, %v2399
  %2401 = vmatprep.mubr.bf16.mxu0 %v868
  %2402 = vmatmul.mubr.bf16.gmra.mrb[0].mxu0 %v867
  %v2403 = vpop.f32.mrb[0].mxu0
  %v2404 = vadd.f32 %v2211, %v2403
  %v2405 = vpop.f32.mrb[0].mxu0
  %v2406 = vadd.f32 %v2213, %v2405
  %v2407 = vpop.f32.mrb[0].mxu0
  %v2408 = vadd.f32 %v2215, %v2407
  %v2409 = vpop.f32.mrb[0].mxu0
  %v2410 = vadd.f32 %v2217, %v2409
  %2411 = vmatprep.mubr.bf16.mxu0 %v878
  %2412 = vmatmul.mubr.bf16.gmra.mrb[0].mxu0 %v877
  %v2413 = vpop.f32.mrb[0].mxu0
  %v2414 = vadd.f32 %v2221, %v2413
  %v2415 = vpop.f32.mrb[0].mxu0
  %v2416 = vadd.f32 %v2223, %v2415
  %v2417 = vpop.f32.mrb[0].mxu0
  %v2418 = vadd.f32 %v2225, %v2417
  %v2419 = vpop.f32.mrb[0].mxu0
  %v2420 = vadd.f32 %v2227, %v2419
  %2421 = vmatprep.mubr.bf16.mxu0 %v888
  %2422 = vmatmul.mubr.bf16.gmra.mrb[0].mxu0 %v887
  %v2423 = vpop.f32.mrb[0].mxu0
  %v2424 = vadd.f32 %v2231, %v2423
  %v2425 = vpop.f32.mrb[0].mxu0
  %v2426 = vadd.f32 %v2233, %v2425
  %v2427 = vpop.f32.mrb[0].mxu0
  %v2428 = vadd.f32 %v2235, %v2427
  %v2429 = vpop.f32.mrb[0].mxu0
  %v2430 = vadd.f32 %v2237, %v2429
  %2431 = vmatprep.mubr.bf16.mxu0 %v898
  %2432 = vmatmul.mubr.bf16.gmra.mrb[0].mxu0 %v897
  %v2433 = vpop.f32.mrb[0].mxu0
  %v2434 = vadd.f32 %v2241, %v2433
  %v2435 = vpop.f32.mrb[0].mxu0
  %v2436 = vadd.f32 %v2243, %v2435
  %v2437 = vpop.f32.mrb[0].mxu0
  %v2438 = vadd.f32 %v2245, %v2437
  %v2439 = vpop.f32.mrb[0].mxu0
  %v2440 = vadd.f32 %v2247, %v2439
  %2441 = vmatprep.mubr.bf16.mxu0 %v908
  %2442 = vmatmul.mubr.bf16.gmra.mrb[0].mxu0 %v907
  %v2443 = vpop.f32.mrb[0].mxu0
  %v2444 = vadd.f32 %v2251, %v2443
  %v2445 = vpop.f32.mrb[0].mxu0
  %v2446 = vadd.f32 %v2253, %v2445
  %v2447 = vpop.f32.mrb[0].mxu0
  %v2448 = vadd.f32 %v2255, %v2447
  %v2449 = vpop.f32.mrb[0].mxu0
  %v2450 = vadd.f32 %v2257, %v2449
  %2451 = vmatprep.mubr.bf16.mxu0 %v918
  %2452 = vmatmul.mubr.bf16.gmra.mrb[0].mxu0 %v917
  %v2453 = vpop.f32.mrb[0].mxu0
  %v2454 = vadd.f32 %v2261, %v2453
  %v2455 = vpop.f32.mrb[0].mxu0
  %v2456 = vadd.f32 %v2263, %v2455
  %v2457 = vpop.f32.mrb[0].mxu0
  %v2458 = vadd.f32 %v2265, %v2457
  %v2459 = vpop.f32.mrb[0].mxu0
  %v2460 = vadd.f32 %v2267, %v2459
  %2461 = vmatprep.mubr.bf16.mxu0 %v928
  %2462 = vmatmul.mubr.bf16.gmra.mrb[0].mxu0 %v927
  %v2463 = vpop.f32.mrb[0].mxu0
  %v2464 = vadd.f32 %v2271, %v2463
  %v2465 = vpop.f32.mrb[0].mxu0
  %v2466 = vadd.f32 %v2273, %v2465
  %v2467 = vpop.f32.mrb[0].mxu0
  %v2468 = vadd.f32 %v2275, %v2467
  %v2469 = vpop.f32.mrb[0].mxu0
  %v2470 = vadd.f32 %v2277, %v2469
  %2471 = vmatprep.mubr.bf16.mxu0 %v938
  %2472 = vmatmul.mubr.bf16.gmra.mrb[0].mxu0 %v937
  %v2473 = vpop.f32.mrb[0].mxu0
  %v2474 = vadd.f32 %v2281, %v2473
  %v2475 = vpop.f32.mrb[0].mxu0
  %v2476 = vadd.f32 %v2283, %v2475
  %v2477 = vpop.f32.mrb[0].mxu0
  %v2478 = vadd.f32 %v2285, %v2477
  %v2479 = vpop.f32.mrb[0].mxu0
  %v2480 = vadd.f32 %v2287, %v2479
  %2481 = vmatprep.mubr.bf16.mxu0 %v948
  %2482 = vmatmul.mubr.bf16.gmra.mrb[0].mxu0 %v947
  %v2483 = vpop.f32.mrb[0].mxu0
  %v2484 = vadd.f32 %v2291, %v2483
  %v2485 = vpop.f32.mrb[0].mxu0
  %v2486 = vadd.f32 %v2293, %v2485
  %v2487 = vpop.f32.mrb[0].mxu0
  %v2488 = vadd.f32 %v2295, %v2487
  %v2489 = vpop.f32.mrb[0].mxu0
  %v2490 = vadd.f32 %v2297, %v2489
  %2491 = vmatprep.mubr.bf16.mxu0 %v958
  %2492 = vmatmul.mubr.bf16.gmra.mrb[0].mxu0 %v957
  %v2493 = vpop.f32.mrb[0].mxu0
  %v2494 = vadd.f32 %v2301, %v2493
  %v2495 = vpop.f32.mrb[0].mxu0
  %v2496 = vadd.f32 %v2303, %v2495
  %v2497 = vpop.f32.mrb[0].mxu0
  %v2498 = vadd.f32 %v2305, %v2497
  %v2499 = vpop.f32.mrb[0].mxu0
  %v2500 = vadd.f32 %v2307, %v2499
  %2501 = vmatprep.mubr.bf16.mxu0 %v968
  %2502 = vmatmul.mubr.bf16.gmra.mrb[0].mxu0 %v967
  %v2503 = vpop.f32.mrb[0].mxu0
  %v2504 = vadd.f32 %v2311, %v2503
  %v2505 = vpop.f32.mrb[0].mxu0
  %v2506 = vadd.f32 %v2313, %v2505
  %v2507 = vpop.f32.mrb[0].mxu0
  %v2508 = vadd.f32 %v2315, %v2507
  %v2509 = vpop.f32.mrb[0].mxu0
  %v2510 = vadd.f32 %v2317, %v2509
  %2511 = vmatprep.mubr.bf16.mxu0 %v978
  %2512 = vmatmul.mubr.bf16.gmra.mrb[0].mxu0 %v977
  %v2513 = vpop.f32.mrb[0].mxu0
  %v2514 = vadd.f32 %v2321, %v2513
  %v2515 = vpop.f32.mrb[0].mxu0
  %v2516 = vadd.f32 %v2323, %v2515
  %v2517 = vpop.f32.mrb[0].mxu0
  %v2518 = vadd.f32 %v2325, %v2517
  %v2519 = vpop.f32.mrb[0].mxu0
  %v2520 = vadd.f32 %v2327, %v2519
  %2521 = vmatprep.mubr.bf16.mxu0 %v988
  %2522 = vmatmul.mubr.bf16.gmra.mrb[0].mxu0 %v987
  %v2523 = vpop.f32.mrb[0].mxu0
  %v2524 = vadd.f32 %v2331, %v2523
  %v2525 = vpop.f32.mrb[0].mxu0
  %v2526 = vadd.f32 %v2333, %v2525
  %v2527 = vpop.f32.mrb[0].mxu0
  %v2528 = vadd.f32 %v2335, %v2527
  %v2529 = vpop.f32.mrb[0].mxu0
  %v2530 = vadd.f32 %v2337, %v2529
  %2531 = vdwg.mxu0
  %2532 = vmatprep.subr.bf16.mxu0 %v1730
  %2533 = vmatpush1.bf16.msra.mxu0 %v1729
  %2534 = vmatprep.subr.bf16.mxu0 %v1732
  %2535 = vmatpush1.bf16.msra.mxu0 %v1731
  %2536 = vmatprep.subr.bf16.mxu0 %v1734
  %2537 = vmatpush1.bf16.msra.mxu0 %v1733
  %2538 = vmatprep.subr.bf16.mxu0 %v1736
  %2539 = vmatpush1.bf16.msra.mxu0 %v1735
  %2540 = vmatprep.subr.bf16.mxu0 %v1738
  %2541 = vmatpush1.bf16.msra.mxu0 %v1737
  %2542 = vmatprep.subr.bf16.mxu0 %v1740
  %2543 = vmatpush1.bf16.msra.mxu0 %v1739
  %2544 = vmatprep.subr.bf16.mxu0 %v1742
  %2545 = vmatpush1.bf16.msra.mxu0 %v1741
  %2546 = vmatprep.subr.bf16.mxu0 %v1744
  %2547 = vmatpush1.bf16.msra.mxu0 %v1743
  %2548 = vmatprep.subr.bf16.mxu0 %v1746
  %2549 = vmatpush1.bf16.msra.mxu0 %v1745
  %2550 = vmatprep.subr.bf16.mxu0 %v1748
  %2551 = vmatpush1.bf16.msra.mxu0 %v1747
  %2552 = vmatprep.subr.bf16.mxu0 %v1750
  %2553 = vmatpush1.bf16.msra.mxu0 %v1749
  %2554 = vmatprep.subr.bf16.mxu0 %v1752
  %2555 = vmatpush1.bf16.msra.mxu0 %v1751
  %2556 = vmatprep.subr.bf16.mxu0 %v1754
  %2557 = vmatpush1.bf16.msra.mxu0 %v1753
  %2558 = vmatprep.subr.bf16.mxu0 %v1756
  %2559 = vmatpush1.bf16.msra.mxu0 %v1755
  %2560 = vmatprep.subr.bf16.mxu0 %v1758
  %2561 = vmatpush1.bf16.msra.mxu0 %v1757
  %2562 = vmatprep.subr.bf16.mxu0 %v1760
  %2563 = vmatpush1.bf16.msra.mxu0 %v1759
  %2564 = vmatprep.mubr.bf16.mxu0 %v840
  %2565 = vmatmul.mubr.bf16.gmra.mrb[0].mxu0 %v839
  %v2566 = vpop.f32.mrb[0].mxu0
  %v2567 = vadd.f32 %v2374, %v2566
  %v2568 = vpop.f32.mrb[0].mxu0
  %v2569 = vadd.f32 %v2376, %v2568
  %v2570 = vpop.f32.mrb[0].mxu0
  %v2571 = vadd.f32 %v2378, %v2570
  %v2572 = vpop.f32.mrb[0].mxu0
  %v2573 = vadd.f32 %v2380, %v2572
  %2574 = vmatprep.mubr.bf16.mxu0 %v850
  %2575 = vmatmul.mubr.bf16.gmra.mrb[0].mxu0 %v849
  %v2576 = vpop.f32.mrb[0].mxu0
  %v2577 = vadd.f32 %v2384, %v2576
  %v2578 = vpop.f32.mrb[0].mxu0
  %v2579 = vadd.f32 %v2386, %v2578
  %v2580 = vpop.f32.mrb[0].mxu0
  %v2581 = vadd.f32 %v2388, %v2580
  %v2582 = vpop.f32.mrb[0].mxu0
  %v2583 = vadd.f32 %v2390, %v2582
  %2584 = vmatprep.mubr.bf16.mxu0 %v860
  %2585 = vmatmul.mubr.bf16.gmra.mrb[0].mxu0 %v859
  %v2586 = vpop.f32.mrb[0].mxu0
  %v2587 = vadd.f32 %v2394, %v2586
  %v2588 = vpop.f32.mrb[0].mxu0
  %v2589 = vadd.f32 %v2396, %v2588
  %v2590 = vpop.f32.mrb[0].mxu0
  %v2591 = vadd.f32 %v2398, %v2590
  %v2592 = vpop.f32.mrb[0].mxu0
  %v2593 = vadd.f32 %v2400, %v2592
  %2594 = vmatprep.mubr.bf16.mxu0 %v870
  %2595 = vmatmul.mubr.bf16.gmra.mrb[0].mxu0 %v869
  %v2596 = vpop.f32.mrb[0].mxu0
  %v2597 = vadd.f32 %v2404, %v2596
  %v2598 = vpop.f32.mrb[0].mxu0
  %v2599 = vadd.f32 %v2406, %v2598
  %v2600 = vpop.f32.mrb[0].mxu0
  %v2601 = vadd.f32 %v2408, %v2600
  %v2602 = vpop.f32.mrb[0].mxu0
  %v2603 = vadd.f32 %v2410, %v2602
  %2604 = vmatprep.mubr.bf16.mxu0 %v880
  %2605 = vmatmul.mubr.bf16.gmra.mrb[0].mxu0 %v879
  %v2606 = vpop.f32.mrb[0].mxu0
  %v2607 = vadd.f32 %v2414, %v2606
  %v2608 = vpop.f32.mrb[0].mxu0
  %v2609 = vadd.f32 %v2416, %v2608
  %v2610 = vpop.f32.mrb[0].mxu0
  %v2611 = vadd.f32 %v2418, %v2610
  %v2612 = vpop.f32.mrb[0].mxu0
  %v2613 = vadd.f32 %v2420, %v2612
  %2614 = vmatprep.mubr.bf16.mxu0 %v890
  %2615 = vmatmul.mubr.bf16.gmra.mrb[0].mxu0 %v889
  %v2616 = vpop.f32.mrb[0].mxu0
  %v2617 = vadd.f32 %v2424, %v2616
  %v2618 = vpop.f32.mrb[0].mxu0
  %v2619 = vadd.f32 %v2426, %v2618
  %v2620 = vpop.f32.mrb[0].mxu0
  %v2621 = vadd.f32 %v2428, %v2620
  %v2622 = vpop.f32.mrb[0].mxu0
  %v2623 = vadd.f32 %v2430, %v2622
  %2624 = vmatprep.mubr.bf16.mxu0 %v900
  %2625 = vmatmul.mubr.bf16.gmra.mrb[0].mxu0 %v899
  %v2626 = vpop.f32.mrb[0].mxu0
  %v2627 = vadd.f32 %v2434, %v2626
  %v2628 = vpop.f32.mrb[0].mxu0
  %v2629 = vadd.f32 %v2436, %v2628
  %v2630 = vpop.f32.mrb[0].mxu0
  %v2631 = vadd.f32 %v2438, %v2630
  %v2632 = vpop.f32.mrb[0].mxu0
  %v2633 = vadd.f32 %v2440, %v2632
  %2634 = vmatprep.mubr.bf16.mxu0 %v910
  %2635 = vmatmul.mubr.bf16.gmra.mrb[0].mxu0 %v909
  %v2636 = vpop.f32.mrb[0].mxu0
  %v2637 = vadd.f32 %v2444, %v2636
  %v2638 = vpop.f32.mrb[0].mxu0
  %v2639 = vadd.f32 %v2446, %v2638
  %v2640 = vpop.f32.mrb[0].mxu0
  %v2641 = vadd.f32 %v2448, %v2640
  %v2642 = vpop.f32.mrb[0].mxu0
  %v2643 = vadd.f32 %v2450, %v2642
  %2644 = vmatprep.mubr.bf16.mxu0 %v920
  %2645 = vmatmul.mubr.bf16.gmra.mrb[0].mxu0 %v919
  %v2646 = vpop.f32.mrb[0].mxu0
  %v2647 = vadd.f32 %v2454, %v2646
  %v2648 = vpop.f32.mrb[0].mxu0
  %v2649 = vadd.f32 %v2456, %v2648
  %v2650 = vpop.f32.mrb[0].mxu0
  %v2651 = vadd.f32 %v2458, %v2650
  %v2652 = vpop.f32.mrb[0].mxu0
  %v2653 = vadd.f32 %v2460, %v2652
  %2654 = vmatprep.mubr.bf16.mxu0 %v930
  %2655 = vmatmul.mubr.bf16.gmra.mrb[0].mxu0 %v929
  %v2656 = vpop.f32.mrb[0].mxu0
  %v2657 = vadd.f32 %v2464, %v2656
  %v2658 = vpop.f32.mrb[0].mxu0
  %v2659 = vadd.f32 %v2466, %v2658
  %v2660 = vpop.f32.mrb[0].mxu0
  %v2661 = vadd.f32 %v2468, %v2660
  %v2662 = vpop.f32.mrb[0].mxu0
  %v2663 = vadd.f32 %v2470, %v2662
  %2664 = vmatprep.mubr.bf16.mxu0 %v940
  %2665 = vmatmul.mubr.bf16.gmra.mrb[0].mxu0 %v939
  %v2666 = vpop.f32.mrb[0].mxu0
  %v2667 = vadd.f32 %v2474, %v2666
  %v2668 = vpop.f32.mrb[0].mxu0
  %v2669 = vadd.f32 %v2476, %v2668
  %v2670 = vpop.f32.mrb[0].mxu0
  %v2671 = vadd.f32 %v2478, %v2670
  %v2672 = vpop.f32.mrb[0].mxu0
  %v2673 = vadd.f32 %v2480, %v2672
  %2674 = vmatprep.mubr.bf16.mxu0 %v950
  %2675 = vmatmul.mubr.bf16.gmra.mrb[0].mxu0 %v949
  %v2676 = vpop.f32.mrb[0].mxu0
  %v2677 = vadd.f32 %v2484, %v2676
  %v2678 = vpop.f32.mrb[0].mxu0
  %v2679 = vadd.f32 %v2486, %v2678
  %v2680 = vpop.f32.mrb[0].mxu0
  %v2681 = vadd.f32 %v2488, %v2680
  %v2682 = vpop.f32.mrb[0].mxu0
  %v2683 = vadd.f32 %v2490, %v2682
  %2684 = vmatprep.mubr.bf16.mxu0 %v960
  %2685 = vmatmul.mubr.bf16.gmra.mrb[0].mxu0 %v959
  %v2686 = vpop.f32.mrb[0].mxu0
  %v2687 = vadd.f32 %v2494, %v2686
  %v2688 = vpop.f32.mrb[0].mxu0
  %v2689 = vadd.f32 %v2496, %v2688
  %v2690 = vpop.f32.mrb[0].mxu0
  %v2691 = vadd.f32 %v2498, %v2690
  %v2692 = vpop.f32.mrb[0].mxu0
  %v2693 = vadd.f32 %v2500, %v2692
  %2694 = vmatprep.mubr.bf16.mxu0 %v970
  %2695 = vmatmul.mubr.bf16.gmra.mrb[0].mxu0 %v969
  %v2696 = vpop.f32.mrb[0].mxu0
  %v2697 = vadd.f32 %v2504, %v2696
  %v2698 = vpop.f32.mrb[0].mxu0
  %v2699 = vadd.f32 %v2506, %v2698
  %v2700 = vpop.f32.mrb[0].mxu0
  %v2701 = vadd.f32 %v2508, %v2700
  %v2702 = vpop.f32.mrb[0].mxu0
  %v2703 = vadd.f32 %v2510, %v2702
  %2704 = vmatprep.mubr.bf16.mxu0 %v980
  %2705 = vmatmul.mubr.bf16.gmra.mrb[0].mxu0 %v979
  %v2706 = vpop.f32.mrb[0].mxu0
  %v2707 = vadd.f32 %v2514, %v2706
  %v2708 = vpop.f32.mrb[0].mxu0
  %v2709 = vadd.f32 %v2516, %v2708
  %v2710 = vpop.f32.mrb[0].mxu0
  %v2711 = vadd.f32 %v2518, %v2710
  %v2712 = vpop.f32.mrb[0].mxu0
  %v2713 = vadd.f32 %v2520, %v2712
  %2714 = vmatprep.mubr.bf16.mxu0 %v990
  %2715 = vmatmul.mubr.bf16.gmra.mrb[0].mxu0 %v989
  %v2716 = vpop.f32.mrb[0].mxu0
  %v2717 = vadd.f32 %v2524, %v2716
  %v2718 = vpop.f32.mrb[0].mxu0
  %v2719 = vadd.f32 %v2526, %v2718
  %v2720 = vpop.f32.mrb[0].mxu0
  %v2721 = vadd.f32 %v2528, %v2720
  %v2722 = vpop.f32.mrb[0].mxu0
  %v2723 = vadd.f32 %v2530, %v2722
  %2724 = vdwg.mxu0
  %2725 = vmatprep.subr.bf16.mxu0 %v1762
  %2726 = vmatpush1.bf16.msra.mxu0 %v1761
  %2727 = vmatprep.subr.bf16.mxu0 %v1764
  %2728 = vmatpush1.bf16.msra.mxu0 %v1763
  %2729 = vmatprep.subr.bf16.mxu0 %v1766
  %2730 = vmatpush1.bf16.msra.mxu0 %v1765
  %2731 = vmatprep.subr.bf16.mxu0 %v1768
  %2732 = vmatpush1.bf16.msra.mxu0 %v1767
  %2733 = vmatprep.subr.bf16.mxu0 %v1770
  %2734 = vmatpush1.bf16.msra.mxu0 %v1769
  %2735 = vmatprep.subr.bf16.mxu0 %v1772
  %2736 = vmatpush1.bf16.msra.mxu0 %v1771
  %2737 = vmatprep.subr.bf16.mxu0 %v1774
  %2738 = vmatpush1.bf16.msra.mxu0 %v1773
  %2739 = vmatprep.subr.bf16.mxu0 %v1776
  %2740 = vmatpush1.bf16.msra.mxu0 %v1775
  %2741 = vmatprep.subr.bf16.mxu0 %v1778
  %2742 = vmatpush1.bf16.msra.mxu0 %v1777
  %2743 = vmatprep.subr.bf16.mxu0 %v1780
  %2744 = vmatpush1.bf16.msra.mxu0 %v1779
  %2745 = vmatprep.subr.bf16.mxu0 %v1782
  %2746 = vmatpush1.bf16.msra.mxu0 %v1781
  %2747 = vmatprep.subr.bf16.mxu0 %v1784
  %2748 = vmatpush1.bf16.msra.mxu0 %v1783
  %2749 = vmatprep.subr.bf16.mxu0 %v1786
  %2750 = vmatpush1.bf16.msra.mxu0 %v1785
  %2751 = vmatprep.subr.bf16.mxu0 %v1788
  %2752 = vmatpush1.bf16.msra.mxu0 %v1787
  %2753 = vmatprep.subr.bf16.mxu0 %v1790
  %2754 = vmatpush1.bf16.msra.mxu0 %v1789
  %2755 = vmatprep.subr.bf16.mxu0 %v1792
  %2756 = vmatpush1.bf16.msra.mxu0 %v1791
  %2757 = vmatprep.mubr.bf16.mxu0 %v842
  %2758 = vmatmul.mubr.bf16.gmra.mrb[0].mxu0 %v841
  %v2759 = vpop.f32.mrb[0].mxu0
  %v2760 = vadd.f32 %v2567, %v2759
  %v2761 = vpop.f32.mrb[0].mxu0
  %v2762 = vadd.f32 %v2569, %v2761
  %v2763 = vpop.f32.mrb[0].mxu0
  %v2764 = vadd.f32 %v2571, %v2763
  %v2765 = vpop.f32.mrb[0].mxu0
  %v2766 = vadd.f32 %v2573, %v2765
  %2767 = vmatprep.mubr.bf16.mxu0 %v852
  %2768 = vmatmul.mubr.bf16.gmra.mrb[0].mxu0 %v851
  %v2769 = vpop.f32.mrb[0].mxu0
  %v2770 = vadd.f32 %v2577, %v2769
  %v2771 = vpop.f32.mrb[0].mxu0
  %v2772 = vadd.f32 %v2579, %v2771
  %v2773 = vpop.f32.mrb[0].mxu0
  %v2774 = vadd.f32 %v2581, %v2773
  %v2775 = vpop.f32.mrb[0].mxu0
  %v2776 = vadd.f32 %v2583, %v2775
  %2777 = vmatprep.mubr.bf16.mxu0 %v862
  %2778 = vmatmul.mubr.bf16.gmra.mrb[0].mxu0 %v861
  %v2779 = vpop.f32.mrb[0].mxu0
  %v2780 = vadd.f32 %v2587, %v2779
  %v2781 = vpop.f32.mrb[0].mxu0
  %v2782 = vadd.f32 %v2589, %v2781
  %v2783 = vpop.f32.mrb[0].mxu0
  %v2784 = vadd.f32 %v2591, %v2783
  %v2785 = vpop.f32.mrb[0].mxu0
  %v2786 = vadd.f32 %v2593, %v2785
  %2787 = vmatprep.mubr.bf16.mxu0 %v872
  %2788 = vmatmul.mubr.bf16.gmra.mrb[0].mxu0 %v871
  %v2789 = vpop.f32.mrb[0].mxu0
  %v2790 = vadd.f32 %v2597, %v2789
  %v2791 = vpop.f32.mrb[0].mxu0
  %v2792 = vadd.f32 %v2599, %v2791
  %v2793 = vpop.f32.mrb[0].mxu0
  %v2794 = vadd.f32 %v2601, %v2793
  %v2795 = vpop.f32.mrb[0].mxu0
  %v2796 = vadd.f32 %v2603, %v2795
  %2797 = vmatprep.mubr.bf16.mxu0 %v882
  %2798 = vmatmul.mubr.bf16.gmra.mrb[0].mxu0 %v881
  %v2799 = vpop.f32.mrb[0].mxu0
  %v2800 = vadd.f32 %v2607, %v2799
  %v2801 = vpop.f32.mrb[0].mxu0
  %v2802 = vadd.f32 %v2609, %v2801
  %v2803 = vpop.f32.mrb[0].mxu0
  %v2804 = vadd.f32 %v2611, %v2803
  %v2805 = vpop.f32.mrb[0].mxu0
  %v2806 = vadd.f32 %v2613, %v2805
  %2807 = vmatprep.mubr.bf16.mxu0 %v892
  %2808 = vmatmul.mubr.bf16.gmra.mrb[0].mxu0 %v891
  %v2809 = vpop.f32.mrb[0].mxu0
  %v2810 = vadd.f32 %v2617, %v2809
  %v2811 = vpop.f32.mrb[0].mxu0
  %v2812 = vadd.f32 %v2619, %v2811
  %v2813 = vpop.f32.mrb[0].mxu0
  %v2814 = vadd.f32 %v2621, %v2813
  %v2815 = vpop.f32.mrb[0].mxu0
  %v2816 = vadd.f32 %v2623, %v2815
  %2817 = vmatprep.mubr.bf16.mxu0 %v902
  %2818 = vmatmul.mubr.bf16.gmra.mrb[0].mxu0 %v901
  %v2819 = vpop.f32.mrb[0].mxu0
  %v2820 = vadd.f32 %v2627, %v2819
  %v2821 = vpop.f32.mrb[0].mxu0
  %v2822 = vadd.f32 %v2629, %v2821
  %v2823 = vpop.f32.mrb[0].mxu0
  %v2824 = vadd.f32 %v2631, %v2823
  %v2825 = vpop.f32.mrb[0].mxu0
  %v2826 = vadd.f32 %v2633, %v2825
  %2827 = vmatprep.mubr.bf16.mxu0 %v912
  %2828 = vmatmul.mubr.bf16.gmra.mrb[0].mxu0 %v911
  %v2829 = vpop.f32.mrb[0].mxu0
  %v2830 = vadd.f32 %v2637, %v2829
  %v2831 = vpop.f32.mrb[0].mxu0
  %v2832 = vadd.f32 %v2639, %v2831
  %v2833 = vpop.f32.mrb[0].mxu0
  %v2834 = vadd.f32 %v2641, %v2833
  %v2835 = vpop.f32.mrb[0].mxu0
  %v2836 = vadd.f32 %v2643, %v2835
  %2837 = vmatprep.mubr.bf16.mxu0 %v922
  %2838 = vmatmul.mubr.bf16.gmra.mrb[0].mxu0 %v921
  %v2839 = vpop.f32.mrb[0].mxu0
  %v2840 = vadd.f32 %v2647, %v2839
  %v2841 = vpop.f32.mrb[0].mxu0
  %v2842 = vadd.f32 %v2649, %v2841
  %v2843 = vpop.f32.mrb[0].mxu0
  %v2844 = vadd.f32 %v2651, %v2843
  %v2845 = vpop.f32.mrb[0].mxu0
  %v2846 = vadd.f32 %v2653, %v2845
  %2847 = vmatprep.mubr.bf16.mxu0 %v932
  %2848 = vmatmul.mubr.bf16.gmra.mrb[0].mxu0 %v931
  %v2849 = vpop.f32.mrb[0].mxu0
  %v2850 = vadd.f32 %v2657, %v2849
  %v2851 = vpop.f32.mrb[0].mxu0
  %v2852 = vadd.f32 %v2659, %v2851
  %v2853 = vpop.f32.mrb[0].mxu0
  %v2854 = vadd.f32 %v2661, %v2853
  %v2855 = vpop.f32.mrb[0].mxu0
  %v2856 = vadd.f32 %v2663, %v2855
  %2857 = vmatprep.mubr.bf16.mxu0 %v942
  %2858 = vmatmul.mubr.bf16.gmra.mrb[0].mxu0 %v941
  %v2859 = vpop.f32.mrb[0].mxu0
  %v2860 = vadd.f32 %v2667, %v2859
  %v2861 = vpop.f32.mrb[0].mxu0
  %v2862 = vadd.f32 %v2669, %v2861
  %v2863 = vpop.f32.mrb[0].mxu0
  %v2864 = vadd.f32 %v2671, %v2863
  %v2865 = vpop.f32.mrb[0].mxu0
  %v2866 = vadd.f32 %v2673, %v2865
  %2867 = vmatprep.mubr.bf16.mxu0 %v952
  %2868 = vmatmul.mubr.bf16.gmra.mrb[0].mxu0 %v951
  %v2869 = vpop.f32.mrb[0].mxu0
  %v2870 = vadd.f32 %v2677, %v2869
  %v2871 = vpop.f32.mrb[0].mxu0
  %v2872 = vadd.f32 %v2679, %v2871
  %v2873 = vpop.f32.mrb[0].mxu0
  %v2874 = vadd.f32 %v2681, %v2873
  %v2875 = vpop.f32.mrb[0].mxu0
  %v2876 = vadd.f32 %v2683, %v2875
  %2877 = vmatprep.mubr.bf16.mxu0 %v962
  %2878 = vmatmul.mubr.bf16.gmra.mrb[0].mxu0 %v961
  %v2879 = vpop.f32.mrb[0].mxu0
  %v2880 = vadd.f32 %v2687, %v2879
  %v2881 = vpop.f32.mrb[0].mxu0
  %v2882 = vadd.f32 %v2689, %v2881
  %v2883 = vpop.f32.mrb[0].mxu0
  %v2884 = vadd.f32 %v2691, %v2883
  %v2885 = vpop.f32.mrb[0].mxu0
  %v2886 = vadd.f32 %v2693, %v2885
  %2887 = vmatprep.mubr.bf16.mxu0 %v972
  %2888 = vmatmul.mubr.bf16.gmra.mrb[0].mxu0 %v971
  %v2889 = vpop.f32.mrb[0].mxu0
  %v2890 = vadd.f32 %v2697, %v2889
  %v2891 = vpop.f32.mrb[0].mxu0
  %v2892 = vadd.f32 %v2699, %v2891
  %v2893 = vpop.f32.mrb[0].mxu0
  %v2894 = vadd.f32 %v2701, %v2893
  %v2895 = vpop.f32.mrb[0].mxu0
  %v2896 = vadd.f32 %v2703, %v2895
  %2897 = vmatprep.mubr.bf16.mxu0 %v982
  %2898 = vmatmul.mubr.bf16.gmra.mrb[0].mxu0 %v981
  %v2899 = vpop.f32.mrb[0].mxu0
  %v2900 = vadd.f32 %v2707, %v2899
  %v2901 = vpop.f32.mrb[0].mxu0
  %v2902 = vadd.f32 %v2709, %v2901
  %v2903 = vpop.f32.mrb[0].mxu0
  %v2904 = vadd.f32 %v2711, %v2903
  %v2905 = vpop.f32.mrb[0].mxu0
  %v2906 = vadd.f32 %v2713, %v2905
  %2907 = vmatprep.mubr.bf16.mxu0 %v992
  %2908 = vmatmul.mubr.bf16.gmra.mrb[0].mxu0 %v991
  %v2909 = vpop.f32.mrb[0].mxu0
  %v2910 = vadd.f32 %v2717, %v2909
  %v2911 = vpop.f32.mrb[0].mxu0
  %v2912 = vadd.f32 %v2719, %v2911
  %v2913 = vpop.f32.mrb[0].mxu0
  %v2914 = vadd.f32 %v2721, %v2913
  %v2915 = vpop.f32.mrb[0].mxu0
  %v2916 = vadd.f32 %v2723, %v2915
  %2917 = vdwg.mxu0
  %v2918 = vpack.c.bf16 %v2764, %v2760
  %v2919 = vpack.c.bf16 %v2766, %v2762
  %v2920 = vpack.c.bf16 %v2774, %v2770
  %v2921 = vpack.c.bf16 %v2776, %v2772
  %v2922 = vpack.c.bf16 %v2784, %v2780
  %v2923 = vpack.c.bf16 %v2786, %v2782
  %v2924 = vpack.c.bf16 %v2794, %v2790
  %v2925 = vpack.c.bf16 %v2796, %v2792
  %v2926 = vpack.c.bf16 %v2804, %v2800
  %v2927 = vpack.c.bf16 %v2806, %v2802
  %v2928 = vpack.c.bf16 %v2814, %v2810
  %v2929 = vpack.c.bf16 %v2816, %v2812
  %v2930 = vpack.c.bf16 %v2824, %v2820
  %v2931 = vpack.c.bf16 %v2826, %v2822
  %v2932 = vpack.c.bf16 %v2834, %v2830
  %v2933 = vpack.c.bf16 %v2836, %v2832
  %v2934 = vpack.c.bf16 %v2844, %v2840
  %v2935 = vpack.c.bf16 %v2846, %v2842
  %v2936 = vpack.c.bf16 %v2854, %v2850
  %v2937 = vpack.c.bf16 %v2856, %v2852
  %v2938 = vpack.c.bf16 %v2864, %v2860
  %v2939 = vpack.c.bf16 %v2866, %v2862
  %v2940 = vpack.c.bf16 %v2874, %v2870
  %v2941 = vpack.c.bf16 %v2876, %v2872
  %v2942 = vpack.c.bf16 %v2884, %v2880
  %v2943 = vpack.c.bf16 %v2886, %v2882
  %v2944 = vpack.c.bf16 %v2894, %v2890
  %v2945 = vpack.c.bf16 %v2896, %v2892
  %v2946 = vpack.c.bf16 %v2904, %v2900
  %v2947 = vpack.c.bf16 %v2906, %v2902
  %v2948 = vpack.c.bf16 %v2914, %v2910
  %v2949 = vpack.c.bf16 %v2916, %v2912
  %v2950 = vld [vmem:[%s3] sm:$0xf]
  %v2951 = vld [vmem:[%s3 + $0x4] sm:$0xf]
  %v2952 = vld [vmem:[%s3 + $0x8] sm:$0xf]
  %v2953 = vld [vmem:[%s3 + $0xc] sm:$0xf]
  %v2954 = vld [vmem:[%s3 + $0x10] sm:$0xf]
  %v2955 = vld [vmem:[%s3 + $0x14] sm:$0xf]
  %v2956 = vld [vmem:[%s3 + $0x18] sm:$0xf]
  %v2957 = vld [vmem:[%s3 + $0x1c] sm:$0xf]
  %v2958 = vld [vmem:[%s3 + $0x20] sm:$0xf]
  %v2959 = vld [vmem:[%s3 + $0x24] sm:$0xf]
  %v2960 = vld [vmem:[%s3 + $0x28] sm:$0xf]
  %v2961 = vld [vmem:[%s3 + $0x2c] sm:$0xf]
  %v2962 = vld [vmem:[%s3 + $0x30] sm:$0xf]
  %v2963 = vld [vmem:[%s3 + $0x34] sm:$0xf]
  %v2964 = vld [vmem:[%s3 + $0x38] sm:$0xf]
  %v2965 = vld [vmem:[%s3 + $0x3c] sm:$0xf]
  %v2966 = vld [vmem:[%s3 + $0x40] sm:$0xf]
  %v2967 = vld [vmem:[%s3 + $0x44] sm:$0xf]
  %v2968 = vld [vmem:[%s3 + $0x48] sm:$0xf]
  %v2969 = vld [vmem:[%s3 + $0x4c] sm:$0xf]
  %v2970 = vld [vmem:[%s3 + $0x50] sm:$0xf]
  %v2971 = vld [vmem:[%s3 + $0x54] sm:$0xf]
  %v2972 = vld [vmem:[%s3 + $0x58] sm:$0xf]
  %v2973 = vld [vmem:[%s3 + $0x5c] sm:$0xf]
  %v2974 = vld [vmem:[%s3 + $0x60] sm:$0xf]
  %v2975 = vld [vmem:[%s3 + $0x64] sm:$0xf]
  %v2976 = vld [vmem:[%s3 + $0x68] sm:$0xf]
  %v2977 = vld [vmem:[%s3 + $0x6c] sm:$0xf]
  %v2978 = vld [vmem:[%s3 + $0x70] sm:$0xf]
  %v2979 = vld [vmem:[%s3 + $0x74] sm:$0xf]
  %v2980 = vld [vmem:[%s3 + $0x78] sm:$0xf]
  %v2981 = vld [vmem:[%s3 + $0x7c] sm:$0xf]
  %v2982 = vld [vmem:[%s1 + $0x8] sm:$0xff]
  %v2983 = vld [vmem:[%s1 + $0x30] sm:$0xff]
  %v2984 = vld [vmem:[%s1 + $0x58] sm:$0xff]
  %v2985 = vld [vmem:[%s1 + $0x80] sm:$0xff]
  %v2986 = vld [vmem:[%s1 + $0xa8] sm:$0xff]
  %v2987 = vld [vmem:[%s1 + $0xd0] sm:$0xff]
  %v2988 = vld [vmem:[%s1 + $0xf8] sm:$0xff]
  %v2989 = vld [vmem:[%s1 + $0x120] sm:$0xff]
  %v2990 = vld [vmem:[%s1 + $0x148] sm:$0xff]
  %v2991 = vld [vmem:[%s1 + $0x170] sm:$0xff]
  %v2992 = vld [vmem:[%s1 + $0x198] sm:$0xff]
  %v2993 = vld [vmem:[%s1 + $0x1c0] sm:$0xff]
  %v2994 = vld [vmem:[%s1 + $0x1e8] sm:$0xff]
  %v2995 = vld [vmem:[%s1 + $0x210] sm:$0xff]
  %v2996 = vld [vmem:[%s1 + $0x238] sm:$0xff]
  %v2997 = vld [vmem:[%s1 + $0x260] sm:$0xff]
  %v2998 = vld [vmem:[%s1 + $0x288] sm:$0xff]
  %v2999 = vld [vmem:[%s1 + $0x2b0] sm:$0xff]
  %v3000 = vld [vmem:[%s1 + $0x2d8] sm:$0xff]
  %v3001 = vld [vmem:[%s1 + $0x300] sm:$0xff]
  %v3002 = vld [vmem:[%s1 + $0x328] sm:$0xff]
  %v3003 = vld [vmem:[%s1 + $0x350] sm:$0xff]
  %v3004 = vld [vmem:[%s1 + $0x378] sm:$0xff]
  %v3005 = vld [vmem:[%s1 + $0x3a0] sm:$0xff]
  %v3006 = vld [vmem:[%s1 + $0x3c8] sm:$0xff]
  %v3007 = vld [vmem:[%s1 + $0x3f0] sm:$0xff]
  %v3008 = vld [vmem:[%s1 + $0x418] sm:$0xff]
  %v3009 = vld [vmem:[%s1 + $0x440] sm:$0xff]
  %v3010 = vld [vmem:[%s1 + $0x468] sm:$0xff]
  %v3011 = vld [vmem:[%s1 + $0x490] sm:$0xff]
  %v3012 = vld [vmem:[%s1 + $0x4b8] sm:$0xff]
  %v3013 = vld [vmem:[%s1 + $0x4e0] sm:$0xff]
  %v3014 = vld [vmem:[%s1 + $0x508] sm:$0xff]
  %v3015 = vld [vmem:[%s1 + $0x530] sm:$0xff]
  %v3016 = vld [vmem:[%s1 + $0x558] sm:$0xff]
  %v3017 = vld [vmem:[%s1 + $0x580] sm:$0xff]
  %v3018 = vld [vmem:[%s1 + $0x5a8] sm:$0xff]
  %v3019 = vld [vmem:[%s1 + $0x5d0] sm:$0xff]
  %v3020 = vld [vmem:[%s1 + $0x5f8] sm:$0xff]
  %v3021 = vld [vmem:[%s1 + $0x620] sm:$0xff]
  %v3022 = vld [vmem:[%s1 + $0x648] sm:$0xff]
  %v3023 = vld [vmem:[%s1 + $0x670] sm:$0xff]
  %v3024 = vld [vmem:[%s1 + $0x698] sm:$0xff]
  %v3025 = vld [vmem:[%s1 + $0x6c0] sm:$0xff]
  %v3026 = vld [vmem:[%s1 + $0x6e8] sm:$0xff]
  %v3027 = vld [vmem:[%s1 + $0x710] sm:$0xff]
  %v3028 = vld [vmem:[%s1 + $0x738] sm:$0xff]
  %v3029 = vld [vmem:[%s1 + $0x760] sm:$0xff]
  %v3030 = vld [vmem:[%s1 + $0x788] sm:$0xff]
  %v3031 = vld [vmem:[%s1 + $0x7b0] sm:$0xff]
  %v3032 = vld [vmem:[%s1 + $0x7d8] sm:$0xff]
  %v3033 = vld [vmem:[%s1 + $0x800] sm:$0xff]
  %v3034 = vld [vmem:[%s1 + $0x828] sm:$0xff]
  %v3035 = vld [vmem:[%s1 + $0x850] sm:$0xff]
  %v3036 = vld [vmem:[%s1 + $0x878] sm:$0xff]
  %v3037 = vld [vmem:[%s1 + $0x8a0] sm:$0xff]
  %v3038 = vld [vmem:[%s1 + $0x8c8] sm:$0xff]
  %v3039 = vld [vmem:[%s1 + $0x8f0] sm:$0xff]
  %v3040 = vld [vmem:[%s1 + $0x918] sm:$0xff]
  %v3041 = vld [vmem:[%s1 + $0x940] sm:$0xff]
  %v3042 = vld [vmem:[%s1 + $0x968] sm:$0xff]
  %v3043 = vld [vmem:[%s1 + $0x990] sm:$0xff]
  %v3044 = vld [vmem:[%s1 + $0x9b8] sm:$0xff]
  %v3045 = vld [vmem:[%s1 + $0x9e0] sm:$0xff]
  %v3046 = vld [vmem:[%s1 + $0xa08] sm:$0xff]
  %v3047 = vld [vmem:[%s1 + $0xa30] sm:$0xff]
  %v3048 = vld [vmem:[%s1 + $0xa58] sm:$0xff]
  %v3049 = vld [vmem:[%s1 + $0xa80] sm:$0xff]
  %v3050 = vld [vmem:[%s1 + $0xaa8] sm:$0xff]
  %v3051 = vld [vmem:[%s1 + $0xad0] sm:$0xff]
  %v3052 = vld [vmem:[%s1 + $0xaf8] sm:$0xff]
  %v3053 = vld [vmem:[%s1 + $0xb20] sm:$0xff]
  %v3054 = vld [vmem:[%s1 + $0xb48] sm:$0xff]
  %v3055 = vld [vmem:[%s1 + $0xb70] sm:$0xff]
  %v3056 = vld [vmem:[%s1 + $0xb98] sm:$0xff]
  %v3057 = vld [vmem:[%s1 + $0xbc0] sm:$0xff]
  %v3058 = vld [vmem:[%s1 + $0xbe8] sm:$0xff]
  %v3059 = vld [vmem:[%s1 + $0xc10] sm:$0xff]
  %v3060 = vld [vmem:[%s1 + $0xc38] sm:$0xff]
  %v3061 = vld [vmem:[%s1 + $0xc60] sm:$0xff]
  %v3062 = vld [vmem:[%s1 + $0xc88] sm:$0xff]
  %v3063 = vld [vmem:[%s1 + $0xcb0] sm:$0xff]
  %v3064 = vld [vmem:[%s1 + $0xcd8] sm:$0xff]
  %v3065 = vld [vmem:[%s1 + $0xd00] sm:$0xff]
  %v3066 = vld [vmem:[%s1 + $0xd28] sm:$0xff]
  %v3067 = vld [vmem:[%s1 + $0xd50] sm:$0xff]
  %v3068 = vld [vmem:[%s1 + $0xd78] sm:$0xff]
  %v3069 = vld [vmem:[%s1 + $0xda0] sm:$0xff]
  %v3070 = vld [vmem:[%s1 + $0xdc8] sm:$0xff]
  %v3071 = vld [vmem:[%s1 + $0xdf0] sm:$0xff]
  %v3072 = vld [vmem:[%s1 + $0xe18] sm:$0xff]
  %v3073 = vld [vmem:[%s1 + $0xe40] sm:$0xff]
  %v3074 = vld [vmem:[%s1 + $0xe68] sm:$0xff]
  %v3075 = vld [vmem:[%s1 + $0xe90] sm:$0xff]
  %v3076 = vld [vmem:[%s1 + $0xeb8] sm:$0xff]
  %v3077 = vld [vmem:[%s1 + $0xee0] sm:$0xff]
  %v3078 = vld [vmem:[%s1 + $0xf08] sm:$0xff]
  %v3079 = vld [vmem:[%s1 + $0xf30] sm:$0xff]
  %v3080 = vld [vmem:[%s1 + $0xf58] sm:$0xff]
  %v3081 = vld [vmem:[%s1 + $0xf80] sm:$0xff]
  %v3082 = vld [vmem:[%s1 + $0xfa8] sm:$0xff]
  %v3083 = vld [vmem:[%s1 + $0xfd0] sm:$0xff]
  %v3084 = vld [vmem:[%s1 + $0xff8] sm:$0xff]
  %v3085 = vld [vmem:[%s1 + $0x1020] sm:$0xff]
  %v3086 = vld [vmem:[%s1 + $0x1048] sm:$0xff]
  %v3087 = vld [vmem:[%s1 + $0x1070] sm:$0xff]
  %v3088 = vld [vmem:[%s1 + $0x1098] sm:$0xff]
  %v3089 = vld [vmem:[%s1 + $0x10c0] sm:$0xff]
  %v3090 = vld [vmem:[%s1 + $0x10e8] sm:$0xff]
  %v3091 = vld [vmem:[%s1 + $0x1110] sm:$0xff]
  %v3092 = vld [vmem:[%s1 + $0x1138] sm:$0xff]
  %v3093 = vld [vmem:[%s1 + $0x1160] sm:$0xff]
  %v3094 = vld [vmem:[%s1 + $0x1188] sm:$0xff]
  %v3095 = vld [vmem:[%s1 + $0x11b0] sm:$0xff]
  %v3096 = vld [vmem:[%s1 + $0x11d8] sm:$0xff]
  %v3097 = vld [vmem:[%s1 + $0x1200] sm:$0xff]
  %v3098 = vld [vmem:[%s1 + $0x1228] sm:$0xff]
  %v3099 = vld [vmem:[%s1 + $0x1250] sm:$0xff]
  %v3100 = vld [vmem:[%s1 + $0x1278] sm:$0xff]
  %v3101 = vld [vmem:[%s1 + $0x12a0] sm:$0xff]
  %v3102 = vld [vmem:[%s1 + $0x12c8] sm:$0xff]
  %v3103 = vld [vmem:[%s1 + $0x12f0] sm:$0xff]
  %v3104 = vld [vmem:[%s1 + $0x1318] sm:$0xff]
  %v3105 = vld [vmem:[%s1 + $0x1340] sm:$0xff]
  %v3106 = vld [vmem:[%s1 + $0x1368] sm:$0xff]
  %v3107 = vld [vmem:[%s1 + $0x1390] sm:$0xff]
  %v3108 = vld [vmem:[%s1 + $0x13b8] sm:$0xff]
  %v3109 = vld [vmem:[%s1 + $0x13e0] sm:$0xff]
  %v3110 = vld [vmem:[%s1 + $0x1408] sm:$0xff]
  %v3111 = vld [vmem:[%s1 + $0x1430] sm:$0xff]
  %v3112 = vld [vmem:[%s1 + $0x1458] sm:$0xff]
  %v3113 = vld [vmem:[%s1 + $0x1480] sm:$0xff]
  %v3114 = vld [vmem:[%s1 + $0x14a8] sm:$0xff]
  %v3115 = vld [vmem:[%s1 + $0x14d0] sm:$0xff]
  %v3116 = vld [vmem:[%s1 + $0x14f8] sm:$0xff]
  %v3117 = vld [vmem:[%s1 + $0x1520] sm:$0xff]
  %v3118 = vld [vmem:[%s1 + $0x1548] sm:$0xff]
  %v3119 = vld [vmem:[%s1 + $0x1570] sm:$0xff]
  %v3120 = vld [vmem:[%s1 + $0x1598] sm:$0xff]
  %v3121 = vld [vmem:[%s1 + $0x15c0] sm:$0xff]
  %v3122 = vld [vmem:[%s1 + $0x15e8] sm:$0xff]
  %v3123 = vld [vmem:[%s1 + $0x1610] sm:$0xff]
  %v3124 = vld [vmem:[%s1 + $0x1638] sm:$0xff]
  %v3125 = vld [vmem:[%s1 + $0x1660] sm:$0xff]
  %v3126 = vld [vmem:[%s1 + $0x1688] sm:$0xff]
  %v3127 = vld [vmem:[%s1 + $0x16b0] sm:$0xff]
  %v3128 = vld [vmem:[%s1 + $0x16d8] sm:$0xff]
  %v3129 = vld [vmem:[%s1 + $0x1700] sm:$0xff]
  %v3130 = vld [vmem:[%s1 + $0x1728] sm:$0xff]
  %v3131 = vld [vmem:[%s1 + $0x1750] sm:$0xff]
  %v3132 = vld [vmem:[%s1 + $0x1778] sm:$0xff]
  %v3133 = vld [vmem:[%s1 + $0x17a0] sm:$0xff]
  %v3134 = vld [vmem:[%s1 + $0x17c8] sm:$0xff]
  %v3135 = vld [vmem:[%s1 + $0x17f0] sm:$0xff]
  %v3136 = vld [vmem:[%s1 + $0x1818] sm:$0xff]
  %v3137 = vld [vmem:[%s1 + $0x1840] sm:$0xff]
  %v3138 = vld [vmem:[%s1 + $0x1868] sm:$0xff]
  %v3139 = vld [vmem:[%s1 + $0x1890] sm:$0xff]
  %v3140 = vld [vmem:[%s1 + $0x18b8] sm:$0xff]
  %v3141 = vld [vmem:[%s1 + $0x18e0] sm:$0xff]
  %v3142 = vld [vmem:[%s2 + $0x2] sm:$0x3]
  %v3144 = vlaneseq
  %v3145 = vshrl.u32 %v3144, 7
  %v3146 = vsub.s32 0, %v3145
  %v3147 = vrot.slane %v3142, %v3146
  %v3148 = vlaneseq
  %v3149 = vshrl.u32 %v3148, 7
  %v3150 = vsub.s32 1, %v3149
  %v3151 = vrot.slane %v3142, %v3150
  %v3314 = vunpack.c.l.b16 %v2982
  %v3315 = vunpack.c.h.b16 %v2982
  %v3316 = vunpack.c.l.b16 %v2983
  %v3317 = vunpack.c.h.b16 %v2983
  %v3318 = vunpack.c.l.b16 %v2984
  %v3319 = vunpack.c.h.b16 %v2984
  %v3320 = vunpack.c.l.b16 %v2985
  %v3321 = vunpack.c.h.b16 %v2985
  %v3322 = vunpack.c.l.b16 %v2986
  %v3323 = vunpack.c.h.b16 %v2986
  %v3324 = vunpack.c.l.b16 %v2987
  %v3325 = vunpack.c.h.b16 %v2987
  %v3326 = vunpack.c.l.b16 %v2988
  %v3327 = vunpack.c.h.b16 %v2988
  %v3328 = vunpack.c.l.b16 %v2989
  %v3329 = vunpack.c.h.b16 %v2989
  %v3330 = vunpack.c.l.b16 %v2990
  %v3331 = vunpack.c.h.b16 %v2990
  %v3332 = vunpack.c.l.b16 %v2991
  %v3333 = vunpack.c.h.b16 %v2991
  %v3334 = vunpack.c.l.b16 %v2992
  %v3335 = vunpack.c.h.b16 %v2992
  %v3336 = vunpack.c.l.b16 %v2993
  %v3337 = vunpack.c.h.b16 %v2993
  %v3338 = vunpack.c.l.b16 %v2994
  %v3339 = vunpack.c.h.b16 %v2994
  %v3340 = vunpack.c.l.b16 %v2995
  %v3341 = vunpack.c.h.b16 %v2995
  %v3342 = vunpack.c.l.b16 %v2996
  %v3343 = vunpack.c.h.b16 %v2996
  %v3344 = vunpack.c.l.b16 %v2997
  %v3345 = vunpack.c.h.b16 %v2997
  %v3346 = vunpack.c.l.b16 %v2998
  %v3347 = vunpack.c.h.b16 %v2998
  %v3348 = vunpack.c.l.b16 %v2999
  %v3349 = vunpack.c.h.b16 %v2999
  %v3350 = vunpack.c.l.b16 %v3000
  %v3351 = vunpack.c.h.b16 %v3000
  %v3352 = vunpack.c.l.b16 %v3001
  %v3353 = vunpack.c.h.b16 %v3001
  %v3354 = vunpack.c.l.b16 %v3002
  %v3355 = vunpack.c.h.b16 %v3002
  %v3356 = vunpack.c.l.b16 %v3003
  %v3357 = vunpack.c.h.b16 %v3003
  %v3358 = vunpack.c.l.b16 %v3004
  %v3359 = vunpack.c.h.b16 %v3004
  %v3360 = vunpack.c.l.b16 %v3005
  %v3361 = vunpack.c.h.b16 %v3005
  %v3362 = vunpack.c.l.b16 %v3006
  %v3363 = vunpack.c.h.b16 %v3006
  %v3364 = vunpack.c.l.b16 %v3007
  %v3365 = vunpack.c.h.b16 %v3007
  %v3366 = vunpack.c.l.b16 %v3008
  %v3367 = vunpack.c.h.b16 %v3008
  %v3368 = vunpack.c.l.b16 %v3009
  %v3369 = vunpack.c.h.b16 %v3009
  %v3370 = vunpack.c.l.b16 %v3010
  %v3371 = vunpack.c.h.b16 %v3010
  %v3372 = vunpack.c.l.b16 %v3011
  %v3373 = vunpack.c.h.b16 %v3011
  %v3374 = vunpack.c.l.b16 %v3012
  %v3375 = vunpack.c.h.b16 %v3012
  %v3376 = vunpack.c.l.b16 %v3013
  %v3377 = vunpack.c.h.b16 %v3013
  %v3378 = vunpack.c.l.b16 %v3014
  %v3379 = vunpack.c.h.b16 %v3014
  %v3380 = vunpack.c.l.b16 %v3015
  %v3381 = vunpack.c.h.b16 %v3015
  %v3382 = vunpack.c.l.b16 %v3016
  %v3383 = vunpack.c.h.b16 %v3016
  %v3384 = vunpack.c.l.b16 %v3017
  %v3385 = vunpack.c.h.b16 %v3017
  %v3386 = vunpack.c.l.b16 %v3018
  %v3387 = vunpack.c.h.b16 %v3018
  %v3388 = vunpack.c.l.b16 %v3019
  %v3389 = vunpack.c.h.b16 %v3019
  %v3390 = vunpack.c.l.b16 %v3020
  %v3391 = vunpack.c.h.b16 %v3020
  %v3392 = vunpack.c.l.b16 %v3021
  %v3393 = vunpack.c.h.b16 %v3021
  %v3394 = vunpack.c.l.b16 %v3022
  %v3395 = vunpack.c.h.b16 %v3022
  %v3396 = vunpack.c.l.b16 %v3023
  %v3397 = vunpack.c.h.b16 %v3023
  %v3398 = vunpack.c.l.b16 %v3024
  %v3399 = vunpack.c.h.b16 %v3024
  %v3400 = vunpack.c.l.b16 %v3025
  %v3401 = vunpack.c.h.b16 %v3025
  %v3402 = vunpack.c.l.b16 %v3026
  %v3403 = vunpack.c.h.b16 %v3026
  %v3404 = vunpack.c.l.b16 %v3027
  %v3405 = vunpack.c.h.b16 %v3027
  %v3406 = vunpack.c.l.b16 %v3028
  %v3407 = vunpack.c.h.b16 %v3028
  %v3408 = vunpack.c.l.b16 %v3029
  %v3409 = vunpack.c.h.b16 %v3029
  %v3410 = vunpack.c.l.b16 %v3030
  %v3411 = vunpack.c.h.b16 %v3030
  %v3412 = vunpack.c.l.b16 %v3031
  %v3413 = vunpack.c.h.b16 %v3031
  %v3414 = vunpack.c.l.b16 %v3032
  %v3415 = vunpack.c.h.b16 %v3032
  %v3416 = vunpack.c.l.b16 %v3033
  %v3417 = vunpack.c.h.b16 %v3033
  %v3418 = vunpack.c.l.b16 %v3034
  %v3419 = vunpack.c.h.b16 %v3034
  %v3420 = vunpack.c.l.b16 %v3035
  %v3421 = vunpack.c.h.b16 %v3035
  %v3422 = vunpack.c.l.b16 %v3036
  %v3423 = vunpack.c.h.b16 %v3036
  %v3424 = vunpack.c.l.b16 %v3037
  %v3425 = vunpack.c.h.b16 %v3037
  %v3426 = vunpack.c.l.b16 %v3038
  %v3427 = vunpack.c.h.b16 %v3038
  %v3428 = vunpack.c.l.b16 %v3039
  %v3429 = vunpack.c.h.b16 %v3039
  %v3430 = vunpack.c.l.b16 %v3040
  %v3431 = vunpack.c.h.b16 %v3040
  %v3432 = vunpack.c.l.b16 %v3041
  %v3433 = vunpack.c.h.b16 %v3041
  %v3434 = vunpack.c.l.b16 %v3042
  %v3435 = vunpack.c.h.b16 %v3042
  %v3436 = vunpack.c.l.b16 %v3043
  %v3437 = vunpack.c.h.b16 %v3043
  %v3438 = vunpack.c.l.b16 %v3044
  %v3439 = vunpack.c.h.b16 %v3044
  %v3440 = vunpack.c.l.b16 %v3045
  %v3441 = vunpack.c.h.b16 %v3045
  %v3442 = vunpack.c.l.b16 %v3046
  %v3443 = vunpack.c.h.b16 %v3046
  %v3444 = vunpack.c.l.b16 %v3047
  %v3445 = vunpack.c.h.b16 %v3047
  %v3446 = vunpack.c.l.b16 %v3048
  %v3447 = vunpack.c.h.b16 %v3048
  %v3448 = vunpack.c.l.b16 %v3049
  %v3449 = vunpack.c.h.b16 %v3049
  %v3450 = vunpack.c.l.b16 %v3050
  %v3451 = vunpack.c.h.b16 %v3050
  %v3452 = vunpack.c.l.b16 %v3051
  %v3453 = vunpack.c.h.b16 %v3051
  %v3454 = vunpack.c.l.b16 %v3052
  %v3455 = vunpack.c.h.b16 %v3052
  %v3456 = vunpack.c.l.b16 %v3053
  %v3457 = vunpack.c.h.b16 %v3053
  %v3458 = vunpack.c.l.b16 %v3054
  %v3459 = vunpack.c.h.b16 %v3054
  %v3460 = vunpack.c.l.b16 %v3055
  %v3461 = vunpack.c.h.b16 %v3055
  %v3462 = vunpack.c.l.b16 %v3056
  %v3463 = vunpack.c.h.b16 %v3056
  %v3464 = vunpack.c.l.b16 %v3057
  %v3465 = vunpack.c.h.b16 %v3057
  %v3466 = vunpack.c.l.b16 %v3058
  %v3467 = vunpack.c.h.b16 %v3058
  %v3468 = vunpack.c.l.b16 %v3059
  %v3469 = vunpack.c.h.b16 %v3059
  %v3470 = vunpack.c.l.b16 %v3060
  %v3471 = vunpack.c.h.b16 %v3060
  %v3472 = vunpack.c.l.b16 %v3061
  %v3473 = vunpack.c.h.b16 %v3061
  %v3474 = vunpack.c.l.b16 %v3062
  %v3475 = vunpack.c.h.b16 %v3062
  %v3476 = vunpack.c.l.b16 %v3063
  %v3477 = vunpack.c.h.b16 %v3063
  %v3478 = vunpack.c.l.b16 %v3064
  %v3479 = vunpack.c.h.b16 %v3064
  %v3480 = vunpack.c.l.b16 %v3065
  %v3481 = vunpack.c.h.b16 %v3065
  %v3482 = vunpack.c.l.b16 %v3066
  %v3483 = vunpack.c.h.b16 %v3066
  %v3484 = vunpack.c.l.b16 %v3067
  %v3485 = vunpack.c.h.b16 %v3067
  %v3486 = vunpack.c.l.b16 %v3068
  %v3487 = vunpack.c.h.b16 %v3068
  %v3488 = vunpack.c.l.b16 %v3069
  %v3489 = vunpack.c.h.b16 %v3069
  %v3490 = vunpack.c.l.b16 %v3070
  %v3491 = vunpack.c.h.b16 %v3070
  %v3492 = vunpack.c.l.b16 %v3071
  %v3493 = vunpack.c.h.b16 %v3071
  %v3494 = vunpack.c.l.b16 %v3072
  %v3495 = vunpack.c.h.b16 %v3072
  %v3496 = vunpack.c.l.b16 %v3073
  %v3497 = vunpack.c.h.b16 %v3073
  %v3498 = vunpack.c.l.b16 %v3074
  %v3499 = vunpack.c.h.b16 %v3074
  %v3500 = vunpack.c.l.b16 %v3075
  %v3501 = vunpack.c.h.b16 %v3075
  %v3502 = vunpack.c.l.b16 %v3076
  %v3503 = vunpack.c.h.b16 %v3076
  %v3504 = vunpack.c.l.b16 %v3077
  %v3505 = vunpack.c.h.b16 %v3077
  %v3506 = vunpack.c.l.b16 %v3078
  %v3507 = vunpack.c.h.b16 %v3078
  %v3508 = vunpack.c.l.b16 %v3079
  %v3509 = vunpack.c.h.b16 %v3079
  %v3510 = vunpack.c.l.b16 %v3080
  %v3511 = vunpack.c.h.b16 %v3080
  %v3512 = vunpack.c.l.b16 %v3081
  %v3513 = vunpack.c.h.b16 %v3081
  %v3514 = vunpack.c.l.b16 %v3082
  %v3515 = vunpack.c.h.b16 %v3082
  %v3516 = vunpack.c.l.b16 %v3083
  %v3517 = vunpack.c.h.b16 %v3083
  %v3518 = vunpack.c.l.b16 %v3084
  %v3519 = vunpack.c.h.b16 %v3084
  %v3520 = vunpack.c.l.b16 %v3085
  %v3521 = vunpack.c.h.b16 %v3085
  %v3522 = vunpack.c.l.b16 %v3086
  %v3523 = vunpack.c.h.b16 %v3086
  %v3524 = vunpack.c.l.b16 %v3087
  %v3525 = vunpack.c.h.b16 %v3087
  %v3526 = vunpack.c.l.b16 %v3088
  %v3527 = vunpack.c.h.b16 %v3088
  %v3528 = vunpack.c.l.b16 %v3089
  %v3529 = vunpack.c.h.b16 %v3089
  %v3530 = vunpack.c.l.b16 %v3090
  %v3531 = vunpack.c.h.b16 %v3090
  %v3532 = vunpack.c.l.b16 %v3091
  %v3533 = vunpack.c.h.b16 %v3091
  %v3534 = vunpack.c.l.b16 %v3092
  %v3535 = vunpack.c.h.b16 %v3092
  %v3536 = vunpack.c.l.b16 %v3093
  %v3537 = vunpack.c.h.b16 %v3093
  %v3538 = vunpack.c.l.b16 %v3094
  %v3539 = vunpack.c.h.b16 %v3094
  %v3540 = vunpack.c.l.b16 %v3095
  %v3541 = vunpack.c.h.b16 %v3095
  %v3542 = vunpack.c.l.b16 %v3096
  %v3543 = vunpack.c.h.b16 %v3096
  %v3544 = vunpack.c.l.b16 %v3097
  %v3545 = vunpack.c.h.b16 %v3097
  %v3546 = vunpack.c.l.b16 %v3098
  %v3547 = vunpack.c.h.b16 %v3098
  %v3548 = vunpack.c.l.b16 %v3099
  %v3549 = vunpack.c.h.b16 %v3099
  %v3550 = vunpack.c.l.b16 %v3100
  %v3551 = vunpack.c.h.b16 %v3100
  %v3552 = vunpack.c.l.b16 %v3101
  %v3553 = vunpack.c.h.b16 %v3101
  %v3554 = vunpack.c.l.b16 %v3102
  %v3555 = vunpack.c.h.b16 %v3102
  %v3556 = vunpack.c.l.b16 %v3103
  %v3557 = vunpack.c.h.b16 %v3103
  %v3558 = vunpack.c.l.b16 %v3104
  %v3559 = vunpack.c.h.b16 %v3104
  %v3560 = vunpack.c.l.b16 %v3105
  %v3561 = vunpack.c.h.b16 %v3105
  %v3562 = vunpack.c.l.b16 %v3106
  %v3563 = vunpack.c.h.b16 %v3106
  %v3564 = vunpack.c.l.b16 %v3107
  %v3565 = vunpack.c.h.b16 %v3107
  %v3566 = vunpack.c.l.b16 %v3108
  %v3567 = vunpack.c.h.b16 %v3108
  %v3568 = vunpack.c.l.b16 %v3109
  %v3569 = vunpack.c.h.b16 %v3109
  %v3570 = vunpack.c.l.b16 %v3110
  %v3571 = vunpack.c.h.b16 %v3110
  %v3572 = vunpack.c.l.b16 %v3111
  %v3573 = vunpack.c.h.b16 %v3111
  %v3574 = vunpack.c.l.b16 %v3112
  %v3575 = vunpack.c.h.b16 %v3112
  %v3576 = vunpack.c.l.b16 %v3113
  %v3577 = vunpack.c.h.b16 %v3113
  %v3578 = vunpack.c.l.b16 %v3114
  %v3579 = vunpack.c.h.b16 %v3114
  %v3580 = vunpack.c.l.b16 %v3115
  %v3581 = vunpack.c.h.b16 %v3115
  %v3582 = vunpack.c.l.b16 %v3116
  %v3583 = vunpack.c.h.b16 %v3116
  %v3584 = vunpack.c.l.b16 %v3117
  %v3585 = vunpack.c.h.b16 %v3117
  %v3586 = vunpack.c.l.b16 %v3118
  %v3587 = vunpack.c.h.b16 %v3118
  %v3588 = vunpack.c.l.b16 %v3119
  %v3589 = vunpack.c.h.b16 %v3119
  %v3590 = vunpack.c.l.b16 %v3120
  %v3591 = vunpack.c.h.b16 %v3120
  %v3592 = vunpack.c.l.b16 %v3121
  %v3593 = vunpack.c.h.b16 %v3121
  %v3594 = vunpack.c.l.b16 %v3122
  %v3595 = vunpack.c.h.b16 %v3122
  %v3596 = vunpack.c.l.b16 %v3123
  %v3597 = vunpack.c.h.b16 %v3123
  %v3598 = vunpack.c.l.b16 %v3124
  %v3599 = vunpack.c.h.b16 %v3124
  %v3600 = vunpack.c.l.b16 %v3125
  %v3601 = vunpack.c.h.b16 %v3125
  %v3602 = vunpack.c.l.b16 %v3126
  %v3603 = vunpack.c.h.b16 %v3126
  %v3604 = vunpack.c.l.b16 %v3127
  %v3605 = vunpack.c.h.b16 %v3127
  %v3606 = vunpack.c.l.b16 %v3128
  %v3607 = vunpack.c.h.b16 %v3128
  %v3608 = vunpack.c.l.b16 %v3129
  %v3609 = vunpack.c.h.b16 %v3129
  %v3610 = vunpack.c.l.b16 %v3130
  %v3611 = vunpack.c.h.b16 %v3130
  %v3612 = vunpack.c.l.b16 %v3131
  %v3613 = vunpack.c.h.b16 %v3131
  %v3614 = vunpack.c.l.b16 %v3132
  %v3615 = vunpack.c.h.b16 %v3132
  %v3616 = vunpack.c.l.b16 %v3133
  %v3617 = vunpack.c.h.b16 %v3133
  %v3618 = vunpack.c.l.b16 %v3134
  %v3619 = vunpack.c.h.b16 %v3134
  %v3620 = vunpack.c.l.b16 %v3135
  %v3621 = vunpack.c.h.b16 %v3135
  %v3622 = vunpack.c.l.b16 %v3136
  %v3623 = vunpack.c.h.b16 %v3136
  %v3624 = vunpack.c.l.b16 %v3137
  %v3625 = vunpack.c.h.b16 %v3137
  %v3626 = vunpack.c.l.b16 %v3138
  %v3627 = vunpack.c.h.b16 %v3138
  %v3628 = vunpack.c.l.b16 %v3139
  %v3629 = vunpack.c.h.b16 %v3139
  %v3630 = vunpack.c.l.b16 %v3140
  %v3631 = vunpack.c.h.b16 %v3140
  %v3632 = vunpack.c.l.b16 %v3141
  %v3633 = vunpack.c.h.b16 %v3141
  %v3634 = vpack.c.b16 %v3316, %v3314
  %v3635 = vpack.c.b16 %v3317, %v3315
  %v3636 = vpack.c.b16 %v3320, %v3318
  %v3637 = vpack.c.b16 %v3321, %v3319
  %v3638 = vpack.c.b16 %v3324, %v3322
  %v3639 = vpack.c.b16 %v3325, %v3323
  %v3640 = vpack.c.b16 %v3328, %v3326
  %v3641 = vpack.c.b16 %v3329, %v3327
  %v3642 = vpack.c.b16 %v3332, %v3330
  %v3643 = vpack.c.b16 %v3333, %v3331
  %v3644 = vpack.c.b16 %v3336, %v3334
  %v3645 = vpack.c.b16 %v3337, %v3335
  %v3646 = vpack.c.b16 %v3340, %v3338
  %v3647 = vpack.c.b16 %v3341, %v3339
  %v3648 = vpack.c.b16 %v3344, %v3342
  %v3649 = vpack.c.b16 %v3345, %v3343
  %v3650 = vpack.c.b16 %v3348, %v3346
  %v3651 = vpack.c.b16 %v3349, %v3347
  %v3652 = vpack.c.b16 %v3352, %v3350
  %v3653 = vpack.c.b16 %v3353, %v3351
  %v3654 = vpack.c.b16 %v3356, %v3354
  %v3655 = vpack.c.b16 %v3357, %v3355
  %v3656 = vpack.c.b16 %v3360, %v3358
  %v3657 = vpack.c.b16 %v3361, %v3359
  %v3658 = vpack.c.b16 %v3364, %v3362
  %v3659 = vpack.c.b16 %v3365, %v3363
  %v3660 = vpack.c.b16 %v3368, %v3366
  %v3661 = vpack.c.b16 %v3369, %v3367
  %v3662 = vpack.c.b16 %v3372, %v3370
  %v3663 = vpack.c.b16 %v3373, %v3371
  %v3664 = vpack.c.b16 %v3376, %v3374
  %v3665 = vpack.c.b16 %v3377, %v3375
  %v3666 = vpack.c.b16 %v3380, %v3378
  %v3667 = vpack.c.b16 %v3381, %v3379
  %v3668 = vpack.c.b16 %v3384, %v3382
  %v3669 = vpack.c.b16 %v3385, %v3383
  %v3670 = vpack.c.b16 %v3388, %v3386
  %v3671 = vpack.c.b16 %v3389, %v3387
  %v3672 = vpack.c.b16 %v3392, %v3390
  %v3673 = vpack.c.b16 %v3393, %v3391
  %v3674 = vpack.c.b16 %v3396, %v3394
  %v3675 = vpack.c.b16 %v3397, %v3395
  %v3676 = vpack.c.b16 %v3400, %v3398
  %v3677 = vpack.c.b16 %v3401, %v3399
  %v3678 = vpack.c.b16 %v3404, %v3402
  %v3679 = vpack.c.b16 %v3405, %v3403
  %v3680 = vpack.c.b16 %v3408, %v3406
  %v3681 = vpack.c.b16 %v3409, %v3407
  %v3682 = vpack.c.b16 %v3412, %v3410
  %v3683 = vpack.c.b16 %v3413, %v3411
  %v3684 = vpack.c.b16 %v3416, %v3414
  %v3685 = vpack.c.b16 %v3417, %v3415
  %v3686 = vpack.c.b16 %v3420, %v3418
  %v3687 = vpack.c.b16 %v3421, %v3419
  %v3688 = vpack.c.b16 %v3424, %v3422
  %v3689 = vpack.c.b16 %v3425, %v3423
  %v3690 = vpack.c.b16 %v3428, %v3426
  %v3691 = vpack.c.b16 %v3429, %v3427
  %v3692 = vpack.c.b16 %v3432, %v3430
  %v3693 = vpack.c.b16 %v3433, %v3431
  %v3694 = vpack.c.b16 %v3436, %v3434
  %v3695 = vpack.c.b16 %v3437, %v3435
  %v3696 = vpack.c.b16 %v3440, %v3438
  %v3697 = vpack.c.b16 %v3441, %v3439
  %v3698 = vpack.c.b16 %v3444, %v3442
  %v3699 = vpack.c.b16 %v3445, %v3443
  %v3700 = vpack.c.b16 %v3448, %v3446
  %v3701 = vpack.c.b16 %v3449, %v3447
  %v3702 = vpack.c.b16 %v3452, %v3450
  %v3703 = vpack.c.b16 %v3453, %v3451
  %v3704 = vpack.c.b16 %v3456, %v3454
  %v3705 = vpack.c.b16 %v3457, %v3455
  %v3706 = vpack.c.b16 %v3460, %v3458
  %v3707 = vpack.c.b16 %v3461, %v3459
  %v3708 = vpack.c.b16 %v3464, %v3462
  %v3709 = vpack.c.b16 %v3465, %v3463
  %v3710 = vpack.c.b16 %v3468, %v3466
  %v3711 = vpack.c.b16 %v3469, %v3467
  %v3712 = vpack.c.b16 %v3472, %v3470
  %v3713 = vpack.c.b16 %v3473, %v3471
  %v3714 = vpack.c.b16 %v3476, %v3474
  %v3715 = vpack.c.b16 %v3477, %v3475
  %v3716 = vpack.c.b16 %v3480, %v3478
  %v3717 = vpack.c.b16 %v3481, %v3479
  %v3718 = vpack.c.b16 %v3484, %v3482
  %v3719 = vpack.c.b16 %v3485, %v3483
  %v3720 = vpack.c.b16 %v3488, %v3486
  %v3721 = vpack.c.b16 %v3489, %v3487
  %v3722 = vpack.c.b16 %v3492, %v3490
  %v3723 = vpack.c.b16 %v3493, %v3491
  %v3724 = vpack.c.b16 %v3496, %v3494
  %v3725 = vpack.c.b16 %v3497, %v3495
  %v3726 = vpack.c.b16 %v3500, %v3498
  %v3727 = vpack.c.b16 %v3501, %v3499
  %v3728 = vpack.c.b16 %v3504, %v3502
  %v3729 = vpack.c.b16 %v3505, %v3503
  %v3730 = vpack.c.b16 %v3508, %v3506
  %v3731 = vpack.c.b16 %v3509, %v3507
  %v3732 = vpack.c.b16 %v3512, %v3510
  %v3733 = vpack.c.b16 %v3513, %v3511
  %v3734 = vpack.c.b16 %v3516, %v3514
  %v3735 = vpack.c.b16 %v3517, %v3515
  %v3736 = vpack.c.b16 %v3520, %v3518
  %v3737 = vpack.c.b16 %v3521, %v3519
  %v3738 = vpack.c.b16 %v3524, %v3522
  %v3739 = vpack.c.b16 %v3525, %v3523
  %v3740 = vpack.c.b16 %v3528, %v3526
  %v3741 = vpack.c.b16 %v3529, %v3527
  %v3742 = vpack.c.b16 %v3532, %v3530
  %v3743 = vpack.c.b16 %v3533, %v3531
  %v3744 = vpack.c.b16 %v3536, %v3534
  %v3745 = vpack.c.b16 %v3537, %v3535
  %v3746 = vpack.c.b16 %v3540, %v3538
  %v3747 = vpack.c.b16 %v3541, %v3539
  %v3748 = vpack.c.b16 %v3544, %v3542
  %v3749 = vpack.c.b16 %v3545, %v3543
  %v3750 = vpack.c.b16 %v3548, %v3546
  %v3751 = vpack.c.b16 %v3549, %v3547
  %v3752 = vpack.c.b16 %v3552, %v3550
  %v3753 = vpack.c.b16 %v3553, %v3551
  %v3754 = vpack.c.b16 %v3556, %v3554
  %v3755 = vpack.c.b16 %v3557, %v3555
  %v3756 = vpack.c.b16 %v3560, %v3558
  %v3757 = vpack.c.b16 %v3561, %v3559
  %v3758 = vpack.c.b16 %v3564, %v3562
  %v3759 = vpack.c.b16 %v3565, %v3563
  %v3760 = vpack.c.b16 %v3568, %v3566
  %v3761 = vpack.c.b16 %v3569, %v3567
  %v3762 = vpack.c.b16 %v3572, %v3570
  %v3763 = vpack.c.b16 %v3573, %v3571
  %v3764 = vpack.c.b16 %v3576, %v3574
  %v3765 = vpack.c.b16 %v3577, %v3575
  %v3766 = vpack.c.b16 %v3580, %v3578
  %v3767 = vpack.c.b16 %v3581, %v3579
  %v3768 = vpack.c.b16 %v3584, %v3582
  %v3769 = vpack.c.b16 %v3585, %v3583
  %v3770 = vpack.c.b16 %v3588, %v3586
  %v3771 = vpack.c.b16 %v3589, %v3587
  %v3772 = vpack.c.b16 %v3592, %v3590
  %v3773 = vpack.c.b16 %v3593, %v3591
  %v3774 = vpack.c.b16 %v3596, %v3594
  %v3775 = vpack.c.b16 %v3597, %v3595
  %v3776 = vpack.c.b16 %v3600, %v3598
  %v3777 = vpack.c.b16 %v3601, %v3599
  %v3778 = vpack.c.b16 %v3604, %v3602
  %v3779 = vpack.c.b16 %v3605, %v3603
  %v3780 = vpack.c.b16 %v3608, %v3606
  %v3781 = vpack.c.b16 %v3609, %v3607
  %v3782 = vpack.c.b16 %v3612, %v3610
  %v3783 = vpack.c.b16 %v3613, %v3611
  %v3784 = vpack.c.b16 %v3616, %v3614
  %v3785 = vpack.c.b16 %v3617, %v3615
  %v3786 = vpack.c.b16 %v3620, %v3618
  %v3787 = vpack.c.b16 %v3621, %v3619
  %v3788 = vpack.c.b16 %v3624, %v3622
  %v3789 = vpack.c.b16 %v3625, %v3623
  %v3790 = vpack.c.b16 %v3628, %v3626
  %v3791 = vpack.c.b16 %v3629, %v3627
  %v3792 = vpack.c.b16 %v3632, %v3630
  %v3793 = vpack.c.b16 %v3633, %v3631
  %3954 = vmatprep.subr.bf16.mxu0 %v3635
  %3955 = vmatpush1.bf16.msra.mxu0 %v3634
  %3956 = vmatprep.subr.bf16.mxu0 %v3637
  %3957 = vmatpush1.bf16.msra.mxu0 %v3636
  %3958 = vmatprep.subr.bf16.mxu0 %v3639
  %3959 = vmatpush1.bf16.msra.mxu0 %v3638
  %3960 = vmatprep.subr.bf16.mxu0 %v3641
  %3961 = vmatpush1.bf16.msra.mxu0 %v3640
  %3962 = vmatprep.subr.bf16.mxu0 %v3643
  %3963 = vmatpush1.bf16.msra.mxu0 %v3642
  %3964 = vmatprep.subr.bf16.mxu0 %v3645
  %3965 = vmatpush1.bf16.msra.mxu0 %v3644
  %3966 = vmatprep.subr.bf16.mxu0 %v3647
  %3967 = vmatpush1.bf16.msra.mxu0 %v3646
  %3968 = vmatprep.subr.bf16.mxu0 %v3649
  %3969 = vmatpush1.bf16.msra.mxu0 %v3648
  %3970 = vmatprep.subr.bf16.mxu0 %v3651
  %3971 = vmatpush1.bf16.msra.mxu0 %v3650
  %3972 = vmatprep.subr.bf16.mxu0 %v3653
  %3973 = vmatpush1.bf16.msra.mxu0 %v3652
  %3974 = vmatprep.subr.bf16.mxu0 %v3655
  %3975 = vmatpush1.bf16.msra.mxu0 %v3654
  %3976 = vmatprep.subr.bf16.mxu0 %v3657
  %3977 = vmatpush1.bf16.msra.mxu0 %v3656
  %3978 = vmatprep.subr.bf16.mxu0 %v3659
  %3979 = vmatpush1.bf16.msra.mxu0 %v3658
  %3980 = vmatprep.subr.bf16.mxu0 %v3661
  %3981 = vmatpush1.bf16.msra.mxu0 %v3660
  %3982 = vmatprep.subr.bf16.mxu0 %v3663
  %3983 = vmatpush1.bf16.msra.mxu0 %v3662
  %3984 = vmatprep.subr.bf16.mxu0 %v3665
  %3985 = vmatpush1.bf16.msra.mxu0 %v3664
  %3986 = vmatprep.mubr.bf16.mxu0 %v834
  %3987 = vmatmul.mubr.bf16.gmra.mrb[0].mxu0 %v833
  %v3988 = vpop.f32.mrb[0].mxu0
  %v3989 = vadd.f32 %v3147, %v3988
  %v3990 = vpop.f32.mrb[0].mxu0
  %v3991 = vadd.f32 %v3151, %v3990
  %v3992 = vpop.f32.mrb[0].mxu0
  %v3993 = vadd.f32 %v3147, %v3992
  %v3994 = vpop.f32.mrb[0].mxu0
  %v3995 = vadd.f32 %v3151, %v3994
  %3996 = vmatprep.mubr.bf16.mxu0 %v844
  %3997 = vmatmul.mubr.bf16.gmra.mrb[0].mxu0 %v843
  %v3998 = vpop.f32.mrb[0].mxu0
  %v3999 = vadd.f32 %v3147, %v3998
  %v4000 = vpop.f32.mrb[0].mxu0
  %v4001 = vadd.f32 %v3151, %v4000
  %v4002 = vpop.f32.mrb[0].mxu0
  %v4003 = vadd.f32 %v3147, %v4002
  %v4004 = vpop.f32.mrb[0].mxu0
  %v4005 = vadd.f32 %v3151, %v4004
  %4006 = vmatprep.mubr.bf16.mxu0 %v854
  %4007 = vmatmul.mubr.bf16.gmra.mrb[0].mxu0 %v853
  %v4008 = vpop.f32.mrb[0].mxu0
  %v4009 = vadd.f32 %v3147, %v4008
  %v4010 = vpop.f32.mrb[0].mxu0
  %v4011 = vadd.f32 %v3151, %v4010
  %v4012 = vpop.f32.mrb[0].mxu0
  %v4013 = vadd.f32 %v3147, %v4012
  %v4014 = vpop.f32.mrb[0].mxu0
  %v4015 = vadd.f32 %v3151, %v4014
  %4016 = vmatprep.mubr.bf16.mxu0 %v864
  %4017 = vmatmul.mubr.bf16.gmra.mrb[0].mxu0 %v863
  %v4018 = vpop.f32.mrb[0].mxu0
  %v4019 = vadd.f32 %v3147, %v4018
  %v4020 = vpop.f32.mrb[0].mxu0
  %v4021 = vadd.f32 %v3151, %v4020
  %v4022 = vpop.f32.mrb[0].mxu0
  %v4023 = vadd.f32 %v3147, %v4022
  %v4024 = vpop.f32.mrb[0].mxu0
  %v4025 = vadd.f32 %v3151, %v4024
  %4026 = vmatprep.mubr.bf16.mxu0 %v874
  %4027 = vmatmul.mubr.bf16.gmra.mrb[0].mxu0 %v873
  %v4028 = vpop.f32.mrb[0].mxu0
  %v4029 = vadd.f32 %v3147, %v4028
  %v4030 = vpop.f32.mrb[0].mxu0
  %v4031 = vadd.f32 %v3151, %v4030
  %v4032 = vpop.f32.mrb[0].mxu0
  %v4033 = vadd.f32 %v3147, %v4032
  %v4034 = vpop.f32.mrb[0].mxu0
  %v4035 = vadd.f32 %v3151, %v4034
  %4036 = vmatprep.mubr.bf16.mxu0 %v884
  %4037 = vmatmul.mubr.bf16.gmra.mrb[0].mxu0 %v883
  %v4038 = vpop.f32.mrb[0].mxu0
  %v4039 = vadd.f32 %v3147, %v4038
  %v4040 = vpop.f32.mrb[0].mxu0
  %v4041 = vadd.f32 %v3151, %v4040
  %v4042 = vpop.f32.mrb[0].mxu0
  %v4043 = vadd.f32 %v3147, %v4042
  %v4044 = vpop.f32.mrb[0].mxu0
  %v4045 = vadd.f32 %v3151, %v4044
  %4046 = vmatprep.mubr.bf16.mxu0 %v894
  %4047 = vmatmul.mubr.bf16.gmra.mrb[0].mxu0 %v893
  %v4048 = vpop.f32.mrb[0].mxu0
  %v4049 = vadd.f32 %v3147, %v4048
  %v4050 = vpop.f32.mrb[0].mxu0
  %v4051 = vadd.f32 %v3151, %v4050
  %v4052 = vpop.f32.mrb[0].mxu0
  %v4053 = vadd.f32 %v3147, %v4052
  %v4054 = vpop.f32.mrb[0].mxu0
  %v4055 = vadd.f32 %v3151, %v4054
  %4056 = vmatprep.mubr.bf16.mxu0 %v904
  %4057 = vmatmul.mubr.bf16.gmra.mrb[0].mxu0 %v903
  %v4058 = vpop.f32.mrb[0].mxu0
  %v4059 = vadd.f32 %v3147, %v4058
  %v4060 = vpop.f32.mrb[0].mxu0
  %v4061 = vadd.f32 %v3151, %v4060
  %v4062 = vpop.f32.mrb[0].mxu0
  %v4063 = vadd.f32 %v3147, %v4062
  %v4064 = vpop.f32.mrb[0].mxu0
  %v4065 = vadd.f32 %v3151, %v4064
  %4066 = vmatprep.mubr.bf16.mxu0 %v914
  %4067 = vmatmul.mubr.bf16.gmra.mrb[0].mxu0 %v913
  %v4068 = vpop.f32.mrb[0].mxu0
  %v4069 = vadd.f32 %v3147, %v4068
  %v4070 = vpop.f32.mrb[0].mxu0
  %v4071 = vadd.f32 %v3151, %v4070
  %v4072 = vpop.f32.mrb[0].mxu0
  %v4073 = vadd.f32 %v3147, %v4072
  %v4074 = vpop.f32.mrb[0].mxu0
  %v4075 = vadd.f32 %v3151, %v4074
  %4076 = vmatprep.mubr.bf16.mxu0 %v924
  %4077 = vmatmul.mubr.bf16.gmra.mrb[0].mxu0 %v923
  %v4078 = vpop.f32.mrb[0].mxu0
  %v4079 = vadd.f32 %v3147, %v4078
  %v4080 = vpop.f32.mrb[0].mxu0
  %v4081 = vadd.f32 %v3151, %v4080
  %v4082 = vpop.f32.mrb[0].mxu0
  %v4083 = vadd.f32 %v3147, %v4082
  %v4084 = vpop.f32.mrb[0].mxu0
  %v4085 = vadd.f32 %v3151, %v4084
  %4086 = vmatprep.mubr.bf16.mxu0 %v934
  %4087 = vmatmul.mubr.bf16.gmra.mrb[0].mxu0 %v933
  %v4088 = vpop.f32.mrb[0].mxu0
  %v4089 = vadd.f32 %v3147, %v4088
  %v4090 = vpop.f32.mrb[0].mxu0
  %v4091 = vadd.f32 %v3151, %v4090
  %v4092 = vpop.f32.mrb[0].mxu0
  %v4093 = vadd.f32 %v3147, %v4092
  %v4094 = vpop.f32.mrb[0].mxu0
  %v4095 = vadd.f32 %v3151, %v4094
  %4096 = vmatprep.mubr.bf16.mxu0 %v944
  %4097 = vmatmul.mubr.bf16.gmra.mrb[0].mxu0 %v943
  %v4098 = vpop.f32.mrb[0].mxu0
  %v4099 = vadd.f32 %v3147, %v4098
  %v4100 = vpop.f32.mrb[0].mxu0
  %v4101 = vadd.f32 %v3151, %v4100
  %v4102 = vpop.f32.mrb[0].mxu0
  %v4103 = vadd.f32 %v3147, %v4102
  %v4104 = vpop.f32.mrb[0].mxu0
  %v4105 = vadd.f32 %v3151, %v4104
  %4106 = vmatprep.mubr.bf16.mxu0 %v954
  %4107 = vmatmul.mubr.bf16.gmra.mrb[0].mxu0 %v953
  %v4108 = vpop.f32.mrb[0].mxu0
  %v4109 = vadd.f32 %v3147, %v4108
  %v4110 = vpop.f32.mrb[0].mxu0
  %v4111 = vadd.f32 %v3151, %v4110
  %v4112 = vpop.f32.mrb[0].mxu0
  %v4113 = vadd.f32 %v3147, %v4112
  %v4114 = vpop.f32.mrb[0].mxu0
  %v4115 = vadd.f32 %v3151, %v4114
  %4116 = vmatprep.mubr.bf16.mxu0 %v964
  %4117 = vmatmul.mubr.bf16.gmra.mrb[0].mxu0 %v963
  %v4118 = vpop.f32.mrb[0].mxu0
  %v4119 = vadd.f32 %v3147, %v4118
  %v4120 = vpop.f32.mrb[0].mxu0
  %v4121 = vadd.f32 %v3151, %v4120
  %v4122 = vpop.f32.mrb[0].mxu0
  %v4123 = vadd.f32 %v3147, %v4122
  %v4124 = vpop.f32.mrb[0].mxu0
  %v4125 = vadd.f32 %v3151, %v4124
  %4126 = vmatprep.mubr.bf16.mxu0 %v974
  %4127 = vmatmul.mubr.bf16.gmra.mrb[0].mxu0 %v973
  %v4128 = vpop.f32.mrb[0].mxu0
  %v4129 = vadd.f32 %v3147, %v4128
  %v4130 = vpop.f32.mrb[0].mxu0
  %v4131 = vadd.f32 %v3151, %v4130
  %v4132 = vpop.f32.mrb[0].mxu0
  %v4133 = vadd.f32 %v3147, %v4132
  %v4134 = vpop.f32.mrb[0].mxu0
  %v4135 = vadd.f32 %v3151, %v4134
  %4136 = vmatprep.mubr.bf16.mxu0 %v984
  %4137 = vmatmul.mubr.bf16.gmra.mrb[0].mxu0 %v983
  %v4138 = vpop.f32.mrb[0].mxu0
  %v4139 = vadd.f32 %v3147, %v4138
  %v4140 = vpop.f32.mrb[0].mxu0
  %v4141 = vadd.f32 %v3151, %v4140
  %v4142 = vpop.f32.mrb[0].mxu0
  %v4143 = vadd.f32 %v3147, %v4142
  %v4144 = vpop.f32.mrb[0].mxu0
  %v4145 = vadd.f32 %v3151, %v4144
  %4146 = vdwg.mxu0
  %4147 = vmatprep.subr.bf16.mxu0 %v3667
  %4148 = vmatpush1.bf16.msra.mxu0 %v3666
  %4149 = vmatprep.subr.bf16.mxu0 %v3669
  %4150 = vmatpush1.bf16.msra.mxu0 %v3668
  %4151 = vmatprep.subr.bf16.mxu0 %v3671
  %4152 = vmatpush1.bf16.msra.mxu0 %v3670
  %4153 = vmatprep.subr.bf16.mxu0 %v3673
  %4154 = vmatpush1.bf16.msra.mxu0 %v3672
  %4155 = vmatprep.subr.bf16.mxu0 %v3675
  %4156 = vmatpush1.bf16.msra.mxu0 %v3674
  %4157 = vmatprep.subr.bf16.mxu0 %v3677
  %4158 = vmatpush1.bf16.msra.mxu0 %v3676
  %4159 = vmatprep.subr.bf16.mxu0 %v3679
  %4160 = vmatpush1.bf16.msra.mxu0 %v3678
  %4161 = vmatprep.subr.bf16.mxu0 %v3681
  %4162 = vmatpush1.bf16.msra.mxu0 %v3680
  %4163 = vmatprep.subr.bf16.mxu0 %v3683
  %4164 = vmatpush1.bf16.msra.mxu0 %v3682
  %4165 = vmatprep.subr.bf16.mxu0 %v3685
  %4166 = vmatpush1.bf16.msra.mxu0 %v3684
  %4167 = vmatprep.subr.bf16.mxu0 %v3687
  %4168 = vmatpush1.bf16.msra.mxu0 %v3686
  %4169 = vmatprep.subr.bf16.mxu0 %v3689
  %4170 = vmatpush1.bf16.msra.mxu0 %v3688
  %4171 = vmatprep.subr.bf16.mxu0 %v3691
  %4172 = vmatpush1.bf16.msra.mxu0 %v3690
  %4173 = vmatprep.subr.bf16.mxu0 %v3693
  %4174 = vmatpush1.bf16.msra.mxu0 %v3692
  %4175 = vmatprep.subr.bf16.mxu0 %v3695
  %4176 = vmatpush1.bf16.msra.mxu0 %v3694
  %4177 = vmatprep.subr.bf16.mxu0 %v3697
  %4178 = vmatpush1.bf16.msra.mxu0 %v3696
  %4179 = vmatprep.mubr.bf16.mxu0 %v836
  %4180 = vmatmul.mubr.bf16.gmra.mrb[0].mxu0 %v835
  %v4181 = vpop.f32.mrb[0].mxu0
  %v4182 = vadd.f32 %v3989, %v4181
  %v4183 = vpop.f32.mrb[0].mxu0
  %v4184 = vadd.f32 %v3991, %v4183
  %v4185 = vpop.f32.mrb[0].mxu0
  %v4186 = vadd.f32 %v3993, %v4185
  %v4187 = vpop.f32.mrb[0].mxu0
  %v4188 = vadd.f32 %v3995, %v4187
  %4189 = vmatprep.mubr.bf16.mxu0 %v846
  %4190 = vmatmul.mubr.bf16.gmra.mrb[0].mxu0 %v845
  %v4191 = vpop.f32.mrb[0].mxu0
  %v4192 = vadd.f32 %v3999, %v4191
  %v4193 = vpop.f32.mrb[0].mxu0
  %v4194 = vadd.f32 %v4001, %v4193
  %v4195 = vpop.f32.mrb[0].mxu0
  %v4196 = vadd.f32 %v4003, %v4195
  %v4197 = vpop.f32.mrb[0].mxu0
  %v4198 = vadd.f32 %v4005, %v4197
  %4199 = vmatprep.mubr.bf16.mxu0 %v856
  %4200 = vmatmul.mubr.bf16.gmra.mrb[0].mxu0 %v855
  %v4201 = vpop.f32.mrb[0].mxu0
  %v4202 = vadd.f32 %v4009, %v4201
  %v4203 = vpop.f32.mrb[0].mxu0
  %v4204 = vadd.f32 %v4011, %v4203
  %v4205 = vpop.f32.mrb[0].mxu0
  %v4206 = vadd.f32 %v4013, %v4205
  %v4207 = vpop.f32.mrb[0].mxu0
  %v4208 = vadd.f32 %v4015, %v4207
  %4209 = vmatprep.mubr.bf16.mxu0 %v866
  %4210 = vmatmul.mubr.bf16.gmra.mrb[0].mxu0 %v865
  %v4211 = vpop.f32.mrb[0].mxu0
  %v4212 = vadd.f32 %v4019, %v4211
  %v4213 = vpop.f32.mrb[0].mxu0
  %v4214 = vadd.f32 %v4021, %v4213
  %v4215 = vpop.f32.mrb[0].mxu0
  %v4216 = vadd.f32 %v4023, %v4215
  %v4217 = vpop.f32.mrb[0].mxu0
  %v4218 = vadd.f32 %v4025, %v4217
  %4219 = vmatprep.mubr.bf16.mxu0 %v876
  %4220 = vmatmul.mubr.bf16.gmra.mrb[0].mxu0 %v875
  %v4221 = vpop.f32.mrb[0].mxu0
  %v4222 = vadd.f32 %v4029, %v4221
  %v4223 = vpop.f32.mrb[0].mxu0
  %v4224 = vadd.f32 %v4031, %v4223
  %v4225 = vpop.f32.mrb[0].mxu0
  %v4226 = vadd.f32 %v4033, %v4225
  %v4227 = vpop.f32.mrb[0].mxu0
  %v4228 = vadd.f32 %v4035, %v4227
  %4229 = vmatprep.mubr.bf16.mxu0 %v886
  %4230 = vmatmul.mubr.bf16.gmra.mrb[0].mxu0 %v885
  %v4231 = vpop.f32.mrb[0].mxu0
  %v4232 = vadd.f32 %v4039, %v4231
  %v4233 = vpop.f32.mrb[0].mxu0
  %v4234 = vadd.f32 %v4041, %v4233
  %v4235 = vpop.f32.mrb[0].mxu0
  %v4236 = vadd.f32 %v4043, %v4235
  %v4237 = vpop.f32.mrb[0].mxu0
  %v4238 = vadd.f32 %v4045, %v4237
  %4239 = vmatprep.mubr.bf16.mxu0 %v896
  %4240 = vmatmul.mubr.bf16.gmra.mrb[0].mxu0 %v895
  %v4241 = vpop.f32.mrb[0].mxu0
  %v4242 = vadd.f32 %v4049, %v4241
  %v4243 = vpop.f32.mrb[0].mxu0
  %v4244 = vadd.f32 %v4051, %v4243
  %v4245 = vpop.f32.mrb[0].mxu0
  %v4246 = vadd.f32 %v4053, %v4245
  %v4247 = vpop.f32.mrb[0].mxu0
  %v4248 = vadd.f32 %v4055, %v4247
  %4249 = vmatprep.mubr.bf16.mxu0 %v906
  %4250 = vmatmul.mubr.bf16.gmra.mrb[0].mxu0 %v905
  %v4251 = vpop.f32.mrb[0].mxu0
  %v4252 = vadd.f32 %v4059, %v4251
  %v4253 = vpop.f32.mrb[0].mxu0
  %v4254 = vadd.f32 %v4061, %v4253
  %v4255 = vpop.f32.mrb[0].mxu0
  %v4256 = vadd.f32 %v4063, %v4255
  %v4257 = vpop.f32.mrb[0].mxu0
  %v4258 = vadd.f32 %v4065, %v4257
  %4259 = vmatprep.mubr.bf16.mxu0 %v916
  %4260 = vmatmul.mubr.bf16.gmra.mrb[0].mxu0 %v915
  %v4261 = vpop.f32.mrb[0].mxu0
  %v4262 = vadd.f32 %v4069, %v4261
  %v4263 = vpop.f32.mrb[0].mxu0
  %v4264 = vadd.f32 %v4071, %v4263
  %v4265 = vpop.f32.mrb[0].mxu0
  %v4266 = vadd.f32 %v4073, %v4265
  %v4267 = vpop.f32.mrb[0].mxu0
  %v4268 = vadd.f32 %v4075, %v4267
  %4269 = vmatprep.mubr.bf16.mxu0 %v926
  %4270 = vmatmul.mubr.bf16.gmra.mrb[0].mxu0 %v925
  %v4271 = vpop.f32.mrb[0].mxu0
  %v4272 = vadd.f32 %v4079, %v4271
  %v4273 = vpop.f32.mrb[0].mxu0
  %v4274 = vadd.f32 %v4081, %v4273
  %v4275 = vpop.f32.mrb[0].mxu0
  %v4276 = vadd.f32 %v4083, %v4275
  %v4277 = vpop.f32.mrb[0].mxu0
  %v4278 = vadd.f32 %v4085, %v4277
  %4279 = vmatprep.mubr.bf16.mxu0 %v936
  %4280 = vmatmul.mubr.bf16.gmra.mrb[0].mxu0 %v935
  %v4281 = vpop.f32.mrb[0].mxu0
  %v4282 = vadd.f32 %v4089, %v4281
  %v4283 = vpop.f32.mrb[0].mxu0
  %v4284 = vadd.f32 %v4091, %v4283
  %v4285 = vpop.f32.mrb[0].mxu0
  %v4286 = vadd.f32 %v4093, %v4285
  %v4287 = vpop.f32.mrb[0].mxu0
  %v4288 = vadd.f32 %v4095, %v4287
  %4289 = vmatprep.mubr.bf16.mxu0 %v946
  %4290 = vmatmul.mubr.bf16.gmra.mrb[0].mxu0 %v945
  %v4291 = vpop.f32.mrb[0].mxu0
  %v4292 = vadd.f32 %v4099, %v4291
  %v4293 = vpop.f32.mrb[0].mxu0
  %v4294 = vadd.f32 %v4101, %v4293
  %v4295 = vpop.f32.mrb[0].mxu0
  %v4296 = vadd.f32 %v4103, %v4295
  %v4297 = vpop.f32.mrb[0].mxu0
  %v4298 = vadd.f32 %v4105, %v4297
  %4299 = vmatprep.mubr.bf16.mxu0 %v956
  %4300 = vmatmul.mubr.bf16.gmra.mrb[0].mxu0 %v955
  %v4301 = vpop.f32.mrb[0].mxu0
  %v4302 = vadd.f32 %v4109, %v4301
  %v4303 = vpop.f32.mrb[0].mxu0
  %v4304 = vadd.f32 %v4111, %v4303
  %v4305 = vpop.f32.mrb[0].mxu0
  %v4306 = vadd.f32 %v4113, %v4305
  %v4307 = vpop.f32.mrb[0].mxu0
  %v4308 = vadd.f32 %v4115, %v4307
  %4309 = vmatprep.mubr.bf16.mxu0 %v966
  %4310 = vmatmul.mubr.bf16.gmra.mrb[0].mxu0 %v965
  %v4311 = vpop.f32.mrb[0].mxu0
  %v4312 = vadd.f32 %v4119, %v4311
  %v4313 = vpop.f32.mrb[0].mxu0
  %v4314 = vadd.f32 %v4121, %v4313
  %v4315 = vpop.f32.mrb[0].mxu0
  %v4316 = vadd.f32 %v4123, %v4315
  %v4317 = vpop.f32.mrb[0].mxu0
  %v4318 = vadd.f32 %v4125, %v4317
  %4319 = vmatprep.mubr.bf16.mxu0 %v976
  %4320 = vmatmul.mubr.bf16.gmra.mrb[0].mxu0 %v975
  %v4321 = vpop.f32.mrb[0].mxu0
  %v4322 = vadd.f32 %v4129, %v4321
  %v4323 = vpop.f32.mrb[0].mxu0
  %v4324 = vadd.f32 %v4131, %v4323
  %v4325 = vpop.f32.mrb[0].mxu0
  %v4326 = vadd.f32 %v4133, %v4325
  %v4327 = vpop.f32.mrb[0].mxu0
  %v4328 = vadd.f32 %v4135, %v4327
  %4329 = vmatprep.mubr.bf16.mxu0 %v986
  %4330 = vmatmul.mubr.bf16.gmra.mrb[0].mxu0 %v985
  %v4331 = vpop.f32.mrb[0].mxu0
  %v4332 = vadd.f32 %v4139, %v4331
  %v4333 = vpop.f32.mrb[0].mxu0
  %v4334 = vadd.f32 %v4141, %v4333
  %v4335 = vpop.f32.mrb[0].mxu0
  %v4336 = vadd.f32 %v4143, %v4335
  %v4337 = vpop.f32.mrb[0].mxu0
  %v4338 = vadd.f32 %v4145, %v4337
  %4339 = vdwg.mxu0
  %4340 = vmatprep.subr.bf16.mxu0 %v3699
  %4341 = vmatpush1.bf16.msra.mxu0 %v3698
  %4342 = vmatprep.subr.bf16.mxu0 %v3701
  %4343 = vmatpush1.bf16.msra.mxu0 %v3700
  %4344 = vmatprep.subr.bf16.mxu0 %v3703
  %4345 = vmatpush1.bf16.msra.mxu0 %v3702
  %4346 = vmatprep.subr.bf16.mxu0 %v3705
  %4347 = vmatpush1.bf16.msra.mxu0 %v3704
  %4348 = vmatprep.subr.bf16.mxu0 %v3707
  %4349 = vmatpush1.bf16.msra.mxu0 %v3706
  %4350 = vmatprep.subr.bf16.mxu0 %v3709
  %4351 = vmatpush1.bf16.msra.mxu0 %v3708
  %4352 = vmatprep.subr.bf16.mxu0 %v3711
  %4353 = vmatpush1.bf16.msra.mxu0 %v3710
  %4354 = vmatprep.subr.bf16.mxu0 %v3713
  %4355 = vmatpush1.bf16.msra.mxu0 %v3712
  %4356 = vmatprep.subr.bf16.mxu0 %v3715
  %4357 = vmatpush1.bf16.msra.mxu0 %v3714
  %4358 = vmatprep.subr.bf16.mxu0 %v3717
  %4359 = vmatpush1.bf16.msra.mxu0 %v3716
  %4360 = vmatprep.subr.bf16.mxu0 %v3719
  %4361 = vmatpush1.bf16.msra.mxu0 %v3718
  %4362 = vmatprep.subr.bf16.mxu0 %v3721
  %4363 = vmatpush1.bf16.msra.mxu0 %v3720
  %4364 = vmatprep.subr.bf16.mxu0 %v3723
  %4365 = vmatpush1.bf16.msra.mxu0 %v3722
  %4366 = vmatprep.subr.bf16.mxu0 %v3725
  %4367 = vmatpush1.bf16.msra.mxu0 %v3724
  %4368 = vmatprep.subr.bf16.mxu0 %v3727
  %4369 = vmatpush1.bf16.msra.mxu0 %v3726
  %4370 = vmatprep.subr.bf16.mxu0 %v3729
  %4371 = vmatpush1.bf16.msra.mxu0 %v3728
  %4372 = vmatprep.mubr.bf16.mxu0 %v838
  %4373 = vmatmul.mubr.bf16.gmra.mrb[0].mxu0 %v837
  %v4374 = vpop.f32.mrb[0].mxu0
  %v4375 = vadd.f32 %v4182, %v4374
  %v4376 = vpop.f32.mrb[0].mxu0
  %v4377 = vadd.f32 %v4184, %v4376
  %v4378 = vpop.f32.mrb[0].mxu0
  %v4379 = vadd.f32 %v4186, %v4378
  %v4380 = vpop.f32.mrb[0].mxu0
  %v4381 = vadd.f32 %v4188, %v4380
  %4382 = vmatprep.mubr.bf16.mxu0 %v848
  %4383 = vmatmul.mubr.bf16.gmra.mrb[0].mxu0 %v847
  %v4384 = vpop.f32.mrb[0].mxu0
  %v4385 = vadd.f32 %v4192, %v4384
  %v4386 = vpop.f32.mrb[0].mxu0
  %v4387 = vadd.f32 %v4194, %v4386
  %v4388 = vpop.f32.mrb[0].mxu0
  %v4389 = vadd.f32 %v4196, %v4388
  %v4390 = vpop.f32.mrb[0].mxu0
  %v4391 = vadd.f32 %v4198, %v4390
  %4392 = vmatprep.mubr.bf16.mxu0 %v858
  %4393 = vmatmul.mubr.bf16.gmra.mrb[0].mxu0 %v857
  %v4394 = vpop.f32.mrb[0].mxu0
  %v4395 = vadd.f32 %v4202, %v4394
  %v4396 = vpop.f32.mrb[0].mxu0
  %v4397 = vadd.f32 %v4204, %v4396
  %v4398 = vpop.f32.mrb[0].mxu0
  %v4399 = vadd.f32 %v4206, %v4398
  %v4400 = vpop.f32.mrb[0].mxu0
  %v4401 = vadd.f32 %v4208, %v4400
  %4402 = vmatprep.mubr.bf16.mxu0 %v868
  %4403 = vmatmul.mubr.bf16.gmra.mrb[0].mxu0 %v867
  %v4404 = vpop.f32.mrb[0].mxu0
  %v4405 = vadd.f32 %v4212, %v4404
  %v4406 = vpop.f32.mrb[0].mxu0
  %v4407 = vadd.f32 %v4214, %v4406
  %v4408 = vpop.f32.mrb[0].mxu0
  %v4409 = vadd.f32 %v4216, %v4408
  %v4410 = vpop.f32.mrb[0].mxu0
  %v4411 = vadd.f32 %v4218, %v4410
  %4412 = vmatprep.mubr.bf16.mxu0 %v878
  %4413 = vmatmul.mubr.bf16.gmra.mrb[0].mxu0 %v877
  %v4414 = vpop.f32.mrb[0].mxu0
  %v4415 = vadd.f32 %v4222, %v4414
  %v4416 = vpop.f32.mrb[0].mxu0
  %v4417 = vadd.f32 %v4224, %v4416
  %v4418 = vpop.f32.mrb[0].mxu0
  %v4419 = vadd.f32 %v4226, %v4418
  %v4420 = vpop.f32.mrb[0].mxu0
  %v4421 = vadd.f32 %v4228, %v4420
  %4422 = vmatprep.mubr.bf16.mxu0 %v888
  %4423 = vmatmul.mubr.bf16.gmra.mrb[0].mxu0 %v887
  %v4424 = vpop.f32.mrb[0].mxu0
  %v4425 = vadd.f32 %v4232, %v4424
  %v4426 = vpop.f32.mrb[0].mxu0
  %v4427 = vadd.f32 %v4234, %v4426
  %v4428 = vpop.f32.mrb[0].mxu0
  %v4429 = vadd.f32 %v4236, %v4428
  %v4430 = vpop.f32.mrb[0].mxu0
  %v4431 = vadd.f32 %v4238, %v4430
  %4432 = vmatprep.mubr.bf16.mxu0 %v898
  %4433 = vmatmul.mubr.bf16.gmra.mrb[0].mxu0 %v897
  %v4434 = vpop.f32.mrb[0].mxu0
  %v4435 = vadd.f32 %v4242, %v4434
  %v4436 = vpop.f32.mrb[0].mxu0
  %v4437 = vadd.f32 %v4244, %v4436
  %v4438 = vpop.f32.mrb[0].mxu0
  %v4439 = vadd.f32 %v4246, %v4438
  %v4440 = vpop.f32.mrb[0].mxu0
  %v4441 = vadd.f32 %v4248, %v4440
  %4442 = vmatprep.mubr.bf16.mxu0 %v908
  %4443 = vmatmul.mubr.bf16.gmra.mrb[0].mxu0 %v907
  %v4444 = vpop.f32.mrb[0].mxu0
  %v4445 = vadd.f32 %v4252, %v4444
  %v4446 = vpop.f32.mrb[0].mxu0
  %v4447 = vadd.f32 %v4254, %v4446
  %v4448 = vpop.f32.mrb[0].mxu0
  %v4449 = vadd.f32 %v4256, %v4448
  %v4450 = vpop.f32.mrb[0].mxu0
  %v4451 = vadd.f32 %v4258, %v4450
  %4452 = vmatprep.mubr.bf16.mxu0 %v918
  %4453 = vmatmul.mubr.bf16.gmra.mrb[0].mxu0 %v917
  %v4454 = vpop.f32.mrb[0].mxu0
  %v4455 = vadd.f32 %v4262, %v4454
  %v4456 = vpop.f32.mrb[0].mxu0
  %v4457 = vadd.f32 %v4264, %v4456
  %v4458 = vpop.f32.mrb[0].mxu0
  %v4459 = vadd.f32 %v4266, %v4458
  %v4460 = vpop.f32.mrb[0].mxu0
  %v4461 = vadd.f32 %v4268, %v4460
  %4462 = vmatprep.mubr.bf16.mxu0 %v928
  %4463 = vmatmul.mubr.bf16.gmra.mrb[0].mxu0 %v927
  %v4464 = vpop.f32.mrb[0].mxu0
  %v4465 = vadd.f32 %v4272, %v4464
  %v4466 = vpop.f32.mrb[0].mxu0
  %v4467 = vadd.f32 %v4274, %v4466
  %v4468 = vpop.f32.mrb[0].mxu0
  %v4469 = vadd.f32 %v4276, %v4468
  %v4470 = vpop.f32.mrb[0].mxu0
  %v4471 = vadd.f32 %v4278, %v4470
  %4472 = vmatprep.mubr.bf16.mxu0 %v938
  %4473 = vmatmul.mubr.bf16.gmra.mrb[0].mxu0 %v937
  %v4474 = vpop.f32.mrb[0].mxu0
  %v4475 = vadd.f32 %v4282, %v4474
  %v4476 = vpop.f32.mrb[0].mxu0
  %v4477 = vadd.f32 %v4284, %v4476
  %v4478 = vpop.f32.mrb[0].mxu0
  %v4479 = vadd.f32 %v4286, %v4478
  %v4480 = vpop.f32.mrb[0].mxu0
  %v4481 = vadd.f32 %v4288, %v4480
  %4482 = vmatprep.mubr.bf16.mxu0 %v948
  %4483 = vmatmul.mubr.bf16.gmra.mrb[0].mxu0 %v947
  %v4484 = vpop.f32.mrb[0].mxu0
  %v4485 = vadd.f32 %v4292, %v4484
  %v4486 = vpop.f32.mrb[0].mxu0
  %v4487 = vadd.f32 %v4294, %v4486
  %v4488 = vpop.f32.mrb[0].mxu0
  %v4489 = vadd.f32 %v4296, %v4488
  %v4490 = vpop.f32.mrb[0].mxu0
  %v4491 = vadd.f32 %v4298, %v4490
  %4492 = vmatprep.mubr.bf16.mxu0 %v958
  %4493 = vmatmul.mubr.bf16.gmra.mrb[0].mxu0 %v957
  %v4494 = vpop.f32.mrb[0].mxu0
  %v4495 = vadd.f32 %v4302, %v4494
  %v4496 = vpop.f32.mrb[0].mxu0
  %v4497 = vadd.f32 %v4304, %v4496
  %v4498 = vpop.f32.mrb[0].mxu0
  %v4499 = vadd.f32 %v4306, %v4498
  %v4500 = vpop.f32.mrb[0].mxu0
  %v4501 = vadd.f32 %v4308, %v4500
  %4502 = vmatprep.mubr.bf16.mxu0 %v968
  %4503 = vmatmul.mubr.bf16.gmra.mrb[0].mxu0 %v967
  %v4504 = vpop.f32.mrb[0].mxu0
  %v4505 = vadd.f32 %v4312, %v4504
  %v4506 = vpop.f32.mrb[0].mxu0
  %v4507 = vadd.f32 %v4314, %v4506
  %v4508 = vpop.f32.mrb[0].mxu0
  %v4509 = vadd.f32 %v4316, %v4508
  %v4510 = vpop.f32.mrb[0].mxu0
  %v4511 = vadd.f32 %v4318, %v4510
  %4512 = vmatprep.mubr.bf16.mxu0 %v978
  %4513 = vmatmul.mubr.bf16.gmra.mrb[0].mxu0 %v977
  %v4514 = vpop.f32.mrb[0].mxu0
  %v4515 = vadd.f32 %v4322, %v4514
  %v4516 = vpop.f32.mrb[0].mxu0
  %v4517 = vadd.f32 %v4324, %v4516
  %v4518 = vpop.f32.mrb[0].mxu0
  %v4519 = vadd.f32 %v4326, %v4518
  %v4520 = vpop.f32.mrb[0].mxu0
  %v4521 = vadd.f32 %v4328, %v4520
  %4522 = vmatprep.mubr.bf16.mxu0 %v988
  %4523 = vmatmul.mubr.bf16.gmra.mrb[0].mxu0 %v987
  %v4524 = vpop.f32.mrb[0].mxu0
  %v4525 = vadd.f32 %v4332, %v4524
  %v4526 = vpop.f32.mrb[0].mxu0
  %v4527 = vadd.f32 %v4334, %v4526
  %v4528 = vpop.f32.mrb[0].mxu0
  %v4529 = vadd.f32 %v4336, %v4528
  %v4530 = vpop.f32.mrb[0].mxu0
  %v4531 = vadd.f32 %v4338, %v4530
  %4532 = vdwg.mxu0
  %4533 = vmatprep.subr.bf16.mxu0 %v3731
  %4534 = vmatpush1.bf16.msra.mxu0 %v3730
  %4535 = vmatprep.subr.bf16.mxu0 %v3733
  %4536 = vmatpush1.bf16.msra.mxu0 %v3732
  %4537 = vmatprep.subr.bf16.mxu0 %v3735
  %4538 = vmatpush1.bf16.msra.mxu0 %v3734
  %4539 = vmatprep.subr.bf16.mxu0 %v3737
  %4540 = vmatpush1.bf16.msra.mxu0 %v3736
  %4541 = vmatprep.subr.bf16.mxu0 %v3739
  %4542 = vmatpush1.bf16.msra.mxu0 %v3738
  %4543 = vmatprep.subr.bf16.mxu0 %v3741
  %4544 = vmatpush1.bf16.msra.mxu0 %v3740
  %4545 = vmatprep.subr.bf16.mxu0 %v3743
  %4546 = vmatpush1.bf16.msra.mxu0 %v3742
  %4547 = vmatprep.subr.bf16.mxu0 %v3745
  %4548 = vmatpush1.bf16.msra.mxu0 %v3744
  %4549 = vmatprep.subr.bf16.mxu0 %v3747
  %4550 = vmatpush1.bf16.msra.mxu0 %v3746
  %4551 = vmatprep.subr.bf16.mxu0 %v3749
  %4552 = vmatpush1.bf16.msra.mxu0 %v3748
  %4553 = vmatprep.subr.bf16.mxu0 %v3751
  %4554 = vmatpush1.bf16.msra.mxu0 %v3750
  %4555 = vmatprep.subr.bf16.mxu0 %v3753
  %4556 = vmatpush1.bf16.msra.mxu0 %v3752
  %4557 = vmatprep.subr.bf16.mxu0 %v3755
  %4558 = vmatpush1.bf16.msra.mxu0 %v3754
  %4559 = vmatprep.subr.bf16.mxu0 %v3757
  %4560 = vmatpush1.bf16.msra.mxu0 %v3756
  %4561 = vmatprep.subr.bf16.mxu0 %v3759
  %4562 = vmatpush1.bf16.msra.mxu0 %v3758
  %4563 = vmatprep.subr.bf16.mxu0 %v3761
  %4564 = vmatpush1.bf16.msra.mxu0 %v3760
  %4565 = vmatprep.mubr.bf16.mxu0 %v840
  %4566 = vmatmul.mubr.bf16.gmra.mrb[0].mxu0 %v839
  %v4567 = vpop.f32.mrb[0].mxu0
  %v4568 = vadd.f32 %v4375, %v4567
  %v4569 = vpop.f32.mrb[0].mxu0
  %v4570 = vadd.f32 %v4377, %v4569
  %v4571 = vpop.f32.mrb[0].mxu0
  %v4572 = vadd.f32 %v4379, %v4571
  %v4573 = vpop.f32.mrb[0].mxu0
  %v4574 = vadd.f32 %v4381, %v4573
  %4575 = vmatprep.mubr.bf16.mxu0 %v850
  %4576 = vmatmul.mubr.bf16.gmra.mrb[0].mxu0 %v849
  %v4577 = vpop.f32.mrb[0].mxu0
  %v4578 = vadd.f32 %v4385, %v4577
  %v4579 = vpop.f32.mrb[0].mxu0
  %v4580 = vadd.f32 %v4387, %v4579
  %v4581 = vpop.f32.mrb[0].mxu0
  %v4582 = vadd.f32 %v4389, %v4581
  %v4583 = vpop.f32.mrb[0].mxu0
  %v4584 = vadd.f32 %v4391, %v4583
  %4585 = vmatprep.mubr.bf16.mxu0 %v860
  %4586 = vmatmul.mubr.bf16.gmra.mrb[0].mxu0 %v859
  %v4587 = vpop.f32.mrb[0].mxu0
  %v4588 = vadd.f32 %v4395, %v4587
  %v4589 = vpop.f32.mrb[0].mxu0
  %v4590 = vadd.f32 %v4397, %v4589
  %v4591 = vpop.f32.mrb[0].mxu0
  %v4592 = vadd.f32 %v4399, %v4591
  %v4593 = vpop.f32.mrb[0].mxu0
  %v4594 = vadd.f32 %v4401, %v4593
  %4595 = vmatprep.mubr.bf16.mxu0 %v870
  %4596 = vmatmul.mubr.bf16.gmra.mrb[0].mxu0 %v869
  %v4597 = vpop.f32.mrb[0].mxu0
  %v4598 = vadd.f32 %v4405, %v4597
  %v4599 = vpop.f32.mrb[0].mxu0
  %v4600 = vadd.f32 %v4407, %v4599
  %v4601 = vpop.f32.mrb[0].mxu0
  %v4602 = vadd.f32 %v4409, %v4601
  %v4603 = vpop.f32.mrb[0].mxu0
  %v4604 = vadd.f32 %v4411, %v4603
  %4605 = vmatprep.mubr.bf16.mxu0 %v880
  %4606 = vmatmul.mubr.bf16.gmra.mrb[0].mxu0 %v879
  %v4607 = vpop.f32.mrb[0].mxu0
  %v4608 = vadd.f32 %v4415, %v4607
  %v4609 = vpop.f32.mrb[0].mxu0
  %v4610 = vadd.f32 %v4417, %v4609
  %v4611 = vpop.f32.mrb[0].mxu0
  %v4612 = vadd.f32 %v4419, %v4611
  %v4613 = vpop.f32.mrb[0].mxu0
  %v4614 = vadd.f32 %v4421, %v4613
  %4615 = vmatprep.mubr.bf16.mxu0 %v890
  %4616 = vmatmul.mubr.bf16.gmra.mrb[0].mxu0 %v889
  %v4617 = vpop.f32.mrb[0].mxu0
  %v4618 = vadd.f32 %v4425, %v4617
  %v4619 = vpop.f32.mrb[0].mxu0
  %v4620 = vadd.f32 %v4427, %v4619
  %v4621 = vpop.f32.mrb[0].mxu0
  %v4622 = vadd.f32 %v4429, %v4621
  %v4623 = vpop.f32.mrb[0].mxu0
  %v4624 = vadd.f32 %v4431, %v4623
  %4625 = vmatprep.mubr.bf16.mxu0 %v900
  %4626 = vmatmul.mubr.bf16.gmra.mrb[0].mxu0 %v899
  %v4627 = vpop.f32.mrb[0].mxu0
  %v4628 = vadd.f32 %v4435, %v4627
  %v4629 = vpop.f32.mrb[0].mxu0
  %v4630 = vadd.f32 %v4437, %v4629
  %v4631 = vpop.f32.mrb[0].mxu0
  %v4632 = vadd.f32 %v4439, %v4631
  %v4633 = vpop.f32.mrb[0].mxu0
  %v4634 = vadd.f32 %v4441, %v4633
  %4635 = vmatprep.mubr.bf16.mxu0 %v910
  %4636 = vmatmul.mubr.bf16.gmra.mrb[0].mxu0 %v909
  %v4637 = vpop.f32.mrb[0].mxu0
  %v4638 = vadd.f32 %v4445, %v4637
  %v4639 = vpop.f32.mrb[0].mxu0
  %v4640 = vadd.f32 %v4447, %v4639
  %v4641 = vpop.f32.mrb[0].mxu0
  %v4642 = vadd.f32 %v4449, %v4641
  %v4643 = vpop.f32.mrb[0].mxu0
  %v4644 = vadd.f32 %v4451, %v4643
  %4645 = vmatprep.mubr.bf16.mxu0 %v920
  %4646 = vmatmul.mubr.bf16.gmra.mrb[0].mxu0 %v919
  %v4647 = vpop.f32.mrb[0].mxu0
  %v4648 = vadd.f32 %v4455, %v4647
  %v4649 = vpop.f32.mrb[0].mxu0
  %v4650 = vadd.f32 %v4457, %v4649
  %v4651 = vpop.f32.mrb[0].mxu0
  %v4652 = vadd.f32 %v4459, %v4651
  %v4653 = vpop.f32.mrb[0].mxu0
  %v4654 = vadd.f32 %v4461, %v4653
  %4655 = vmatprep.mubr.bf16.mxu0 %v930
  %4656 = vmatmul.mubr.bf16.gmra.mrb[0].mxu0 %v929
  %v4657 = vpop.f32.mrb[0].mxu0
  %v4658 = vadd.f32 %v4465, %v4657
  %v4659 = vpop.f32.mrb[0].mxu0
  %v4660 = vadd.f32 %v4467, %v4659
  %v4661 = vpop.f32.mrb[0].mxu0
  %v4662 = vadd.f32 %v4469, %v4661
  %v4663 = vpop.f32.mrb[0].mxu0
  %v4664 = vadd.f32 %v4471, %v4663
  %4665 = vmatprep.mubr.bf16.mxu0 %v940
  %4666 = vmatmul.mubr.bf16.gmra.mrb[0].mxu0 %v939
  %v4667 = vpop.f32.mrb[0].mxu0
  %v4668 = vadd.f32 %v4475, %v4667
  %v4669 = vpop.f32.mrb[0].mxu0
  %v4670 = vadd.f32 %v4477, %v4669
  %v4671 = vpop.f32.mrb[0].mxu0
  %v4672 = vadd.f32 %v4479, %v4671
  %v4673 = vpop.f32.mrb[0].mxu0
  %v4674 = vadd.f32 %v4481, %v4673
  %4675 = vmatprep.mubr.bf16.mxu0 %v950
  %4676 = vmatmul.mubr.bf16.gmra.mrb[0].mxu0 %v949
  %v4677 = vpop.f32.mrb[0].mxu0
  %v4678 = vadd.f32 %v4485, %v4677
  %v4679 = vpop.f32.mrb[0].mxu0
  %v4680 = vadd.f32 %v4487, %v4679
  %v4681 = vpop.f32.mrb[0].mxu0
  %v4682 = vadd.f32 %v4489, %v4681
  %v4683 = vpop.f32.mrb[0].mxu0
  %v4684 = vadd.f32 %v4491, %v4683
  %4685 = vmatprep.mubr.bf16.mxu0 %v960
  %4686 = vmatmul.mubr.bf16.gmra.mrb[0].mxu0 %v959
  %v4687 = vpop.f32.mrb[0].mxu0
  %v4688 = vadd.f32 %v4495, %v4687
  %v4689 = vpop.f32.mrb[0].mxu0
  %v4690 = vadd.f32 %v4497, %v4689
  %v4691 = vpop.f32.mrb[0].mxu0
  %v4692 = vadd.f32 %v4499, %v4691
  %v4693 = vpop.f32.mrb[0].mxu0
  %v4694 = vadd.f32 %v4501, %v4693
  %4695 = vmatprep.mubr.bf16.mxu0 %v970
  %4696 = vmatmul.mubr.bf16.gmra.mrb[0].mxu0 %v969
  %v4697 = vpop.f32.mrb[0].mxu0
  %v4698 = vadd.f32 %v4505, %v4697
  %v4699 = vpop.f32.mrb[0].mxu0
  %v4700 = vadd.f32 %v4507, %v4699
  %v4701 = vpop.f32.mrb[0].mxu0
  %v4702 = vadd.f32 %v4509, %v4701
  %v4703 = vpop.f32.mrb[0].mxu0
  %v4704 = vadd.f32 %v4511, %v4703
  %4705 = vmatprep.mubr.bf16.mxu0 %v980
  %4706 = vmatmul.mubr.bf16.gmra.mrb[0].mxu0 %v979
  %v4707 = vpop.f32.mrb[0].mxu0
  %v4708 = vadd.f32 %v4515, %v4707
  %v4709 = vpop.f32.mrb[0].mxu0
  %v4710 = vadd.f32 %v4517, %v4709
  %v4711 = vpop.f32.mrb[0].mxu0
  %v4712 = vadd.f32 %v4519, %v4711
  %v4713 = vpop.f32.mrb[0].mxu0
  %v4714 = vadd.f32 %v4521, %v4713
  %4715 = vmatprep.mubr.bf16.mxu0 %v990
  %4716 = vmatmul.mubr.bf16.gmra.mrb[0].mxu0 %v989
  %v4717 = vpop.f32.mrb[0].mxu0
  %v4718 = vadd.f32 %v4525, %v4717
  %v4719 = vpop.f32.mrb[0].mxu0
  %v4720 = vadd.f32 %v4527, %v4719
  %v4721 = vpop.f32.mrb[0].mxu0
  %v4722 = vadd.f32 %v4529, %v4721
  %v4723 = vpop.f32.mrb[0].mxu0
  %v4724 = vadd.f32 %v4531, %v4723
  %4725 = vdwg.mxu0
  %4726 = vmatprep.subr.bf16.mxu0 %v3763
  %4727 = vmatpush1.bf16.msra.mxu0 %v3762
  %4728 = vmatprep.subr.bf16.mxu0 %v3765
  %4729 = vmatpush1.bf16.msra.mxu0 %v3764
  %4730 = vmatprep.subr.bf16.mxu0 %v3767
  %4731 = vmatpush1.bf16.msra.mxu0 %v3766
  %4732 = vmatprep.subr.bf16.mxu0 %v3769
  %4733 = vmatpush1.bf16.msra.mxu0 %v3768
  %4734 = vmatprep.subr.bf16.mxu0 %v3771
  %4735 = vmatpush1.bf16.msra.mxu0 %v3770
  %4736 = vmatprep.subr.bf16.mxu0 %v3773
  %4737 = vmatpush1.bf16.msra.mxu0 %v3772
  %4738 = vmatprep.subr.bf16.mxu0 %v3775
  %4739 = vmatpush1.bf16.msra.mxu0 %v3774
  %4740 = vmatprep.subr.bf16.mxu0 %v3777
  %4741 = vmatpush1.bf16.msra.mxu0 %v3776
  %4742 = vmatprep.subr.bf16.mxu0 %v3779
  %4743 = vmatpush1.bf16.msra.mxu0 %v3778
  %4744 = vmatprep.subr.bf16.mxu0 %v3781
  %4745 = vmatpush1.bf16.msra.mxu0 %v3780
  %4746 = vmatprep.subr.bf16.mxu0 %v3783
  %4747 = vmatpush1.bf16.msra.mxu0 %v3782
  %4748 = vmatprep.subr.bf16.mxu0 %v3785
  %4749 = vmatpush1.bf16.msra.mxu0 %v3784
  %4750 = vmatprep.subr.bf16.mxu0 %v3787
  %4751 = vmatpush1.bf16.msra.mxu0 %v3786
  %4752 = vmatprep.subr.bf16.mxu0 %v3789
  %4753 = vmatpush1.bf16.msra.mxu0 %v3788
  %4754 = vmatprep.subr.bf16.mxu0 %v3791
  %4755 = vmatpush1.bf16.msra.mxu0 %v3790
  %4756 = vmatprep.subr.bf16.mxu0 %v3793
  %4757 = vmatpush1.bf16.msra.mxu0 %v3792
  %4758 = vmatprep.mubr.bf16.mxu0 %v842
  %4759 = vmatmul.mubr.bf16.gmra.mrb[0].mxu0 %v841
  %v4760 = vpop.f32.mrb[0].mxu0
  %v4761 = vadd.f32 %v4568, %v4760
  %v4762 = vpop.f32.mrb[0].mxu0
  %v4763 = vadd.f32 %v4570, %v4762
  %v4764 = vpop.f32.mrb[0].mxu0
  %v4765 = vadd.f32 %v4572, %v4764
  %v4766 = vpop.f32.mrb[0].mxu0
  %v4767 = vadd.f32 %v4574, %v4766
  %4768 = vmatprep.mubr.bf16.mxu0 %v852
  %4769 = vmatmul.mubr.bf16.gmra.mrb[0].mxu0 %v851
  %v4770 = vpop.f32.mrb[0].mxu0
  %v4771 = vadd.f32 %v4578, %v4770
  %v4772 = vpop.f32.mrb[0].mxu0
  %v4773 = vadd.f32 %v4580, %v4772
  %v4774 = vpop.f32.mrb[0].mxu0
  %v4775 = vadd.f32 %v4582, %v4774
  %v4776 = vpop.f32.mrb[0].mxu0
  %v4777 = vadd.f32 %v4584, %v4776
  %4778 = vmatprep.mubr.bf16.mxu0 %v862
  %4779 = vmatmul.mubr.bf16.gmra.mrb[0].mxu0 %v861
  %v4780 = vpop.f32.mrb[0].mxu0
  %v4781 = vadd.f32 %v4588, %v4780
  %v4782 = vpop.f32.mrb[0].mxu0
  %v4783 = vadd.f32 %v4590, %v4782
  %v4784 = vpop.f32.mrb[0].mxu0
  %v4785 = vadd.f32 %v4592, %v4784
  %v4786 = vpop.f32.mrb[0].mxu0
  %v4787 = vadd.f32 %v4594, %v4786
  %4788 = vmatprep.mubr.bf16.mxu0 %v872
  %4789 = vmatmul.mubr.bf16.gmra.mrb[0].mxu0 %v871
  %v4790 = vpop.f32.mrb[0].mxu0
  %v4791 = vadd.f32 %v4598, %v4790
  %v4792 = vpop.f32.mrb[0].mxu0
  %v4793 = vadd.f32 %v4600, %v4792
  %v4794 = vpop.f32.mrb[0].mxu0
  %v4795 = vadd.f32 %v4602, %v4794
  %v4796 = vpop.f32.mrb[0].mxu0
  %v4797 = vadd.f32 %v4604, %v4796
  %4798 = vmatprep.mubr.bf16.mxu0 %v882
  %4799 = vmatmul.mubr.bf16.gmra.mrb[0].mxu0 %v881
  %v4800 = vpop.f32.mrb[0].mxu0
  %v4801 = vadd.f32 %v4608, %v4800
  %v4802 = vpop.f32.mrb[0].mxu0
  %v4803 = vadd.f32 %v4610, %v4802
  %v4804 = vpop.f32.mrb[0].mxu0
  %v4805 = vadd.f32 %v4612, %v4804
  %v4806 = vpop.f32.mrb[0].mxu0
  %v4807 = vadd.f32 %v4614, %v4806
  %4808 = vmatprep.mubr.bf16.mxu0 %v892
  %4809 = vmatmul.mubr.bf16.gmra.mrb[0].mxu0 %v891
  %v4810 = vpop.f32.mrb[0].mxu0
  %v4811 = vadd.f32 %v4618, %v4810
  %v4812 = vpop.f32.mrb[0].mxu0
  %v4813 = vadd.f32 %v4620, %v4812
  %v4814 = vpop.f32.mrb[0].mxu0
  %v4815 = vadd.f32 %v4622, %v4814
  %v4816 = vpop.f32.mrb[0].mxu0
  %v4817 = vadd.f32 %v4624, %v4816
  %4818 = vmatprep.mubr.bf16.mxu0 %v902
  %4819 = vmatmul.mubr.bf16.gmra.mrb[0].mxu0 %v901
  %v4820 = vpop.f32.mrb[0].mxu0
  %v4821 = vadd.f32 %v4628, %v4820
  %v4822 = vpop.f32.mrb[0].mxu0
  %v4823 = vadd.f32 %v4630, %v4822
  %v4824 = vpop.f32.mrb[0].mxu0
  %v4825 = vadd.f32 %v4632, %v4824
  %v4826 = vpop.f32.mrb[0].mxu0
  %v4827 = vadd.f32 %v4634, %v4826
  %4828 = vmatprep.mubr.bf16.mxu0 %v912
  %4829 = vmatmul.mubr.bf16.gmra.mrb[0].mxu0 %v911
  %v4830 = vpop.f32.mrb[0].mxu0
  %v4831 = vadd.f32 %v4638, %v4830
  %v4832 = vpop.f32.mrb[0].mxu0
  %v4833 = vadd.f32 %v4640, %v4832
  %v4834 = vpop.f32.mrb[0].mxu0
  %v4835 = vadd.f32 %v4642, %v4834
  %v4836 = vpop.f32.mrb[0].mxu0
  %v4837 = vadd.f32 %v4644, %v4836
  %4838 = vmatprep.mubr.bf16.mxu0 %v922
  %4839 = vmatmul.mubr.bf16.gmra.mrb[0].mxu0 %v921
  %v4840 = vpop.f32.mrb[0].mxu0
  %v4841 = vadd.f32 %v4648, %v4840
  %v4842 = vpop.f32.mrb[0].mxu0
  %v4843 = vadd.f32 %v4650, %v4842
  %v4844 = vpop.f32.mrb[0].mxu0
  %v4845 = vadd.f32 %v4652, %v4844
  %v4846 = vpop.f32.mrb[0].mxu0
  %v4847 = vadd.f32 %v4654, %v4846
  %4848 = vmatprep.mubr.bf16.mxu0 %v932
  %4849 = vmatmul.mubr.bf16.gmra.mrb[0].mxu0 %v931
  %v4850 = vpop.f32.mrb[0].mxu0
  %v4851 = vadd.f32 %v4658, %v4850
  %v4852 = vpop.f32.mrb[0].mxu0
  %v4853 = vadd.f32 %v4660, %v4852
  %v4854 = vpop.f32.mrb[0].mxu0
  %v4855 = vadd.f32 %v4662, %v4854
  %v4856 = vpop.f32.mrb[0].mxu0
  %v4857 = vadd.f32 %v4664, %v4856
  %4858 = vmatprep.mubr.bf16.mxu0 %v942
  %4859 = vmatmul.mubr.bf16.gmra.mrb[0].mxu0 %v941
  %v4860 = vpop.f32.mrb[0].mxu0
  %v4861 = vadd.f32 %v4668, %v4860
  %v4862 = vpop.f32.mrb[0].mxu0
  %v4863 = vadd.f32 %v4670, %v4862
  %v4864 = vpop.f32.mrb[0].mxu0
  %v4865 = vadd.f32 %v4672, %v4864
  %v4866 = vpop.f32.mrb[0].mxu0
  %v4867 = vadd.f32 %v4674, %v4866
  %4868 = vmatprep.mubr.bf16.mxu0 %v952
  %4869 = vmatmul.mubr.bf16.gmra.mrb[0].mxu0 %v951
  %v4870 = vpop.f32.mrb[0].mxu0
  %v4871 = vadd.f32 %v4678, %v4870
  %v4872 = vpop.f32.mrb[0].mxu0
  %v4873 = vadd.f32 %v4680, %v4872
  %v4874 = vpop.f32.mrb[0].mxu0
  %v4875 = vadd.f32 %v4682, %v4874
  %v4876 = vpop.f32.mrb[0].mxu0
  %v4877 = vadd.f32 %v4684, %v4876
  %4878 = vmatprep.mubr.bf16.mxu0 %v962
  %4879 = vmatmul.mubr.bf16.gmra.mrb[0].mxu0 %v961
  %v4880 = vpop.f32.mrb[0].mxu0
  %v4881 = vadd.f32 %v4688, %v4880
  %v4882 = vpop.f32.mrb[0].mxu0
  %v4883 = vadd.f32 %v4690, %v4882
  %v4884 = vpop.f32.mrb[0].mxu0
  %v4885 = vadd.f32 %v4692, %v4884
  %v4886 = vpop.f32.mrb[0].mxu0
  %v4887 = vadd.f32 %v4694, %v4886
  %4888 = vmatprep.mubr.bf16.mxu0 %v972
  %4889 = vmatmul.mubr.bf16.gmra.mrb[0].mxu0 %v971
  %v4890 = vpop.f32.mrb[0].mxu0
  %v4891 = vadd.f32 %v4698, %v4890
  %v4892 = vpop.f32.mrb[0].mxu0
  %v4893 = vadd.f32 %v4700, %v4892
  %v4894 = vpop.f32.mrb[0].mxu0
  %v4895 = vadd.f32 %v4702, %v4894
  %v4896 = vpop.f32.mrb[0].mxu0
  %v4897 = vadd.f32 %v4704, %v4896
  %4898 = vmatprep.mubr.bf16.mxu0 %v982
  %4899 = vmatmul.mubr.bf16.gmra.mrb[0].mxu0 %v981
  %v4900 = vpop.f32.mrb[0].mxu0
  %v4901 = vadd.f32 %v4708, %v4900
  %v4902 = vpop.f32.mrb[0].mxu0
  %v4903 = vadd.f32 %v4710, %v4902
  %v4904 = vpop.f32.mrb[0].mxu0
  %v4905 = vadd.f32 %v4712, %v4904
  %v4906 = vpop.f32.mrb[0].mxu0
  %v4907 = vadd.f32 %v4714, %v4906
  %4908 = vmatprep.mubr.bf16.mxu0 %v992
  %4909 = vmatmul.mubr.bf16.gmra.mrb[0].mxu0 %v991
  %v4910 = vpop.f32.mrb[0].mxu0
  %v4911 = vadd.f32 %v4718, %v4910
  %v4912 = vpop.f32.mrb[0].mxu0
  %v4913 = vadd.f32 %v4720, %v4912
  %v4914 = vpop.f32.mrb[0].mxu0
  %v4915 = vadd.f32 %v4722, %v4914
  %v4916 = vpop.f32.mrb[0].mxu0
  %v4917 = vadd.f32 %v4724, %v4916
  %4918 = vdwg.mxu0
  %v4919 = vpack.c.bf16 %v4765, %v4761
  %v4920 = vpack.c.bf16 %v4767, %v4763
  %v4921 = vpack.c.bf16 %v4775, %v4771
  %v4922 = vpack.c.bf16 %v4777, %v4773
  %v4923 = vpack.c.bf16 %v4785, %v4781
  %v4924 = vpack.c.bf16 %v4787, %v4783
  %v4925 = vpack.c.bf16 %v4795, %v4791
  %v4926 = vpack.c.bf16 %v4797, %v4793
  %v4927 = vpack.c.bf16 %v4805, %v4801
  %v4928 = vpack.c.bf16 %v4807, %v4803
  %v4929 = vpack.c.bf16 %v4815, %v4811
  %v4930 = vpack.c.bf16 %v4817, %v4813
  %v4931 = vpack.c.bf16 %v4825, %v4821
  %v4932 = vpack.c.bf16 %v4827, %v4823
  %v4933 = vpack.c.bf16 %v4835, %v4831
  %v4934 = vpack.c.bf16 %v4837, %v4833
  %v4935 = vpack.c.bf16 %v4845, %v4841
  %v4936 = vpack.c.bf16 %v4847, %v4843
  %v4937 = vpack.c.bf16 %v4855, %v4851
  %v4938 = vpack.c.bf16 %v4857, %v4853
  %v4939 = vpack.c.bf16 %v4865, %v4861
  %v4940 = vpack.c.bf16 %v4867, %v4863
  %v4941 = vpack.c.bf16 %v4875, %v4871
  %v4942 = vpack.c.bf16 %v4877, %v4873
  %v4943 = vpack.c.bf16 %v4885, %v4881
  %v4944 = vpack.c.bf16 %v4887, %v4883
  %v4945 = vpack.c.bf16 %v4895, %v4891
  %v4946 = vpack.c.bf16 %v4897, %v4893
  %v4947 = vpack.c.bf16 %v4905, %v4901
  %v4948 = vpack.c.bf16 %v4907, %v4903
  %v4949 = vpack.c.bf16 %v4915, %v4911
  %v4950 = vpack.c.bf16 %v4917, %v4913
  %v4951 = vld [vmem:[%s3 + $0x80] sm:$0xf]
  %v4952 = vld [vmem:[%s3 + $0x84] sm:$0xf]
  %v4953 = vld [vmem:[%s3 + $0x88] sm:$0xf]
  %v4954 = vld [vmem:[%s3 + $0x8c] sm:$0xf]
  %v4955 = vld [vmem:[%s3 + $0x90] sm:$0xf]
  %v4956 = vld [vmem:[%s3 + $0x94] sm:$0xf]
  %v4957 = vld [vmem:[%s3 + $0x98] sm:$0xf]
  %v4958 = vld [vmem:[%s3 + $0x9c] sm:$0xf]
  %v4959 = vld [vmem:[%s3 + $0xa0] sm:$0xf]
  %v4960 = vld [vmem:[%s3 + $0xa4] sm:$0xf]
  %v4961 = vld [vmem:[%s3 + $0xa8] sm:$0xf]
  %v4962 = vld [vmem:[%s3 + $0xac] sm:$0xf]
  %v4963 = vld [vmem:[%s3 + $0xb0] sm:$0xf]
  %v4964 = vld [vmem:[%s3 + $0xb4] sm:$0xf]
  %v4965 = vld [vmem:[%s3 + $0xb8] sm:$0xf]
  %v4966 = vld [vmem:[%s3 + $0xbc] sm:$0xf]
  %v4967 = vld [vmem:[%s3 + $0xc0] sm:$0xf]
  %v4968 = vld [vmem:[%s3 + $0xc4] sm:$0xf]
  %v4969 = vld [vmem:[%s3 + $0xc8] sm:$0xf]
  %v4970 = vld [vmem:[%s3 + $0xcc] sm:$0xf]
  %v4971 = vld [vmem:[%s3 + $0xd0] sm:$0xf]
  %v4972 = vld [vmem:[%s3 + $0xd4] sm:$0xf]
  %v4973 = vld [vmem:[%s3 + $0xd8] sm:$0xf]
  %v4974 = vld [vmem:[%s3 + $0xdc] sm:$0xf]
  %v4975 = vld [vmem:[%s3 + $0xe0] sm:$0xf]
  %v4976 = vld [vmem:[%s3 + $0xe4] sm:$0xf]
  %v4977 = vld [vmem:[%s3 + $0xe8] sm:$0xf]
  %v4978 = vld [vmem:[%s3 + $0xec] sm:$0xf]
  %v4979 = vld [vmem:[%s3 + $0xf0] sm:$0xf]
  %v4980 = vld [vmem:[%s3 + $0xf4] sm:$0xf]
  %v4981 = vld [vmem:[%s3 + $0xf8] sm:$0xf]
  %v4982 = vld [vmem:[%s3 + $0xfc] sm:$0xf]
  %v5015 = vunpack.c.l.b16 %v4951
  %v5016 = vunpack.c.l.b16 %v4952
  %v5017 = vunpack.c.l.b16 %v4953
  %v5018 = vunpack.c.l.b16 %v4954
  %v5019 = vunpack.c.l.b16 %v4955
  %v5020 = vunpack.c.l.b16 %v4956
  %v5021 = vunpack.c.l.b16 %v4957
  %v5022 = vunpack.c.l.b16 %v4958
  %v5023 = vunpack.c.l.b16 %v4959
  %v5024 = vunpack.c.l.b16 %v4960
  %v5025 = vunpack.c.l.b16 %v4961
  %v5026 = vunpack.c.l.b16 %v4962
  %v5027 = vunpack.c.l.b16 %v4963
  %v5028 = vunpack.c.l.b16 %v4964
  %v5029 = vunpack.c.l.b16 %v4965
  %v5030 = vunpack.c.l.b16 %v4966
  %v5031 = vunpack.c.l.b16 %v4967
  %v5032 = vunpack.c.l.b16 %v4968
  %v5033 = vunpack.c.l.b16 %v4969
  %v5034 = vunpack.c.l.b16 %v4970
  %v5035 = vunpack.c.l.b16 %v4971
  %v5036 = vunpack.c.l.b16 %v4972
  %v5037 = vunpack.c.l.b16 %v4973
  %v5038 = vunpack.c.l.b16 %v4974
  %v5039 = vunpack.c.l.b16 %v4975
  %v5040 = vunpack.c.l.b16 %v4976
  %v5041 = vunpack.c.l.b16 %v4977
  %v5042 = vunpack.c.l.b16 %v4978
  %v5043 = vunpack.c.l.b16 %v4979
  %v5044 = vunpack.c.l.b16 %v4980
  %v5045 = vunpack.c.l.b16 %v4981
  %v5046 = vunpack.c.l.b16 %v4982
  %v5047 = vpack.c.b16 %v5016, %v5015
  %v5048 = vpack.c.b16 %v5018, %v5017
  %v5049 = vpack.c.b16 %v5020, %v5019
  %v5050 = vpack.c.b16 %v5022, %v5021
  %v5051 = vpack.c.b16 %v5024, %v5023
  %v5052 = vpack.c.b16 %v5026, %v5025
  %v5053 = vpack.c.b16 %v5028, %v5027
  %v5054 = vpack.c.b16 %v5030, %v5029
  %v5055 = vpack.c.b16 %v5032, %v5031
  %v5056 = vpack.c.b16 %v5034, %v5033
  %v5057 = vpack.c.b16 %v5036, %v5035
  %v5058 = vpack.c.b16 %v5038, %v5037
  %v5059 = vpack.c.b16 %v5040, %v5039
  %v5060 = vpack.c.b16 %v5042, %v5041
  %v5061 = vpack.c.b16 %v5044, %v5043
  %v5062 = vpack.c.b16 %v5046, %v5045
  %5079 = vmatprep.subr.bf16.mxu0 0
  %5080 = vmatpush1.bf16.msra.mxu0 %v5047
  %5081 = vmatprep.subr.bf16.mxu0 0
  %5082 = vmatpush1.bf16.msra.mxu0 %v5048
  %5083 = vmatprep.subr.bf16.mxu0 0
  %5084 = vmatpush1.bf16.msra.mxu0 %v5049
  %5085 = vmatprep.subr.bf16.mxu0 0
  %5086 = vmatpush1.bf16.msra.mxu0 %v5050
  %5087 = vmatprep.subr.bf16.mxu0 0
  %5088 = vmatpush1.bf16.msra.mxu0 %v5051
  %5089 = vmatprep.subr.bf16.mxu0 0
  %5090 = vmatpush1.bf16.msra.mxu0 %v5052
  %5091 = vmatprep.subr.bf16.mxu0 0
  %5092 = vmatpush1.bf16.msra.mxu0 %v5053
  %5093 = vmatprep.subr.bf16.mxu0 0
  %5094 = vmatpush1.bf16.msra.mxu0 %v5054
  %5095 = vmatprep.subr.bf16.mxu0 0
  %5096 = vmatpush1.bf16.msra.mxu0 %v5055
  %5097 = vmatprep.subr.bf16.mxu0 0
  %5098 = vmatpush1.bf16.msra.mxu0 %v5056
  %5099 = vmatprep.subr.bf16.mxu0 0
  %5100 = vmatpush1.bf16.msra.mxu0 %v5057
  %5101 = vmatprep.subr.bf16.mxu0 0
  %5102 = vmatpush1.bf16.msra.mxu0 %v5058
  %5103 = vmatprep.subr.bf16.mxu0 0
  %5104 = vmatpush1.bf16.msra.mxu0 %v5059
  %5105 = vmatprep.subr.bf16.mxu0 0
  %5106 = vmatpush1.bf16.msra.mxu0 %v5060
  %5107 = vmatprep.subr.bf16.mxu0 0
  %5108 = vmatpush1.bf16.msra.mxu0 %v5061
  %5109 = vmatprep.subr.bf16.mxu0 0
  %5110 = vmatpush1.bf16.msra.mxu0 %v5062
  %5111 = vmatprep.mubr.bf16.mxu0 %v4920
  %5112 = vmatmul.mubr.bf16.gmra.mrb[0].mxu0 %v4919
  %v5113 = vpop.f32.mrb[0].mxu0
  %v5114 = vadd.f32 0.0, %v5113
  %v5115 = vpop.f32.mrb[0].mxu0
  %v5116 = vpop.f32.mrb[0].mxu0
  %v5117 = vadd.f32 0.0, %v5116
  %v5118 = vpop.f32.mrb[0].mxu0
  %5119 = vmatprep.mubr.bf16.mxu0 %v4922
  %5120 = vmatmul.mubr.bf16.gmra.mrb[0].mxu0 %v4921
  %v5121 = vpop.f32.mrb[0].mxu0
  %v5122 = vadd.f32 0.0, %v5121
  %v5123 = vpop.f32.mrb[0].mxu0
  %v5124 = vpop.f32.mrb[0].mxu0
  %v5125 = vadd.f32 0.0, %v5124
  %v5126 = vpop.f32.mrb[0].mxu0
  %5127 = vmatprep.mubr.bf16.mxu0 %v4924
  %5128 = vmatmul.mubr.bf16.gmra.mrb[0].mxu0 %v4923
  %v5129 = vpop.f32.mrb[0].mxu0
  %v5130 = vadd.f32 0.0, %v5129
  %v5131 = vpop.f32.mrb[0].mxu0
  %v5132 = vpop.f32.mrb[0].mxu0
  %v5133 = vadd.f32 0.0, %v5132
  %v5134 = vpop.f32.mrb[0].mxu0
  %5135 = vmatprep.mubr.bf16.mxu0 %v4926
  %5136 = vmatmul.mubr.bf16.gmra.mrb[0].mxu0 %v4925
  %v5137 = vpop.f32.mrb[0].mxu0
  %v5138 = vadd.f32 0.0, %v5137
  %v5139 = vpop.f32.mrb[0].mxu0
  %v5140 = vpop.f32.mrb[0].mxu0
  %v5141 = vadd.f32 0.0, %v5140
  %v5142 = vpop.f32.mrb[0].mxu0
  %5143 = vmatprep.mubr.bf16.mxu0 %v4928
  %5144 = vmatmul.mubr.bf16.gmra.mrb[0].mxu0 %v4927
  %v5145 = vpop.f32.mrb[0].mxu0
  %v5146 = vadd.f32 0.0, %v5145
  %v5147 = vpop.f32.mrb[0].mxu0
  %v5148 = vpop.f32.mrb[0].mxu0
  %v5149 = vadd.f32 0.0, %v5148
  %v5150 = vpop.f32.mrb[0].mxu0
  %5151 = vmatprep.mubr.bf16.mxu0 %v4930
  %5152 = vmatmul.mubr.bf16.gmra.mrb[0].mxu0 %v4929
  %v5153 = vpop.f32.mrb[0].mxu0
  %v5154 = vadd.f32 0.0, %v5153
  %v5155 = vpop.f32.mrb[0].mxu0
  %v5156 = vpop.f32.mrb[0].mxu0
  %v5157 = vadd.f32 0.0, %v5156
  %v5158 = vpop.f32.mrb[0].mxu0
  %5159 = vmatprep.mubr.bf16.mxu0 %v4932
  %5160 = vmatmul.mubr.bf16.gmra.mrb[0].mxu0 %v4931
  %v5161 = vpop.f32.mrb[0].mxu0
  %v5162 = vadd.f32 0.0, %v5161
  %v5163 = vpop.f32.mrb[0].mxu0
  %v5164 = vpop.f32.mrb[0].mxu0
  %v5165 = vadd.f32 0.0, %v5164
  %v5166 = vpop.f32.mrb[0].mxu0
  %5167 = vmatprep.mubr.bf16.mxu0 %v4934
  %5168 = vmatmul.mubr.bf16.gmra.mrb[0].mxu0 %v4933
  %v5169 = vpop.f32.mrb[0].mxu0
  %v5170 = vadd.f32 0.0, %v5169
  %v5171 = vpop.f32.mrb[0].mxu0
  %v5172 = vpop.f32.mrb[0].mxu0
  %v5173 = vadd.f32 0.0, %v5172
  %v5174 = vpop.f32.mrb[0].mxu0
  %5175 = vmatprep.mubr.bf16.mxu0 %v4936
  %5176 = vmatmul.mubr.bf16.gmra.mrb[0].mxu0 %v4935
  %v5177 = vpop.f32.mrb[0].mxu0
  %v5178 = vadd.f32 0.0, %v5177
  %v5179 = vpop.f32.mrb[0].mxu0
  %v5180 = vpop.f32.mrb[0].mxu0
  %v5181 = vadd.f32 0.0, %v5180
  %v5182 = vpop.f32.mrb[0].mxu0
  %5183 = vmatprep.mubr.bf16.mxu0 %v4938
  %5184 = vmatmul.mubr.bf16.gmra.mrb[0].mxu0 %v4937
  %v5185 = vpop.f32.mrb[0].mxu0
  %v5186 = vadd.f32 0.0, %v5185
  %v5187 = vpop.f32.mrb[0].mxu0
  %v5188 = vpop.f32.mrb[0].mxu0
  %v5189 = vadd.f32 0.0, %v5188
  %v5190 = vpop.f32.mrb[0].mxu0
  %5191 = vmatprep.mubr.bf16.mxu0 %v4940
  %5192 = vmatmul.mubr.bf16.gmra.mrb[0].mxu0 %v4939
  %v5193 = vpop.f32.mrb[0].mxu0
  %v5194 = vadd.f32 0.0, %v5193
  %v5195 = vpop.f32.mrb[0].mxu0
  %v5196 = vpop.f32.mrb[0].mxu0
  %v5197 = vadd.f32 0.0, %v5196
  %v5198 = vpop.f32.mrb[0].mxu0
  %5199 = vmatprep.mubr.bf16.mxu0 %v4942
  %5200 = vmatmul.mubr.bf16.gmra.mrb[0].mxu0 %v4941
  %v5201 = vpop.f32.mrb[0].mxu0
  %v5202 = vadd.f32 0.0, %v5201
  %v5203 = vpop.f32.mrb[0].mxu0
  %v5204 = vpop.f32.mrb[0].mxu0
  %v5205 = vadd.f32 0.0, %v5204
  %v5206 = vpop.f32.mrb[0].mxu0
  %5207 = vmatprep.mubr.bf16.mxu0 %v4944
  %5208 = vmatmul.mubr.bf16.gmra.mrb[0].mxu0 %v4943
  %v5209 = vpop.f32.mrb[0].mxu0
  %v5210 = vadd.f32 0.0, %v5209
  %v5211 = vpop.f32.mrb[0].mxu0
  %v5212 = vpop.f32.mrb[0].mxu0
  %v5213 = vadd.f32 0.0, %v5212
  %v5214 = vpop.f32.mrb[0].mxu0
  %5215 = vmatprep.mubr.bf16.mxu0 %v4946
  %5216 = vmatmul.mubr.bf16.gmra.mrb[0].mxu0 %v4945
  %v5217 = vpop.f32.mrb[0].mxu0
  %v5218 = vadd.f32 0.0, %v5217
  %v5219 = vpop.f32.mrb[0].mxu0
  %v5220 = vpop.f32.mrb[0].mxu0
  %v5221 = vadd.f32 0.0, %v5220
  %v5222 = vpop.f32.mrb[0].mxu0
  %5223 = vmatprep.mubr.bf16.mxu0 %v4948
  %5224 = vmatmul.mubr.bf16.gmra.mrb[0].mxu0 %v4947
  %v5225 = vpop.f32.mrb[0].mxu0
  %v5226 = vadd.f32 0.0, %v5225
  %v5227 = vpop.f32.mrb[0].mxu0
  %v5228 = vpop.f32.mrb[0].mxu0
  %v5229 = vadd.f32 0.0, %v5228
  %v5230 = vpop.f32.mrb[0].mxu0
  %5231 = vmatprep.mubr.bf16.mxu0 %v4950
  %5232 = vmatmul.mubr.bf16.gmra.mrb[0].mxu0 %v4949
  %v5233 = vpop.f32.mrb[0].mxu0
  %v5234 = vadd.f32 0.0, %v5233
  %v5235 = vpop.f32.mrb[0].mxu0
  %v5236 = vpop.f32.mrb[0].mxu0
  %v5237 = vadd.f32 0.0, %v5236
  %v5238 = vpop.f32.mrb[0].mxu0
  %5239 = vdwg.mxu0
  %v5272 = vunpack.c.l.b16 %v2950
  %v5273 = vunpack.c.l.b16 %v2951
  %v5274 = vunpack.c.l.b16 %v2952
  %v5275 = vunpack.c.l.b16 %v2953
  %v5276 = vunpack.c.l.b16 %v2954
  %v5277 = vunpack.c.l.b16 %v2955
  %v5278 = vunpack.c.l.b16 %v2956
  %v5279 = vunpack.c.l.b16 %v2957
  %v5280 = vunpack.c.l.b16 %v2958
  %v5281 = vunpack.c.l.b16 %v2959
  %v5282 = vunpack.c.l.b16 %v2960
  %v5283 = vunpack.c.l.b16 %v2961
  %v5284 = vunpack.c.l.b16 %v2962
  %v5285 = vunpack.c.l.b16 %v2963
  %v5286 = vunpack.c.l.b16 %v2964
  %v5287 = vunpack.c.l.b16 %v2965
  %v5288 = vunpack.c.l.b16 %v2966
  %v5289 = vunpack.c.l.b16 %v2967
  %v5290 = vunpack.c.l.b16 %v2968
  %v5291 = vunpack.c.l.b16 %v2969
  %v5292 = vunpack.c.l.b16 %v2970
  %v5293 = vunpack.c.l.b16 %v2971
  %v5294 = vunpack.c.l.b16 %v2972
  %v5295 = vunpack.c.l.b16 %v2973
  %v5296 = vunpack.c.l.b16 %v2974
  %v5297 = vunpack.c.l.b16 %v2975
  %v5298 = vunpack.c.l.b16 %v2976
  %v5299 = vunpack.c.l.b16 %v2977
  %v5300 = vunpack.c.l.b16 %v2978
  %v5301 = vunpack.c.l.b16 %v2979
  %v5302 = vunpack.c.l.b16 %v2980
  %v5303 = vunpack.c.l.b16 %v2981
  %v5304 = vpack.c.b16 %v5273, %v5272
  %v5305 = vpack.c.b16 %v5275, %v5274
  %v5306 = vpack.c.b16 %v5277, %v5276
  %v5307 = vpack.c.b16 %v5279, %v5278
  %v5308 = vpack.c.b16 %v5281, %v5280
  %v5309 = vpack.c.b16 %v5283, %v5282
  %v5310 = vpack.c.b16 %v5285, %v5284
  %v5311 = vpack.c.b16 %v5287, %v5286
  %v5312 = vpack.c.b16 %v5289, %v5288
  %v5313 = vpack.c.b16 %v5291, %v5290
  %v5314 = vpack.c.b16 %v5293, %v5292
  %v5315 = vpack.c.b16 %v5295, %v5294
  %v5316 = vpack.c.b16 %v5297, %v5296
  %v5317 = vpack.c.b16 %v5299, %v5298
  %v5318 = vpack.c.b16 %v5301, %v5300
  %v5319 = vpack.c.b16 %v5303, %v5302
  %5336 = vmatprep.subr.bf16.mxu0 0
  %5337 = vmatpush1.bf16.msra.mxu0 %v5304
  %5338 = vmatprep.subr.bf16.mxu0 0
  %5339 = vmatpush1.bf16.msra.mxu0 %v5305
  %5340 = vmatprep.subr.bf16.mxu0 0
  %5341 = vmatpush1.bf16.msra.mxu0 %v5306
  %5342 = vmatprep.subr.bf16.mxu0 0
  %5343 = vmatpush1.bf16.msra.mxu0 %v5307
  %5344 = vmatprep.subr.bf16.mxu0 0
  %5345 = vmatpush1.bf16.msra.mxu0 %v5308
  %5346 = vmatprep.subr.bf16.mxu0 0
  %5347 = vmatpush1.bf16.msra.mxu0 %v5309
  %5348 = vmatprep.subr.bf16.mxu0 0
  %5349 = vmatpush1.bf16.msra.mxu0 %v5310
  %5350 = vmatprep.subr.bf16.mxu0 0
  %5351 = vmatpush1.bf16.msra.mxu0 %v5311
  %5352 = vmatprep.subr.bf16.mxu0 0
  %5353 = vmatpush1.bf16.msra.mxu0 %v5312
  %5354 = vmatprep.subr.bf16.mxu0 0
  %5355 = vmatpush1.bf16.msra.mxu0 %v5313
  %5356 = vmatprep.subr.bf16.mxu0 0
  %5357 = vmatpush1.bf16.msra.mxu0 %v5314
  %5358 = vmatprep.subr.bf16.mxu0 0
  %5359 = vmatpush1.bf16.msra.mxu0 %v5315
  %5360 = vmatprep.subr.bf16.mxu0 0
  %5361 = vmatpush1.bf16.msra.mxu0 %v5316
  %5362 = vmatprep.subr.bf16.mxu0 0
  %5363 = vmatpush1.bf16.msra.mxu0 %v5317
  %5364 = vmatprep.subr.bf16.mxu0 0
  %5365 = vmatpush1.bf16.msra.mxu0 %v5318
  %5366 = vmatprep.subr.bf16.mxu0 0
  %5367 = vmatpush1.bf16.msra.mxu0 %v5319
  %5368 = vmatprep.mubr.bf16.mxu0 %v2919
  %5369 = vmatmul.mubr.bf16.gmra.mrb[0].mxu0 %v2918
  %v5370 = vpop.f32.mrb[0].mxu0
  %v5371 = vadd.f32 %v5114, %v5370
  %v5372 = vpop.f32.mrb[0].mxu0
  %v5373 = vpop.f32.mrb[0].mxu0
  %v5374 = vadd.f32 %v5117, %v5373
  %v5375 = vpop.f32.mrb[0].mxu0
  %5376 = vmatprep.mubr.bf16.mxu0 %v2921
  %5377 = vmatmul.mubr.bf16.gmra.mrb[0].mxu0 %v2920
  %v5378 = vpop.f32.mrb[0].mxu0
  %v5379 = vadd.f32 %v5122, %v5378
  %v5380 = vpop.f32.mrb[0].mxu0
  %v5381 = vpop.f32.mrb[0].mxu0
  %v5382 = vadd.f32 %v5125, %v5381
  %v5383 = vpop.f32.mrb[0].mxu0
  %5384 = vmatprep.mubr.bf16.mxu0 %v2923
  %5385 = vmatmul.mubr.bf16.gmra.mrb[0].mxu0 %v2922
  %v5386 = vpop.f32.mrb[0].mxu0
  %v5387 = vadd.f32 %v5130, %v5386
  %v5388 = vpop.f32.mrb[0].mxu0
  %v5389 = vpop.f32.mrb[0].mxu0
  %v5390 = vadd.f32 %v5133, %v5389
  %v5391 = vpop.f32.mrb[0].mxu0
  %5392 = vmatprep.mubr.bf16.mxu0 %v2925
  %5393 = vmatmul.mubr.bf16.gmra.mrb[0].mxu0 %v2924
  %v5394 = vpop.f32.mrb[0].mxu0
  %v5395 = vadd.f32 %v5138, %v5394
  %v5396 = vpop.f32.mrb[0].mxu0
  %v5397 = vpop.f32.mrb[0].mxu0
  %v5398 = vadd.f32 %v5141, %v5397
  %v5399 = vpop.f32.mrb[0].mxu0
  %5400 = vmatprep.mubr.bf16.mxu0 %v2927
  %5401 = vmatmul.mubr.bf16.gmra.mrb[0].mxu0 %v2926
  %v5402 = vpop.f32.mrb[0].mxu0
  %v5403 = vadd.f32 %v5146, %v5402
  %v5404 = vpop.f32.mrb[0].mxu0
  %v5405 = vpop.f32.mrb[0].mxu0
  %v5406 = vadd.f32 %v5149, %v5405
  %v5407 = vpop.f32.mrb[0].mxu0
  %5408 = vmatprep.mubr.bf16.mxu0 %v2929
  %5409 = vmatmul.mubr.bf16.gmra.mrb[0].mxu0 %v2928
  %v5410 = vpop.f32.mrb[0].mxu0
  %v5411 = vadd.f32 %v5154, %v5410
  %v5412 = vpop.f32.mrb[0].mxu0
  %v5413 = vpop.f32.mrb[0].mxu0
  %v5414 = vadd.f32 %v5157, %v5413
  %v5415 = vpop.f32.mrb[0].mxu0
  %5416 = vmatprep.mubr.bf16.mxu0 %v2931
  %5417 = vmatmul.mubr.bf16.gmra.mrb[0].mxu0 %v2930
  %v5418 = vpop.f32.mrb[0].mxu0
  %v5419 = vadd.f32 %v5162, %v5418
  %v5420 = vpop.f32.mrb[0].mxu0
  %v5421 = vpop.f32.mrb[0].mxu0
  %v5422 = vadd.f32 %v5165, %v5421
  %v5423 = vpop.f32.mrb[0].mxu0
  %5424 = vmatprep.mubr.bf16.mxu0 %v2933
  %5425 = vmatmul.mubr.bf16.gmra.mrb[0].mxu0 %v2932
  %v5426 = vpop.f32.mrb[0].mxu0
  %v5427 = vadd.f32 %v5170, %v5426
  %v5428 = vpop.f32.mrb[0].mxu0
  %v5429 = vpop.f32.mrb[0].mxu0
  %v5430 = vadd.f32 %v5173, %v5429
  %v5431 = vpop.f32.mrb[0].mxu0
  %5432 = vmatprep.mubr.bf16.mxu0 %v2935
  %5433 = vmatmul.mubr.bf16.gmra.mrb[0].mxu0 %v2934
  %v5434 = vpop.f32.mrb[0].mxu0
  %v5435 = vadd.f32 %v5178, %v5434
  %v5436 = vpop.f32.mrb[0].mxu0
  %v5437 = vpop.f32.mrb[0].mxu0
  %v5438 = vadd.f32 %v5181, %v5437
  %v5439 = vpop.f32.mrb[0].mxu0
  %5440 = vmatprep.mubr.bf16.mxu0 %v2937
  %5441 = vmatmul.mubr.bf16.gmra.mrb[0].mxu0 %v2936
  %v5442 = vpop.f32.mrb[0].mxu0
  %v5443 = vadd.f32 %v5186, %v5442
  %v5444 = vpop.f32.mrb[0].mxu0
  %v5445 = vpop.f32.mrb[0].mxu0
  %v5446 = vadd.f32 %v5189, %v5445
  %v5447 = vpop.f32.mrb[0].mxu0
  %5448 = vmatprep.mubr.bf16.mxu0 %v2939
  %5449 = vmatmul.mubr.bf16.gmra.mrb[0].mxu0 %v2938
  %v5450 = vpop.f32.mrb[0].mxu0
  %v5451 = vadd.f32 %v5194, %v5450
  %v5452 = vpop.f32.mrb[0].mxu0
  %v5453 = vpop.f32.mrb[0].mxu0
  %v5454 = vadd.f32 %v5197, %v5453
  %v5455 = vpop.f32.mrb[0].mxu0
  %5456 = vmatprep.mubr.bf16.mxu0 %v2941
  %5457 = vmatmul.mubr.bf16.gmra.mrb[0].mxu0 %v2940
  %v5458 = vpop.f32.mrb[0].mxu0
  %v5459 = vadd.f32 %v5202, %v5458
  %v5460 = vpop.f32.mrb[0].mxu0
  %v5461 = vpop.f32.mrb[0].mxu0
  %v5462 = vadd.f32 %v5205, %v5461
  %v5463 = vpop.f32.mrb[0].mxu0
  %5464 = vmatprep.mubr.bf16.mxu0 %v2943
  %5465 = vmatmul.mubr.bf16.gmra.mrb[0].mxu0 %v2942
  %v5466 = vpop.f32.mrb[0].mxu0
  %v5467 = vadd.f32 %v5210, %v5466
  %v5468 = vpop.f32.mrb[0].mxu0
  %v5469 = vpop.f32.mrb[0].mxu0
  %v5470 = vadd.f32 %v5213, %v5469
  %v5471 = vpop.f32.mrb[0].mxu0
  %5472 = vmatprep.mubr.bf16.mxu0 %v2945
  %5473 = vmatmul.mubr.bf16.gmra.mrb[0].mxu0 %v2944
  %v5474 = vpop.f32.mrb[0].mxu0
  %v5475 = vadd.f32 %v5218, %v5474
  %v5476 = vpop.f32.mrb[0].mxu0
  %v5477 = vpop.f32.mrb[0].mxu0
  %v5478 = vadd.f32 %v5221, %v5477
  %v5479 = vpop.f32.mrb[0].mxu0
  %5480 = vmatprep.mubr.bf16.mxu0 %v2947
  %5481 = vmatmul.mubr.bf16.gmra.mrb[0].mxu0 %v2946
  %v5482 = vpop.f32.mrb[0].mxu0
  %v5483 = vadd.f32 %v5226, %v5482
  %v5484 = vpop.f32.mrb[0].mxu0
  %v5485 = vpop.f32.mrb[0].mxu0
  %v5486 = vadd.f32 %v5229, %v5485
  %v5487 = vpop.f32.mrb[0].mxu0
  %5488 = vmatprep.mubr.bf16.mxu0 %v2949
  %5489 = vmatmul.mubr.bf16.gmra.mrb[0].mxu0 %v2948
  %v5490 = vpop.f32.mrb[0].mxu0
  %v5491 = vadd.f32 %v5234, %v5490
  %v5492 = vpop.f32.mrb[0].mxu0
  %v5493 = vpop.f32.mrb[0].mxu0
  %v5494 = vadd.f32 %v5237, %v5493
  %v5495 = vpop.f32.mrb[0].mxu0
  %5496 = vdwg.mxu0
  %v5497 = vld [vmem:[%s1 + $0x10] sm:$0xff]
  %v5498 = vld [vmem:[%s1 + $0x38] sm:$0xff]
  %v5499 = vld [vmem:[%s1 + $0x60] sm:$0xff]
  %v5500 = vld [vmem:[%s1 + $0x88] sm:$0xff]
  %v5501 = vld [vmem:[%s1 + $0xb0] sm:$0xff]
  %v5502 = vld [vmem:[%s1 + $0xd8] sm:$0xff]
  %v5503 = vld [vmem:[%s1 + $0x100] sm:$0xff]
  %v5504 = vld [vmem:[%s1 + $0x128] sm:$0xff]
  %v5505 = vld [vmem:[%s1 + $0x150] sm:$0xff]
  %v5506 = vld [vmem:[%s1 + $0x178] sm:$0xff]
  %v5507 = vld [vmem:[%s1 + $0x1a0] sm:$0xff]
  %v5508 = vld [vmem:[%s1 + $0x1c8] sm:$0xff]
  %v5509 = vld [vmem:[%s1 + $0x1f0] sm:$0xff]
  %v5510 = vld [vmem:[%s1 + $0x218] sm:$0xff]
  %v5511 = vld [vmem:[%s1 + $0x240] sm:$0xff]
  %v5512 = vld [vmem:[%s1 + $0x268] sm:$0xff]
  %v5513 = vld [vmem:[%s1 + $0x290] sm:$0xff]
  %v5514 = vld [vmem:[%s1 + $0x2b8] sm:$0xff]
  %v5515 = vld [vmem:[%s1 + $0x2e0] sm:$0xff]
  %v5516 = vld [vmem:[%s1 + $0x308] sm:$0xff]
  %v5517 = vld [vmem:[%s1 + $0x330] sm:$0xff]
  %v5518 = vld [vmem:[%s1 + $0x358] sm:$0xff]
  %v5519 = vld [vmem:[%s1 + $0x380] sm:$0xff]
  %v5520 = vld [vmem:[%s1 + $0x3a8] sm:$0xff]
  %v5521 = vld [vmem:[%s1 + $0x3d0] sm:$0xff]
  %v5522 = vld [vmem:[%s1 + $0x3f8] sm:$0xff]
  %v5523 = vld [vmem:[%s1 + $0x420] sm:$0xff]
  %v5524 = vld [vmem:[%s1 + $0x448] sm:$0xff]
  %v5525 = vld [vmem:[%s1 + $0x470] sm:$0xff]
  %v5526 = vld [vmem:[%s1 + $0x498] sm:$0xff]
  %v5527 = vld [vmem:[%s1 + $0x4c0] sm:$0xff]
  %v5528 = vld [vmem:[%s1 + $0x4e8] sm:$0xff]
  %v5529 = vld [vmem:[%s1 + $0x510] sm:$0xff]
  %v5530 = vld [vmem:[%s1 + $0x538] sm:$0xff]
  %v5531 = vld [vmem:[%s1 + $0x560] sm:$0xff]
  %v5532 = vld [vmem:[%s1 + $0x588] sm:$0xff]
  %v5533 = vld [vmem:[%s1 + $0x5b0] sm:$0xff]
  %v5534 = vld [vmem:[%s1 + $0x5d8] sm:$0xff]
  %v5535 = vld [vmem:[%s1 + $0x600] sm:$0xff]
  %v5536 = vld [vmem:[%s1 + $0x628] sm:$0xff]
  %v5537 = vld [vmem:[%s1 + $0x650] sm:$0xff]
  %v5538 = vld [vmem:[%s1 + $0x678] sm:$0xff]
  %v5539 = vld [vmem:[%s1 + $0x6a0] sm:$0xff]
  %v5540 = vld [vmem:[%s1 + $0x6c8] sm:$0xff]
  %v5541 = vld [vmem:[%s1 + $0x6f0] sm:$0xff]
  %v5542 = vld [vmem:[%s1 + $0x718] sm:$0xff]
  %v5543 = vld [vmem:[%s1 + $0x740] sm:$0xff]
  %v5544 = vld [vmem:[%s1 + $0x768] sm:$0xff]
  %v5545 = vld [vmem:[%s1 + $0x790] sm:$0xff]
  %v5546 = vld [vmem:[%s1 + $0x7b8] sm:$0xff]
  %v5547 = vld [vmem:[%s1 + $0x7e0] sm:$0xff]
  %v5548 = vld [vmem:[%s1 + $0x808] sm:$0xff]
  %v5549 = vld [vmem:[%s1 + $0x830] sm:$0xff]
  %v5550 = vld [vmem:[%s1 + $0x858] sm:$0xff]
  %v5551 = vld [vmem:[%s1 + $0x880] sm:$0xff]
  %v5552 = vld [vmem:[%s1 + $0x8a8] sm:$0xff]
  %v5553 = vld [vmem:[%s1 + $0x8d0] sm:$0xff]
  %v5554 = vld [vmem:[%s1 + $0x8f8] sm:$0xff]
  %v5555 = vld [vmem:[%s1 + $0x920] sm:$0xff]
  %v5556 = vld [vmem:[%s1 + $0x948] sm:$0xff]
  %v5557 = vld [vmem:[%s1 + $0x970] sm:$0xff]
  %v5558 = vld [vmem:[%s1 + $0x998] sm:$0xff]
  %v5559 = vld [vmem:[%s1 + $0x9c0] sm:$0xff]
  %v5560 = vld [vmem:[%s1 + $0x9e8] sm:$0xff]
  %v5561 = vld [vmem:[%s1 + $0xa10] sm:$0xff]
  %v5562 = vld [vmem:[%s1 + $0xa38] sm:$0xff]
  %v5563 = vld [vmem:[%s1 + $0xa60] sm:$0xff]
  %v5564 = vld [vmem:[%s1 + $0xa88] sm:$0xff]
  %v5565 = vld [vmem:[%s1 + $0xab0] sm:$0xff]
  %v5566 = vld [vmem:[%s1 + $0xad8] sm:$0xff]
  %v5567 = vld [vmem:[%s1 + $0xb00] sm:$0xff]
  %v5568 = vld [vmem:[%s1 + $0xb28] sm:$0xff]
  %v5569 = vld [vmem:[%s1 + $0xb50] sm:$0xff]
  %v5570 = vld [vmem:[%s1 + $0xb78] sm:$0xff]
  %v5571 = vld [vmem:[%s1 + $0xba0] sm:$0xff]
  %v5572 = vld [vmem:[%s1 + $0xbc8] sm:$0xff]
  %v5573 = vld [vmem:[%s1 + $0xbf0] sm:$0xff]
  %v5574 = vld [vmem:[%s1 + $0xc18] sm:$0xff]
  %v5575 = vld [vmem:[%s1 + $0xc40] sm:$0xff]
  %v5576 = vld [vmem:[%s1 + $0xc68] sm:$0xff]
  %v5577 = vld [vmem:[%s1 + $0xc90] sm:$0xff]
  %v5578 = vld [vmem:[%s1 + $0xcb8] sm:$0xff]
  %v5579 = vld [vmem:[%s1 + $0xce0] sm:$0xff]
  %v5580 = vld [vmem:[%s1 + $0xd08] sm:$0xff]
  %v5581 = vld [vmem:[%s1 + $0xd30] sm:$0xff]
  %v5582 = vld [vmem:[%s1 + $0xd58] sm:$0xff]
  %v5583 = vld [vmem:[%s1 + $0xd80] sm:$0xff]
  %v5584 = vld [vmem:[%s1 + $0xda8] sm:$0xff]
  %v5585 = vld [vmem:[%s1 + $0xdd0] sm:$0xff]
  %v5586 = vld [vmem:[%s1 + $0xdf8] sm:$0xff]
  %v5587 = vld [vmem:[%s1 + $0xe20] sm:$0xff]
  %v5588 = vld [vmem:[%s1 + $0xe48] sm:$0xff]
  %v5589 = vld [vmem:[%s1 + $0xe70] sm:$0xff]
  %v5590 = vld [vmem:[%s1 + $0xe98] sm:$0xff]
  %v5591 = vld [vmem:[%s1 + $0xec0] sm:$0xff]
  %v5592 = vld [vmem:[%s1 + $0xee8] sm:$0xff]
  %v5593 = vld [vmem:[%s1 + $0xf10] sm:$0xff]
  %v5594 = vld [vmem:[%s1 + $0xf38] sm:$0xff]
  %v5595 = vld [vmem:[%s1 + $0xf60] sm:$0xff]
  %v5596 = vld [vmem:[%s1 + $0xf88] sm:$0xff]
  %v5597 = vld [vmem:[%s1 + $0xfb0] sm:$0xff]
  %v5598 = vld [vmem:[%s1 + $0xfd8] sm:$0xff]
  %v5599 = vld [vmem:[%s1 + $0x1000] sm:$0xff]
  %v5600 = vld [vmem:[%s1 + $0x1028] sm:$0xff]
  %v5601 = vld [vmem:[%s1 + $0x1050] sm:$0xff]
  %v5602 = vld [vmem:[%s1 + $0x1078] sm:$0xff]
  %v5603 = vld [vmem:[%s1 + $0x10a0] sm:$0xff]
  %v5604 = vld [vmem:[%s1 + $0x10c8] sm:$0xff]
  %v5605 = vld [vmem:[%s1 + $0x10f0] sm:$0xff]
  %v5606 = vld [vmem:[%s1 + $0x1118] sm:$0xff]
  %v5607 = vld [vmem:[%s1 + $0x1140] sm:$0xff]
  %v5608 = vld [vmem:[%s1 + $0x1168] sm:$0xff]
  %v5609 = vld [vmem:[%s1 + $0x1190] sm:$0xff]
  %v5610 = vld [vmem:[%s1 + $0x11b8] sm:$0xff]
  %v5611 = vld [vmem:[%s1 + $0x11e0] sm:$0xff]
  %v5612 = vld [vmem:[%s1 + $0x1208] sm:$0xff]
  %v5613 = vld [vmem:[%s1 + $0x1230] sm:$0xff]
  %v5614 = vld [vmem:[%s1 + $0x1258] sm:$0xff]
  %v5615 = vld [vmem:[%s1 + $0x1280] sm:$0xff]
  %v5616 = vld [vmem:[%s1 + $0x12a8] sm:$0xff]
  %v5617 = vld [vmem:[%s1 + $0x12d0] sm:$0xff]
  %v5618 = vld [vmem:[%s1 + $0x12f8] sm:$0xff]
  %v5619 = vld [vmem:[%s1 + $0x1320] sm:$0xff]
  %v5620 = vld [vmem:[%s1 + $0x1348] sm:$0xff]
  %v5621 = vld [vmem:[%s1 + $0x1370] sm:$0xff]
  %v5622 = vld [vmem:[%s1 + $0x1398] sm:$0xff]
  %v5623 = vld [vmem:[%s1 + $0x13c0] sm:$0xff]
  %v5624 = vld [vmem:[%s1 + $0x13e8] sm:$0xff]
  %v5625 = vld [vmem:[%s1 + $0x1410] sm:$0xff]
  %v5626 = vld [vmem:[%s1 + $0x1438] sm:$0xff]
  %v5627 = vld [vmem:[%s1 + $0x1460] sm:$0xff]
  %v5628 = vld [vmem:[%s1 + $0x1488] sm:$0xff]
  %v5629 = vld [vmem:[%s1 + $0x14b0] sm:$0xff]
  %v5630 = vld [vmem:[%s1 + $0x14d8] sm:$0xff]
  %v5631 = vld [vmem:[%s1 + $0x1500] sm:$0xff]
  %v5632 = vld [vmem:[%s1 + $0x1528] sm:$0xff]
  %v5633 = vld [vmem:[%s1 + $0x1550] sm:$0xff]
  %v5634 = vld [vmem:[%s1 + $0x1578] sm:$0xff]
  %v5635 = vld [vmem:[%s1 + $0x15a0] sm:$0xff]
  %v5636 = vld [vmem:[%s1 + $0x15c8] sm:$0xff]
  %v5637 = vld [vmem:[%s1 + $0x15f0] sm:$0xff]
  %v5638 = vld [vmem:[%s1 + $0x1618] sm:$0xff]
  %v5639 = vld [vmem:[%s1 + $0x1640] sm:$0xff]
  %v5640 = vld [vmem:[%s1 + $0x1668] sm:$0xff]
  %v5641 = vld [vmem:[%s1 + $0x1690] sm:$0xff]
  %v5642 = vld [vmem:[%s1 + $0x16b8] sm:$0xff]
  %v5643 = vld [vmem:[%s1 + $0x16e0] sm:$0xff]
  %v5644 = vld [vmem:[%s1 + $0x1708] sm:$0xff]
  %v5645 = vld [vmem:[%s1 + $0x1730] sm:$0xff]
  %v5646 = vld [vmem:[%s1 + $0x1758] sm:$0xff]
  %v5647 = vld [vmem:[%s1 + $0x1780] sm:$0xff]
  %v5648 = vld [vmem:[%s1 + $0x17a8] sm:$0xff]
  %v5649 = vld [vmem:[%s1 + $0x17d0] sm:$0xff]
  %v5650 = vld [vmem:[%s1 + $0x17f8] sm:$0xff]
  %v5651 = vld [vmem:[%s1 + $0x1820] sm:$0xff]
  %v5652 = vld [vmem:[%s1 + $0x1848] sm:$0xff]
  %v5653 = vld [vmem:[%s1 + $0x1870] sm:$0xff]
  %v5654 = vld [vmem:[%s1 + $0x1898] sm:$0xff]
  %v5655 = vld [vmem:[%s1 + $0x18c0] sm:$0xff]
  %v5656 = vld [vmem:[%s1 + $0x18e8] sm:$0xff]
  %v5657 = vld [vmem:[%s2 + $0x4] sm:$0x3]
  %v5659 = vlaneseq
  %v5660 = vshrl.u32 %v5659, 7
  %v5661 = vsub.s32 0, %v5660
  %v5662 = vrot.slane %v5657, %v5661
  %v5663 = vlaneseq
  %v5664 = vshrl.u32 %v5663, 7
  %v5665 = vsub.s32 1, %v5664
  %v5666 = vrot.slane %v5657, %v5665
  %v5829 = vunpack.c.l.b16 %v5497
  %v5830 = vunpack.c.h.b16 %v5497
  %v5831 = vunpack.c.l.b16 %v5498
  %v5832 = vunpack.c.h.b16 %v5498
  %v5833 = vunpack.c.l.b16 %v5499
  %v5834 = vunpack.c.h.b16 %v5499
  %v5835 = vunpack.c.l.b16 %v5500
  %v5836 = vunpack.c.h.b16 %v5500
  %v5837 = vunpack.c.l.b16 %v5501
  %v5838 = vunpack.c.h.b16 %v5501
  %v5839 = vunpack.c.l.b16 %v5502
  %v5840 = vunpack.c.h.b16 %v5502
  %v5841 = vunpack.c.l.b16 %v5503
  %v5842 = vunpack.c.h.b16 %v5503
  %v5843 = vunpack.c.l.b16 %v5504
  %v5844 = vunpack.c.h.b16 %v5504
  %v5845 = vunpack.c.l.b16 %v5505
  %v5846 = vunpack.c.h.b16 %v5505
  %v5847 = vunpack.c.l.b16 %v5506
  %v5848 = vunpack.c.h.b16 %v5506
  %v5849 = vunpack.c.l.b16 %v5507
  %v5850 = vunpack.c.h.b16 %v5507
  %v5851 = vunpack.c.l.b16 %v5508
  %v5852 = vunpack.c.h.b16 %v5508
  %v5853 = vunpack.c.l.b16 %v5509
  %v5854 = vunpack.c.h.b16 %v5509
  %v5855 = vunpack.c.l.b16 %v5510
  %v5856 = vunpack.c.h.b16 %v5510
  %v5857 = vunpack.c.l.b16 %v5511
  %v5858 = vunpack.c.h.b16 %v5511
  %v5859 = vunpack.c.l.b16 %v5512
  %v5860 = vunpack.c.h.b16 %v5512
  %v5861 = vunpack.c.l.b16 %v5513
  %v5862 = vunpack.c.h.b16 %v5513
  %v5863 = vunpack.c.l.b16 %v5514
  %v5864 = vunpack.c.h.b16 %v5514
  %v5865 = vunpack.c.l.b16 %v5515
  %v5866 = vunpack.c.h.b16 %v5515
  %v5867 = vunpack.c.l.b16 %v5516
  %v5868 = vunpack.c.h.b16 %v5516
  %v5869 = vunpack.c.l.b16 %v5517
  %v5870 = vunpack.c.h.b16 %v5517
  %v5871 = vunpack.c.l.b16 %v5518
  %v5872 = vunpack.c.h.b16 %v5518
  %v5873 = vunpack.c.l.b16 %v5519
  %v5874 = vunpack.c.h.b16 %v5519
  %v5875 = vunpack.c.l.b16 %v5520
  %v5876 = vunpack.c.h.b16 %v5520
  %v5877 = vunpack.c.l.b16 %v5521
  %v5878 = vunpack.c.h.b16 %v5521
  %v5879 = vunpack.c.l.b16 %v5522
  %v5880 = vunpack.c.h.b16 %v5522
  %v5881 = vunpack.c.l.b16 %v5523
  %v5882 = vunpack.c.h.b16 %v5523
  %v5883 = vunpack.c.l.b16 %v5524
  %v5884 = vunpack.c.h.b16 %v5524
  %v5885 = vunpack.c.l.b16 %v5525
  %v5886 = vunpack.c.h.b16 %v5525
  %v5887 = vunpack.c.l.b16 %v5526
  %v5888 = vunpack.c.h.b16 %v5526
  %v5889 = vunpack.c.l.b16 %v5527
  %v5890 = vunpack.c.h.b16 %v5527
  %v5891 = vunpack.c.l.b16 %v5528
  %v5892 = vunpack.c.h.b16 %v5528
  %v5893 = vunpack.c.l.b16 %v5529
  %v5894 = vunpack.c.h.b16 %v5529
  %v5895 = vunpack.c.l.b16 %v5530
  %v5896 = vunpack.c.h.b16 %v5530
  %v5897 = vunpack.c.l.b16 %v5531
  %v5898 = vunpack.c.h.b16 %v5531
  %v5899 = vunpack.c.l.b16 %v5532
  %v5900 = vunpack.c.h.b16 %v5532
  %v5901 = vunpack.c.l.b16 %v5533
  %v5902 = vunpack.c.h.b16 %v5533
  %v5903 = vunpack.c.l.b16 %v5534
  %v5904 = vunpack.c.h.b16 %v5534
  %v5905 = vunpack.c.l.b16 %v5535
  %v5906 = vunpack.c.h.b16 %v5535
  %v5907 = vunpack.c.l.b16 %v5536
  %v5908 = vunpack.c.h.b16 %v5536
  %v5909 = vunpack.c.l.b16 %v5537
  %v5910 = vunpack.c.h.b16 %v5537
  %v5911 = vunpack.c.l.b16 %v5538
  %v5912 = vunpack.c.h.b16 %v5538
  %v5913 = vunpack.c.l.b16 %v5539
  %v5914 = vunpack.c.h.b16 %v5539
  %v5915 = vunpack.c.l.b16 %v5540
  %v5916 = vunpack.c.h.b16 %v5540
  %v5917 = vunpack.c.l.b16 %v5541
  %v5918 = vunpack.c.h.b16 %v5541
  %v5919 = vunpack.c.l.b16 %v5542
  %v5920 = vunpack.c.h.b16 %v5542
  %v5921 = vunpack.c.l.b16 %v5543
  %v5922 = vunpack.c.h.b16 %v5543
  %v5923 = vunpack.c.l.b16 %v5544
  %v5924 = vunpack.c.h.b16 %v5544
  %v5925 = vunpack.c.l.b16 %v5545
  %v5926 = vunpack.c.h.b16 %v5545
  %v5927 = vunpack.c.l.b16 %v5546
  %v5928 = vunpack.c.h.b16 %v5546
  %v5929 = vunpack.c.l.b16 %v5547
  %v5930 = vunpack.c.h.b16 %v5547
  %v5931 = vunpack.c.l.b16 %v5548
  %v5932 = vunpack.c.h.b16 %v5548
  %v5933 = vunpack.c.l.b16 %v5549
  %v5934 = vunpack.c.h.b16 %v5549
  %v5935 = vunpack.c.l.b16 %v5550
  %v5936 = vunpack.c.h.b16 %v5550
  %v5937 = vunpack.c.l.b16 %v5551
  %v5938 = vunpack.c.h.b16 %v5551
  %v5939 = vunpack.c.l.b16 %v5552
  %v5940 = vunpack.c.h.b16 %v5552
  %v5941 = vunpack.c.l.b16 %v5553
  %v5942 = vunpack.c.h.b16 %v5553
  %v5943 = vunpack.c.l.b16 %v5554
  %v5944 = vunpack.c.h.b16 %v5554
  %v5945 = vunpack.c.l.b16 %v5555
  %v5946 = vunpack.c.h.b16 %v5555
  %v5947 = vunpack.c.l.b16 %v5556
  %v5948 = vunpack.c.h.b16 %v5556
  %v5949 = vunpack.c.l.b16 %v5557
  %v5950 = vunpack.c.h.b16 %v5557
  %v5951 = vunpack.c.l.b16 %v5558
  %v5952 = vunpack.c.h.b16 %v5558
  %v5953 = vunpack.c.l.b16 %v5559
  %v5954 = vunpack.c.h.b16 %v5559
  %v5955 = vunpack.c.l.b16 %v5560
  %v5956 = vunpack.c.h.b16 %v5560
  %v5957 = vunpack.c.l.b16 %v5561
  %v5958 = vunpack.c.h.b16 %v5561
  %v5959 = vunpack.c.l.b16 %v5562
  %v5960 = vunpack.c.h.b16 %v5562
  %v5961 = vunpack.c.l.b16 %v5563
  %v5962 = vunpack.c.h.b16 %v5563
  %v5963 = vunpack.c.l.b16 %v5564
  %v5964 = vunpack.c.h.b16 %v5564
  %v5965 = vunpack.c.l.b16 %v5565
  %v5966 = vunpack.c.h.b16 %v5565
  %v5967 = vunpack.c.l.b16 %v5566
  %v5968 = vunpack.c.h.b16 %v5566
  %v5969 = vunpack.c.l.b16 %v5567
  %v5970 = vunpack.c.h.b16 %v5567
  %v5971 = vunpack.c.l.b16 %v5568
  %v5972 = vunpack.c.h.b16 %v5568
  %v5973 = vunpack.c.l.b16 %v5569
  %v5974 = vunpack.c.h.b16 %v5569
  %v5975 = vunpack.c.l.b16 %v5570
  %v5976 = vunpack.c.h.b16 %v5570
  %v5977 = vunpack.c.l.b16 %v5571
  %v5978 = vunpack.c.h.b16 %v5571
  %v5979 = vunpack.c.l.b16 %v5572
  %v5980 = vunpack.c.h.b16 %v5572
  %v5981 = vunpack.c.l.b16 %v5573
  %v5982 = vunpack.c.h.b16 %v5573
  %v5983 = vunpack.c.l.b16 %v5574
  %v5984 = vunpack.c.h.b16 %v5574
  %v5985 = vunpack.c.l.b16 %v5575
  %v5986 = vunpack.c.h.b16 %v5575
  %v5987 = vunpack.c.l.b16 %v5576
  %v5988 = vunpack.c.h.b16 %v5576
  %v5989 = vunpack.c.l.b16 %v5577
  %v5990 = vunpack.c.h.b16 %v5577
  %v5991 = vunpack.c.l.b16 %v5578
  %v5992 = vunpack.c.h.b16 %v5578
  %v5993 = vunpack.c.l.b16 %v5579
  %v5994 = vunpack.c.h.b16 %v5579
  %v5995 = vunpack.c.l.b16 %v5580
  %v5996 = vunpack.c.h.b16 %v5580
  %v5997 = vunpack.c.l.b16 %v5581
  %v5998 = vunpack.c.h.b16 %v5581
  %v5999 = vunpack.c.l.b16 %v5582
  %v6000 = vunpack.c.h.b16 %v5582
  %v6001 = vunpack.c.l.b16 %v5583
  %v6002 = vunpack.c.h.b16 %v5583
  %v6003 = vunpack.c.l.b16 %v5584
  %v6004 = vunpack.c.h.b16 %v5584
  %v6005 = vunpack.c.l.b16 %v5585
  %v6006 = vunpack.c.h.b16 %v5585
  %v6007 = vunpack.c.l.b16 %v5586
  %v6008 = vunpack.c.h.b16 %v5586
  %v6009 = vunpack.c.l.b16 %v5587
  %v6010 = vunpack.c.h.b16 %v5587
  %v6011 = vunpack.c.l.b16 %v5588
  %v6012 = vunpack.c.h.b16 %v5588
  %v6013 = vunpack.c.l.b16 %v5589
  %v6014 = vunpack.c.h.b16 %v5589
  %v6015 = vunpack.c.l.b16 %v5590
  %v6016 = vunpack.c.h.b16 %v5590
  %v6017 = vunpack.c.l.b16 %v5591
  %v6018 = vunpack.c.h.b16 %v5591
  %v6019 = vunpack.c.l.b16 %v5592
  %v6020 = vunpack.c.h.b16 %v5592
  %v6021 = vunpack.c.l.b16 %v5593
  %v6022 = vunpack.c.h.b16 %v5593
  %v6023 = vunpack.c.l.b16 %v5594
  %v6024 = vunpack.c.h.b16 %v5594
  %v6025 = vunpack.c.l.b16 %v5595
  %v6026 = vunpack.c.h.b16 %v5595
  %v6027 = vunpack.c.l.b16 %v5596
  %v6028 = vunpack.c.h.b16 %v5596
  %v6029 = vunpack.c.l.b16 %v5597
  %v6030 = vunpack.c.h.b16 %v5597
  %v6031 = vunpack.c.l.b16 %v5598
  %v6032 = vunpack.c.h.b16 %v5598
  %v6033 = vunpack.c.l.b16 %v5599
  %v6034 = vunpack.c.h.b16 %v5599
  %v6035 = vunpack.c.l.b16 %v5600
  %v6036 = vunpack.c.h.b16 %v5600
  %v6037 = vunpack.c.l.b16 %v5601
  %v6038 = vunpack.c.h.b16 %v5601
  %v6039 = vunpack.c.l.b16 %v5602
  %v6040 = vunpack.c.h.b16 %v5602
  %v6041 = vunpack.c.l.b16 %v5603
  %v6042 = vunpack.c.h.b16 %v5603
  %v6043 = vunpack.c.l.b16 %v5604
  %v6044 = vunpack.c.h.b16 %v5604
  %v6045 = vunpack.c.l.b16 %v5605
  %v6046 = vunpack.c.h.b16 %v5605
  %v6047 = vunpack.c.l.b16 %v5606
  %v6048 = vunpack.c.h.b16 %v5606
  %v6049 = vunpack.c.l.b16 %v5607
  %v6050 = vunpack.c.h.b16 %v5607
  %v6051 = vunpack.c.l.b16 %v5608
  %v6052 = vunpack.c.h.b16 %v5608
  %v6053 = vunpack.c.l.b16 %v5609
  %v6054 = vunpack.c.h.b16 %v5609
  %v6055 = vunpack.c.l.b16 %v5610
  %v6056 = vunpack.c.h.b16 %v5610
  %v6057 = vunpack.c.l.b16 %v5611
  %v6058 = vunpack.c.h.b16 %v5611
  %v6059 = vunpack.c.l.b16 %v5612
  %v6060 = vunpack.c.h.b16 %v5612
  %v6061 = vunpack.c.l.b16 %v5613
  %v6062 = vunpack.c.h.b16 %v5613
  %v6063 = vunpack.c.l.b16 %v5614
  %v6064 = vunpack.c.h.b16 %v5614
  %v6065 = vunpack.c.l.b16 %v5615
  %v6066 = vunpack.c.h.b16 %v5615
  %v6067 = vunpack.c.l.b16 %v5616
  %v6068 = vunpack.c.h.b16 %v5616
  %v6069 = vunpack.c.l.b16 %v5617
  %v6070 = vunpack.c.h.b16 %v5617
  %v6071 = vunpack.c.l.b16 %v5618
  %v6072 = vunpack.c.h.b16 %v5618
  %v6073 = vunpack.c.l.b16 %v5619
  %v6074 = vunpack.c.h.b16 %v5619
  %v6075 = vunpack.c.l.b16 %v5620
  %v6076 = vunpack.c.h.b16 %v5620
  %v6077 = vunpack.c.l.b16 %v5621
  %v6078 = vunpack.c.h.b16 %v5621
  %v6079 = vunpack.c.l.b16 %v5622
  %v6080 = vunpack.c.h.b16 %v5622
  %v6081 = vunpack.c.l.b16 %v5623
  %v6082 = vunpack.c.h.b16 %v5623
  %v6083 = vunpack.c.l.b16 %v5624
  %v6084 = vunpack.c.h.b16 %v5624
  %v6085 = vunpack.c.l.b16 %v5625
  %v6086 = vunpack.c.h.b16 %v5625
  %v6087 = vunpack.c.l.b16 %v5626
  %v6088 = vunpack.c.h.b16 %v5626
  %v6089 = vunpack.c.l.b16 %v5627
  %v6090 = vunpack.c.h.b16 %v5627
  %v6091 = vunpack.c.l.b16 %v5628
  %v6092 = vunpack.c.h.b16 %v5628
  %v6093 = vunpack.c.l.b16 %v5629
  %v6094 = vunpack.c.h.b16 %v5629
  %v6095 = vunpack.c.l.b16 %v5630
  %v6096 = vunpack.c.h.b16 %v5630
  %v6097 = vunpack.c.l.b16 %v5631
  %v6098 = vunpack.c.h.b16 %v5631
  %v6099 = vunpack.c.l.b16 %v5632
  %v6100 = vunpack.c.h.b16 %v5632
  %v6101 = vunpack.c.l.b16 %v5633
  %v6102 = vunpack.c.h.b16 %v5633
  %v6103 = vunpack.c.l.b16 %v5634
  %v6104 = vunpack.c.h.b16 %v5634
  %v6105 = vunpack.c.l.b16 %v5635
  %v6106 = vunpack.c.h.b16 %v5635
  %v6107 = vunpack.c.l.b16 %v5636
  %v6108 = vunpack.c.h.b16 %v5636
  %v6109 = vunpack.c.l.b16 %v5637
  %v6110 = vunpack.c.h.b16 %v5637
  %v6111 = vunpack.c.l.b16 %v5638
  %v6112 = vunpack.c.h.b16 %v5638
  %v6113 = vunpack.c.l.b16 %v5639
  %v6114 = vunpack.c.h.b16 %v5639
  %v6115 = vunpack.c.l.b16 %v5640
  %v6116 = vunpack.c.h.b16 %v5640
  %v6117 = vunpack.c.l.b16 %v5641
  %v6118 = vunpack.c.h.b16 %v5641
  %v6119 = vunpack.c.l.b16 %v5642
  %v6120 = vunpack.c.h.b16 %v5642
  %v6121 = vunpack.c.l.b16 %v5643
  %v6122 = vunpack.c.h.b16 %v5643
  %v6123 = vunpack.c.l.b16 %v5644
  %v6124 = vunpack.c.h.b16 %v5644
  %v6125 = vunpack.c.l.b16 %v5645
  %v6126 = vunpack.c.h.b16 %v5645
  %v6127 = vunpack.c.l.b16 %v5646
  %v6128 = vunpack.c.h.b16 %v5646
  %v6129 = vunpack.c.l.b16 %v5647
  %v6130 = vunpack.c.h.b16 %v5647
  %v6131 = vunpack.c.l.b16 %v5648
  %v6132 = vunpack.c.h.b16 %v5648
  %v6133 = vunpack.c.l.b16 %v5649
  %v6134 = vunpack.c.h.b16 %v5649
  %v6135 = vunpack.c.l.b16 %v5650
  %v6136 = vunpack.c.h.b16 %v5650
  %v6137 = vunpack.c.l.b16 %v5651
  %v6138 = vunpack.c.h.b16 %v5651
  %v6139 = vunpack.c.l.b16 %v5652
  %v6140 = vunpack.c.h.b16 %v5652
  %v6141 = vunpack.c.l.b16 %v5653
  %v6142 = vunpack.c.h.b16 %v5653
  %v6143 = vunpack.c.l.b16 %v5654
  %v6144 = vunpack.c.h.b16 %v5654
  %v6145 = vunpack.c.l.b16 %v5655
  %v6146 = vunpack.c.h.b16 %v5655
  %v6147 = vunpack.c.l.b16 %v5656
  %v6148 = vunpack.c.h.b16 %v5656
  %v6149 = vpack.c.b16 %v5831, %v5829
  %v6150 = vpack.c.b16 %v5832, %v5830
  %v6151 = vpack.c.b16 %v5835, %v5833
  %v6152 = vpack.c.b16 %v5836, %v5834
  %v6153 = vpack.c.b16 %v5839, %v5837
  %v6154 = vpack.c.b16 %v5840, %v5838
  %v6155 = vpack.c.b16 %v5843, %v5841
  %v6156 = vpack.c.b16 %v5844, %v5842
  %v6157 = vpack.c.b16 %v5847, %v5845
  %v6158 = vpack.c.b16 %v5848, %v5846
  %v6159 = vpack.c.b16 %v5851, %v5849
  %v6160 = vpack.c.b16 %v5852, %v5850
  %v6161 = vpack.c.b16 %v5855, %v5853
  %v6162 = vpack.c.b16 %v5856, %v5854
  %v6163 = vpack.c.b16 %v5859, %v5857
  %v6164 = vpack.c.b16 %v5860, %v5858
  %v6165 = vpack.c.b16 %v5863, %v5861
  %v6166 = vpack.c.b16 %v5864, %v5862
  %v6167 = vpack.c.b16 %v5867, %v5865
  %v6168 = vpack.c.b16 %v5868, %v5866
  %v6169 = vpack.c.b16 %v5871, %v5869
  %v6170 = vpack.c.b16 %v5872, %v5870
  %v6171 = vpack.c.b16 %v5875, %v5873
  %v6172 = vpack.c.b16 %v5876, %v5874
  %v6173 = vpack.c.b16 %v5879, %v5877
  %v6174 = vpack.c.b16 %v5880, %v5878
  %v6175 = vpack.c.b16 %v5883, %v5881
  %v6176 = vpack.c.b16 %v5884, %v5882
  %v6177 = vpack.c.b16 %v5887, %v5885
  %v6178 = vpack.c.b16 %v5888, %v5886
  %v6179 = vpack.c.b16 %v5891, %v5889
  %v6180 = vpack.c.b16 %v5892, %v5890
  %v6181 = vpack.c.b16 %v5895, %v5893
  %v6182 = vpack.c.b16 %v5896, %v5894
  %v6183 = vpack.c.b16 %v5899, %v5897
  %v6184 = vpack.c.b16 %v5900, %v5898
  %v6185 = vpack.c.b16 %v5903, %v5901
  %v6186 = vpack.c.b16 %v5904, %v5902
  %v6187 = vpack.c.b16 %v5907, %v5905
  %v6188 = vpack.c.b16 %v5908, %v5906
  %v6189 = vpack.c.b16 %v5911, %v5909
  %v6190 = vpack.c.b16 %v5912, %v5910
  %v6191 = vpack.c.b16 %v5915, %v5913
  %v6192 = vpack.c.b16 %v5916, %v5914
  %v6193 = vpack.c.b16 %v5919, %v5917
  %v6194 = vpack.c.b16 %v5920, %v5918
  %v6195 = vpack.c.b16 %v5923, %v5921
  %v6196 = vpack.c.b16 %v5924, %v5922
  %v6197 = vpack.c.b16 %v5927, %v5925
  %v6198 = vpack.c.b16 %v5928, %v5926
  %v6199 = vpack.c.b16 %v5931, %v5929
  %v6200 = vpack.c.b16 %v5932, %v5930
  %v6201 = vpack.c.b16 %v5935, %v5933
  %v6202 = vpack.c.b16 %v5936, %v5934
  %v6203 = vpack.c.b16 %v5939, %v5937
  %v6204 = vpack.c.b16 %v5940, %v5938
  %v6205 = vpack.c.b16 %v5943, %v5941
  %v6206 = vpack.c.b16 %v5944, %v5942
  %v6207 = vpack.c.b16 %v5947, %v5945
  %v6208 = vpack.c.b16 %v5948, %v5946
  %v6209 = vpack.c.b16 %v5951, %v5949
  %v6210 = vpack.c.b16 %v5952, %v5950
  %v6211 = vpack.c.b16 %v5955, %v5953
  %v6212 = vpack.c.b16 %v5956, %v5954
  %v6213 = vpack.c.b16 %v5959, %v5957
  %v6214 = vpack.c.b16 %v5960, %v5958
  %v6215 = vpack.c.b16 %v5963, %v5961
  %v6216 = vpack.c.b16 %v5964, %v5962
  %v6217 = vpack.c.b16 %v5967, %v5965
  %v6218 = vpack.c.b16 %v5968, %v5966
  %v6219 = vpack.c.b16 %v5971, %v5969
  %v6220 = vpack.c.b16 %v5972, %v5970
  %v6221 = vpack.c.b16 %v5975, %v5973
  %v6222 = vpack.c.b16 %v5976, %v5974
  %v6223 = vpack.c.b16 %v5979, %v5977
  %v6224 = vpack.c.b16 %v5980, %v5978
  %v6225 = vpack.c.b16 %v5983, %v5981
  %v6226 = vpack.c.b16 %v5984, %v5982
  %v6227 = vpack.c.b16 %v5987, %v5985
  %v6228 = vpack.c.b16 %v5988, %v5986
  %v6229 = vpack.c.b16 %v5991, %v5989
  %v6230 = vpack.c.b16 %v5992, %v5990
  %v6231 = vpack.c.b16 %v5995, %v5993
  %v6232 = vpack.c.b16 %v5996, %v5994
  %v6233 = vpack.c.b16 %v5999, %v5997
  %v6234 = vpack.c.b16 %v6000, %v5998
  %v6235 = vpack.c.b16 %v6003, %v6001
  %v6236 = vpack.c.b16 %v6004, %v6002
  %v6237 = vpack.c.b16 %v6007, %v6005
  %v6238 = vpack.c.b16 %v6008, %v6006
  %v6239 = vpack.c.b16 %v6011, %v6009
  %v6240 = vpack.c.b16 %v6012, %v6010
  %v6241 = vpack.c.b16 %v6015, %v6013
  %v6242 = vpack.c.b16 %v6016, %v6014
  %v6243 = vpack.c.b16 %v6019, %v6017
  %v6244 = vpack.c.b16 %v6020, %v6018
  %v6245 = vpack.c.b16 %v6023, %v6021
  %v6246 = vpack.c.b16 %v6024, %v6022
  %v6247 = vpack.c.b16 %v6027, %v6025
  %v6248 = vpack.c.b16 %v6028, %v6026
  %v6249 = vpack.c.b16 %v6031, %v6029
  %v6250 = vpack.c.b16 %v6032, %v6030
  %v6251 = vpack.c.b16 %v6035, %v6033
  %v6252 = vpack.c.b16 %v6036, %v6034
  %v6253 = vpack.c.b16 %v6039, %v6037
  %v6254 = vpack.c.b16 %v6040, %v6038
  %v6255 = vpack.c.b16 %v6043, %v6041
  %v6256 = vpack.c.b16 %v6044, %v6042
  %v6257 = vpack.c.b16 %v6047, %v6045
  %v6258 = vpack.c.b16 %v6048, %v6046
  %v6259 = vpack.c.b16 %v6051, %v6049
  %v6260 = vpack.c.b16 %v6052, %v6050
  %v6261 = vpack.c.b16 %v6055, %v6053
  %v6262 = vpack.c.b16 %v6056, %v6054
  %v6263 = vpack.c.b16 %v6059, %v6057
  %v6264 = vpack.c.b16 %v6060, %v6058
  %v6265 = vpack.c.b16 %v6063, %v6061
  %v6266 = vpack.c.b16 %v6064, %v6062
  %v6267 = vpack.c.b16 %v6067, %v6065
  %v6268 = vpack.c.b16 %v6068, %v6066
  %v6269 = vpack.c.b16 %v6071, %v6069
  %v6270 = vpack.c.b16 %v6072, %v6070
  %v6271 = vpack.c.b16 %v6075, %v6073
  %v6272 = vpack.c.b16 %v6076, %v6074
  %v6273 = vpack.c.b16 %v6079, %v6077
  %v6274 = vpack.c.b16 %v6080, %v6078
  %v6275 = vpack.c.b16 %v6083, %v6081
  %v6276 = vpack.c.b16 %v6084, %v6082
  %v6277 = vpack.c.b16 %v6087, %v6085
  %v6278 = vpack.c.b16 %v6088, %v6086
  %v6279 = vpack.c.b16 %v6091, %v6089
  %v6280 = vpack.c.b16 %v6092, %v6090
  %v6281 = vpack.c.b16 %v6095, %v6093
  %v6282 = vpack.c.b16 %v6096, %v6094
  %v6283 = vpack.c.b16 %v6099, %v6097
  %v6284 = vpack.c.b16 %v6100, %v6098
  %v6285 = vpack.c.b16 %v6103, %v6101
  %v6286 = vpack.c.b16 %v6104, %v6102
  %v6287 = vpack.c.b16 %v6107, %v6105
  %v6288 = vpack.c.b16 %v6108, %v6106
  %v6289 = vpack.c.b16 %v6111, %v6109
  %v6290 = vpack.c.b16 %v6112, %v6110
  %v6291 = vpack.c.b16 %v6115, %v6113
  %v6292 = vpack.c.b16 %v6116, %v6114
  %v6293 = vpack.c.b16 %v6119, %v6117
  %v6294 = vpack.c.b16 %v6120, %v6118
  %v6295 = vpack.c.b16 %v6123, %v6121
  %v6296 = vpack.c.b16 %v6124, %v6122
  %v6297 = vpack.c.b16 %v6127, %v6125
  %v6298 = vpack.c.b16 %v6128, %v6126
  %v6299 = vpack.c.b16 %v6131, %v6129
  %v6300 = vpack.c.b16 %v6132, %v6130
  %v6301 = vpack.c.b16 %v6135, %v6133
  %v6302 = vpack.c.b16 %v6136, %v6134
  %v6303 = vpack.c.b16 %v6139, %v6137
  %v6304 = vpack.c.b16 %v6140, %v6138
  %v6305 = vpack.c.b16 %v6143, %v6141
  %v6306 = vpack.c.b16 %v6144, %v6142
  %v6307 = vpack.c.b16 %v6147, %v6145
  %v6308 = vpack.c.b16 %v6148, %v6146
  %6469 = vmatprep.subr.bf16.mxu0 %v6150
  %6470 = vmatpush1.bf16.msra.mxu0 %v6149
  %6471 = vmatprep.subr.bf16.mxu0 %v6152
  %6472 = vmatpush1.bf16.msra.mxu0 %v6151
  %6473 = vmatprep.subr.bf16.mxu0 %v6154
  %6474 = vmatpush1.bf16.msra.mxu0 %v6153
  %6475 = vmatprep.subr.bf16.mxu0 %v6156
  %6476 = vmatpush1.bf16.msra.mxu0 %v6155
  %6477 = vmatprep.subr.bf16.mxu0 %v6158
  %6478 = vmatpush1.bf16.msra.mxu0 %v6157
  %6479 = vmatprep.subr.bf16.mxu0 %v6160
  %6480 = vmatpush1.bf16.msra.mxu0 %v6159
  %6481 = vmatprep.subr.bf16.mxu0 %v6162
  %6482 = vmatpush1.bf16.msra.mxu0 %v6161
  %6483 = vmatprep.subr.bf16.mxu0 %v6164
  %6484 = vmatpush1.bf16.msra.mxu0 %v6163
  %6485 = vmatprep.subr.bf16.mxu0 %v6166
  %6486 = vmatpush1.bf16.msra.mxu0 %v6165
  %6487 = vmatprep.subr.bf16.mxu0 %v6168
  %6488 = vmatpush1.bf16.msra.mxu0 %v6167
  %6489 = vmatprep.subr.bf16.mxu0 %v6170
  %6490 = vmatpush1.bf16.msra.mxu0 %v6169
  %6491 = vmatprep.subr.bf16.mxu0 %v6172
  %6492 = vmatpush1.bf16.msra.mxu0 %v6171
  %6493 = vmatprep.subr.bf16.mxu0 %v6174
  %6494 = vmatpush1.bf16.msra.mxu0 %v6173
  %6495 = vmatprep.subr.bf16.mxu0 %v6176
  %6496 = vmatpush1.bf16.msra.mxu0 %v6175
  %6497 = vmatprep.subr.bf16.mxu0 %v6178
  %6498 = vmatpush1.bf16.msra.mxu0 %v6177
  %6499 = vmatprep.subr.bf16.mxu0 %v6180
  %6500 = vmatpush1.bf16.msra.mxu0 %v6179
  %6501 = vmatprep.mubr.bf16.mxu0 %v834
  %6502 = vmatmul.mubr.bf16.gmra.mrb[0].mxu0 %v833
  %v6503 = vpop.f32.mrb[0].mxu0
  %v6504 = vadd.f32 %v5662, %v6503
  %v6505 = vpop.f32.mrb[0].mxu0
  %v6506 = vadd.f32 %v5666, %v6505
  %v6507 = vpop.f32.mrb[0].mxu0
  %v6508 = vadd.f32 %v5662, %v6507
  %v6509 = vpop.f32.mrb[0].mxu0
  %v6510 = vadd.f32 %v5666, %v6509
  %6511 = vmatprep.mubr.bf16.mxu0 %v844
  %6512 = vmatmul.mubr.bf16.gmra.mrb[0].mxu0 %v843
  %v6513 = vpop.f32.mrb[0].mxu0
  %v6514 = vadd.f32 %v5662, %v6513
  %v6515 = vpop.f32.mrb[0].mxu0
  %v6516 = vadd.f32 %v5666, %v6515
  %v6517 = vpop.f32.mrb[0].mxu0
  %v6518 = vadd.f32 %v5662, %v6517
  %v6519 = vpop.f32.mrb[0].mxu0
  %v6520 = vadd.f32 %v5666, %v6519
  %6521 = vmatprep.mubr.bf16.mxu0 %v854
  %6522 = vmatmul.mubr.bf16.gmra.mrb[0].mxu0 %v853
  %v6523 = vpop.f32.mrb[0].mxu0
  %v6524 = vadd.f32 %v5662, %v6523
  %v6525 = vpop.f32.mrb[0].mxu0
  %v6526 = vadd.f32 %v5666, %v6525
  %v6527 = vpop.f32.mrb[0].mxu0
  %v6528 = vadd.f32 %v5662, %v6527
  %v6529 = vpop.f32.mrb[0].mxu0
  %v6530 = vadd.f32 %v5666, %v6529
  %6531 = vmatprep.mubr.bf16.mxu0 %v864
  %6532 = vmatmul.mubr.bf16.gmra.mrb[0].mxu0 %v863
  %v6533 = vpop.f32.mrb[0].mxu0
  %v6534 = vadd.f32 %v5662, %v6533
  %v6535 = vpop.f32.mrb[0].mxu0
  %v6536 = vadd.f32 %v5666, %v6535
  %v6537 = vpop.f32.mrb[0].mxu0
  %v6538 = vadd.f32 %v5662, %v6537
  %v6539 = vpop.f32.mrb[0].mxu0
  %v6540 = vadd.f32 %v5666, %v6539
  %6541 = vmatprep.mubr.bf16.mxu0 %v874
  %6542 = vmatmul.mubr.bf16.gmra.mrb[0].mxu0 %v873
  %v6543 = vpop.f32.mrb[0].mxu0
  %v6544 = vadd.f32 %v5662, %v6543
  %v6545 = vpop.f32.mrb[0].mxu0
  %v6546 = vadd.f32 %v5666, %v6545
  %v6547 = vpop.f32.mrb[0].mxu0
  %v6548 = vadd.f32 %v5662, %v6547
  %v6549 = vpop.f32.mrb[0].mxu0
  %v6550 = vadd.f32 %v5666, %v6549
  %6551 = vmatprep.mubr.bf16.mxu0 %v884
  %6552 = vmatmul.mubr.bf16.gmra.mrb[0].mxu0 %v883
  %v6553 = vpop.f32.mrb[0].mxu0
  %v6554 = vadd.f32 %v5662, %v6553
  %v6555 = vpop.f32.mrb[0].mxu0
  %v6556 = vadd.f32 %v5666, %v6555
  %v6557 = vpop.f32.mrb[0].mxu0
  %v6558 = vadd.f32 %v5662, %v6557
  %v6559 = vpop.f32.mrb[0].mxu0
  %v6560 = vadd.f32 %v5666, %v6559
  %6561 = vmatprep.mubr.bf16.mxu0 %v894
  %6562 = vmatmul.mubr.bf16.gmra.mrb[0].mxu0 %v893
  %v6563 = vpop.f32.mrb[0].mxu0
  %v6564 = vadd.f32 %v5662, %v6563
  %v6565 = vpop.f32.mrb[0].mxu0
  %v6566 = vadd.f32 %v5666, %v6565
  %v6567 = vpop.f32.mrb[0].mxu0
  %v6568 = vadd.f32 %v5662, %v6567
  %v6569 = vpop.f32.mrb[0].mxu0
  %v6570 = vadd.f32 %v5666, %v6569
  %6571 = vmatprep.mubr.bf16.mxu0 %v904
  %6572 = vmatmul.mubr.bf16.gmra.mrb[0].mxu0 %v903
  %v6573 = vpop.f32.mrb[0].mxu0
  %v6574 = vadd.f32 %v5662, %v6573
  %v6575 = vpop.f32.mrb[0].mxu0
  %v6576 = vadd.f32 %v5666, %v6575
  %v6577 = vpop.f32.mrb[0].mxu0
  %v6578 = vadd.f32 %v5662, %v6577
  %v6579 = vpop.f32.mrb[0].mxu0
  %v6580 = vadd.f32 %v5666, %v6579
  %6581 = vmatprep.mubr.bf16.mxu0 %v914
  %6582 = vmatmul.mubr.bf16.gmra.mrb[0].mxu0 %v913
  %v6583 = vpop.f32.mrb[0].mxu0
  %v6584 = vadd.f32 %v5662, %v6583
  %v6585 = vpop.f32.mrb[0].mxu0
  %v6586 = vadd.f32 %v5666, %v6585
  %v6587 = vpop.f32.mrb[0].mxu0
  %v6588 = vadd.f32 %v5662, %v6587
  %v6589 = vpop.f32.mrb[0].mxu0
  %v6590 = vadd.f32 %v5666, %v6589
  %6591 = vmatprep.mubr.bf16.mxu0 %v924
  %6592 = vmatmul.mubr.bf16.gmra.mrb[0].mxu0 %v923
  %v6593 = vpop.f32.mrb[0].mxu0
  %v6594 = vadd.f32 %v5662, %v6593
  %v6595 = vpop.f32.mrb[0].mxu0
  %v6596 = vadd.f32 %v5666, %v6595
  %v6597 = vpop.f32.mrb[0].mxu0
  %v6598 = vadd.f32 %v5662, %v6597
  %v6599 = vpop.f32.mrb[0].mxu0
  %v6600 = vadd.f32 %v5666, %v6599
  %6601 = vmatprep.mubr.bf16.mxu0 %v934
  %6602 = vmatmul.mubr.bf16.gmra.mrb[0].mxu0 %v933
  %v6603 = vpop.f32.mrb[0].mxu0
  %v6604 = vadd.f32 %v5662, %v6603
  %v6605 = vpop.f32.mrb[0].mxu0
  %v6606 = vadd.f32 %v5666, %v6605
  %v6607 = vpop.f32.mrb[0].mxu0
  %v6608 = vadd.f32 %v5662, %v6607
  %v6609 = vpop.f32.mrb[0].mxu0
  %v6610 = vadd.f32 %v5666, %v6609
  %6611 = vmatprep.mubr.bf16.mxu0 %v944
  %6612 = vmatmul.mubr.bf16.gmra.mrb[0].mxu0 %v943
  %v6613 = vpop.f32.mrb[0].mxu0
  %v6614 = vadd.f32 %v5662, %v6613
  %v6615 = vpop.f32.mrb[0].mxu0
  %v6616 = vadd.f32 %v5666, %v6615
  %v6617 = vpop.f32.mrb[0].mxu0
  %v6618 = vadd.f32 %v5662, %v6617
  %v6619 = vpop.f32.mrb[0].mxu0
  %v6620 = vadd.f32 %v5666, %v6619
  %6621 = vmatprep.mubr.bf16.mxu0 %v954
  %6622 = vmatmul.mubr.bf16.gmra.mrb[0].mxu0 %v953
  %v6623 = vpop.f32.mrb[0].mxu0
  %v6624 = vadd.f32 %v5662, %v6623
  %v6625 = vpop.f32.mrb[0].mxu0
  %v6626 = vadd.f32 %v5666, %v6625
  %v6627 = vpop.f32.mrb[0].mxu0
  %v6628 = vadd.f32 %v5662, %v6627
  %v6629 = vpop.f32.mrb[0].mxu0
  %v6630 = vadd.f32 %v5666, %v6629
  %6631 = vmatprep.mubr.bf16.mxu0 %v964
  %6632 = vmatmul.mubr.bf16.gmra.mrb[0].mxu0 %v963
  %v6633 = vpop.f32.mrb[0].mxu0
  %v6634 = vadd.f32 %v5662, %v6633
  %v6635 = vpop.f32.mrb[0].mxu0
  %v6636 = vadd.f32 %v5666, %v6635
  %v6637 = vpop.f32.mrb[0].mxu0
  %v6638 = vadd.f32 %v5662, %v6637
  %v6639 = vpop.f32.mrb[0].mxu0
  %v6640 = vadd.f32 %v5666, %v6639
  %6641 = vmatprep.mubr.bf16.mxu0 %v974
  %6642 = vmatmul.mubr.bf16.gmra.mrb[0].mxu0 %v973
  %v6643 = vpop.f32.mrb[0].mxu0
  %v6644 = vadd.f32 %v5662, %v6643
  %v6645 = vpop.f32.mrb[0].mxu0
  %v6646 = vadd.f32 %v5666, %v6645
  %v6647 = vpop.f32.mrb[0].mxu0
  %v6648 = vadd.f32 %v5662, %v6647
  %v6649 = vpop.f32.mrb[0].mxu0
  %v6650 = vadd.f32 %v5666, %v6649
  %6651 = vmatprep.mubr.bf16.mxu0 %v984
  %6652 = vmatmul.mubr.bf16.gmra.mrb[0].mxu0 %v983
  %v6653 = vpop.f32.mrb[0].mxu0
  %v6654 = vadd.f32 %v5662, %v6653
  %v6655 = vpop.f32.mrb[0].mxu0
  %v6656 = vadd.f32 %v5666, %v6655
  %v6657 = vpop.f32.mrb[0].mxu0
  %v6658 = vadd.f32 %v5662, %v6657
  %v6659 = vpop.f32.mrb[0].mxu0
  %v6660 = vadd.f32 %v5666, %v6659
  %6661 = vdwg.mxu0
  %6662 = vmatprep.subr.bf16.mxu0 %v6182
  %6663 = vmatpush1.bf16.msra.mxu0 %v6181
  %6664 = vmatprep.subr.bf16.mxu0 %v6184
  %6665 = vmatpush1.bf16.msra.mxu0 %v6183
  %6666 = vmatprep.subr.bf16.mxu0 %v6186
  %6667 = vmatpush1.bf16.msra.mxu0 %v6185
  %6668 = vmatprep.subr.bf16.mxu0 %v6188
  %6669 = vmatpush1.bf16.msra.mxu0 %v6187
  %6670 = vmatprep.subr.bf16.mxu0 %v6190
  %6671 = vmatpush1.bf16.msra.mxu0 %v6189
  %6672 = vmatprep.subr.bf16.mxu0 %v6192
  %6673 = vmatpush1.bf16.msra.mxu0 %v6191
  %6674 = vmatprep.subr.bf16.mxu0 %v6194
  %6675 = vmatpush1.bf16.msra.mxu0 %v6193
  %6676 = vmatprep.subr.bf16.mxu0 %v6196
  %6677 = vmatpush1.bf16.msra.mxu0 %v6195
  %6678 = vmatprep.subr.bf16.mxu0 %v6198
  %6679 = vmatpush1.bf16.msra.mxu0 %v6197
  %6680 = vmatprep.subr.bf16.mxu0 %v6200
  %6681 = vmatpush1.bf16.msra.mxu0 %v6199
  %6682 = vmatprep.subr.bf16.mxu0 %v6202
  %6683 = vmatpush1.bf16.msra.mxu0 %v6201
  %6684 = vmatprep.subr.bf16.mxu0 %v6204
  %6685 = vmatpush1.bf16.msra.mxu0 %v6203
  %6686 = vmatprep.subr.bf16.mxu0 %v6206
  %6687 = vmatpush1.bf16.msra.mxu0 %v6205
  %6688 = vmatprep.subr.bf16.mxu0 %v6208
  %6689 = vmatpush1.bf16.msra.mxu0 %v6207
  %6690 = vmatprep.subr.bf16.mxu0 %v6210
  %6691 = vmatpush1.bf16.msra.mxu0 %v6209
  %6692 = vmatprep.subr.bf16.mxu0 %v6212
  %6693 = vmatpush1.bf16.msra.mxu0 %v6211
  %6694 = vmatprep.mubr.bf16.mxu0 %v836
  %6695 = vmatmul.mubr.bf16.gmra.mrb[0].mxu0 %v835
  %v6696 = vpop.f32.mrb[0].mxu0
  %v6697 = vadd.f32 %v6504, %v6696
  %v6698 = vpop.f32.mrb[0].mxu0
  %v6699 = vadd.f32 %v6506, %v6698
  %v6700 = vpop.f32.mrb[0].mxu0
  %v6701 = vadd.f32 %v6508, %v6700
  %v6702 = vpop.f32.mrb[0].mxu0
  %v6703 = vadd.f32 %v6510, %v6702
  %6704 = vmatprep.mubr.bf16.mxu0 %v846
  %6705 = vmatmul.mubr.bf16.gmra.mrb[0].mxu0 %v845
  %v6706 = vpop.f32.mrb[0].mxu0
  %v6707 = vadd.f32 %v6514, %v6706
  %v6708 = vpop.f32.mrb[0].mxu0
  %v6709 = vadd.f32 %v6516, %v6708
  %v6710 = vpop.f32.mrb[0].mxu0
  %v6711 = vadd.f32 %v6518, %v6710
  %v6712 = vpop.f32.mrb[0].mxu0
  %v6713 = vadd.f32 %v6520, %v6712
  %6714 = vmatprep.mubr.bf16.mxu0 %v856
  %6715 = vmatmul.mubr.bf16.gmra.mrb[0].mxu0 %v855
  %v6716 = vpop.f32.mrb[0].mxu0
  %v6717 = vadd.f32 %v6524, %v6716
  %v6718 = vpop.f32.mrb[0].mxu0
  %v6719 = vadd.f32 %v6526, %v6718
  %v6720 = vpop.f32.mrb[0].mxu0
  %v6721 = vadd.f32 %v6528, %v6720
  %v6722 = vpop.f32.mrb[0].mxu0
  %v6723 = vadd.f32 %v6530, %v6722
  %6724 = vmatprep.mubr.bf16.mxu0 %v866
  %6725 = vmatmul.mubr.bf16.gmra.mrb[0].mxu0 %v865
  %v6726 = vpop.f32.mrb[0].mxu0
  %v6727 = vadd.f32 %v6534, %v6726
  %v6728 = vpop.f32.mrb[0].mxu0
  %v6729 = vadd.f32 %v6536, %v6728
  %v6730 = vpop.f32.mrb[0].mxu0
  %v6731 = vadd.f32 %v6538, %v6730
  %v6732 = vpop.f32.mrb[0].mxu0
  %v6733 = vadd.f32 %v6540, %v6732
  %6734 = vmatprep.mubr.bf16.mxu0 %v876
  %6735 = vmatmul.mubr.bf16.gmra.mrb[0].mxu0 %v875
  %v6736 = vpop.f32.mrb[0].mxu0
  %v6737 = vadd.f32 %v6544, %v6736
  %v6738 = vpop.f32.mrb[0].mxu0
  %v6739 = vadd.f32 %v6546, %v6738
  %v6740 = vpop.f32.mrb[0].mxu0
  %v6741 = vadd.f32 %v6548, %v6740
  %v6742 = vpop.f32.mrb[0].mxu0
  %v6743 = vadd.f32 %v6550, %v6742
  %6744 = vmatprep.mubr.bf16.mxu0 %v886
  %6745 = vmatmul.mubr.bf16.gmra.mrb[0].mxu0 %v885
  %v6746 = vpop.f32.mrb[0].mxu0
  %v6747 = vadd.f32 %v6554, %v6746
  %v6748 = vpop.f32.mrb[0].mxu0
  %v6749 = vadd.f32 %v6556, %v6748
  %v6750 = vpop.f32.mrb[0].mxu0
  %v6751 = vadd.f32 %v6558, %v6750
  %v6752 = vpop.f32.mrb[0].mxu0
  %v6753 = vadd.f32 %v6560, %v6752
  %6754 = vmatprep.mubr.bf16.mxu0 %v896
  %6755 = vmatmul.mubr.bf16.gmra.mrb[0].mxu0 %v895
  %v6756 = vpop.f32.mrb[0].mxu0
  %v6757 = vadd.f32 %v6564, %v6756
  %v6758 = vpop.f32.mrb[0].mxu0
  %v6759 = vadd.f32 %v6566, %v6758
  %v6760 = vpop.f32.mrb[0].mxu0
  %v6761 = vadd.f32 %v6568, %v6760
  %v6762 = vpop.f32.mrb[0].mxu0
  %v6763 = vadd.f32 %v6570, %v6762
  %6764 = vmatprep.mubr.bf16.mxu0 %v906
  %6765 = vmatmul.mubr.bf16.gmra.mrb[0].mxu0 %v905
  %v6766 = vpop.f32.mrb[0].mxu0
  %v6767 = vadd.f32 %v6574, %v6766
  %v6768 = vpop.f32.mrb[0].mxu0
  %v6769 = vadd.f32 %v6576, %v6768
  %v6770 = vpop.f32.mrb[0].mxu0
  %v6771 = vadd.f32 %v6578, %v6770
  %v6772 = vpop.f32.mrb[0].mxu0
  %v6773 = vadd.f32 %v6580, %v6772
  %6774 = vmatprep.mubr.bf16.mxu0 %v916
  %6775 = vmatmul.mubr.bf16.gmra.mrb[0].mxu0 %v915
  %v6776 = vpop.f32.mrb[0].mxu0
  %v6777 = vadd.f32 %v6584, %v6776
  %v6778 = vpop.f32.mrb[0].mxu0
  %v6779 = vadd.f32 %v6586, %v6778
  %v6780 = vpop.f32.mrb[0].mxu0
  %v6781 = vadd.f32 %v6588, %v6780
  %v6782 = vpop.f32.mrb[0].mxu0
  %v6783 = vadd.f32 %v6590, %v6782
  %6784 = vmatprep.mubr.bf16.mxu0 %v926
  %6785 = vmatmul.mubr.bf16.gmra.mrb[0].mxu0 %v925
  %v6786 = vpop.f32.mrb[0].mxu0
  %v6787 = vadd.f32 %v6594, %v6786
  %v6788 = vpop.f32.mrb[0].mxu0
  %v6789 = vadd.f32 %v6596, %v6788
  %v6790 = vpop.f32.mrb[0].mxu0
  %v6791 = vadd.f32 %v6598, %v6790
  %v6792 = vpop.f32.mrb[0].mxu0
  %v6793 = vadd.f32 %v6600, %v6792
  %6794 = vmatprep.mubr.bf16.mxu0 %v936
  %6795 = vmatmul.mubr.bf16.gmra.mrb[0].mxu0 %v935
  %v6796 = vpop.f32.mrb[0].mxu0
  %v6797 = vadd.f32 %v6604, %v6796
  %v6798 = vpop.f32.mrb[0].mxu0
  %v6799 = vadd.f32 %v6606, %v6798
  %v6800 = vpop.f32.mrb[0].mxu0
  %v6801 = vadd.f32 %v6608, %v6800
  %v6802 = vpop.f32.mrb[0].mxu0
  %v6803 = vadd.f32 %v6610, %v6802
  %6804 = vmatprep.mubr.bf16.mxu0 %v946
  %6805 = vmatmul.mubr.bf16.gmra.mrb[0].mxu0 %v945
  %v6806 = vpop.f32.mrb[0].mxu0
  %v6807 = vadd.f32 %v6614, %v6806
  %v6808 = vpop.f32.mrb[0].mxu0
  %v6809 = vadd.f32 %v6616, %v6808
  %v6810 = vpop.f32.mrb[0].mxu0
  %v6811 = vadd.f32 %v6618, %v6810
  %v6812 = vpop.f32.mrb[0].mxu0
  %v6813 = vadd.f32 %v6620, %v6812
  %6814 = vmatprep.mubr.bf16.mxu0 %v956
  %6815 = vmatmul.mubr.bf16.gmra.mrb[0].mxu0 %v955
  %v6816 = vpop.f32.mrb[0].mxu0
  %v6817 = vadd.f32 %v6624, %v6816
  %v6818 = vpop.f32.mrb[0].mxu0
  %v6819 = vadd.f32 %v6626, %v6818
  %v6820 = vpop.f32.mrb[0].mxu0
  %v6821 = vadd.f32 %v6628, %v6820
  %v6822 = vpop.f32.mrb[0].mxu0
  %v6823 = vadd.f32 %v6630, %v6822
  %6824 = vmatprep.mubr.bf16.mxu0 %v966
  %6825 = vmatmul.mubr.bf16.gmra.mrb[0].mxu0 %v965
  %v6826 = vpop.f32.mrb[0].mxu0
  %v6827 = vadd.f32 %v6634, %v6826
  %v6828 = vpop.f32.mrb[0].mxu0
  %v6829 = vadd.f32 %v6636, %v6828
  %v6830 = vpop.f32.mrb[0].mxu0
  %v6831 = vadd.f32 %v6638, %v6830
  %v6832 = vpop.f32.mrb[0].mxu0
  %v6833 = vadd.f32 %v6640, %v6832
  %6834 = vmatprep.mubr.bf16.mxu0 %v976
  %6835 = vmatmul.mubr.bf16.gmra.mrb[0].mxu0 %v975
  %v6836 = vpop.f32.mrb[0].mxu0
  %v6837 = vadd.f32 %v6644, %v6836
  %v6838 = vpop.f32.mrb[0].mxu0
  %v6839 = vadd.f32 %v6646, %v6838
  %v6840 = vpop.f32.mrb[0].mxu0
  %v6841 = vadd.f32 %v6648, %v6840
  %v6842 = vpop.f32.mrb[0].mxu0
  %v6843 = vadd.f32 %v6650, %v6842
  %6844 = vmatprep.mubr.bf16.mxu0 %v986
  %6845 = vmatmul.mubr.bf16.gmra.mrb[0].mxu0 %v985
  %v6846 = vpop.f32.mrb[0].mxu0
  %v6847 = vadd.f32 %v6654, %v6846
  %v6848 = vpop.f32.mrb[0].mxu0
  %v6849 = vadd.f32 %v6656, %v6848
  %v6850 = vpop.f32.mrb[0].mxu0
  %v6851 = vadd.f32 %v6658, %v6850
  %v6852 = vpop.f32.mrb[0].mxu0
  %v6853 = vadd.f32 %v6660, %v6852
  %6854 = vdwg.mxu0
  %6855 = vmatprep.subr.bf16.mxu0 %v6214
  %6856 = vmatpush1.bf16.msra.mxu0 %v6213
  %6857 = vmatprep.subr.bf16.mxu0 %v6216
  %6858 = vmatpush1.bf16.msra.mxu0 %v6215
  %6859 = vmatprep.subr.bf16.mxu0 %v6218
  %6860 = vmatpush1.bf16.msra.mxu0 %v6217
  %6861 = vmatprep.subr.bf16.mxu0 %v6220
  %6862 = vmatpush1.bf16.msra.mxu0 %v6219
  %6863 = vmatprep.subr.bf16.mxu0 %v6222
  %6864 = vmatpush1.bf16.msra.mxu0 %v6221
  %6865 = vmatprep.subr.bf16.mxu0 %v6224
  %6866 = vmatpush1.bf16.msra.mxu0 %v6223
  %6867 = vmatprep.subr.bf16.mxu0 %v6226
  %6868 = vmatpush1.bf16.msra.mxu0 %v6225
  %6869 = vmatprep.subr.bf16.mxu0 %v6228
  %6870 = vmatpush1.bf16.msra.mxu0 %v6227
  %6871 = vmatprep.subr.bf16.mxu0 %v6230
  %6872 = vmatpush1.bf16.msra.mxu0 %v6229
  %6873 = vmatprep.subr.bf16.mxu0 %v6232
  %6874 = vmatpush1.bf16.msra.mxu0 %v6231
  %6875 = vmatprep.subr.bf16.mxu0 %v6234
  %6876 = vmatpush1.bf16.msra.mxu0 %v6233
  %6877 = vmatprep.subr.bf16.mxu0 %v6236
  %6878 = vmatpush1.bf16.msra.mxu0 %v6235
  %6879 = vmatprep.subr.bf16.mxu0 %v6238
  %6880 = vmatpush1.bf16.msra.mxu0 %v6237
  %6881 = vmatprep.subr.bf16.mxu0 %v6240
  %6882 = vmatpush1.bf16.msra.mxu0 %v6239
  %6883 = vmatprep.subr.bf16.mxu0 %v6242
  %6884 = vmatpush1.bf16.msra.mxu0 %v6241
  %6885 = vmatprep.subr.bf16.mxu0 %v6244
  %6886 = vmatpush1.bf16.msra.mxu0 %v6243
  %6887 = vmatprep.mubr.bf16.mxu0 %v838
  %6888 = vmatmul.mubr.bf16.gmra.mrb[0].mxu0 %v837
  %v6889 = vpop.f32.mrb[0].mxu0
  %v6890 = vadd.f32 %v6697, %v6889
  %v6891 = vpop.f32.mrb[0].mxu0
  %v6892 = vadd.f32 %v6699, %v6891
  %v6893 = vpop.f32.mrb[0].mxu0
  %v6894 = vadd.f32 %v6701, %v6893
  %v6895 = vpop.f32.mrb[0].mxu0
  %v6896 = vadd.f32 %v6703, %v6895
  %6897 = vmatprep.mubr.bf16.mxu0 %v848
  %6898 = vmatmul.mubr.bf16.gmra.mrb[0].mxu0 %v847
  %v6899 = vpop.f32.mrb[0].mxu0
  %v6900 = vadd.f32 %v6707, %v6899
  %v6901 = vpop.f32.mrb[0].mxu0
  %v6902 = vadd.f32 %v6709, %v6901
  %v6903 = vpop.f32.mrb[0].mxu0
  %v6904 = vadd.f32 %v6711, %v6903
  %v6905 = vpop.f32.mrb[0].mxu0
  %v6906 = vadd.f32 %v6713, %v6905
  %6907 = vmatprep.mubr.bf16.mxu0 %v858
  %6908 = vmatmul.mubr.bf16.gmra.mrb[0].mxu0 %v857
  %v6909 = vpop.f32.mrb[0].mxu0
  %v6910 = vadd.f32 %v6717, %v6909
  %v6911 = vpop.f32.mrb[0].mxu0
  %v6912 = vadd.f32 %v6719, %v6911
  %v6913 = vpop.f32.mrb[0].mxu0
  %v6914 = vadd.f32 %v6721, %v6913
  %v6915 = vpop.f32.mrb[0].mxu0
  %v6916 = vadd.f32 %v6723, %v6915
  %6917 = vmatprep.mubr.bf16.mxu0 %v868
  %6918 = vmatmul.mubr.bf16.gmra.mrb[0].mxu0 %v867
  %v6919 = vpop.f32.mrb[0].mxu0
  %v6920 = vadd.f32 %v6727, %v6919
  %v6921 = vpop.f32.mrb[0].mxu0
  %v6922 = vadd.f32 %v6729, %v6921
  %v6923 = vpop.f32.mrb[0].mxu0
  %v6924 = vadd.f32 %v6731, %v6923
  %v6925 = vpop.f32.mrb[0].mxu0
  %v6926 = vadd.f32 %v6733, %v6925
  %6927 = vmatprep.mubr.bf16.mxu0 %v878
  %6928 = vmatmul.mubr.bf16.gmra.mrb[0].mxu0 %v877
  %v6929 = vpop.f32.mrb[0].mxu0
  %v6930 = vadd.f32 %v6737, %v6929
  %v6931 = vpop.f32.mrb[0].mxu0
  %v6932 = vadd.f32 %v6739, %v6931
  %v6933 = vpop.f32.mrb[0].mxu0
  %v6934 = vadd.f32 %v6741, %v6933
  %v6935 = vpop.f32.mrb[0].mxu0
  %v6936 = vadd.f32 %v6743, %v6935
  %6937 = vmatprep.mubr.bf16.mxu0 %v888
  %6938 = vmatmul.mubr.bf16.gmra.mrb[0].mxu0 %v887
  %v6939 = vpop.f32.mrb[0].mxu0
  %v6940 = vadd.f32 %v6747, %v6939
  %v6941 = vpop.f32.mrb[0].mxu0
  %v6942 = vadd.f32 %v6749, %v6941
  %v6943 = vpop.f32.mrb[0].mxu0
  %v6944 = vadd.f32 %v6751, %v6943
  %v6945 = vpop.f32.mrb[0].mxu0
  %v6946 = vadd.f32 %v6753, %v6945
  %6947 = vmatprep.mubr.bf16.mxu0 %v898
  %6948 = vmatmul.mubr.bf16.gmra.mrb[0].mxu0 %v897
  %v6949 = vpop.f32.mrb[0].mxu0
  %v6950 = vadd.f32 %v6757, %v6949
  %v6951 = vpop.f32.mrb[0].mxu0
  %v6952 = vadd.f32 %v6759, %v6951
  %v6953 = vpop.f32.mrb[0].mxu0
  %v6954 = vadd.f32 %v6761, %v6953
  %v6955 = vpop.f32.mrb[0].mxu0
  %v6956 = vadd.f32 %v6763, %v6955
  %6957 = vmatprep.mubr.bf16.mxu0 %v908
  %6958 = vmatmul.mubr.bf16.gmra.mrb[0].mxu0 %v907
  %v6959 = vpop.f32.mrb[0].mxu0
  %v6960 = vadd.f32 %v6767, %v6959
  %v6961 = vpop.f32.mrb[0].mxu0
  %v6962 = vadd.f32 %v6769, %v6961
  %v6963 = vpop.f32.mrb[0].mxu0
  %v6964 = vadd.f32 %v6771, %v6963
  %v6965 = vpop.f32.mrb[0].mxu0
  %v6966 = vadd.f32 %v6773, %v6965
  %6967 = vmatprep.mubr.bf16.mxu0 %v918
  %6968 = vmatmul.mubr.bf16.gmra.mrb[0].mxu0 %v917
  %v6969 = vpop.f32.mrb[0].mxu0
  %v6970 = vadd.f32 %v6777, %v6969
  %v6971 = vpop.f32.mrb[0].mxu0
  %v6972 = vadd.f32 %v6779, %v6971
  %v6973 = vpop.f32.mrb[0].mxu0
  %v6974 = vadd.f32 %v6781, %v6973
  %v6975 = vpop.f32.mrb[0].mxu0
  %v6976 = vadd.f32 %v6783, %v6975
  %6977 = vmatprep.mubr.bf16.mxu0 %v928
  %6978 = vmatmul.mubr.bf16.gmra.mrb[0].mxu0 %v927
  %v6979 = vpop.f32.mrb[0].mxu0
  %v6980 = vadd.f32 %v6787, %v6979
  %v6981 = vpop.f32.mrb[0].mxu0
  %v6982 = vadd.f32 %v6789, %v6981
  %v6983 = vpop.f32.mrb[0].mxu0
  %v6984 = vadd.f32 %v6791, %v6983
  %v6985 = vpop.f32.mrb[0].mxu0
  %v6986 = vadd.f32 %v6793, %v6985
  %6987 = vmatprep.mubr.bf16.mxu0 %v938
  %6988 = vmatmul.mubr.bf16.gmra.mrb[0].mxu0 %v937
  %v6989 = vpop.f32.mrb[0].mxu0
  %v6990 = vadd.f32 %v6797, %v6989
  %v6991 = vpop.f32.mrb[0].mxu0
  %v6992 = vadd.f32 %v6799, %v6991
  %v6993 = vpop.f32.mrb[0].mxu0
  %v6994 = vadd.f32 %v6801, %v6993
  %v6995 = vpop.f32.mrb[0].mxu0
  %v6996 = vadd.f32 %v6803, %v6995
  %6997 = vmatprep.mubr.bf16.mxu0 %v948
  %6998 = vmatmul.mubr.bf16.gmra.mrb[0].mxu0 %v947
  %v6999 = vpop.f32.mrb[0].mxu0
  %v7000 = vadd.f32 %v6807, %v6999
  %v7001 = vpop.f32.mrb[0].mxu0
  %v7002 = vadd.f32 %v6809, %v7001
  %v7003 = vpop.f32.mrb[0].mxu0
  %v7004 = vadd.f32 %v6811, %v7003
  %v7005 = vpop.f32.mrb[0].mxu0
  %v7006 = vadd.f32 %v6813, %v7005
  %7007 = vmatprep.mubr.bf16.mxu0 %v958
  %7008 = vmatmul.mubr.bf16.gmra.mrb[0].mxu0 %v957
  %v7009 = vpop.f32.mrb[0].mxu0
  %v7010 = vadd.f32 %v6817, %v7009
  %v7011 = vpop.f32.mrb[0].mxu0
  %v7012 = vadd.f32 %v6819, %v7011
  %v7013 = vpop.f32.mrb[0].mxu0
  %v7014 = vadd.f32 %v6821, %v7013
  %v7015 = vpop.f32.mrb[0].mxu0
  %v7016 = vadd.f32 %v6823, %v7015
  %7017 = vmatprep.mubr.bf16.mxu0 %v968
  %7018 = vmatmul.mubr.bf16.gmra.mrb[0].mxu0 %v967
  %v7019 = vpop.f32.mrb[0].mxu0
  %v7020 = vadd.f32 %v6827, %v7019
  %v7021 = vpop.f32.mrb[0].mxu0
  %v7022 = vadd.f32 %v6829, %v7021
  %v7023 = vpop.f32.mrb[0].mxu0
  %v7024 = vadd.f32 %v6831, %v7023
  %v7025 = vpop.f32.mrb[0].mxu0
  %v7026 = vadd.f32 %v6833, %v7025
  %7027 = vmatprep.mubr.bf16.mxu0 %v978
  %7028 = vmatmul.mubr.bf16.gmra.mrb[0].mxu0 %v977
  %v7029 = vpop.f32.mrb[0].mxu0
  %v7030 = vadd.f32 %v6837, %v7029
  %v7031 = vpop.f32.mrb[0].mxu0
  %v7032 = vadd.f32 %v6839, %v7031
  %v7033 = vpop.f32.mrb[0].mxu0
  %v7034 = vadd.f32 %v6841, %v7033
  %v7035 = vpop.f32.mrb[0].mxu0
  %v7036 = vadd.f32 %v6843, %v7035
  %7037 = vmatprep.mubr.bf16.mxu0 %v988
  %7038 = vmatmul.mubr.bf16.gmra.mrb[0].mxu0 %v987
  %v7039 = vpop.f32.mrb[0].mxu0
  %v7040 = vadd.f32 %v6847, %v7039
  %v7041 = vpop.f32.mrb[0].mxu0
  %v7042 = vadd.f32 %v6849, %v7041
  %v7043 = vpop.f32.mrb[0].mxu0
  %v7044 = vadd.f32 %v6851, %v7043
  %v7045 = vpop.f32.mrb[0].mxu0
  %v7046 = vadd.f32 %v6853, %v7045
  %7047 = vdwg.mxu0
  %7048 = vmatprep.subr.bf16.mxu0 %v6246
  %7049 = vmatpush1.bf16.msra.mxu0 %v6245
  %7050 = vmatprep.subr.bf16.mxu0 %v6248
  %7051 = vmatpush1.bf16.msra.mxu0 %v6247
  %7052 = vmatprep.subr.bf16.mxu0 %v6250
  %7053 = vmatpush1.bf16.msra.mxu0 %v6249
  %7054 = vmatprep.subr.bf16.mxu0 %v6252
  %7055 = vmatpush1.bf16.msra.mxu0 %v6251
  %7056 = vmatprep.subr.bf16.mxu0 %v6254
  %7057 = vmatpush1.bf16.msra.mxu0 %v6253
  %7058 = vmatprep.subr.bf16.mxu0 %v6256
  %7059 = vmatpush1.bf16.msra.mxu0 %v6255
  %7060 = vmatprep.subr.bf16.mxu0 %v6258
  %7061 = vmatpush1.bf16.msra.mxu0 %v6257
  %7062 = vmatprep.subr.bf16.mxu0 %v6260
  %7063 = vmatpush1.bf16.msra.mxu0 %v6259
  %7064 = vmatprep.subr.bf16.mxu0 %v6262
  %7065 = vmatpush1.bf16.msra.mxu0 %v6261
  %7066 = vmatprep.subr.bf16.mxu0 %v6264
  %7067 = vmatpush1.bf16.msra.mxu0 %v6263
  %7068 = vmatprep.subr.bf16.mxu0 %v6266
  %7069 = vmatpush1.bf16.msra.mxu0 %v6265
  %7070 = vmatprep.subr.bf16.mxu0 %v6268
  %7071 = vmatpush1.bf16.msra.mxu0 %v6267
  %7072 = vmatprep.subr.bf16.mxu0 %v6270
  %7073 = vmatpush1.bf16.msra.mxu0 %v6269
  %7074 = vmatprep.subr.bf16.mxu0 %v6272
  %7075 = vmatpush1.bf16.msra.mxu0 %v6271
  %7076 = vmatprep.subr.bf16.mxu0 %v6274
  %7077 = vmatpush1.bf16.msra.mxu0 %v6273
  %7078 = vmatprep.subr.bf16.mxu0 %v6276
  %7079 = vmatpush1.bf16.msra.mxu0 %v6275
  %7080 = vmatprep.mubr.bf16.mxu0 %v840
  %7081 = vmatmul.mubr.bf16.gmra.mrb[0].mxu0 %v839
  %v7082 = vpop.f32.mrb[0].mxu0
  %v7083 = vadd.f32 %v6890, %v7082
  %v7084 = vpop.f32.mrb[0].mxu0
  %v7085 = vadd.f32 %v6892, %v7084
  %v7086 = vpop.f32.mrb[0].mxu0
  %v7087 = vadd.f32 %v6894, %v7086
  %v7088 = vpop.f32.mrb[0].mxu0
  %v7089 = vadd.f32 %v6896, %v7088
  %7090 = vmatprep.mubr.bf16.mxu0 %v850
  %7091 = vmatmul.mubr.bf16.gmra.mrb[0].mxu0 %v849
  %v7092 = vpop.f32.mrb[0].mxu0
  %v7093 = vadd.f32 %v6900, %v7092
  %v7094 = vpop.f32.mrb[0].mxu0
  %v7095 = vadd.f32 %v6902, %v7094
  %v7096 = vpop.f32.mrb[0].mxu0
  %v7097 = vadd.f32 %v6904, %v7096
  %v7098 = vpop.f32.mrb[0].mxu0
  %v7099 = vadd.f32 %v6906, %v7098
  %7100 = vmatprep.mubr.bf16.mxu0 %v860
  %7101 = vmatmul.mubr.bf16.gmra.mrb[0].mxu0 %v859
  %v7102 = vpop.f32.mrb[0].mxu0
  %v7103 = vadd.f32 %v6910, %v7102
  %v7104 = vpop.f32.mrb[0].mxu0
  %v7105 = vadd.f32 %v6912, %v7104
  %v7106 = vpop.f32.mrb[0].mxu0
  %v7107 = vadd.f32 %v6914, %v7106
  %v7108 = vpop.f32.mrb[0].mxu0
  %v7109 = vadd.f32 %v6916, %v7108
  %7110 = vmatprep.mubr.bf16.mxu0 %v870
  %7111 = vmatmul.mubr.bf16.gmra.mrb[0].mxu0 %v869
  %v7112 = vpop.f32.mrb[0].mxu0
  %v7113 = vadd.f32 %v6920, %v7112
  %v7114 = vpop.f32.mrb[0].mxu0
  %v7115 = vadd.f32 %v6922, %v7114
  %v7116 = vpop.f32.mrb[0].mxu0
  %v7117 = vadd.f32 %v6924, %v7116
  %v7118 = vpop.f32.mrb[0].mxu0
  %v7119 = vadd.f32 %v6926, %v7118
  %7120 = vmatprep.mubr.bf16.mxu0 %v880
  %7121 = vmatmul.mubr.bf16.gmra.mrb[0].mxu0 %v879
  %v7122 = vpop.f32.mrb[0].mxu0
  %v7123 = vadd.f32 %v6930, %v7122
  %v7124 = vpop.f32.mrb[0].mxu0
  %v7125 = vadd.f32 %v6932, %v7124
  %v7126 = vpop.f32.mrb[0].mxu0
  %v7127 = vadd.f32 %v6934, %v7126
  %v7128 = vpop.f32.mrb[0].mxu0
  %v7129 = vadd.f32 %v6936, %v7128
  %7130 = vmatprep.mubr.bf16.mxu0 %v890
  %7131 = vmatmul.mubr.bf16.gmra.mrb[0].mxu0 %v889
  %v7132 = vpop.f32.mrb[0].mxu0
  %v7133 = vadd.f32 %v6940, %v7132
  %v7134 = vpop.f32.mrb[0].mxu0
  %v7135 = vadd.f32 %v6942, %v7134
  %v7136 = vpop.f32.mrb[0].mxu0
  %v7137 = vadd.f32 %v6944, %v7136
  %v7138 = vpop.f32.mrb[0].mxu0
  %v7139 = vadd.f32 %v6946, %v7138
  %7140 = vmatprep.mubr.bf16.mxu0 %v900
  %7141 = vmatmul.mubr.bf16.gmra.mrb[0].mxu0 %v899
  %v7142 = vpop.f32.mrb[0].mxu0
  %v7143 = vadd.f32 %v6950, %v7142
  %v7144 = vpop.f32.mrb[0].mxu0
  %v7145 = vadd.f32 %v6952, %v7144
  %v7146 = vpop.f32.mrb[0].mxu0
  %v7147 = vadd.f32 %v6954, %v7146
  %v7148 = vpop.f32.mrb[0].mxu0
  %v7149 = vadd.f32 %v6956, %v7148
  %7150 = vmatprep.mubr.bf16.mxu0 %v910
  %7151 = vmatmul.mubr.bf16.gmra.mrb[0].mxu0 %v909
  %v7152 = vpop.f32.mrb[0].mxu0
  %v7153 = vadd.f32 %v6960, %v7152
  %v7154 = vpop.f32.mrb[0].mxu0
  %v7155 = vadd.f32 %v6962, %v7154
  %v7156 = vpop.f32.mrb[0].mxu0
  %v7157 = vadd.f32 %v6964, %v7156
  %v7158 = vpop.f32.mrb[0].mxu0
  %v7159 = vadd.f32 %v6966, %v7158
  %7160 = vmatprep.mubr.bf16.mxu0 %v920
  %7161 = vmatmul.mubr.bf16.gmra.mrb[0].mxu0 %v919
  %v7162 = vpop.f32.mrb[0].mxu0
  %v7163 = vadd.f32 %v6970, %v7162
  %v7164 = vpop.f32.mrb[0].mxu0
  %v7165 = vadd.f32 %v6972, %v7164
  %v7166 = vpop.f32.mrb[0].mxu0
  %v7167 = vadd.f32 %v6974, %v7166
  %v7168 = vpop.f32.mrb[0].mxu0
  %v7169 = vadd.f32 %v6976, %v7168
  %7170 = vmatprep.mubr.bf16.mxu0 %v930
  %7171 = vmatmul.mubr.bf16.gmra.mrb[0].mxu0 %v929
  %v7172 = vpop.f32.mrb[0].mxu0
  %v7173 = vadd.f32 %v6980, %v7172
  %v7174 = vpop.f32.mrb[0].mxu0
  %v7175 = vadd.f32 %v6982, %v7174
  %v7176 = vpop.f32.mrb[0].mxu0
  %v7177 = vadd.f32 %v6984, %v7176
  %v7178 = vpop.f32.mrb[0].mxu0
  %v7179 = vadd.f32 %v6986, %v7178
  %7180 = vmatprep.mubr.bf16.mxu0 %v940
  %7181 = vmatmul.mubr.bf16.gmra.mrb[0].mxu0 %v939
  %v7182 = vpop.f32.mrb[0].mxu0
  %v7183 = vadd.f32 %v6990, %v7182
  %v7184 = vpop.f32.mrb[0].mxu0
  %v7185 = vadd.f32 %v6992, %v7184
  %v7186 = vpop.f32.mrb[0].mxu0
  %v7187 = vadd.f32 %v6994, %v7186
  %v7188 = vpop.f32.mrb[0].mxu0
  %v7189 = vadd.f32 %v6996, %v7188
  %7190 = vmatprep.mubr.bf16.mxu0 %v950
  %7191 = vmatmul.mubr.bf16.gmra.mrb[0].mxu0 %v949
  %v7192 = vpop.f32.mrb[0].mxu0
  %v7193 = vadd.f32 %v7000, %v7192
  %v7194 = vpop.f32.mrb[0].mxu0
  %v7195 = vadd.f32 %v7002, %v7194
  %v7196 = vpop.f32.mrb[0].mxu0
  %v7197 = vadd.f32 %v7004, %v7196
  %v7198 = vpop.f32.mrb[0].mxu0
  %v7199 = vadd.f32 %v7006, %v7198
  %7200 = vmatprep.mubr.bf16.mxu0 %v960
  %7201 = vmatmul.mubr.bf16.gmra.mrb[0].mxu0 %v959
  %v7202 = vpop.f32.mrb[0].mxu0
  %v7203 = vadd.f32 %v7010, %v7202
  %v7204 = vpop.f32.mrb[0].mxu0
  %v7205 = vadd.f32 %v7012, %v7204
  %v7206 = vpop.f32.mrb[0].mxu0
  %v7207 = vadd.f32 %v7014, %v7206
  %v7208 = vpop.f32.mrb[0].mxu0
  %v7209 = vadd.f32 %v7016, %v7208
  %7210 = vmatprep.mubr.bf16.mxu0 %v970
  %7211 = vmatmul.mubr.bf16.gmra.mrb[0].mxu0 %v969
  %v7212 = vpop.f32.mrb[0].mxu0
  %v7213 = vadd.f32 %v7020, %v7212
  %v7214 = vpop.f32.mrb[0].mxu0
  %v7215 = vadd.f32 %v7022, %v7214
  %v7216 = vpop.f32.mrb[0].mxu0
  %v7217 = vadd.f32 %v7024, %v7216
  %v7218 = vpop.f32.mrb[0].mxu0
  %v7219 = vadd.f32 %v7026, %v7218
  %7220 = vmatprep.mubr.bf16.mxu0 %v980
  %7221 = vmatmul.mubr.bf16.gmra.mrb[0].mxu0 %v979
  %v7222 = vpop.f32.mrb[0].mxu0
  %v7223 = vadd.f32 %v7030, %v7222
  %v7224 = vpop.f32.mrb[0].mxu0
  %v7225 = vadd.f32 %v7032, %v7224
  %v7226 = vpop.f32.mrb[0].mxu0
  %v7227 = vadd.f32 %v7034, %v7226
  %v7228 = vpop.f32.mrb[0].mxu0
  %v7229 = vadd.f32 %v7036, %v7228
  %7230 = vmatprep.mubr.bf16.mxu0 %v990
  %7231 = vmatmul.mubr.bf16.gmra.mrb[0].mxu0 %v989
  %v7232 = vpop.f32.mrb[0].mxu0
  %v7233 = vadd.f32 %v7040, %v7232
  %v7234 = vpop.f32.mrb[0].mxu0
  %v7235 = vadd.f32 %v7042, %v7234
  %v7236 = vpop.f32.mrb[0].mxu0
  %v7237 = vadd.f32 %v7044, %v7236
  %v7238 = vpop.f32.mrb[0].mxu0
  %v7239 = vadd.f32 %v7046, %v7238
  %7240 = vdwg.mxu0
  %7241 = vmatprep.subr.bf16.mxu0 %v6278
  %7242 = vmatpush1.bf16.msra.mxu0 %v6277
  %7243 = vmatprep.subr.bf16.mxu0 %v6280
  %7244 = vmatpush1.bf16.msra.mxu0 %v6279
  %7245 = vmatprep.subr.bf16.mxu0 %v6282
  %7246 = vmatpush1.bf16.msra.mxu0 %v6281
  %7247 = vmatprep.subr.bf16.mxu0 %v6284
  %7248 = vmatpush1.bf16.msra.mxu0 %v6283
  %7249 = vmatprep.subr.bf16.mxu0 %v6286
  %7250 = vmatpush1.bf16.msra.mxu0 %v6285
  %7251 = vmatprep.subr.bf16.mxu0 %v6288
  %7252 = vmatpush1.bf16.msra.mxu0 %v6287
  %7253 = vmatprep.subr.bf16.mxu0 %v6290
  %7254 = vmatpush1.bf16.msra.mxu0 %v6289
  %7255 = vmatprep.subr.bf16.mxu0 %v6292
  %7256 = vmatpush1.bf16.msra.mxu0 %v6291
  %7257 = vmatprep.subr.bf16.mxu0 %v6294
  %7258 = vmatpush1.bf16.msra.mxu0 %v6293
  %7259 = vmatprep.subr.bf16.mxu0 %v6296
  %7260 = vmatpush1.bf16.msra.mxu0 %v6295
  %7261 = vmatprep.subr.bf16.mxu0 %v6298
  %7262 = vmatpush1.bf16.msra.mxu0 %v6297
  %7263 = vmatprep.subr.bf16.mxu0 %v6300
  %7264 = vmatpush1.bf16.msra.mxu0 %v6299
  %7265 = vmatprep.subr.bf16.mxu0 %v6302
  %7266 = vmatpush1.bf16.msra.mxu0 %v6301
  %7267 = vmatprep.subr.bf16.mxu0 %v6304
  %7268 = vmatpush1.bf16.msra.mxu0 %v6303
  %7269 = vmatprep.subr.bf16.mxu0 %v6306
  %7270 = vmatpush1.bf16.msra.mxu0 %v6305
  %7271 = vmatprep.subr.bf16.mxu0 %v6308
  %7272 = vmatpush1.bf16.msra.mxu0 %v6307
  %7273 = vmatprep.mubr.bf16.mxu0 %v842
  %7274 = vmatmul.mubr.bf16.gmra.mrb[0].mxu0 %v841
  %v7275 = vpop.f32.mrb[0].mxu0
  %v7276 = vadd.f32 %v7083, %v7275
  %v7277 = vpop.f32.mrb[0].mxu0
  %v7278 = vadd.f32 %v7085, %v7277
  %v7279 = vpop.f32.mrb[0].mxu0
  %v7280 = vadd.f32 %v7087, %v7279
  %v7281 = vpop.f32.mrb[0].mxu0
  %v7282 = vadd.f32 %v7089, %v7281
  %7283 = vmatprep.mubr.bf16.mxu0 %v852
  %7284 = vmatmul.mubr.bf16.gmra.mrb[0].mxu0 %v851
  %v7285 = vpop.f32.mrb[0].mxu0
  %v7286 = vadd.f32 %v7093, %v7285
  %v7287 = vpop.f32.mrb[0].mxu0
  %v7288 = vadd.f32 %v7095, %v7287
  %v7289 = vpop.f32.mrb[0].mxu0
  %v7290 = vadd.f32 %v7097, %v7289
  %v7291 = vpop.f32.mrb[0].mxu0
  %v7292 = vadd.f32 %v7099, %v7291
  %7293 = vmatprep.mubr.bf16.mxu0 %v862
  %7294 = vmatmul.mubr.bf16.gmra.mrb[0].mxu0 %v861
  %v7295 = vpop.f32.mrb[0].mxu0
  %v7296 = vadd.f32 %v7103, %v7295
  %v7297 = vpop.f32.mrb[0].mxu0
  %v7298 = vadd.f32 %v7105, %v7297
  %v7299 = vpop.f32.mrb[0].mxu0
  %v7300 = vadd.f32 %v7107, %v7299
  %v7301 = vpop.f32.mrb[0].mxu0
  %v7302 = vadd.f32 %v7109, %v7301
  %7303 = vmatprep.mubr.bf16.mxu0 %v872
  %7304 = vmatmul.mubr.bf16.gmra.mrb[0].mxu0 %v871
  %v7305 = vpop.f32.mrb[0].mxu0
  %v7306 = vadd.f32 %v7113, %v7305
  %v7307 = vpop.f32.mrb[0].mxu0
  %v7308 = vadd.f32 %v7115, %v7307
  %v7309 = vpop.f32.mrb[0].mxu0
  %v7310 = vadd.f32 %v7117, %v7309
  %v7311 = vpop.f32.mrb[0].mxu0
  %v7312 = vadd.f32 %v7119, %v7311
  %7313 = vmatprep.mubr.bf16.mxu0 %v882
  %7314 = vmatmul.mubr.bf16.gmra.mrb[0].mxu0 %v881
  %v7315 = vpop.f32.mrb[0].mxu0
  %v7316 = vadd.f32 %v7123, %v7315
  %v7317 = vpop.f32.mrb[0].mxu0
  %v7318 = vadd.f32 %v7125, %v7317
  %v7319 = vpop.f32.mrb[0].mxu0
  %v7320 = vadd.f32 %v7127, %v7319
  %v7321 = vpop.f32.mrb[0].mxu0
  %v7322 = vadd.f32 %v7129, %v7321
  %7323 = vmatprep.mubr.bf16.mxu0 %v892
  %7324 = vmatmul.mubr.bf16.gmra.mrb[0].mxu0 %v891
  %v7325 = vpop.f32.mrb[0].mxu0
  %v7326 = vadd.f32 %v7133, %v7325
  %v7327 = vpop.f32.mrb[0].mxu0
  %v7328 = vadd.f32 %v7135, %v7327
  %v7329 = vpop.f32.mrb[0].mxu0
  %v7330 = vadd.f32 %v7137, %v7329
  %v7331 = vpop.f32.mrb[0].mxu0
  %v7332 = vadd.f32 %v7139, %v7331
  %7333 = vmatprep.mubr.bf16.mxu0 %v902
  %7334 = vmatmul.mubr.bf16.gmra.mrb[0].mxu0 %v901
  %v7335 = vpop.f32.mrb[0].mxu0
  %v7336 = vadd.f32 %v7143, %v7335
  %v7337 = vpop.f32.mrb[0].mxu0
  %v7338 = vadd.f32 %v7145, %v7337
  %v7339 = vpop.f32.mrb[0].mxu0
  %v7340 = vadd.f32 %v7147, %v7339
  %v7341 = vpop.f32.mrb[0].mxu0
  %v7342 = vadd.f32 %v7149, %v7341
  %7343 = vmatprep.mubr.bf16.mxu0 %v912
  %7344 = vmatmul.mubr.bf16.gmra.mrb[0].mxu0 %v911
  %v7345 = vpop.f32.mrb[0].mxu0
  %v7346 = vadd.f32 %v7153, %v7345
  %v7347 = vpop.f32.mrb[0].mxu0
  %v7348 = vadd.f32 %v7155, %v7347
  %v7349 = vpop.f32.mrb[0].mxu0
  %v7350 = vadd.f32 %v7157, %v7349
  %v7351 = vpop.f32.mrb[0].mxu0
  %v7352 = vadd.f32 %v7159, %v7351
  %7353 = vmatprep.mubr.bf16.mxu0 %v922
  %7354 = vmatmul.mubr.bf16.gmra.mrb[0].mxu0 %v921
  %v7355 = vpop.f32.mrb[0].mxu0
  %v7356 = vadd.f32 %v7163, %v7355
  %v7357 = vpop.f32.mrb[0].mxu0
  %v7358 = vadd.f32 %v7165, %v7357
  %v7359 = vpop.f32.mrb[0].mxu0
  %v7360 = vadd.f32 %v7167, %v7359
  %v7361 = vpop.f32.mrb[0].mxu0
  %v7362 = vadd.f32 %v7169, %v7361
  %7363 = vmatprep.mubr.bf16.mxu0 %v932
  %7364 = vmatmul.mubr.bf16.gmra.mrb[0].mxu0 %v931
  %v7365 = vpop.f32.mrb[0].mxu0
  %v7366 = vadd.f32 %v7173, %v7365
  %v7367 = vpop.f32.mrb[0].mxu0
  %v7368 = vadd.f32 %v7175, %v7367
  %v7369 = vpop.f32.mrb[0].mxu0
  %v7370 = vadd.f32 %v7177, %v7369
  %v7371 = vpop.f32.mrb[0].mxu0
  %v7372 = vadd.f32 %v7179, %v7371
  %7373 = vmatprep.mubr.bf16.mxu0 %v942
  %7374 = vmatmul.mubr.bf16.gmra.mrb[0].mxu0 %v941
  %v7375 = vpop.f32.mrb[0].mxu0
  %v7376 = vadd.f32 %v7183, %v7375
  %v7377 = vpop.f32.mrb[0].mxu0
  %v7378 = vadd.f32 %v7185, %v7377
  %v7379 = vpop.f32.mrb[0].mxu0
  %v7380 = vadd.f32 %v7187, %v7379
  %v7381 = vpop.f32.mrb[0].mxu0
  %v7382 = vadd.f32 %v7189, %v7381
  %7383 = vmatprep.mubr.bf16.mxu0 %v952
  %7384 = vmatmul.mubr.bf16.gmra.mrb[0].mxu0 %v951
  %v7385 = vpop.f32.mrb[0].mxu0
  %v7386 = vadd.f32 %v7193, %v7385
  %v7387 = vpop.f32.mrb[0].mxu0
  %v7388 = vadd.f32 %v7195, %v7387
  %v7389 = vpop.f32.mrb[0].mxu0
  %v7390 = vadd.f32 %v7197, %v7389
  %v7391 = vpop.f32.mrb[0].mxu0
  %v7392 = vadd.f32 %v7199, %v7391
  %7393 = vmatprep.mubr.bf16.mxu0 %v962
  %7394 = vmatmul.mubr.bf16.gmra.mrb[0].mxu0 %v961
  %v7395 = vpop.f32.mrb[0].mxu0
  %v7396 = vadd.f32 %v7203, %v7395
  %v7397 = vpop.f32.mrb[0].mxu0
  %v7398 = vadd.f32 %v7205, %v7397
  %v7399 = vpop.f32.mrb[0].mxu0
  %v7400 = vadd.f32 %v7207, %v7399
  %v7401 = vpop.f32.mrb[0].mxu0
  %v7402 = vadd.f32 %v7209, %v7401
  %7403 = vmatprep.mubr.bf16.mxu0 %v972
  %7404 = vmatmul.mubr.bf16.gmra.mrb[0].mxu0 %v971
  %v7405 = vpop.f32.mrb[0].mxu0
  %v7406 = vadd.f32 %v7213, %v7405
  %v7407 = vpop.f32.mrb[0].mxu0
  %v7408 = vadd.f32 %v7215, %v7407
  %v7409 = vpop.f32.mrb[0].mxu0
  %v7410 = vadd.f32 %v7217, %v7409
  %v7411 = vpop.f32.mrb[0].mxu0
  %v7412 = vadd.f32 %v7219, %v7411
  %7413 = vmatprep.mubr.bf16.mxu0 %v982
  %7414 = vmatmul.mubr.bf16.gmra.mrb[0].mxu0 %v981
  %v7415 = vpop.f32.mrb[0].mxu0
  %v7416 = vadd.f32 %v7223, %v7415
  %v7417 = vpop.f32.mrb[0].mxu0
  %v7418 = vadd.f32 %v7225, %v7417
  %v7419 = vpop.f32.mrb[0].mxu0
  %v7420 = vadd.f32 %v7227, %v7419
  %v7421 = vpop.f32.mrb[0].mxu0
  %v7422 = vadd.f32 %v7229, %v7421
  %7423 = vmatprep.mubr.bf16.mxu0 %v992
  %7424 = vmatmul.mubr.bf16.gmra.mrb[0].mxu0 %v991
  %v7425 = vpop.f32.mrb[0].mxu0
  %v7426 = vadd.f32 %v7233, %v7425
  %v7427 = vpop.f32.mrb[0].mxu0
  %v7428 = vadd.f32 %v7235, %v7427
  %v7429 = vpop.f32.mrb[0].mxu0
  %v7430 = vadd.f32 %v7237, %v7429
  %v7431 = vpop.f32.mrb[0].mxu0
  %v7432 = vadd.f32 %v7239, %v7431
  %7433 = vdwg.mxu0
  %v7434 = vpack.c.bf16 %v7280, %v7276
  %v7435 = vpack.c.bf16 %v7282, %v7278
  %v7436 = vpack.c.bf16 %v7290, %v7286
  %v7437 = vpack.c.bf16 %v7292, %v7288
  %v7438 = vpack.c.bf16 %v7300, %v7296
  %v7439 = vpack.c.bf16 %v7302, %v7298
  %v7440 = vpack.c.bf16 %v7310, %v7306
  %v7441 = vpack.c.bf16 %v7312, %v7308
  %v7442 = vpack.c.bf16 %v7320, %v7316
  %v7443 = vpack.c.bf16 %v7322, %v7318
  %v7444 = vpack.c.bf16 %v7330, %v7326
  %v7445 = vpack.c.bf16 %v7332, %v7328
  %v7446 = vpack.c.bf16 %v7340, %v7336
  %v7447 = vpack.c.bf16 %v7342, %v7338
  %v7448 = vpack.c.bf16 %v7350, %v7346
  %v7449 = vpack.c.bf16 %v7352, %v7348
  %v7450 = vpack.c.bf16 %v7360, %v7356
  %v7451 = vpack.c.bf16 %v7362, %v7358
  %v7452 = vpack.c.bf16 %v7370, %v7366
  %v7453 = vpack.c.bf16 %v7372, %v7368
  %v7454 = vpack.c.bf16 %v7380, %v7376
  %v7455 = vpack.c.bf16 %v7382, %v7378
  %v7456 = vpack.c.bf16 %v7390, %v7386
  %v7457 = vpack.c.bf16 %v7392, %v7388
  %v7458 = vpack.c.bf16 %v7400, %v7396
  %v7459 = vpack.c.bf16 %v7402, %v7398
  %v7460 = vpack.c.bf16 %v7410, %v7406
  %v7461 = vpack.c.bf16 %v7412, %v7408
  %v7462 = vpack.c.bf16 %v7420, %v7416
  %v7463 = vpack.c.bf16 %v7422, %v7418
  %v7464 = vpack.c.bf16 %v7430, %v7426
  %v7465 = vpack.c.bf16 %v7432, %v7428
  %v7466 = vld [vmem:[%s3 + $0x100] sm:$0xf]
  %v7467 = vld [vmem:[%s3 + $0x104] sm:$0xf]
  %v7468 = vld [vmem:[%s3 + $0x108] sm:$0xf]
  %v7469 = vld [vmem:[%s3 + $0x10c] sm:$0xf]
  %v7470 = vld [vmem:[%s3 + $0x110] sm:$0xf]
  %v7471 = vld [vmem:[%s3 + $0x114] sm:$0xf]
  %v7472 = vld [vmem:[%s3 + $0x118] sm:$0xf]
  %v7473 = vld [vmem:[%s3 + $0x11c] sm:$0xf]
  %v7474 = vld [vmem:[%s3 + $0x120] sm:$0xf]
  %v7475 = vld [vmem:[%s3 + $0x124] sm:$0xf]
  %v7476 = vld [vmem:[%s3 + $0x128] sm:$0xf]
  %v7477 = vld [vmem:[%s3 + $0x12c] sm:$0xf]
  %v7478 = vld [vmem:[%s3 + $0x130] sm:$0xf]
  %v7479 = vld [vmem:[%s3 + $0x134] sm:$0xf]
  %v7480 = vld [vmem:[%s3 + $0x138] sm:$0xf]
  %v7481 = vld [vmem:[%s3 + $0x13c] sm:$0xf]
  %v7482 = vld [vmem:[%s3 + $0x140] sm:$0xf]
  %v7483 = vld [vmem:[%s3 + $0x144] sm:$0xf]
  %v7484 = vld [vmem:[%s3 + $0x148] sm:$0xf]
  %v7485 = vld [vmem:[%s3 + $0x14c] sm:$0xf]
  %v7486 = vld [vmem:[%s3 + $0x150] sm:$0xf]
  %v7487 = vld [vmem:[%s3 + $0x154] sm:$0xf]
  %v7488 = vld [vmem:[%s3 + $0x158] sm:$0xf]
  %v7489 = vld [vmem:[%s3 + $0x15c] sm:$0xf]
  %v7490 = vld [vmem:[%s3 + $0x160] sm:$0xf]
  %v7491 = vld [vmem:[%s3 + $0x164] sm:$0xf]
  %v7492 = vld [vmem:[%s3 + $0x168] sm:$0xf]
  %v7493 = vld [vmem:[%s3 + $0x16c] sm:$0xf]
  %v7494 = vld [vmem:[%s3 + $0x170] sm:$0xf]
  %v7495 = vld [vmem:[%s3 + $0x174] sm:$0xf]
  %v7496 = vld [vmem:[%s3 + $0x178] sm:$0xf]
  %v7497 = vld [vmem:[%s3 + $0x17c] sm:$0xf]
  %v7530 = vunpack.c.l.b16 %v7466
  %v7531 = vunpack.c.l.b16 %v7467
  %v7532 = vunpack.c.l.b16 %v7468
  %v7533 = vunpack.c.l.b16 %v7469
  %v7534 = vunpack.c.l.b16 %v7470
  %v7535 = vunpack.c.l.b16 %v7471
  %v7536 = vunpack.c.l.b16 %v7472
  %v7537 = vunpack.c.l.b16 %v7473
  %v7538 = vunpack.c.l.b16 %v7474
  %v7539 = vunpack.c.l.b16 %v7475
  %v7540 = vunpack.c.l.b16 %v7476
  %v7541 = vunpack.c.l.b16 %v7477
  %v7542 = vunpack.c.l.b16 %v7478
  %v7543 = vunpack.c.l.b16 %v7479
  %v7544 = vunpack.c.l.b16 %v7480
  %v7545 = vunpack.c.l.b16 %v7481
  %v7546 = vunpack.c.l.b16 %v7482
  %v7547 = vunpack.c.l.b16 %v7483
  %v7548 = vunpack.c.l.b16 %v7484
  %v7549 = vunpack.c.l.b16 %v7485
  %v7550 = vunpack.c.l.b16 %v7486
  %v7551 = vunpack.c.l.b16 %v7487
  %v7552 = vunpack.c.l.b16 %v7488
  %v7553 = vunpack.c.l.b16 %v7489
  %v7554 = vunpack.c.l.b16 %v7490
  %v7555 = vunpack.c.l.b16 %v7491
  %v7556 = vunpack.c.l.b16 %v7492
  %v7557 = vunpack.c.l.b16 %v7493
  %v7558 = vunpack.c.l.b16 %v7494
  %v7559 = vunpack.c.l.b16 %v7495
  %v7560 = vunpack.c.l.b16 %v7496
  %v7561 = vunpack.c.l.b16 %v7497
  %v7562 = vpack.c.b16 %v7531, %v7530
  %v7563 = vpack.c.b16 %v7533, %v7532
  %v7564 = vpack.c.b16 %v7535, %v7534
  %v7565 = vpack.c.b16 %v7537, %v7536
  %v7566 = vpack.c.b16 %v7539, %v7538
  %v7567 = vpack.c.b16 %v7541, %v7540
  %v7568 = vpack.c.b16 %v7543, %v7542
  %v7569 = vpack.c.b16 %v7545, %v7544
  %v7570 = vpack.c.b16 %v7547, %v7546
  %v7571 = vpack.c.b16 %v7549, %v7548
  %v7572 = vpack.c.b16 %v7551, %v7550
  %v7573 = vpack.c.b16 %v7553, %v7552
  %v7574 = vpack.c.b16 %v7555, %v7554
  %v7575 = vpack.c.b16 %v7557, %v7556
  %v7576 = vpack.c.b16 %v7559, %v7558
  %v7577 = vpack.c.b16 %v7561, %v7560
  %7594 = vmatprep.subr.bf16.mxu0 0
  %7595 = vmatpush1.bf16.msra.mxu0 %v7562
  %7596 = vmatprep.subr.bf16.mxu0 0
  %7597 = vmatpush1.bf16.msra.mxu0 %v7563
  %7598 = vmatprep.subr.bf16.mxu0 0
  %7599 = vmatpush1.bf16.msra.mxu0 %v7564
  %7600 = vmatprep.subr.bf16.mxu0 0
  %7601 = vmatpush1.bf16.msra.mxu0 %v7565
  %7602 = vmatprep.subr.bf16.mxu0 0
  %7603 = vmatpush1.bf16.msra.mxu0 %v7566
  %7604 = vmatprep.subr.bf16.mxu0 0
  %7605 = vmatpush1.bf16.msra.mxu0 %v7567
  %7606 = vmatprep.subr.bf16.mxu0 0
  %7607 = vmatpush1.bf16.msra.mxu0 %v7568
  %7608 = vmatprep.subr.bf16.mxu0 0
  %7609 = vmatpush1.bf16.msra.mxu0 %v7569
  %7610 = vmatprep.subr.bf16.mxu0 0
  %7611 = vmatpush1.bf16.msra.mxu0 %v7570
  %7612 = vmatprep.subr.bf16.mxu0 0
  %7613 = vmatpush1.bf16.msra.mxu0 %v7571
  %7614 = vmatprep.subr.bf16.mxu0 0
  %7615 = vmatpush1.bf16.msra.mxu0 %v7572
  %7616 = vmatprep.subr.bf16.mxu0 0
  %7617 = vmatpush1.bf16.msra.mxu0 %v7573
  %7618 = vmatprep.subr.bf16.mxu0 0
  %7619 = vmatpush1.bf16.msra.mxu0 %v7574
  %7620 = vmatprep.subr.bf16.mxu0 0
  %7621 = vmatpush1.bf16.msra.mxu0 %v7575
  %7622 = vmatprep.subr.bf16.mxu0 0
  %7623 = vmatpush1.bf16.msra.mxu0 %v7576
  %7624 = vmatprep.subr.bf16.mxu0 0
  %7625 = vmatpush1.bf16.msra.mxu0 %v7577
  %7626 = vmatprep.mubr.bf16.mxu0 %v7435
  %7627 = vmatmul.mubr.bf16.gmra.mrb[0].mxu0 %v7434
  %v7628 = vpop.f32.mrb[0].mxu0
  %v7629 = vadd.f32 0.0, %v7628
  %v7630 = vpop.f32.mrb[0].mxu0
  %v7631 = vpop.f32.mrb[0].mxu0
  %v7632 = vadd.f32 0.0, %v7631
  %v7633 = vpop.f32.mrb[0].mxu0
  %7634 = vmatprep.mubr.bf16.mxu0 %v7437
  %7635 = vmatmul.mubr.bf16.gmra.mrb[0].mxu0 %v7436
  %v7636 = vpop.f32.mrb[0].mxu0
  %v7637 = vadd.f32 0.0, %v7636
  %v7638 = vpop.f32.mrb[0].mxu0
  %v7639 = vpop.f32.mrb[0].mxu0
  %v7640 = vadd.f32 0.0, %v7639
  %v7641 = vpop.f32.mrb[0].mxu0
  %7642 = vmatprep.mubr.bf16.mxu0 %v7439
  %7643 = vmatmul.mubr.bf16.gmra.mrb[0].mxu0 %v7438
  %v7644 = vpop.f32.mrb[0].mxu0
  %v7645 = vadd.f32 0.0, %v7644
  %v7646 = vpop.f32.mrb[0].mxu0
  %v7647 = vpop.f32.mrb[0].mxu0
  %v7648 = vadd.f32 0.0, %v7647
  %v7649 = vpop.f32.mrb[0].mxu0
  %7650 = vmatprep.mubr.bf16.mxu0 %v7441
  %7651 = vmatmul.mubr.bf16.gmra.mrb[0].mxu0 %v7440
  %v7652 = vpop.f32.mrb[0].mxu0
  %v7653 = vadd.f32 0.0, %v7652
  %v7654 = vpop.f32.mrb[0].mxu0
  %v7655 = vpop.f32.mrb[0].mxu0
  %v7656 = vadd.f32 0.0, %v7655
  %v7657 = vpop.f32.mrb[0].mxu0
  %7658 = vmatprep.mubr.bf16.mxu0 %v7443
  %7659 = vmatmul.mubr.bf16.gmra.mrb[0].mxu0 %v7442
  %v7660 = vpop.f32.mrb[0].mxu0
  %v7661 = vadd.f32 0.0, %v7660
  %v7662 = vpop.f32.mrb[0].mxu0
  %v7663 = vpop.f32.mrb[0].mxu0
  %v7664 = vadd.f32 0.0, %v7663
  %v7665 = vpop.f32.mrb[0].mxu0
  %7666 = vmatprep.mubr.bf16.mxu0 %v7445
  %7667 = vmatmul.mubr.bf16.gmra.mrb[0].mxu0 %v7444
  %v7668 = vpop.f32.mrb[0].mxu0
  %v7669 = vadd.f32 0.0, %v7668
  %v7670 = vpop.f32.mrb[0].mxu0
  %v7671 = vpop.f32.mrb[0].mxu0
  %v7672 = vadd.f32 0.0, %v7671
  %v7673 = vpop.f32.mrb[0].mxu0
  %7674 = vmatprep.mubr.bf16.mxu0 %v7447
  %7675 = vmatmul.mubr.bf16.gmra.mrb[0].mxu0 %v7446
  %v7676 = vpop.f32.mrb[0].mxu0
  %v7677 = vadd.f32 0.0, %v7676
  %v7678 = vpop.f32.mrb[0].mxu0
  %v7679 = vpop.f32.mrb[0].mxu0
  %v7680 = vadd.f32 0.0, %v7679
  %v7681 = vpop.f32.mrb[0].mxu0
  %7682 = vmatprep.mubr.bf16.mxu0 %v7449
  %7683 = vmatmul.mubr.bf16.gmra.mrb[0].mxu0 %v7448
  %v7684 = vpop.f32.mrb[0].mxu0
  %v7685 = vadd.f32 0.0, %v7684
  %v7686 = vpop.f32.mrb[0].mxu0
  %v7687 = vpop.f32.mrb[0].mxu0
  %v7688 = vadd.f32 0.0, %v7687
  %v7689 = vpop.f32.mrb[0].mxu0
  %7690 = vmatprep.mubr.bf16.mxu0 %v7451
  %7691 = vmatmul.mubr.bf16.gmra.mrb[0].mxu0 %v7450
  %v7692 = vpop.f32.mrb[0].mxu0
  %v7693 = vadd.f32 0.0, %v7692
  %v7694 = vpop.f32.mrb[0].mxu0
  %v7695 = vpop.f32.mrb[0].mxu0
  %v7696 = vadd.f32 0.0, %v7695
  %v7697 = vpop.f32.mrb[0].mxu0
  %7698 = vmatprep.mubr.bf16.mxu0 %v7453
  %7699 = vmatmul.mubr.bf16.gmra.mrb[0].mxu0 %v7452
  %v7700 = vpop.f32.mrb[0].mxu0
  %v7701 = vadd.f32 0.0, %v7700
  %v7702 = vpop.f32.mrb[0].mxu0
  %v7703 = vpop.f32.mrb[0].mxu0
  %v7704 = vadd.f32 0.0, %v7703
  %v7705 = vpop.f32.mrb[0].mxu0
  %7706 = vmatprep.mubr.bf16.mxu0 %v7455
  %7707 = vmatmul.mubr.bf16.gmra.mrb[0].mxu0 %v7454
  %v7708 = vpop.f32.mrb[0].mxu0
  %v7709 = vadd.f32 0.0, %v7708
  %v7710 = vpop.f32.mrb[0].mxu0
  %v7711 = vpop.f32.mrb[0].mxu0
  %v7712 = vadd.f32 0.0, %v7711
  %v7713 = vpop.f32.mrb[0].mxu0
  %7714 = vmatprep.mubr.bf16.mxu0 %v7457
  %7715 = vmatmul.mubr.bf16.gmra.mrb[0].mxu0 %v7456
  %v7716 = vpop.f32.mrb[0].mxu0
  %v7717 = vadd.f32 0.0, %v7716
  %v7718 = vpop.f32.mrb[0].mxu0
  %v7719 = vpop.f32.mrb[0].mxu0
  %v7720 = vadd.f32 0.0, %v7719
  %v7721 = vpop.f32.mrb[0].mxu0
  %7722 = vmatprep.mubr.bf16.mxu0 %v7459
  %7723 = vmatmul.mubr.bf16.gmra.mrb[0].mxu0 %v7458
  %v7724 = vpop.f32.mrb[0].mxu0
  %v7725 = vadd.f32 0.0, %v7724
  %v7726 = vpop.f32.mrb[0].mxu0
  %v7727 = vpop.f32.mrb[0].mxu0
  %v7728 = vadd.f32 0.0, %v7727
  %v7729 = vpop.f32.mrb[0].mxu0
  %7730 = vmatprep.mubr.bf16.mxu0 %v7461
  %7731 = vmatmul.mubr.bf16.gmra.mrb[0].mxu0 %v7460
  %v7732 = vpop.f32.mrb[0].mxu0
  %v7733 = vadd.f32 0.0, %v7732
  %v7734 = vpop.f32.mrb[0].mxu0
  %v7735 = vpop.f32.mrb[0].mxu0
  %v7736 = vadd.f32 0.0, %v7735
  %v7737 = vpop.f32.mrb[0].mxu0
  %7738 = vmatprep.mubr.bf16.mxu0 %v7463
  %7739 = vmatmul.mubr.bf16.gmra.mrb[0].mxu0 %v7462
  %v7740 = vpop.f32.mrb[0].mxu0
  %v7741 = vadd.f32 0.0, %v7740
  %v7742 = vpop.f32.mrb[0].mxu0
  %v7743 = vpop.f32.mrb[0].mxu0
  %v7744 = vadd.f32 0.0, %v7743
  %v7745 = vpop.f32.mrb[0].mxu0
  %7746 = vmatprep.mubr.bf16.mxu0 %v7465
  %7747 = vmatmul.mubr.bf16.gmra.mrb[0].mxu0 %v7464
  %v7748 = vpop.f32.mrb[0].mxu0
  %v7749 = vadd.f32 0.0, %v7748
  %v7750 = vpop.f32.mrb[0].mxu0
  %v7751 = vpop.f32.mrb[0].mxu0
  %v7752 = vadd.f32 0.0, %v7751
  %v7753 = vpop.f32.mrb[0].mxu0
  %7754 = vdwg.mxu0
  %v7755 = vadd.f32 %v5371, %v7629
  %v7756 = vadd.f32 %v5374, %v7632
  %v7757 = vadd.f32 %v5379, %v7637
  %v7758 = vadd.f32 %v5382, %v7640
  %v7759 = vadd.f32 %v5387, %v7645
  %v7760 = vadd.f32 %v5390, %v7648
  %v7761 = vadd.f32 %v5395, %v7653
  %v7762 = vadd.f32 %v5398, %v7656
  %v7763 = vadd.f32 %v5403, %v7661
  %v7764 = vadd.f32 %v5406, %v7664
  %v7765 = vadd.f32 %v5411, %v7669
  %v7766 = vadd.f32 %v5414, %v7672
  %v7767 = vadd.f32 %v5419, %v7677
  %v7768 = vadd.f32 %v5422, %v7680
  %v7769 = vadd.f32 %v5427, %v7685
  %v7770 = vadd.f32 %v5430, %v7688
  %v7771 = vadd.f32 %v5435, %v7693
  %v7772 = vadd.f32 %v5438, %v7696
  %v7773 = vadd.f32 %v5443, %v7701
  %v7774 = vadd.f32 %v5446, %v7704
  %v7775 = vadd.f32 %v5451, %v7709
  %v7776 = vadd.f32 %v5454, %v7712
  %v7777 = vadd.f32 %v5459, %v7717
  %v7778 = vadd.f32 %v5462, %v7720
  %v7779 = vadd.f32 %v5467, %v7725
  %v7780 = vadd.f32 %v5470, %v7728
  %v7781 = vadd.f32 %v5475, %v7733
  %v7782 = vadd.f32 %v5478, %v7736
  %v7783 = vadd.f32 %v5483, %v7741
  %v7784 = vadd.f32 %v5486, %v7744
  %v7785 = vadd.f32 %v5491, %v7749
  %v7786 = vadd.f32 %v5494, %v7752
  %v7787 = vld [vmem:[%s1 + $0x18] sm:$0xff]
  %v7788 = vld [vmem:[%s1 + $0x40] sm:$0xff]
  %v7789 = vld [vmem:[%s1 + $0x68] sm:$0xff]
  %v7790 = vld [vmem:[%s1 + $0x90] sm:$0xff]
  %v7791 = vld [vmem:[%s1 + $0xb8] sm:$0xff]
  %v7792 = vld [vmem:[%s1 + $0xe0] sm:$0xff]
  %v7793 = vld [vmem:[%s1 + $0x108] sm:$0xff]
  %v7794 = vld [vmem:[%s1 + $0x130] sm:$0xff]
  %v7795 = vld [vmem:[%s1 + $0x158] sm:$0xff]
  %v7796 = vld [vmem:[%s1 + $0x180] sm:$0xff]
  %v7797 = vld [vmem:[%s1 + $0x1a8] sm:$0xff]
  %v7798 = vld [vmem:[%s1 + $0x1d0] sm:$0xff]
  %v7799 = vld [vmem:[%s1 + $0x1f8] sm:$0xff]
  %v7800 = vld [vmem:[%s1 + $0x220] sm:$0xff]
  %v7801 = vld [vmem:[%s1 + $0x248] sm:$0xff]
  %v7802 = vld [vmem:[%s1 + $0x270] sm:$0xff]
  %v7803 = vld [vmem:[%s1 + $0x298] sm:$0xff]
  %v7804 = vld [vmem:[%s1 + $0x2c0] sm:$0xff]
  %v7805 = vld [vmem:[%s1 + $0x2e8] sm:$0xff]
  %v7806 = vld [vmem:[%s1 + $0x310] sm:$0xff]
  %v7807 = vld [vmem:[%s1 + $0x338] sm:$0xff]
  %v7808 = vld [vmem:[%s1 + $0x360] sm:$0xff]
  %v7809 = vld [vmem:[%s1 + $0x388] sm:$0xff]
  %v7810 = vld [vmem:[%s1 + $0x3b0] sm:$0xff]
  %v7811 = vld [vmem:[%s1 + $0x3d8] sm:$0xff]
  %v7812 = vld [vmem:[%s1 + $0x400] sm:$0xff]
  %v7813 = vld [vmem:[%s1 + $0x428] sm:$0xff]
  %v7814 = vld [vmem:[%s1 + $0x450] sm:$0xff]
  %v7815 = vld [vmem:[%s1 + $0x478] sm:$0xff]
  %v7816 = vld [vmem:[%s1 + $0x4a0] sm:$0xff]
  %v7817 = vld [vmem:[%s1 + $0x4c8] sm:$0xff]
  %v7818 = vld [vmem:[%s1 + $0x4f0] sm:$0xff]
  %v7819 = vld [vmem:[%s1 + $0x518] sm:$0xff]
  %v7820 = vld [vmem:[%s1 + $0x540] sm:$0xff]
  %v7821 = vld [vmem:[%s1 + $0x568] sm:$0xff]
  %v7822 = vld [vmem:[%s1 + $0x590] sm:$0xff]
  %v7823 = vld [vmem:[%s1 + $0x5b8] sm:$0xff]
  %v7824 = vld [vmem:[%s1 + $0x5e0] sm:$0xff]
  %v7825 = vld [vmem:[%s1 + $0x608] sm:$0xff]
  %v7826 = vld [vmem:[%s1 + $0x630] sm:$0xff]
  %v7827 = vld [vmem:[%s1 + $0x658] sm:$0xff]
  %v7828 = vld [vmem:[%s1 + $0x680] sm:$0xff]
  %v7829 = vld [vmem:[%s1 + $0x6a8] sm:$0xff]
  %v7830 = vld [vmem:[%s1 + $0x6d0] sm:$0xff]
  %v7831 = vld [vmem:[%s1 + $0x6f8] sm:$0xff]
  %v7832 = vld [vmem:[%s1 + $0x720] sm:$0xff]
  %v7833 = vld [vmem:[%s1 + $0x748] sm:$0xff]
  %v7834 = vld [vmem:[%s1 + $0x770] sm:$0xff]
  %v7835 = vld [vmem:[%s1 + $0x798] sm:$0xff]
  %v7836 = vld [vmem:[%s1 + $0x7c0] sm:$0xff]
  %v7837 = vld [vmem:[%s1 + $0x7e8] sm:$0xff]
  %v7838 = vld [vmem:[%s1 + $0x810] sm:$0xff]
  %v7839 = vld [vmem:[%s1 + $0x838] sm:$0xff]
  %v7840 = vld [vmem:[%s1 + $0x860] sm:$0xff]
  %v7841 = vld [vmem:[%s1 + $0x888] sm:$0xff]
  %v7842 = vld [vmem:[%s1 + $0x8b0] sm:$0xff]
  %v7843 = vld [vmem:[%s1 + $0x8d8] sm:$0xff]
  %v7844 = vld [vmem:[%s1 + $0x900] sm:$0xff]
  %v7845 = vld [vmem:[%s1 + $0x928] sm:$0xff]
  %v7846 = vld [vmem:[%s1 + $0x950] sm:$0xff]
  %v7847 = vld [vmem:[%s1 + $0x978] sm:$0xff]
  %v7848 = vld [vmem:[%s1 + $0x9a0] sm:$0xff]
  %v7849 = vld [vmem:[%s1 + $0x9c8] sm:$0xff]
  %v7850 = vld [vmem:[%s1 + $0x9f0] sm:$0xff]
  %v7851 = vld [vmem:[%s1 + $0xa18] sm:$0xff]
  %v7852 = vld [vmem:[%s1 + $0xa40] sm:$0xff]
  %v7853 = vld [vmem:[%s1 + $0xa68] sm:$0xff]
  %v7854 = vld [vmem:[%s1 + $0xa90] sm:$0xff]
  %v7855 = vld [vmem:[%s1 + $0xab8] sm:$0xff]
  %v7856 = vld [vmem:[%s1 + $0xae0] sm:$0xff]
  %v7857 = vld [vmem:[%s1 + $0xb08] sm:$0xff]
  %v7858 = vld [vmem:[%s1 + $0xb30] sm:$0xff]
  %v7859 = vld [vmem:[%s1 + $0xb58] sm:$0xff]
  %v7860 = vld [vmem:[%s1 + $0xb80] sm:$0xff]
  %v7861 = vld [vmem:[%s1 + $0xba8] sm:$0xff]
  %v7862 = vld [vmem:[%s1 + $0xbd0] sm:$0xff]
  %v7863 = vld [vmem:[%s1 + $0xbf8] sm:$0xff]
  %v7864 = vld [vmem:[%s1 + $0xc20] sm:$0xff]
  %v7865 = vld [vmem:[%s1 + $0xc48] sm:$0xff]
  %v7866 = vld [vmem:[%s1 + $0xc70] sm:$0xff]
  %v7867 = vld [vmem:[%s1 + $0xc98] sm:$0xff]
  %v7868 = vld [vmem:[%s1 + $0xcc0] sm:$0xff]
  %v7869 = vld [vmem:[%s1 + $0xce8] sm:$0xff]
  %v7870 = vld [vmem:[%s1 + $0xd10] sm:$0xff]
  %v7871 = vld [vmem:[%s1 + $0xd38] sm:$0xff]
  %v7872 = vld [vmem:[%s1 + $0xd60] sm:$0xff]
  %v7873 = vld [vmem:[%s1 + $0xd88] sm:$0xff]
  %v7874 = vld [vmem:[%s1 + $0xdb0] sm:$0xff]
  %v7875 = vld [vmem:[%s1 + $0xdd8] sm:$0xff]
  %v7876 = vld [vmem:[%s1 + $0xe00] sm:$0xff]
  %v7877 = vld [vmem:[%s1 + $0xe28] sm:$0xff]
  %v7878 = vld [vmem:[%s1 + $0xe50] sm:$0xff]
  %v7879 = vld [vmem:[%s1 + $0xe78] sm:$0xff]
  %v7880 = vld [vmem:[%s1 + $0xea0] sm:$0xff]
  %v7881 = vld [vmem:[%s1 + $0xec8] sm:$0xff]
  %v7882 = vld [vmem:[%s1 + $0xef0] sm:$0xff]
  %v7883 = vld [vmem:[%s1 + $0xf18] sm:$0xff]
  %v7884 = vld [vmem:[%s1 + $0xf40] sm:$0xff]
  %v7885 = vld [vmem:[%s1 + $0xf68] sm:$0xff]
  %v7886 = vld [vmem:[%s1 + $0xf90] sm:$0xff]
  %v7887 = vld [vmem:[%s1 + $0xfb8] sm:$0xff]
  %v7888 = vld [vmem:[%s1 + $0xfe0] sm:$0xff]
  %v7889 = vld [vmem:[%s1 + $0x1008] sm:$0xff]
  %v7890 = vld [vmem:[%s1 + $0x1030] sm:$0xff]
  %v7891 = vld [vmem:[%s1 + $0x1058] sm:$0xff]
  %v7892 = vld [vmem:[%s1 + $0x1080] sm:$0xff]
  %v7893 = vld [vmem:[%s1 + $0x10a8] sm:$0xff]
  %v7894 = vld [vmem:[%s1 + $0x10d0] sm:$0xff]
  %v7895 = vld [vmem:[%s1 + $0x10f8] sm:$0xff]
  %v7896 = vld [vmem:[%s1 + $0x1120] sm:$0xff]
  %v7897 = vld [vmem:[%s1 + $0x1148] sm:$0xff]
  %v7898 = vld [vmem:[%s1 + $0x1170] sm:$0xff]
  %v7899 = vld [vmem:[%s1 + $0x1198] sm:$0xff]
  %v7900 = vld [vmem:[%s1 + $0x11c0] sm:$0xff]
  %v7901 = vld [vmem:[%s1 + $0x11e8] sm:$0xff]
  %v7902 = vld [vmem:[%s1 + $0x1210] sm:$0xff]
  %v7903 = vld [vmem:[%s1 + $0x1238] sm:$0xff]
  %v7904 = vld [vmem:[%s1 + $0x1260] sm:$0xff]
  %v7905 = vld [vmem:[%s1 + $0x1288] sm:$0xff]
  %v7906 = vld [vmem:[%s1 + $0x12b0] sm:$0xff]
  %v7907 = vld [vmem:[%s1 + $0x12d8] sm:$0xff]
  %v7908 = vld [vmem:[%s1 + $0x1300] sm:$0xff]
  %v7909 = vld [vmem:[%s1 + $0x1328] sm:$0xff]
  %v7910 = vld [vmem:[%s1 + $0x1350] sm:$0xff]
  %v7911 = vld [vmem:[%s1 + $0x1378] sm:$0xff]
  %v7912 = vld [vmem:[%s1 + $0x13a0] sm:$0xff]
  %v7913 = vld [vmem:[%s1 + $0x13c8] sm:$0xff]
  %v7914 = vld [vmem:[%s1 + $0x13f0] sm:$0xff]
  %v7915 = vld [vmem:[%s1 + $0x1418] sm:$0xff]
  %v7916 = vld [vmem:[%s1 + $0x1440] sm:$0xff]
  %v7917 = vld [vmem:[%s1 + $0x1468] sm:$0xff]
  %v7918 = vld [vmem:[%s1 + $0x1490] sm:$0xff]
  %v7919 = vld [vmem:[%s1 + $0x14b8] sm:$0xff]
  %v7920 = vld [vmem:[%s1 + $0x14e0] sm:$0xff]
  %v7921 = vld [vmem:[%s1 + $0x1508] sm:$0xff]
  %v7922 = vld [vmem:[%s1 + $0x1530] sm:$0xff]
  %v7923 = vld [vmem:[%s1 + $0x1558] sm:$0xff]
  %v7924 = vld [vmem:[%s1 + $0x1580] sm:$0xff]
  %v7925 = vld [vmem:[%s1 + $0x15a8] sm:$0xff]
  %v7926 = vld [vmem:[%s1 + $0x15d0] sm:$0xff]
  %v7927 = vld [vmem:[%s1 + $0x15f8] sm:$0xff]
  %v7928 = vld [vmem:[%s1 + $0x1620] sm:$0xff]
  %v7929 = vld [vmem:[%s1 + $0x1648] sm:$0xff]
  %v7930 = vld [vmem:[%s1 + $0x1670] sm:$0xff]
  %v7931 = vld [vmem:[%s1 + $0x1698] sm:$0xff]
  %v7932 = vld [vmem:[%s1 + $0x16c0] sm:$0xff]
  %v7933 = vld [vmem:[%s1 + $0x16e8] sm:$0xff]
  %v7934 = vld [vmem:[%s1 + $0x1710] sm:$0xff]
  %v7935 = vld [vmem:[%s1 + $0x1738] sm:$0xff]
  %v7936 = vld [vmem:[%s1 + $0x1760] sm:$0xff]
  %v7937 = vld [vmem:[%s1 + $0x1788] sm:$0xff]
  %v7938 = vld [vmem:[%s1 + $0x17b0] sm:$0xff]
  %v7939 = vld [vmem:[%s1 + $0x17d8] sm:$0xff]
  %v7940 = vld [vmem:[%s1 + $0x1800] sm:$0xff]
  %v7941 = vld [vmem:[%s1 + $0x1828] sm:$0xff]
  %v7942 = vld [vmem:[%s1 + $0x1850] sm:$0xff]
  %v7943 = vld [vmem:[%s1 + $0x1878] sm:$0xff]
  %v7944 = vld [vmem:[%s1 + $0x18a0] sm:$0xff]
  %v7945 = vld [vmem:[%s1 + $0x18c8] sm:$0xff]
  %v7946 = vld [vmem:[%s1 + $0x18f0] sm:$0xff]
  %v7947 = vld [vmem:[%s2 + $0x6] sm:$0x3]
  %v7949 = vlaneseq
  %v7950 = vshrl.u32 %v7949, 7
  %v7951 = vsub.s32 0, %v7950
  %v7952 = vrot.slane %v7947, %v7951
  %v7953 = vlaneseq
  %v7954 = vshrl.u32 %v7953, 7
  %v7955 = vsub.s32 1, %v7954
  %v7956 = vrot.slane %v7947, %v7955
  %v8119 = vunpack.c.l.b16 %v7787
  %v8120 = vunpack.c.h.b16 %v7787
  %v8121 = vunpack.c.l.b16 %v7788
  %v8122 = vunpack.c.h.b16 %v7788
  %v8123 = vunpack.c.l.b16 %v7789
  %v8124 = vunpack.c.h.b16 %v7789
  %v8125 = vunpack.c.l.b16 %v7790
  %v8126 = vunpack.c.h.b16 %v7790
  %v8127 = vunpack.c.l.b16 %v7791
  %v8128 = vunpack.c.h.b16 %v7791
  %v8129 = vunpack.c.l.b16 %v7792
  %v8130 = vunpack.c.h.b16 %v7792
  %v8131 = vunpack.c.l.b16 %v7793
  %v8132 = vunpack.c.h.b16 %v7793
  %v8133 = vunpack.c.l.b16 %v7794
  %v8134 = vunpack.c.h.b16 %v7794
  %v8135 = vunpack.c.l.b16 %v7795
  %v8136 = vunpack.c.h.b16 %v7795
  %v8137 = vunpack.c.l.b16 %v7796
  %v8138 = vunpack.c.h.b16 %v7796
  %v8139 = vunpack.c.l.b16 %v7797
  %v8140 = vunpack.c.h.b16 %v7797
  %v8141 = vunpack.c.l.b16 %v7798
  %v8142 = vunpack.c.h.b16 %v7798
  %v8143 = vunpack.c.l.b16 %v7799
  %v8144 = vunpack.c.h.b16 %v7799
  %v8145 = vunpack.c.l.b16 %v7800
  %v8146 = vunpack.c.h.b16 %v7800
  %v8147 = vunpack.c.l.b16 %v7801
  %v8148 = vunpack.c.h.b16 %v7801
  %v8149 = vunpack.c.l.b16 %v7802
  %v8150 = vunpack.c.h.b16 %v7802
  %v8151 = vunpack.c.l.b16 %v7803
  %v8152 = vunpack.c.h.b16 %v7803
  %v8153 = vunpack.c.l.b16 %v7804
  %v8154 = vunpack.c.h.b16 %v7804
  %v8155 = vunpack.c.l.b16 %v7805
  %v8156 = vunpack.c.h.b16 %v7805
  %v8157 = vunpack.c.l.b16 %v7806
  %v8158 = vunpack.c.h.b16 %v7806
  %v8159 = vunpack.c.l.b16 %v7807
  %v8160 = vunpack.c.h.b16 %v7807
  %v8161 = vunpack.c.l.b16 %v7808
  %v8162 = vunpack.c.h.b16 %v7808
  %v8163 = vunpack.c.l.b16 %v7809
  %v8164 = vunpack.c.h.b16 %v7809
  %v8165 = vunpack.c.l.b16 %v7810
  %v8166 = vunpack.c.h.b16 %v7810
  %v8167 = vunpack.c.l.b16 %v7811
  %v8168 = vunpack.c.h.b16 %v7811
  %v8169 = vunpack.c.l.b16 %v7812
  %v8170 = vunpack.c.h.b16 %v7812
  %v8171 = vunpack.c.l.b16 %v7813
  %v8172 = vunpack.c.h.b16 %v7813
  %v8173 = vunpack.c.l.b16 %v7814
  %v8174 = vunpack.c.h.b16 %v7814
  %v8175 = vunpack.c.l.b16 %v7815
  %v8176 = vunpack.c.h.b16 %v7815
  %v8177 = vunpack.c.l.b16 %v7816
  %v8178 = vunpack.c.h.b16 %v7816
  %v8179 = vunpack.c.l.b16 %v7817
  %v8180 = vunpack.c.h.b16 %v7817
  %v8181 = vunpack.c.l.b16 %v7818
  %v8182 = vunpack.c.h.b16 %v7818
  %v8183 = vunpack.c.l.b16 %v7819
  %v8184 = vunpack.c.h.b16 %v7819
  %v8185 = vunpack.c.l.b16 %v7820
  %v8186 = vunpack.c.h.b16 %v7820
  %v8187 = vunpack.c.l.b16 %v7821
  %v8188 = vunpack.c.h.b16 %v7821
  %v8189 = vunpack.c.l.b16 %v7822
  %v8190 = vunpack.c.h.b16 %v7822
  %v8191 = vunpack.c.l.b16 %v7823
  %v8192 = vunpack.c.h.b16 %v7823
  %v8193 = vunpack.c.l.b16 %v7824
  %v8194 = vunpack.c.h.b16 %v7824
  %v8195 = vunpack.c.l.b16 %v7825
  %v8196 = vunpack.c.h.b16 %v7825
  %v8197 = vunpack.c.l.b16 %v7826
  %v8198 = vunpack.c.h.b16 %v7826
  %v8199 = vunpack.c.l.b16 %v7827
  %v8200 = vunpack.c.h.b16 %v7827
  %v8201 = vunpack.c.l.b16 %v7828
  %v8202 = vunpack.c.h.b16 %v7828
  %v8203 = vunpack.c.l.b16 %v7829
  %v8204 = vunpack.c.h.b16 %v7829
  %v8205 = vunpack.c.l.b16 %v7830
  %v8206 = vunpack.c.h.b16 %v7830
  %v8207 = vunpack.c.l.b16 %v7831
  %v8208 = vunpack.c.h.b16 %v7831
  %v8209 = vunpack.c.l.b16 %v7832
  %v8210 = vunpack.c.h.b16 %v7832
  %v8211 = vunpack.c.l.b16 %v7833
  %v8212 = vunpack.c.h.b16 %v7833
  %v8213 = vunpack.c.l.b16 %v7834
  %v8214 = vunpack.c.h.b16 %v7834
  %v8215 = vunpack.c.l.b16 %v7835
  %v8216 = vunpack.c.h.b16 %v7835
  %v8217 = vunpack.c.l.b16 %v7836
  %v8218 = vunpack.c.h.b16 %v7836
  %v8219 = vunpack.c.l.b16 %v7837
  %v8220 = vunpack.c.h.b16 %v7837
  %v8221 = vunpack.c.l.b16 %v7838
  %v8222 = vunpack.c.h.b16 %v7838
  %v8223 = vunpack.c.l.b16 %v7839
  %v8224 = vunpack.c.h.b16 %v7839
  %v8225 = vunpack.c.l.b16 %v7840
  %v8226 = vunpack.c.h.b16 %v7840
  %v8227 = vunpack.c.l.b16 %v7841
  %v8228 = vunpack.c.h.b16 %v7841
  %v8229 = vunpack.c.l.b16 %v7842
  %v8230 = vunpack.c.h.b16 %v7842
  %v8231 = vunpack.c.l.b16 %v7843
  %v8232 = vunpack.c.h.b16 %v7843
  %v8233 = vunpack.c.l.b16 %v7844
  %v8234 = vunpack.c.h.b16 %v7844
  %v8235 = vunpack.c.l.b16 %v7845
  %v8236 = vunpack.c.h.b16 %v7845
  %v8237 = vunpack.c.l.b16 %v7846
  %v8238 = vunpack.c.h.b16 %v7846
  %v8239 = vunpack.c.l.b16 %v7847
  %v8240 = vunpack.c.h.b16 %v7847
  %v8241 = vunpack.c.l.b16 %v7848
  %v8242 = vunpack.c.h.b16 %v7848
  %v8243 = vunpack.c.l.b16 %v7849
  %v8244 = vunpack.c.h.b16 %v7849
  %v8245 = vunpack.c.l.b16 %v7850
  %v8246 = vunpack.c.h.b16 %v7850
  %v8247 = vunpack.c.l.b16 %v7851
  %v8248 = vunpack.c.h.b16 %v7851
  %v8249 = vunpack.c.l.b16 %v7852
  %v8250 = vunpack.c.h.b16 %v7852
  %v8251 = vunpack.c.l.b16 %v7853
  %v8252 = vunpack.c.h.b16 %v7853
  %v8253 = vunpack.c.l.b16 %v7854
  %v8254 = vunpack.c.h.b16 %v7854
  %v8255 = vunpack.c.l.b16 %v7855
  %v8256 = vunpack.c.h.b16 %v7855
  %v8257 = vunpack.c.l.b16 %v7856
  %v8258 = vunpack.c.h.b16 %v7856
  %v8259 = vunpack.c.l.b16 %v7857
  %v8260 = vunpack.c.h.b16 %v7857
  %v8261 = vunpack.c.l.b16 %v7858
  %v8262 = vunpack.c.h.b16 %v7858
  %v8263 = vunpack.c.l.b16 %v7859
  %v8264 = vunpack.c.h.b16 %v7859
  %v8265 = vunpack.c.l.b16 %v7860
  %v8266 = vunpack.c.h.b16 %v7860
  %v8267 = vunpack.c.l.b16 %v7861
  %v8268 = vunpack.c.h.b16 %v7861
  %v8269 = vunpack.c.l.b16 %v7862
  %v8270 = vunpack.c.h.b16 %v7862
  %v8271 = vunpack.c.l.b16 %v7863
  %v8272 = vunpack.c.h.b16 %v7863
  %v8273 = vunpack.c.l.b16 %v7864
  %v8274 = vunpack.c.h.b16 %v7864
  %v8275 = vunpack.c.l.b16 %v7865
  %v8276 = vunpack.c.h.b16 %v7865
  %v8277 = vunpack.c.l.b16 %v7866
  %v8278 = vunpack.c.h.b16 %v7866
  %v8279 = vunpack.c.l.b16 %v7867
  %v8280 = vunpack.c.h.b16 %v7867
  %v8281 = vunpack.c.l.b16 %v7868
  %v8282 = vunpack.c.h.b16 %v7868
  %v8283 = vunpack.c.l.b16 %v7869
  %v8284 = vunpack.c.h.b16 %v7869
  %v8285 = vunpack.c.l.b16 %v7870
  %v8286 = vunpack.c.h.b16 %v7870
  %v8287 = vunpack.c.l.b16 %v7871
  %v8288 = vunpack.c.h.b16 %v7871
  %v8289 = vunpack.c.l.b16 %v7872
  %v8290 = vunpack.c.h.b16 %v7872
  %v8291 = vunpack.c.l.b16 %v7873
  %v8292 = vunpack.c.h.b16 %v7873
  %v8293 = vunpack.c.l.b16 %v7874
  %v8294 = vunpack.c.h.b16 %v7874
  %v8295 = vunpack.c.l.b16 %v7875
  %v8296 = vunpack.c.h.b16 %v7875
  %v8297 = vunpack.c.l.b16 %v7876
  %v8298 = vunpack.c.h.b16 %v7876
  %v8299 = vunpack.c.l.b16 %v7877
  %v8300 = vunpack.c.h.b16 %v7877
  %v8301 = vunpack.c.l.b16 %v7878
  %v8302 = vunpack.c.h.b16 %v7878
  %v8303 = vunpack.c.l.b16 %v7879
  %v8304 = vunpack.c.h.b16 %v7879
  %v8305 = vunpack.c.l.b16 %v7880
  %v8306 = vunpack.c.h.b16 %v7880
  %v8307 = vunpack.c.l.b16 %v7881
  %v8308 = vunpack.c.h.b16 %v7881
  %v8309 = vunpack.c.l.b16 %v7882
  %v8310 = vunpack.c.h.b16 %v7882
  %v8311 = vunpack.c.l.b16 %v7883
  %v8312 = vunpack.c.h.b16 %v7883
  %v8313 = vunpack.c.l.b16 %v7884
  %v8314 = vunpack.c.h.b16 %v7884
  %v8315 = vunpack.c.l.b16 %v7885
  %v8316 = vunpack.c.h.b16 %v7885
  %v8317 = vunpack.c.l.b16 %v7886
  %v8318 = vunpack.c.h.b16 %v7886
  %v8319 = vunpack.c.l.b16 %v7887
  %v8320 = vunpack.c.h.b16 %v7887
  %v8321 = vunpack.c.l.b16 %v7888
  %v8322 = vunpack.c.h.b16 %v7888
  %v8323 = vunpack.c.l.b16 %v7889
  %v8324 = vunpack.c.h.b16 %v7889
  %v8325 = vunpack.c.l.b16 %v7890
  %v8326 = vunpack.c.h.b16 %v7890
  %v8327 = vunpack.c.l.b16 %v7891
  %v8328 = vunpack.c.h.b16 %v7891
  %v8329 = vunpack.c.l.b16 %v7892
  %v8330 = vunpack.c.h.b16 %v7892
  %v8331 = vunpack.c.l.b16 %v7893
  %v8332 = vunpack.c.h.b16 %v7893
  %v8333 = vunpack.c.l.b16 %v7894
  %v8334 = vunpack.c.h.b16 %v7894
  %v8335 = vunpack.c.l.b16 %v7895
  %v8336 = vunpack.c.h.b16 %v7895
  %v8337 = vunpack.c.l.b16 %v7896
  %v8338 = vunpack.c.h.b16 %v7896
  %v8339 = vunpack.c.l.b16 %v7897
  %v8340 = vunpack.c.h.b16 %v7897
  %v8341 = vunpack.c.l.b16 %v7898
  %v8342 = vunpack.c.h.b16 %v7898
  %v8343 = vunpack.c.l.b16 %v7899
  %v8344 = vunpack.c.h.b16 %v7899
  %v8345 = vunpack.c.l.b16 %v7900
  %v8346 = vunpack.c.h.b16 %v7900
  %v8347 = vunpack.c.l.b16 %v7901
  %v8348 = vunpack.c.h.b16 %v7901
  %v8349 = vunpack.c.l.b16 %v7902
  %v8350 = vunpack.c.h.b16 %v7902
  %v8351 = vunpack.c.l.b16 %v7903
  %v8352 = vunpack.c.h.b16 %v7903
  %v8353 = vunpack.c.l.b16 %v7904
  %v8354 = vunpack.c.h.b16 %v7904
  %v8355 = vunpack.c.l.b16 %v7905
  %v8356 = vunpack.c.h.b16 %v7905
  %v8357 = vunpack.c.l.b16 %v7906
  %v8358 = vunpack.c.h.b16 %v7906
  %v8359 = vunpack.c.l.b16 %v7907
  %v8360 = vunpack.c.h.b16 %v7907
  %v8361 = vunpack.c.l.b16 %v7908
  %v8362 = vunpack.c.h.b16 %v7908
  %v8363 = vunpack.c.l.b16 %v7909
  %v8364 = vunpack.c.h.b16 %v7909
  %v8365 = vunpack.c.l.b16 %v7910
  %v8366 = vunpack.c.h.b16 %v7910
  %v8367 = vunpack.c.l.b16 %v7911
  %v8368 = vunpack.c.h.b16 %v7911
  %v8369 = vunpack.c.l.b16 %v7912
  %v8370 = vunpack.c.h.b16 %v7912
  %v8371 = vunpack.c.l.b16 %v7913
  %v8372 = vunpack.c.h.b16 %v7913
  %v8373 = vunpack.c.l.b16 %v7914
  %v8374 = vunpack.c.h.b16 %v7914
  %v8375 = vunpack.c.l.b16 %v7915
  %v8376 = vunpack.c.h.b16 %v7915
  %v8377 = vunpack.c.l.b16 %v7916
  %v8378 = vunpack.c.h.b16 %v7916
  %v8379 = vunpack.c.l.b16 %v7917
  %v8380 = vunpack.c.h.b16 %v7917
  %v8381 = vunpack.c.l.b16 %v7918
  %v8382 = vunpack.c.h.b16 %v7918
  %v8383 = vunpack.c.l.b16 %v7919
  %v8384 = vunpack.c.h.b16 %v7919
  %v8385 = vunpack.c.l.b16 %v7920
  %v8386 = vunpack.c.h.b16 %v7920
  %v8387 = vunpack.c.l.b16 %v7921
  %v8388 = vunpack.c.h.b16 %v7921
  %v8389 = vunpack.c.l.b16 %v7922
  %v8390 = vunpack.c.h.b16 %v7922
  %v8391 = vunpack.c.l.b16 %v7923
  %v8392 = vunpack.c.h.b16 %v7923
  %v8393 = vunpack.c.l.b16 %v7924
  %v8394 = vunpack.c.h.b16 %v7924
  %v8395 = vunpack.c.l.b16 %v7925
  %v8396 = vunpack.c.h.b16 %v7925
  %v8397 = vunpack.c.l.b16 %v7926
  %v8398 = vunpack.c.h.b16 %v7926
  %v8399 = vunpack.c.l.b16 %v7927
  %v8400 = vunpack.c.h.b16 %v7927
  %v8401 = vunpack.c.l.b16 %v7928
  %v8402 = vunpack.c.h.b16 %v7928
  %v8403 = vunpack.c.l.b16 %v7929
  %v8404 = vunpack.c.h.b16 %v7929
  %v8405 = vunpack.c.l.b16 %v7930
  %v8406 = vunpack.c.h.b16 %v7930
  %v8407 = vunpack.c.l.b16 %v7931
  %v8408 = vunpack.c.h.b16 %v7931
  %v8409 = vunpack.c.l.b16 %v7932
  %v8410 = vunpack.c.h.b16 %v7932
  %v8411 = vunpack.c.l.b16 %v7933
  %v8412 = vunpack.c.h.b16 %v7933
  %v8413 = vunpack.c.l.b16 %v7934
  %v8414 = vunpack.c.h.b16 %v7934
  %v8415 = vunpack.c.l.b16 %v7935
  %v8416 = vunpack.c.h.b16 %v7935
  %v8417 = vunpack.c.l.b16 %v7936
  %v8418 = vunpack.c.h.b16 %v7936
  %v8419 = vunpack.c.l.b16 %v7937
  %v8420 = vunpack.c.h.b16 %v7937
  %v8421 = vunpack.c.l.b16 %v7938
  %v8422 = vunpack.c.h.b16 %v7938
  %v8423 = vunpack.c.l.b16 %v7939
  %v8424 = vunpack.c.h.b16 %v7939
  %v8425 = vunpack.c.l.b16 %v7940
  %v8426 = vunpack.c.h.b16 %v7940
  %v8427 = vunpack.c.l.b16 %v7941
  %v8428 = vunpack.c.h.b16 %v7941
  %v8429 = vunpack.c.l.b16 %v7942
  %v8430 = vunpack.c.h.b16 %v7942
  %v8431 = vunpack.c.l.b16 %v7943
  %v8432 = vunpack.c.h.b16 %v7943
  %v8433 = vunpack.c.l.b16 %v7944
  %v8434 = vunpack.c.h.b16 %v7944
  %v8435 = vunpack.c.l.b16 %v7945
  %v8436 = vunpack.c.h.b16 %v7945
  %v8437 = vunpack.c.l.b16 %v7946
  %v8438 = vunpack.c.h.b16 %v7946
  %v8439 = vpack.c.b16 %v8121, %v8119
  %v8440 = vpack.c.b16 %v8122, %v8120
  %v8441 = vpack.c.b16 %v8125, %v8123
  %v8442 = vpack.c.b16 %v8126, %v8124
  %v8443 = vpack.c.b16 %v8129, %v8127
  %v8444 = vpack.c.b16 %v8130, %v8128
  %v8445 = vpack.c.b16 %v8133, %v8131
  %v8446 = vpack.c.b16 %v8134, %v8132
  %v8447 = vpack.c.b16 %v8137, %v8135
  %v8448 = vpack.c.b16 %v8138, %v8136
  %v8449 = vpack.c.b16 %v8141, %v8139
  %v8450 = vpack.c.b16 %v8142, %v8140
  %v8451 = vpack.c.b16 %v8145, %v8143
  %v8452 = vpack.c.b16 %v8146, %v8144
  %v8453 = vpack.c.b16 %v8149, %v8147
  %v8454 = vpack.c.b16 %v8150, %v8148
  %v8455 = vpack.c.b16 %v8153, %v8151
  %v8456 = vpack.c.b16 %v8154, %v8152
  %v8457 = vpack.c.b16 %v8157, %v8155
  %v8458 = vpack.c.b16 %v8158, %v8156
  %v8459 = vpack.c.b16 %v8161, %v8159
  %v8460 = vpack.c.b16 %v8162, %v8160
  %v8461 = vpack.c.b16 %v8165, %v8163
  %v8462 = vpack.c.b16 %v8166, %v8164
  %v8463 = vpack.c.b16 %v8169, %v8167
  %v8464 = vpack.c.b16 %v8170, %v8168
  %v8465 = vpack.c.b16 %v8173, %v8171
  %v8466 = vpack.c.b16 %v8174, %v8172
  %v8467 = vpack.c.b16 %v8177, %v8175
  %v8468 = vpack.c.b16 %v8178, %v8176
  %v8469 = vpack.c.b16 %v8181, %v8179
  %v8470 = vpack.c.b16 %v8182, %v8180
  %v8471 = vpack.c.b16 %v8185, %v8183
  %v8472 = vpack.c.b16 %v8186, %v8184
  %v8473 = vpack.c.b16 %v8189, %v8187
  %v8474 = vpack.c.b16 %v8190, %v8188
  %v8475 = vpack.c.b16 %v8193, %v8191
  %v8476 = vpack.c.b16 %v8194, %v8192
  %v8477 = vpack.c.b16 %v8197, %v8195
  %v8478 = vpack.c.b16 %v8198, %v8196
  %v8479 = vpack.c.b16 %v8201, %v8199
  %v8480 = vpack.c.b16 %v8202, %v8200
  %v8481 = vpack.c.b16 %v8205, %v8203
  %v8482 = vpack.c.b16 %v8206, %v8204
  %v8483 = vpack.c.b16 %v8209, %v8207
  %v8484 = vpack.c.b16 %v8210, %v8208
  %v8485 = vpack.c.b16 %v8213, %v8211
  %v8486 = vpack.c.b16 %v8214, %v8212
  %v8487 = vpack.c.b16 %v8217, %v8215
  %v8488 = vpack.c.b16 %v8218, %v8216
  %v8489 = vpack.c.b16 %v8221, %v8219
  %v8490 = vpack.c.b16 %v8222, %v8220
  %v8491 = vpack.c.b16 %v8225, %v8223
  %v8492 = vpack.c.b16 %v8226, %v8224
  %v8493 = vpack.c.b16 %v8229, %v8227
  %v8494 = vpack.c.b16 %v8230, %v8228
  %v8495 = vpack.c.b16 %v8233, %v8231
  %v8496 = vpack.c.b16 %v8234, %v8232
  %v8497 = vpack.c.b16 %v8237, %v8235
  %v8498 = vpack.c.b16 %v8238, %v8236
  %v8499 = vpack.c.b16 %v8241, %v8239
  %v8500 = vpack.c.b16 %v8242, %v8240
  %v8501 = vpack.c.b16 %v8245, %v8243
  %v8502 = vpack.c.b16 %v8246, %v8244
  %v8503 = vpack.c.b16 %v8249, %v8247
  %v8504 = vpack.c.b16 %v8250, %v8248
  %v8505 = vpack.c.b16 %v8253, %v8251
  %v8506 = vpack.c.b16 %v8254, %v8252
  %v8507 = vpack.c.b16 %v8257, %v8255
  %v8508 = vpack.c.b16 %v8258, %v8256
  %v8509 = vpack.c.b16 %v8261, %v8259
  %v8510 = vpack.c.b16 %v8262, %v8260
  %v8511 = vpack.c.b16 %v8265, %v8263
  %v8512 = vpack.c.b16 %v8266, %v8264
  %v8513 = vpack.c.b16 %v8269, %v8267
  %v8514 = vpack.c.b16 %v8270, %v8268
  %v8515 = vpack.c.b16 %v8273, %v8271
  %v8516 = vpack.c.b16 %v8274, %v8272
  %v8517 = vpack.c.b16 %v8277, %v8275
  %v8518 = vpack.c.b16 %v8278, %v8276
  %v8519 = vpack.c.b16 %v8281, %v8279
  %v8520 = vpack.c.b16 %v8282, %v8280
  %v8521 = vpack.c.b16 %v8285, %v8283
  %v8522 = vpack.c.b16 %v8286, %v8284
  %v8523 = vpack.c.b16 %v8289, %v8287
  %v8524 = vpack.c.b16 %v8290, %v8288
  %v8525 = vpack.c.b16 %v8293, %v8291
  %v8526 = vpack.c.b16 %v8294, %v8292
  %v8527 = vpack.c.b16 %v8297, %v8295
  %v8528 = vpack.c.b16 %v8298, %v8296
  %v8529 = vpack.c.b16 %v8301, %v8299
  %v8530 = vpack.c.b16 %v8302, %v8300
  %v8531 = vpack.c.b16 %v8305, %v8303
  %v8532 = vpack.c.b16 %v8306, %v8304
  %v8533 = vpack.c.b16 %v8309, %v8307
  %v8534 = vpack.c.b16 %v8310, %v8308
  %v8535 = vpack.c.b16 %v8313, %v8311
  %v8536 = vpack.c.b16 %v8314, %v8312
  %v8537 = vpack.c.b16 %v8317, %v8315
  %v8538 = vpack.c.b16 %v8318, %v8316
  %v8539 = vpack.c.b16 %v8321, %v8319
  %v8540 = vpack.c.b16 %v8322, %v8320
  %v8541 = vpack.c.b16 %v8325, %v8323
  %v8542 = vpack.c.b16 %v8326, %v8324
  %v8543 = vpack.c.b16 %v8329, %v8327
  %v8544 = vpack.c.b16 %v8330, %v8328
  %v8545 = vpack.c.b16 %v8333, %v8331
  %v8546 = vpack.c.b16 %v8334, %v8332
  %v8547 = vpack.c.b16 %v8337, %v8335
  %v8548 = vpack.c.b16 %v8338, %v8336
  %v8549 = vpack.c.b16 %v8341, %v8339
  %v8550 = vpack.c.b16 %v8342, %v8340
  %v8551 = vpack.c.b16 %v8345, %v8343
  %v8552 = vpack.c.b16 %v8346, %v8344
  %v8553 = vpack.c.b16 %v8349, %v8347
  %v8554 = vpack.c.b16 %v8350, %v8348
  %v8555 = vpack.c.b16 %v8353, %v8351
  %v8556 = vpack.c.b16 %v8354, %v8352
  %v8557 = vpack.c.b16 %v8357, %v8355
  %v8558 = vpack.c.b16 %v8358, %v8356
  %v8559 = vpack.c.b16 %v8361, %v8359
  %v8560 = vpack.c.b16 %v8362, %v8360
  %v8561 = vpack.c.b16 %v8365, %v8363
  %v8562 = vpack.c.b16 %v8366, %v8364
  %v8563 = vpack.c.b16 %v8369, %v8367
  %v8564 = vpack.c.b16 %v8370, %v8368
  %v8565 = vpack.c.b16 %v8373, %v8371
  %v8566 = vpack.c.b16 %v8374, %v8372
  %v8567 = vpack.c.b16 %v8377, %v8375
  %v8568 = vpack.c.b16 %v8378, %v8376
  %v8569 = vpack.c.b16 %v8381, %v8379
  %v8570 = vpack.c.b16 %v8382, %v8380
  %v8571 = vpack.c.b16 %v8385, %v8383
  %v8572 = vpack.c.b16 %v8386, %v8384
  %v8573 = vpack.c.b16 %v8389, %v8387
  %v8574 = vpack.c.b16 %v8390, %v8388
  %v8575 = vpack.c.b16 %v8393, %v8391
  %v8576 = vpack.c.b16 %v8394, %v8392
  %v8577 = vpack.c.b16 %v8397, %v8395
  %v8578 = vpack.c.b16 %v8398, %v8396
  %v8579 = vpack.c.b16 %v8401, %v8399
  %v8580 = vpack.c.b16 %v8402, %v8400
  %v8581 = vpack.c.b16 %v8405, %v8403
  %v8582 = vpack.c.b16 %v8406, %v8404
  %v8583 = vpack.c.b16 %v8409, %v8407
  %v8584 = vpack.c.b16 %v8410, %v8408
  %v8585 = vpack.c.b16 %v8413, %v8411
  %v8586 = vpack.c.b16 %v8414, %v8412
  %v8587 = vpack.c.b16 %v8417, %v8415
  %v8588 = vpack.c.b16 %v8418, %v8416
  %v8589 = vpack.c.b16 %v8421, %v8419
  %v8590 = vpack.c.b16 %v8422, %v8420
  %v8591 = vpack.c.b16 %v8425, %v8423
  %v8592 = vpack.c.b16 %v8426, %v8424
  %v8593 = vpack.c.b16 %v8429, %v8427
  %v8594 = vpack.c.b16 %v8430, %v8428
  %v8595 = vpack.c.b16 %v8433, %v8431
  %v8596 = vpack.c.b16 %v8434, %v8432
  %v8597 = vpack.c.b16 %v8437, %v8435
  %v8598 = vpack.c.b16 %v8438, %v8436
  %8759 = vmatprep.subr.bf16.mxu0 %v8440
  %8760 = vmatpush1.bf16.msra.mxu0 %v8439
  %8761 = vmatprep.subr.bf16.mxu0 %v8442
  %8762 = vmatpush1.bf16.msra.mxu0 %v8441
  %8763 = vmatprep.subr.bf16.mxu0 %v8444
  %8764 = vmatpush1.bf16.msra.mxu0 %v8443
  %8765 = vmatprep.subr.bf16.mxu0 %v8446
  %8766 = vmatpush1.bf16.msra.mxu0 %v8445
  %8767 = vmatprep.subr.bf16.mxu0 %v8448
  %8768 = vmatpush1.bf16.msra.mxu0 %v8447
  %8769 = vmatprep.subr.bf16.mxu0 %v8450
  %8770 = vmatpush1.bf16.msra.mxu0 %v8449
  %8771 = vmatprep.subr.bf16.mxu0 %v8452
  %8772 = vmatpush1.bf16.msra.mxu0 %v8451
  %8773 = vmatprep.subr.bf16.mxu0 %v8454
  %8774 = vmatpush1.bf16.msra.mxu0 %v8453
  %8775 = vmatprep.subr.bf16.mxu0 %v8456
  %8776 = vmatpush1.bf16.msra.mxu0 %v8455
  %8777 = vmatprep.subr.bf16.mxu0 %v8458
  %8778 = vmatpush1.bf16.msra.mxu0 %v8457
  %8779 = vmatprep.subr.bf16.mxu0 %v8460
  %8780 = vmatpush1.bf16.msra.mxu0 %v8459
  %8781 = vmatprep.subr.bf16.mxu0 %v8462
  %8782 = vmatpush1.bf16.msra.mxu0 %v8461
  %8783 = vmatprep.subr.bf16.mxu0 %v8464
  %8784 = vmatpush1.bf16.msra.mxu0 %v8463
  %8785 = vmatprep.subr.bf16.mxu0 %v8466
  %8786 = vmatpush1.bf16.msra.mxu0 %v8465
  %8787 = vmatprep.subr.bf16.mxu0 %v8468
  %8788 = vmatpush1.bf16.msra.mxu0 %v8467
  %8789 = vmatprep.subr.bf16.mxu0 %v8470
  %8790 = vmatpush1.bf16.msra.mxu0 %v8469
  %8791 = vmatprep.mubr.bf16.mxu0 %v834
  %8792 = vmatmul.mubr.bf16.gmra.mrb[0].mxu0 %v833
  %v8793 = vpop.f32.mrb[0].mxu0
  %v8794 = vadd.f32 %v7952, %v8793
  %v8795 = vpop.f32.mrb[0].mxu0
  %v8796 = vadd.f32 %v7956, %v8795
  %v8797 = vpop.f32.mrb[0].mxu0
  %v8798 = vadd.f32 %v7952, %v8797
  %v8799 = vpop.f32.mrb[0].mxu0
  %v8800 = vadd.f32 %v7956, %v8799
  %8801 = vmatprep.mubr.bf16.mxu0 %v844
  %8802 = vmatmul.mubr.bf16.gmra.mrb[0].mxu0 %v843
  %v8803 = vpop.f32.mrb[0].mxu0
  %v8804 = vadd.f32 %v7952, %v8803
  %v8805 = vpop.f32.mrb[0].mxu0
  %v8806 = vadd.f32 %v7956, %v8805
  %v8807 = vpop.f32.mrb[0].mxu0
  %v8808 = vadd.f32 %v7952, %v8807
  %v8809 = vpop.f32.mrb[0].mxu0
  %v8810 = vadd.f32 %v7956, %v8809
  %8811 = vmatprep.mubr.bf16.mxu0 %v854
  %8812 = vmatmul.mubr.bf16.gmra.mrb[0].mxu0 %v853
  %v8813 = vpop.f32.mrb[0].mxu0
  %v8814 = vadd.f32 %v7952, %v8813
  %v8815 = vpop.f32.mrb[0].mxu0
  %v8816 = vadd.f32 %v7956, %v8815
  %v8817 = vpop.f32.mrb[0].mxu0
  %v8818 = vadd.f32 %v7952, %v8817
  %v8819 = vpop.f32.mrb[0].mxu0
  %v8820 = vadd.f32 %v7956, %v8819
  %8821 = vmatprep.mubr.bf16.mxu0 %v864
  %8822 = vmatmul.mubr.bf16.gmra.mrb[0].mxu0 %v863
  %v8823 = vpop.f32.mrb[0].mxu0
  %v8824 = vadd.f32 %v7952, %v8823
  %v8825 = vpop.f32.mrb[0].mxu0
  %v8826 = vadd.f32 %v7956, %v8825
  %v8827 = vpop.f32.mrb[0].mxu0
  %v8828 = vadd.f32 %v7952, %v8827
  %v8829 = vpop.f32.mrb[0].mxu0
  %v8830 = vadd.f32 %v7956, %v8829
  %8831 = vmatprep.mubr.bf16.mxu0 %v874
  %8832 = vmatmul.mubr.bf16.gmra.mrb[0].mxu0 %v873
  %v8833 = vpop.f32.mrb[0].mxu0
  %v8834 = vadd.f32 %v7952, %v8833
  %v8835 = vpop.f32.mrb[0].mxu0
  %v8836 = vadd.f32 %v7956, %v8835
  %v8837 = vpop.f32.mrb[0].mxu0
  %v8838 = vadd.f32 %v7952, %v8837
  %v8839 = vpop.f32.mrb[0].mxu0
  %v8840 = vadd.f32 %v7956, %v8839
  %8841 = vmatprep.mubr.bf16.mxu0 %v884
  %8842 = vmatmul.mubr.bf16.gmra.mrb[0].mxu0 %v883
  %v8843 = vpop.f32.mrb[0].mxu0
  %v8844 = vadd.f32 %v7952, %v8843
  %v8845 = vpop.f32.mrb[0].mxu0
  %v8846 = vadd.f32 %v7956, %v8845
  %v8847 = vpop.f32.mrb[0].mxu0
  %v8848 = vadd.f32 %v7952, %v8847
  %v8849 = vpop.f32.mrb[0].mxu0
  %v8850 = vadd.f32 %v7956, %v8849
  %8851 = vmatprep.mubr.bf16.mxu0 %v894
  %8852 = vmatmul.mubr.bf16.gmra.mrb[0].mxu0 %v893
  %v8853 = vpop.f32.mrb[0].mxu0
  %v8854 = vadd.f32 %v7952, %v8853
  %v8855 = vpop.f32.mrb[0].mxu0
  %v8856 = vadd.f32 %v7956, %v8855
  %v8857 = vpop.f32.mrb[0].mxu0
  %v8858 = vadd.f32 %v7952, %v8857
  %v8859 = vpop.f32.mrb[0].mxu0
  %v8860 = vadd.f32 %v7956, %v8859
  %8861 = vmatprep.mubr.bf16.mxu0 %v904
  %8862 = vmatmul.mubr.bf16.gmra.mrb[0].mxu0 %v903
  %v8863 = vpop.f32.mrb[0].mxu0
  %v8864 = vadd.f32 %v7952, %v8863
  %v8865 = vpop.f32.mrb[0].mxu0
  %v8866 = vadd.f32 %v7956, %v8865
  %v8867 = vpop.f32.mrb[0].mxu0
  %v8868 = vadd.f32 %v7952, %v8867
  %v8869 = vpop.f32.mrb[0].mxu0
  %v8870 = vadd.f32 %v7956, %v8869
  %8871 = vmatprep.mubr.bf16.mxu0 %v914
  %8872 = vmatmul.mubr.bf16.gmra.mrb[0].mxu0 %v913
  %v8873 = vpop.f32.mrb[0].mxu0
  %v8874 = vadd.f32 %v7952, %v8873
  %v8875 = vpop.f32.mrb[0].mxu0
  %v8876 = vadd.f32 %v7956, %v8875
  %v8877 = vpop.f32.mrb[0].mxu0
  %v8878 = vadd.f32 %v7952, %v8877
  %v8879 = vpop.f32.mrb[0].mxu0
  %v8880 = vadd.f32 %v7956, %v8879
  %8881 = vmatprep.mubr.bf16.mxu0 %v924
  %8882 = vmatmul.mubr.bf16.gmra.mrb[0].mxu0 %v923
  %v8883 = vpop.f32.mrb[0].mxu0
  %v8884 = vadd.f32 %v7952, %v8883
  %v8885 = vpop.f32.mrb[0].mxu0
  %v8886 = vadd.f32 %v7956, %v8885
  %v8887 = vpop.f32.mrb[0].mxu0
  %v8888 = vadd.f32 %v7952, %v8887
  %v8889 = vpop.f32.mrb[0].mxu0
  %v8890 = vadd.f32 %v7956, %v8889
  %8891 = vmatprep.mubr.bf16.mxu0 %v934
  %8892 = vmatmul.mubr.bf16.gmra.mrb[0].mxu0 %v933
  %v8893 = vpop.f32.mrb[0].mxu0
  %v8894 = vadd.f32 %v7952, %v8893
  %v8895 = vpop.f32.mrb[0].mxu0
  %v8896 = vadd.f32 %v7956, %v8895
  %v8897 = vpop.f32.mrb[0].mxu0
  %v8898 = vadd.f32 %v7952, %v8897
  %v8899 = vpop.f32.mrb[0].mxu0
  %v8900 = vadd.f32 %v7956, %v8899
  %8901 = vmatprep.mubr.bf16.mxu0 %v944
  %8902 = vmatmul.mubr.bf16.gmra.mrb[0].mxu0 %v943
  %v8903 = vpop.f32.mrb[0].mxu0
  %v8904 = vadd.f32 %v7952, %v8903
  %v8905 = vpop.f32.mrb[0].mxu0
  %v8906 = vadd.f32 %v7956, %v8905
  %v8907 = vpop.f32.mrb[0].mxu0
  %v8908 = vadd.f32 %v7952, %v8907
  %v8909 = vpop.f32.mrb[0].mxu0
  %v8910 = vadd.f32 %v7956, %v8909
  %8911 = vmatprep.mubr.bf16.mxu0 %v954
  %8912 = vmatmul.mubr.bf16.gmra.mrb[0].mxu0 %v953
  %v8913 = vpop.f32.mrb[0].mxu0
  %v8914 = vadd.f32 %v7952, %v8913
  %v8915 = vpop.f32.mrb[0].mxu0
  %v8916 = vadd.f32 %v7956, %v8915
  %v8917 = vpop.f32.mrb[0].mxu0
  %v8918 = vadd.f32 %v7952, %v8917
  %v8919 = vpop.f32.mrb[0].mxu0
  %v8920 = vadd.f32 %v7956, %v8919
  %8921 = vmatprep.mubr.bf16.mxu0 %v964
  %8922 = vmatmul.mubr.bf16.gmra.mrb[0].mxu0 %v963
  %v8923 = vpop.f32.mrb[0].mxu0
  %v8924 = vadd.f32 %v7952, %v8923
  %v8925 = vpop.f32.mrb[0].mxu0
  %v8926 = vadd.f32 %v7956, %v8925
  %v8927 = vpop.f32.mrb[0].mxu0
  %v8928 = vadd.f32 %v7952, %v8927
  %v8929 = vpop.f32.mrb[0].mxu0
  %v8930 = vadd.f32 %v7956, %v8929
  %8931 = vmatprep.mubr.bf16.mxu0 %v974
  %8932 = vmatmul.mubr.bf16.gmra.mrb[0].mxu0 %v973
  %v8933 = vpop.f32.mrb[0].mxu0
  %v8934 = vadd.f32 %v7952, %v8933
  %v8935 = vpop.f32.mrb[0].mxu0
  %v8936 = vadd.f32 %v7956, %v8935
  %v8937 = vpop.f32.mrb[0].mxu0
  %v8938 = vadd.f32 %v7952, %v8937
  %v8939 = vpop.f32.mrb[0].mxu0
  %v8940 = vadd.f32 %v7956, %v8939
  %8941 = vmatprep.mubr.bf16.mxu0 %v984
  %8942 = vmatmul.mubr.bf16.gmra.mrb[0].mxu0 %v983
  %v8943 = vpop.f32.mrb[0].mxu0
  %v8944 = vadd.f32 %v7952, %v8943
  %v8945 = vpop.f32.mrb[0].mxu0
  %v8946 = vadd.f32 %v7956, %v8945
  %v8947 = vpop.f32.mrb[0].mxu0
  %v8948 = vadd.f32 %v7952, %v8947
  %v8949 = vpop.f32.mrb[0].mxu0
  %v8950 = vadd.f32 %v7956, %v8949
  %8951 = vdwg.mxu0
  %8952 = vmatprep.subr.bf16.mxu0 %v8472
  %8953 = vmatpush1.bf16.msra.mxu0 %v8471
  %8954 = vmatprep.subr.bf16.mxu0 %v8474
  %8955 = vmatpush1.bf16.msra.mxu0 %v8473
  %8956 = vmatprep.subr.bf16.mxu0 %v8476
  %8957 = vmatpush1.bf16.msra.mxu0 %v8475
  %8958 = vmatprep.subr.bf16.mxu0 %v8478
  %8959 = vmatpush1.bf16.msra.mxu0 %v8477
  %8960 = vmatprep.subr.bf16.mxu0 %v8480
  %8961 = vmatpush1.bf16.msra.mxu0 %v8479
  %8962 = vmatprep.subr.bf16.mxu0 %v8482
  %8963 = vmatpush1.bf16.msra.mxu0 %v8481
  %8964 = vmatprep.subr.bf16.mxu0 %v8484
  %8965 = vmatpush1.bf16.msra.mxu0 %v8483
  %8966 = vmatprep.subr.bf16.mxu0 %v8486
  %8967 = vmatpush1.bf16.msra.mxu0 %v8485
  %8968 = vmatprep.subr.bf16.mxu0 %v8488
  %8969 = vmatpush1.bf16.msra.mxu0 %v8487
  %8970 = vmatprep.subr.bf16.mxu0 %v8490
  %8971 = vmatpush1.bf16.msra.mxu0 %v8489
  %8972 = vmatprep.subr.bf16.mxu0 %v8492
  %8973 = vmatpush1.bf16.msra.mxu0 %v8491
  %8974 = vmatprep.subr.bf16.mxu0 %v8494
  %8975 = vmatpush1.bf16.msra.mxu0 %v8493
  %8976 = vmatprep.subr.bf16.mxu0 %v8496
  %8977 = vmatpush1.bf16.msra.mxu0 %v8495
  %8978 = vmatprep.subr.bf16.mxu0 %v8498
  %8979 = vmatpush1.bf16.msra.mxu0 %v8497
  %8980 = vmatprep.subr.bf16.mxu0 %v8500
  %8981 = vmatpush1.bf16.msra.mxu0 %v8499
  %8982 = vmatprep.subr.bf16.mxu0 %v8502
  %8983 = vmatpush1.bf16.msra.mxu0 %v8501
  %8984 = vmatprep.mubr.bf16.mxu0 %v836
  %8985 = vmatmul.mubr.bf16.gmra.mrb[0].mxu0 %v835
  %v8986 = vpop.f32.mrb[0].mxu0
  %v8987 = vadd.f32 %v8794, %v8986
  %v8988 = vpop.f32.mrb[0].mxu0
  %v8989 = vadd.f32 %v8796, %v8988
  %v8990 = vpop.f32.mrb[0].mxu0
  %v8991 = vadd.f32 %v8798, %v8990
  %v8992 = vpop.f32.mrb[0].mxu0
  %v8993 = vadd.f32 %v8800, %v8992
  %8994 = vmatprep.mubr.bf16.mxu0 %v846
  %8995 = vmatmul.mubr.bf16.gmra.mrb[0].mxu0 %v845
  %v8996 = vpop.f32.mrb[0].mxu0
  %v8997 = vadd.f32 %v8804, %v8996
  %v8998 = vpop.f32.mrb[0].mxu0
  %v8999 = vadd.f32 %v8806, %v8998
  %v9000 = vpop.f32.mrb[0].mxu0
  %v9001 = vadd.f32 %v8808, %v9000
  %v9002 = vpop.f32.mrb[0].mxu0
  %v9003 = vadd.f32 %v8810, %v9002
  %9004 = vmatprep.mubr.bf16.mxu0 %v856
  %9005 = vmatmul.mubr.bf16.gmra.mrb[0].mxu0 %v855
  %v9006 = vpop.f32.mrb[0].mxu0
  %v9007 = vadd.f32 %v8814, %v9006
  %v9008 = vpop.f32.mrb[0].mxu0
  %v9009 = vadd.f32 %v8816, %v9008
  %v9010 = vpop.f32.mrb[0].mxu0
  %v9011 = vadd.f32 %v8818, %v9010
  %v9012 = vpop.f32.mrb[0].mxu0
  %v9013 = vadd.f32 %v8820, %v9012
  %9014 = vmatprep.mubr.bf16.mxu0 %v866
  %9015 = vmatmul.mubr.bf16.gmra.mrb[0].mxu0 %v865
  %v9016 = vpop.f32.mrb[0].mxu0
  %v9017 = vadd.f32 %v8824, %v9016
  %v9018 = vpop.f32.mrb[0].mxu0
  %v9019 = vadd.f32 %v8826, %v9018
  %v9020 = vpop.f32.mrb[0].mxu0
  %v9021 = vadd.f32 %v8828, %v9020
  %v9022 = vpop.f32.mrb[0].mxu0
  %v9023 = vadd.f32 %v8830, %v9022
  %9024 = vmatprep.mubr.bf16.mxu0 %v876
  %9025 = vmatmul.mubr.bf16.gmra.mrb[0].mxu0 %v875
  %v9026 = vpop.f32.mrb[0].mxu0
  %v9027 = vadd.f32 %v8834, %v9026
  %v9028 = vpop.f32.mrb[0].mxu0
  %v9029 = vadd.f32 %v8836, %v9028
  %v9030 = vpop.f32.mrb[0].mxu0
  %v9031 = vadd.f32 %v8838, %v9030
  %v9032 = vpop.f32.mrb[0].mxu0
  %v9033 = vadd.f32 %v8840, %v9032
  %9034 = vmatprep.mubr.bf16.mxu0 %v886
  %9035 = vmatmul.mubr.bf16.gmra.mrb[0].mxu0 %v885
  %v9036 = vpop.f32.mrb[0].mxu0
  %v9037 = vadd.f32 %v8844, %v9036
  %v9038 = vpop.f32.mrb[0].mxu0
  %v9039 = vadd.f32 %v8846, %v9038
  %v9040 = vpop.f32.mrb[0].mxu0
  %v9041 = vadd.f32 %v8848, %v9040
  %v9042 = vpop.f32.mrb[0].mxu0
  %v9043 = vadd.f32 %v8850, %v9042
  %9044 = vmatprep.mubr.bf16.mxu0 %v896
  %9045 = vmatmul.mubr.bf16.gmra.mrb[0].mxu0 %v895
  %v9046 = vpop.f32.mrb[0].mxu0
  %v9047 = vadd.f32 %v8854, %v9046
  %v9048 = vpop.f32.mrb[0].mxu0
  %v9049 = vadd.f32 %v8856, %v9048
  %v9050 = vpop.f32.mrb[0].mxu0
  %v9051 = vadd.f32 %v8858, %v9050
  %v9052 = vpop.f32.mrb[0].mxu0
  %v9053 = vadd.f32 %v8860, %v9052
  %9054 = vmatprep.mubr.bf16.mxu0 %v906
  %9055 = vmatmul.mubr.bf16.gmra.mrb[0].mxu0 %v905
  %v9056 = vpop.f32.mrb[0].mxu0
  %v9057 = vadd.f32 %v8864, %v9056
  %v9058 = vpop.f32.mrb[0].mxu0
  %v9059 = vadd.f32 %v8866, %v9058
  %v9060 = vpop.f32.mrb[0].mxu0
  %v9061 = vadd.f32 %v8868, %v9060
  %v9062 = vpop.f32.mrb[0].mxu0
  %v9063 = vadd.f32 %v8870, %v9062
  %9064 = vmatprep.mubr.bf16.mxu0 %v916
  %9065 = vmatmul.mubr.bf16.gmra.mrb[0].mxu0 %v915
  %v9066 = vpop.f32.mrb[0].mxu0
  %v9067 = vadd.f32 %v8874, %v9066
  %v9068 = vpop.f32.mrb[0].mxu0
  %v9069 = vadd.f32 %v8876, %v9068
  %v9070 = vpop.f32.mrb[0].mxu0
  %v9071 = vadd.f32 %v8878, %v9070
  %v9072 = vpop.f32.mrb[0].mxu0
  %v9073 = vadd.f32 %v8880, %v9072
  %9074 = vmatprep.mubr.bf16.mxu0 %v926
  %9075 = vmatmul.mubr.bf16.gmra.mrb[0].mxu0 %v925
  %v9076 = vpop.f32.mrb[0].mxu0
  %v9077 = vadd.f32 %v8884, %v9076
  %v9078 = vpop.f32.mrb[0].mxu0
  %v9079 = vadd.f32 %v8886, %v9078
  %v9080 = vpop.f32.mrb[0].mxu0
  %v9081 = vadd.f32 %v8888, %v9080
  %v9082 = vpop.f32.mrb[0].mxu0
  %v9083 = vadd.f32 %v8890, %v9082
  %9084 = vmatprep.mubr.bf16.mxu0 %v936
  %9085 = vmatmul.mubr.bf16.gmra.mrb[0].mxu0 %v935
  %v9086 = vpop.f32.mrb[0].mxu0
  %v9087 = vadd.f32 %v8894, %v9086
  %v9088 = vpop.f32.mrb[0].mxu0
  %v9089 = vadd.f32 %v8896, %v9088
  %v9090 = vpop.f32.mrb[0].mxu0
  %v9091 = vadd.f32 %v8898, %v9090
  %v9092 = vpop.f32.mrb[0].mxu0
  %v9093 = vadd.f32 %v8900, %v9092
  %9094 = vmatprep.mubr.bf16.mxu0 %v946
  %9095 = vmatmul.mubr.bf16.gmra.mrb[0].mxu0 %v945
  %v9096 = vpop.f32.mrb[0].mxu0
  %v9097 = vadd.f32 %v8904, %v9096
  %v9098 = vpop.f32.mrb[0].mxu0
  %v9099 = vadd.f32 %v8906, %v9098
  %v9100 = vpop.f32.mrb[0].mxu0
  %v9101 = vadd.f32 %v8908, %v9100
  %v9102 = vpop.f32.mrb[0].mxu0
  %v9103 = vadd.f32 %v8910, %v9102
  %9104 = vmatprep.mubr.bf16.mxu0 %v956
  %9105 = vmatmul.mubr.bf16.gmra.mrb[0].mxu0 %v955
  %v9106 = vpop.f32.mrb[0].mxu0
  %v9107 = vadd.f32 %v8914, %v9106
  %v9108 = vpop.f32.mrb[0].mxu0
  %v9109 = vadd.f32 %v8916, %v9108
  %v9110 = vpop.f32.mrb[0].mxu0
  %v9111 = vadd.f32 %v8918, %v9110
  %v9112 = vpop.f32.mrb[0].mxu0
  %v9113 = vadd.f32 %v8920, %v9112
  %9114 = vmatprep.mubr.bf16.mxu0 %v966
  %9115 = vmatmul.mubr.bf16.gmra.mrb[0].mxu0 %v965
  %v9116 = vpop.f32.mrb[0].mxu0
  %v9117 = vadd.f32 %v8924, %v9116
  %v9118 = vpop.f32.mrb[0].mxu0
  %v9119 = vadd.f32 %v8926, %v9118
  %v9120 = vpop.f32.mrb[0].mxu0
  %v9121 = vadd.f32 %v8928, %v9120
  %v9122 = vpop.f32.mrb[0].mxu0
  %v9123 = vadd.f32 %v8930, %v9122
  %9124 = vmatprep.mubr.bf16.mxu0 %v976
  %9125 = vmatmul.mubr.bf16.gmra.mrb[0].mxu0 %v975
  %v9126 = vpop.f32.mrb[0].mxu0
  %v9127 = vadd.f32 %v8934, %v9126
  %v9128 = vpop.f32.mrb[0].mxu0
  %v9129 = vadd.f32 %v8936, %v9128
  %v9130 = vpop.f32.mrb[0].mxu0
  %v9131 = vadd.f32 %v8938, %v9130
  %v9132 = vpop.f32.mrb[0].mxu0
  %v9133 = vadd.f32 %v8940, %v9132
  %9134 = vmatprep.mubr.bf16.mxu0 %v986
  %9135 = vmatmul.mubr.bf16.gmra.mrb[0].mxu0 %v985
  %v9136 = vpop.f32.mrb[0].mxu0
  %v9137 = vadd.f32 %v8944, %v9136
  %v9138 = vpop.f32.mrb[0].mxu0
  %v9139 = vadd.f32 %v8946, %v9138
  %v9140 = vpop.f32.mrb[0].mxu0
  %v9141 = vadd.f32 %v8948, %v9140
  %v9142 = vpop.f32.mrb[0].mxu0
  %v9143 = vadd.f32 %v8950, %v9142
  %9144 = vdwg.mxu0
  %9145 = vmatprep.subr.bf16.mxu0 %v8504
  %9146 = vmatpush1.bf16.msra.mxu0 %v8503
  %9147 = vmatprep.subr.bf16.mxu0 %v8506
  %9148 = vmatpush1.bf16.msra.mxu0 %v8505
  %9149 = vmatprep.subr.bf16.mxu0 %v8508
  %9150 = vmatpush1.bf16.msra.mxu0 %v8507
  %9151 = vmatprep.subr.bf16.mxu0 %v8510
  %9152 = vmatpush1.bf16.msra.mxu0 %v8509
  %9153 = vmatprep.subr.bf16.mxu0 %v8512
  %9154 = vmatpush1.bf16.msra.mxu0 %v8511
  %9155 = vmatprep.subr.bf16.mxu0 %v8514
  %9156 = vmatpush1.bf16.msra.mxu0 %v8513
  %9157 = vmatprep.subr.bf16.mxu0 %v8516
  %9158 = vmatpush1.bf16.msra.mxu0 %v8515
  %9159 = vmatprep.subr.bf16.mxu0 %v8518
  %9160 = vmatpush1.bf16.msra.mxu0 %v8517
  %9161 = vmatprep.subr.bf16.mxu0 %v8520
  %9162 = vmatpush1.bf16.msra.mxu0 %v8519
  %9163 = vmatprep.subr.bf16.mxu0 %v8522
  %9164 = vmatpush1.bf16.msra.mxu0 %v8521
  %9165 = vmatprep.subr.bf16.mxu0 %v8524
  %9166 = vmatpush1.bf16.msra.mxu0 %v8523
  %9167 = vmatprep.subr.bf16.mxu0 %v8526
  %9168 = vmatpush1.bf16.msra.mxu0 %v8525
  %9169 = vmatprep.subr.bf16.mxu0 %v8528
  %9170 = vmatpush1.bf16.msra.mxu0 %v8527
  %9171 = vmatprep.subr.bf16.mxu0 %v8530
  %9172 = vmatpush1.bf16.msra.mxu0 %v8529
  %9173 = vmatprep.subr.bf16.mxu0 %v8532
  %9174 = vmatpush1.bf16.msra.mxu0 %v8531
  %9175 = vmatprep.subr.bf16.mxu0 %v8534
  %9176 = vmatpush1.bf16.msra.mxu0 %v8533
  %9177 = vmatprep.mubr.bf16.mxu0 %v838
  %9178 = vmatmul.mubr.bf16.gmra.mrb[0].mxu0 %v837
  %v9179 = vpop.f32.mrb[0].mxu0
  %v9180 = vadd.f32 %v8987, %v9179
  %v9181 = vpop.f32.mrb[0].mxu0
  %v9182 = vadd.f32 %v8989, %v9181
  %v9183 = vpop.f32.mrb[0].mxu0
  %v9184 = vadd.f32 %v8991, %v9183
  %v9185 = vpop.f32.mrb[0].mxu0
  %v9186 = vadd.f32 %v8993, %v9185
  %9187 = vmatprep.mubr.bf16.mxu0 %v848
  %9188 = vmatmul.mubr.bf16.gmra.mrb[0].mxu0 %v847
  %v9189 = vpop.f32.mrb[0].mxu0
  %v9190 = vadd.f32 %v8997, %v9189
  %v9191 = vpop.f32.mrb[0].mxu0
  %v9192 = vadd.f32 %v8999, %v9191
  %v9193 = vpop.f32.mrb[0].mxu0
  %v9194 = vadd.f32 %v9001, %v9193
  %v9195 = vpop.f32.mrb[0].mxu0
  %v9196 = vadd.f32 %v9003, %v9195
  %9197 = vmatprep.mubr.bf16.mxu0 %v858
  %9198 = vmatmul.mubr.bf16.gmra.mrb[0].mxu0 %v857
  %v9199 = vpop.f32.mrb[0].mxu0
  %v9200 = vadd.f32 %v9007, %v9199
  %v9201 = vpop.f32.mrb[0].mxu0
  %v9202 = vadd.f32 %v9009, %v9201
  %v9203 = vpop.f32.mrb[0].mxu0
  %v9204 = vadd.f32 %v9011, %v9203
  %v9205 = vpop.f32.mrb[0].mxu0
  %v9206 = vadd.f32 %v9013, %v9205
  %9207 = vmatprep.mubr.bf16.mxu0 %v868
  %9208 = vmatmul.mubr.bf16.gmra.mrb[0].mxu0 %v867
  %v9209 = vpop.f32.mrb[0].mxu0
  %v9210 = vadd.f32 %v9017, %v9209
  %v9211 = vpop.f32.mrb[0].mxu0
  %v9212 = vadd.f32 %v9019, %v9211
  %v9213 = vpop.f32.mrb[0].mxu0
  %v9214 = vadd.f32 %v9021, %v9213
  %v9215 = vpop.f32.mrb[0].mxu0
  %v9216 = vadd.f32 %v9023, %v9215
  %9217 = vmatprep.mubr.bf16.mxu0 %v878
  %9218 = vmatmul.mubr.bf16.gmra.mrb[0].mxu0 %v877
  %v9219 = vpop.f32.mrb[0].mxu0
  %v9220 = vadd.f32 %v9027, %v9219
  %v9221 = vpop.f32.mrb[0].mxu0
  %v9222 = vadd.f32 %v9029, %v9221
  %v9223 = vpop.f32.mrb[0].mxu0
  %v9224 = vadd.f32 %v9031, %v9223
  %v9225 = vpop.f32.mrb[0].mxu0
  %v9226 = vadd.f32 %v9033, %v9225
  %9227 = vmatprep.mubr.bf16.mxu0 %v888
  %9228 = vmatmul.mubr.bf16.gmra.mrb[0].mxu0 %v887
  %v9229 = vpop.f32.mrb[0].mxu0
  %v9230 = vadd.f32 %v9037, %v9229
  %v9231 = vpop.f32.mrb[0].mxu0
  %v9232 = vadd.f32 %v9039, %v9231
  %v9233 = vpop.f32.mrb[0].mxu0
  %v9234 = vadd.f32 %v9041, %v9233
  %v9235 = vpop.f32.mrb[0].mxu0
  %v9236 = vadd.f32 %v9043, %v9235
  %9237 = vmatprep.mubr.bf16.mxu0 %v898
  %9238 = vmatmul.mubr.bf16.gmra.mrb[0].mxu0 %v897
  %v9239 = vpop.f32.mrb[0].mxu0
  %v9240 = vadd.f32 %v9047, %v9239
  %v9241 = vpop.f32.mrb[0].mxu0
  %v9242 = vadd.f32 %v9049, %v9241
  %v9243 = vpop.f32.mrb[0].mxu0
  %v9244 = vadd.f32 %v9051, %v9243
  %v9245 = vpop.f32.mrb[0].mxu0
  %v9246 = vadd.f32 %v9053, %v9245
  %9247 = vmatprep.mubr.bf16.mxu0 %v908
  %9248 = vmatmul.mubr.bf16.gmra.mrb[0].mxu0 %v907
  %v9249 = vpop.f32.mrb[0].mxu0
  %v9250 = vadd.f32 %v9057, %v9249
  %v9251 = vpop.f32.mrb[0].mxu0
  %v9252 = vadd.f32 %v9059, %v9251
  %v9253 = vpop.f32.mrb[0].mxu0
  %v9254 = vadd.f32 %v9061, %v9253
  %v9255 = vpop.f32.mrb[0].mxu0
  %v9256 = vadd.f32 %v9063, %v9255
  %9257 = vmatprep.mubr.bf16.mxu0 %v918
  %9258 = vmatmul.mubr.bf16.gmra.mrb[0].mxu0 %v917
  %v9259 = vpop.f32.mrb[0].mxu0
  %v9260 = vadd.f32 %v9067, %v9259
  %v9261 = vpop.f32.mrb[0].mxu0
  %v9262 = vadd.f32 %v9069, %v9261
  %v9263 = vpop.f32.mrb[0].mxu0
  %v9264 = vadd.f32 %v9071, %v9263
  %v9265 = vpop.f32.mrb[0].mxu0
  %v9266 = vadd.f32 %v9073, %v9265
  %9267 = vmatprep.mubr.bf16.mxu0 %v928
  %9268 = vmatmul.mubr.bf16.gmra.mrb[0].mxu0 %v927
  %v9269 = vpop.f32.mrb[0].mxu0
  %v9270 = vadd.f32 %v9077, %v9269
  %v9271 = vpop.f32.mrb[0].mxu0
  %v9272 = vadd.f32 %v9079, %v9271
  %v9273 = vpop.f32.mrb[0].mxu0
  %v9274 = vadd.f32 %v9081, %v9273
  %v9275 = vpop.f32.mrb[0].mxu0
  %v9276 = vadd.f32 %v9083, %v9275
  %9277 = vmatprep.mubr.bf16.mxu0 %v938
  %9278 = vmatmul.mubr.bf16.gmra.mrb[0].mxu0 %v937
  %v9279 = vpop.f32.mrb[0].mxu0
  %v9280 = vadd.f32 %v9087, %v9279
  %v9281 = vpop.f32.mrb[0].mxu0
  %v9282 = vadd.f32 %v9089, %v9281
  %v9283 = vpop.f32.mrb[0].mxu0
  %v9284 = vadd.f32 %v9091, %v9283
  %v9285 = vpop.f32.mrb[0].mxu0
  %v9286 = vadd.f32 %v9093, %v9285
  %9287 = vmatprep.mubr.bf16.mxu0 %v948
  %9288 = vmatmul.mubr.bf16.gmra.mrb[0].mxu0 %v947
  %v9289 = vpop.f32.mrb[0].mxu0
  %v9290 = vadd.f32 %v9097, %v9289
  %v9291 = vpop.f32.mrb[0].mxu0
  %v9292 = vadd.f32 %v9099, %v9291
  %v9293 = vpop.f32.mrb[0].mxu0
  %v9294 = vadd.f32 %v9101, %v9293
  %v9295 = vpop.f32.mrb[0].mxu0
  %v9296 = vadd.f32 %v9103, %v9295
  %9297 = vmatprep.mubr.bf16.mxu0 %v958
  %9298 = vmatmul.mubr.bf16.gmra.mrb[0].mxu0 %v957
  %v9299 = vpop.f32.mrb[0].mxu0
  %v9300 = vadd.f32 %v9107, %v9299
  %v9301 = vpop.f32.mrb[0].mxu0
  %v9302 = vadd.f32 %v9109, %v9301
  %v9303 = vpop.f32.mrb[0].mxu0
  %v9304 = vadd.f32 %v9111, %v9303
  %v9305 = vpop.f32.mrb[0].mxu0
  %v9306 = vadd.f32 %v9113, %v9305
  %9307 = vmatprep.mubr.bf16.mxu0 %v968
  %9308 = vmatmul.mubr.bf16.gmra.mrb[0].mxu0 %v967
  %v9309 = vpop.f32.mrb[0].mxu0
  %v9310 = vadd.f32 %v9117, %v9309
  %v9311 = vpop.f32.mrb[0].mxu0
  %v9312 = vadd.f32 %v9119, %v9311
  %v9313 = vpop.f32.mrb[0].mxu0
  %v9314 = vadd.f32 %v9121, %v9313
  %v9315 = vpop.f32.mrb[0].mxu0
  %v9316 = vadd.f32 %v9123, %v9315
  %9317 = vmatprep.mubr.bf16.mxu0 %v978
  %9318 = vmatmul.mubr.bf16.gmra.mrb[0].mxu0 %v977
  %v9319 = vpop.f32.mrb[0].mxu0
  %v9320 = vadd.f32 %v9127, %v9319
  %v9321 = vpop.f32.mrb[0].mxu0
  %v9322 = vadd.f32 %v9129, %v9321
  %v9323 = vpop.f32.mrb[0].mxu0
  %v9324 = vadd.f32 %v9131, %v9323
  %v9325 = vpop.f32.mrb[0].mxu0
  %v9326 = vadd.f32 %v9133, %v9325
  %9327 = vmatprep.mubr.bf16.mxu0 %v988
  %9328 = vmatmul.mubr.bf16.gmra.mrb[0].mxu0 %v987
  %v9329 = vpop.f32.mrb[0].mxu0
  %v9330 = vadd.f32 %v9137, %v9329
  %v9331 = vpop.f32.mrb[0].mxu0
  %v9332 = vadd.f32 %v9139, %v9331
  %v9333 = vpop.f32.mrb[0].mxu0
  %v9334 = vadd.f32 %v9141, %v9333
  %v9335 = vpop.f32.mrb[0].mxu0
  %v9336 = vadd.f32 %v9143, %v9335
  %9337 = vdwg.mxu0
  %9338 = vmatprep.subr.bf16.mxu0 %v8536
  %9339 = vmatpush1.bf16.msra.mxu0 %v8535
  %9340 = vmatprep.subr.bf16.mxu0 %v8538
  %9341 = vmatpush1.bf16.msra.mxu0 %v8537
  %9342 = vmatprep.subr.bf16.mxu0 %v8540
  %9343 = vmatpush1.bf16.msra.mxu0 %v8539
  %9344 = vmatprep.subr.bf16.mxu0 %v8542
  %9345 = vmatpush1.bf16.msra.mxu0 %v8541
  %9346 = vmatprep.subr.bf16.mxu0 %v8544
  %9347 = vmatpush1.bf16.msra.mxu0 %v8543
  %9348 = vmatprep.subr.bf16.mxu0 %v8546
  %9349 = vmatpush1.bf16.msra.mxu0 %v8545
  %9350 = vmatprep.subr.bf16.mxu0 %v8548
  %9351 = vmatpush1.bf16.msra.mxu0 %v8547
  %9352 = vmatprep.subr.bf16.mxu0 %v8550
  %9353 = vmatpush1.bf16.msra.mxu0 %v8549
  %9354 = vmatprep.subr.bf16.mxu0 %v8552
  %9355 = vmatpush1.bf16.msra.mxu0 %v8551
  %9356 = vmatprep.subr.bf16.mxu0 %v8554
  %9357 = vmatpush1.bf16.msra.mxu0 %v8553
  %9358 = vmatprep.subr.bf16.mxu0 %v8556
  %9359 = vmatpush1.bf16.msra.mxu0 %v8555
  %9360 = vmatprep.subr.bf16.mxu0 %v8558
  %9361 = vmatpush1.bf16.msra.mxu0 %v8557
  %9362 = vmatprep.subr.bf16.mxu0 %v8560
  %9363 = vmatpush1.bf16.msra.mxu0 %v8559
  %9364 = vmatprep.subr.bf16.mxu0 %v8562
  %9365 = vmatpush1.bf16.msra.mxu0 %v8561
  %9366 = vmatprep.subr.bf16.mxu0 %v8564
  %9367 = vmatpush1.bf16.msra.mxu0 %v8563
  %9368 = vmatprep.subr.bf16.mxu0 %v8566
  %9369 = vmatpush1.bf16.msra.mxu0 %v8565
  %9370 = vmatprep.mubr.bf16.mxu0 %v840
  %9371 = vmatmul.mubr.bf16.gmra.mrb[0].mxu0 %v839
  %v9372 = vpop.f32.mrb[0].mxu0
  %v9373 = vadd.f32 %v9180, %v9372
  %v9374 = vpop.f32.mrb[0].mxu0
  %v9375 = vadd.f32 %v9182, %v9374
  %v9376 = vpop.f32.mrb[0].mxu0
  %v9377 = vadd.f32 %v9184, %v9376
  %v9378 = vpop.f32.mrb[0].mxu0
  %v9379 = vadd.f32 %v9186, %v9378
  %9380 = vmatprep.mubr.bf16.mxu0 %v850
  %9381 = vmatmul.mubr.bf16.gmra.mrb[0].mxu0 %v849
  %v9382 = vpop.f32.mrb[0].mxu0
  %v9383 = vadd.f32 %v9190, %v9382
  %v9384 = vpop.f32.mrb[0].mxu0
  %v9385 = vadd.f32 %v9192, %v9384
  %v9386 = vpop.f32.mrb[0].mxu0
  %v9387 = vadd.f32 %v9194, %v9386
  %v9388 = vpop.f32.mrb[0].mxu0
  %v9389 = vadd.f32 %v9196, %v9388
  %9390 = vmatprep.mubr.bf16.mxu0 %v860
  %9391 = vmatmul.mubr.bf16.gmra.mrb[0].mxu0 %v859
  %v9392 = vpop.f32.mrb[0].mxu0
  %v9393 = vadd.f32 %v9200, %v9392
  %v9394 = vpop.f32.mrb[0].mxu0
  %v9395 = vadd.f32 %v9202, %v9394
  %v9396 = vpop.f32.mrb[0].mxu0
  %v9397 = vadd.f32 %v9204, %v9396
  %v9398 = vpop.f32.mrb[0].mxu0
  %v9399 = vadd.f32 %v9206, %v9398
  %9400 = vmatprep.mubr.bf16.mxu0 %v870
  %9401 = vmatmul.mubr.bf16.gmra.mrb[0].mxu0 %v869
  %v9402 = vpop.f32.mrb[0].mxu0
  %v9403 = vadd.f32 %v9210, %v9402
  %v9404 = vpop.f32.mrb[0].mxu0
  %v9405 = vadd.f32 %v9212, %v9404
  %v9406 = vpop.f32.mrb[0].mxu0
  %v9407 = vadd.f32 %v9214, %v9406
  %v9408 = vpop.f32.mrb[0].mxu0
  %v9409 = vadd.f32 %v9216, %v9408
  %9410 = vmatprep.mubr.bf16.mxu0 %v880
  %9411 = vmatmul.mubr.bf16.gmra.mrb[0].mxu0 %v879
  %v9412 = vpop.f32.mrb[0].mxu0
  %v9413 = vadd.f32 %v9220, %v9412
  %v9414 = vpop.f32.mrb[0].mxu0
  %v9415 = vadd.f32 %v9222, %v9414
  %v9416 = vpop.f32.mrb[0].mxu0
  %v9417 = vadd.f32 %v9224, %v9416
  %v9418 = vpop.f32.mrb[0].mxu0
  %v9419 = vadd.f32 %v9226, %v9418
  %9420 = vmatprep.mubr.bf16.mxu0 %v890
  %9421 = vmatmul.mubr.bf16.gmra.mrb[0].mxu0 %v889
  %v9422 = vpop.f32.mrb[0].mxu0
  %v9423 = vadd.f32 %v9230, %v9422
  %v9424 = vpop.f32.mrb[0].mxu0
  %v9425 = vadd.f32 %v9232, %v9424
  %v9426 = vpop.f32.mrb[0].mxu0
  %v9427 = vadd.f32 %v9234, %v9426
  %v9428 = vpop.f32.mrb[0].mxu0
  %v9429 = vadd.f32 %v9236, %v9428
  %9430 = vmatprep.mubr.bf16.mxu0 %v900
  %9431 = vmatmul.mubr.bf16.gmra.mrb[0].mxu0 %v899
  %v9432 = vpop.f32.mrb[0].mxu0
  %v9433 = vadd.f32 %v9240, %v9432
  %v9434 = vpop.f32.mrb[0].mxu0
  %v9435 = vadd.f32 %v9242, %v9434
  %v9436 = vpop.f32.mrb[0].mxu0
  %v9437 = vadd.f32 %v9244, %v9436
  %v9438 = vpop.f32.mrb[0].mxu0
  %v9439 = vadd.f32 %v9246, %v9438
  %9440 = vmatprep.mubr.bf16.mxu0 %v910
  %9441 = vmatmul.mubr.bf16.gmra.mrb[0].mxu0 %v909
  %v9442 = vpop.f32.mrb[0].mxu0
  %v9443 = vadd.f32 %v9250, %v9442
  %v9444 = vpop.f32.mrb[0].mxu0
  %v9445 = vadd.f32 %v9252, %v9444
  %v9446 = vpop.f32.mrb[0].mxu0
  %v9447 = vadd.f32 %v9254, %v9446
  %v9448 = vpop.f32.mrb[0].mxu0
  %v9449 = vadd.f32 %v9256, %v9448
  %9450 = vmatprep.mubr.bf16.mxu0 %v920
  %9451 = vmatmul.mubr.bf16.gmra.mrb[0].mxu0 %v919
  %v9452 = vpop.f32.mrb[0].mxu0
  %v9453 = vadd.f32 %v9260, %v9452
  %v9454 = vpop.f32.mrb[0].mxu0
  %v9455 = vadd.f32 %v9262, %v9454
  %v9456 = vpop.f32.mrb[0].mxu0
  %v9457 = vadd.f32 %v9264, %v9456
  %v9458 = vpop.f32.mrb[0].mxu0
  %v9459 = vadd.f32 %v9266, %v9458
  %9460 = vmatprep.mubr.bf16.mxu0 %v930
  %9461 = vmatmul.mubr.bf16.gmra.mrb[0].mxu0 %v929
  %v9462 = vpop.f32.mrb[0].mxu0
  %v9463 = vadd.f32 %v9270, %v9462
  %v9464 = vpop.f32.mrb[0].mxu0
  %v9465 = vadd.f32 %v9272, %v9464
  %v9466 = vpop.f32.mrb[0].mxu0
  %v9467 = vadd.f32 %v9274, %v9466
  %v9468 = vpop.f32.mrb[0].mxu0
  %v9469 = vadd.f32 %v9276, %v9468
  %9470 = vmatprep.mubr.bf16.mxu0 %v940
  %9471 = vmatmul.mubr.bf16.gmra.mrb[0].mxu0 %v939
  %v9472 = vpop.f32.mrb[0].mxu0
  %v9473 = vadd.f32 %v9280, %v9472
  %v9474 = vpop.f32.mrb[0].mxu0
  %v9475 = vadd.f32 %v9282, %v9474
  %v9476 = vpop.f32.mrb[0].mxu0
  %v9477 = vadd.f32 %v9284, %v9476
  %v9478 = vpop.f32.mrb[0].mxu0
  %v9479 = vadd.f32 %v9286, %v9478
  %9480 = vmatprep.mubr.bf16.mxu0 %v950
  %9481 = vmatmul.mubr.bf16.gmra.mrb[0].mxu0 %v949
  %v9482 = vpop.f32.mrb[0].mxu0
  %v9483 = vadd.f32 %v9290, %v9482
  %v9484 = vpop.f32.mrb[0].mxu0
  %v9485 = vadd.f32 %v9292, %v9484
  %v9486 = vpop.f32.mrb[0].mxu0
  %v9487 = vadd.f32 %v9294, %v9486
  %v9488 = vpop.f32.mrb[0].mxu0
  %v9489 = vadd.f32 %v9296, %v9488
  %9490 = vmatprep.mubr.bf16.mxu0 %v960
  %9491 = vmatmul.mubr.bf16.gmra.mrb[0].mxu0 %v959
  %v9492 = vpop.f32.mrb[0].mxu0
  %v9493 = vadd.f32 %v9300, %v9492
  %v9494 = vpop.f32.mrb[0].mxu0
  %v9495 = vadd.f32 %v9302, %v9494
  %v9496 = vpop.f32.mrb[0].mxu0
  %v9497 = vadd.f32 %v9304, %v9496
  %v9498 = vpop.f32.mrb[0].mxu0
  %v9499 = vadd.f32 %v9306, %v9498
  %9500 = vmatprep.mubr.bf16.mxu0 %v970
  %9501 = vmatmul.mubr.bf16.gmra.mrb[0].mxu0 %v969
  %v9502 = vpop.f32.mrb[0].mxu0
  %v9503 = vadd.f32 %v9310, %v9502
  %v9504 = vpop.f32.mrb[0].mxu0
  %v9505 = vadd.f32 %v9312, %v9504
  %v9506 = vpop.f32.mrb[0].mxu0
  %v9507 = vadd.f32 %v9314, %v9506
  %v9508 = vpop.f32.mrb[0].mxu0
  %v9509 = vadd.f32 %v9316, %v9508
  %9510 = vmatprep.mubr.bf16.mxu0 %v980
  %9511 = vmatmul.mubr.bf16.gmra.mrb[0].mxu0 %v979
  %v9512 = vpop.f32.mrb[0].mxu0
  %v9513 = vadd.f32 %v9320, %v9512
  %v9514 = vpop.f32.mrb[0].mxu0
  %v9515 = vadd.f32 %v9322, %v9514
  %v9516 = vpop.f32.mrb[0].mxu0
  %v9517 = vadd.f32 %v9324, %v9516
  %v9518 = vpop.f32.mrb[0].mxu0
  %v9519 = vadd.f32 %v9326, %v9518
  %9520 = vmatprep.mubr.bf16.mxu0 %v990
  %9521 = vmatmul.mubr.bf16.gmra.mrb[0].mxu0 %v989
  %v9522 = vpop.f32.mrb[0].mxu0
  %v9523 = vadd.f32 %v9330, %v9522
  %v9524 = vpop.f32.mrb[0].mxu0
  %v9525 = vadd.f32 %v9332, %v9524
  %v9526 = vpop.f32.mrb[0].mxu0
  %v9527 = vadd.f32 %v9334, %v9526
  %v9528 = vpop.f32.mrb[0].mxu0
  %v9529 = vadd.f32 %v9336, %v9528
  %9530 = vdwg.mxu0
  %9531 = vmatprep.subr.bf16.mxu0 %v8568
  %9532 = vmatpush1.bf16.msra.mxu0 %v8567
  %9533 = vmatprep.subr.bf16.mxu0 %v8570
  %9534 = vmatpush1.bf16.msra.mxu0 %v8569
  %9535 = vmatprep.subr.bf16.mxu0 %v8572
  %9536 = vmatpush1.bf16.msra.mxu0 %v8571
  %9537 = vmatprep.subr.bf16.mxu0 %v8574
  %9538 = vmatpush1.bf16.msra.mxu0 %v8573
  %9539 = vmatprep.subr.bf16.mxu0 %v8576
  %9540 = vmatpush1.bf16.msra.mxu0 %v8575
  %9541 = vmatprep.subr.bf16.mxu0 %v8578
  %9542 = vmatpush1.bf16.msra.mxu0 %v8577
  %9543 = vmatprep.subr.bf16.mxu0 %v8580
  %9544 = vmatpush1.bf16.msra.mxu0 %v8579
  %9545 = vmatprep.subr.bf16.mxu0 %v8582
  %9546 = vmatpush1.bf16.msra.mxu0 %v8581
  %9547 = vmatprep.subr.bf16.mxu0 %v8584
  %9548 = vmatpush1.bf16.msra.mxu0 %v8583
  %9549 = vmatprep.subr.bf16.mxu0 %v8586
  %9550 = vmatpush1.bf16.msra.mxu0 %v8585
  %9551 = vmatprep.subr.bf16.mxu0 %v8588
  %9552 = vmatpush1.bf16.msra.mxu0 %v8587
  %9553 = vmatprep.subr.bf16.mxu0 %v8590
  %9554 = vmatpush1.bf16.msra.mxu0 %v8589
  %9555 = vmatprep.subr.bf16.mxu0 %v8592
  %9556 = vmatpush1.bf16.msra.mxu0 %v8591
  %9557 = vmatprep.subr.bf16.mxu0 %v8594
  %9558 = vmatpush1.bf16.msra.mxu0 %v8593
  %9559 = vmatprep.subr.bf16.mxu0 %v8596
  %9560 = vmatpush1.bf16.msra.mxu0 %v8595
  %9561 = vmatprep.subr.bf16.mxu0 %v8598
  %9562 = vmatpush1.bf16.msra.mxu0 %v8597
  %9563 = vmatprep.mubr.bf16.mxu0 %v842
  %9564 = vmatmul.mubr.bf16.gmra.mrb[0].mxu0 %v841
  %v9565 = vpop.f32.mrb[0].mxu0
  %v9566 = vadd.f32 %v9373, %v9565
  %v9567 = vpop.f32.mrb[0].mxu0
  %v9568 = vadd.f32 %v9375, %v9567
  %v9569 = vpop.f32.mrb[0].mxu0
  %v9570 = vadd.f32 %v9377, %v9569
  %v9571 = vpop.f32.mrb[0].mxu0
  %v9572 = vadd.f32 %v9379, %v9571
  %9573 = vmatprep.mubr.bf16.mxu0 %v852
  %9574 = vmatmul.mubr.bf16.gmra.mrb[0].mxu0 %v851
  %v9575 = vpop.f32.mrb[0].mxu0
  %v9576 = vadd.f32 %v9383, %v9575
  %v9577 = vpop.f32.mrb[0].mxu0
  %v9578 = vadd.f32 %v9385, %v9577
  %v9579 = vpop.f32.mrb[0].mxu0
  %v9580 = vadd.f32 %v9387, %v9579
  %v9581 = vpop.f32.mrb[0].mxu0
  %v9582 = vadd.f32 %v9389, %v9581
  %9583 = vmatprep.mubr.bf16.mxu0 %v862
  %9584 = vmatmul.mubr.bf16.gmra.mrb[0].mxu0 %v861
  %v9585 = vpop.f32.mrb[0].mxu0
  %v9586 = vadd.f32 %v9393, %v9585
  %v9587 = vpop.f32.mrb[0].mxu0
  %v9588 = vadd.f32 %v9395, %v9587
  %v9589 = vpop.f32.mrb[0].mxu0
  %v9590 = vadd.f32 %v9397, %v9589
  %v9591 = vpop.f32.mrb[0].mxu0
  %v9592 = vadd.f32 %v9399, %v9591
  %9593 = vmatprep.mubr.bf16.mxu0 %v872
  %9594 = vmatmul.mubr.bf16.gmra.mrb[0].mxu0 %v871
  %v9595 = vpop.f32.mrb[0].mxu0
  %v9596 = vadd.f32 %v9403, %v9595
  %v9597 = vpop.f32.mrb[0].mxu0
  %v9598 = vadd.f32 %v9405, %v9597
  %v9599 = vpop.f32.mrb[0].mxu0
  %v9600 = vadd.f32 %v9407, %v9599
  %v9601 = vpop.f32.mrb[0].mxu0
  %v9602 = vadd.f32 %v9409, %v9601
  %9603 = vmatprep.mubr.bf16.mxu0 %v882
  %9604 = vmatmul.mubr.bf16.gmra.mrb[0].mxu0 %v881
  %v9605 = vpop.f32.mrb[0].mxu0
  %v9606 = vadd.f32 %v9413, %v9605
  %v9607 = vpop.f32.mrb[0].mxu0
  %v9608 = vadd.f32 %v9415, %v9607
  %v9609 = vpop.f32.mrb[0].mxu0
  %v9610 = vadd.f32 %v9417, %v9609
  %v9611 = vpop.f32.mrb[0].mxu0
  %v9612 = vadd.f32 %v9419, %v9611
  %9613 = vmatprep.mubr.bf16.mxu0 %v892
  %9614 = vmatmul.mubr.bf16.gmra.mrb[0].mxu0 %v891
  %v9615 = vpop.f32.mrb[0].mxu0
  %v9616 = vadd.f32 %v9423, %v9615
  %v9617 = vpop.f32.mrb[0].mxu0
  %v9618 = vadd.f32 %v9425, %v9617
  %v9619 = vpop.f32.mrb[0].mxu0
  %v9620 = vadd.f32 %v9427, %v9619
  %v9621 = vpop.f32.mrb[0].mxu0
  %v9622 = vadd.f32 %v9429, %v9621
  %9623 = vmatprep.mubr.bf16.mxu0 %v902
  %9624 = vmatmul.mubr.bf16.gmra.mrb[0].mxu0 %v901
  %v9625 = vpop.f32.mrb[0].mxu0
  %v9626 = vadd.f32 %v9433, %v9625
  %v9627 = vpop.f32.mrb[0].mxu0
  %v9628 = vadd.f32 %v9435, %v9627
  %v9629 = vpop.f32.mrb[0].mxu0
  %v9630 = vadd.f32 %v9437, %v9629
  %v9631 = vpop.f32.mrb[0].mxu0
  %v9632 = vadd.f32 %v9439, %v9631
  %9633 = vmatprep.mubr.bf16.mxu0 %v912
  %9634 = vmatmul.mubr.bf16.gmra.mrb[0].mxu0 %v911
  %v9635 = vpop.f32.mrb[0].mxu0
  %v9636 = vadd.f32 %v9443, %v9635
  %v9637 = vpop.f32.mrb[0].mxu0
  %v9638 = vadd.f32 %v9445, %v9637
  %v9639 = vpop.f32.mrb[0].mxu0
  %v9640 = vadd.f32 %v9447, %v9639
  %v9641 = vpop.f32.mrb[0].mxu0
  %v9642 = vadd.f32 %v9449, %v9641
  %9643 = vmatprep.mubr.bf16.mxu0 %v922
  %9644 = vmatmul.mubr.bf16.gmra.mrb[0].mxu0 %v921
  %v9645 = vpop.f32.mrb[0].mxu0
  %v9646 = vadd.f32 %v9453, %v9645
  %v9647 = vpop.f32.mrb[0].mxu0
  %v9648 = vadd.f32 %v9455, %v9647
  %v9649 = vpop.f32.mrb[0].mxu0
  %v9650 = vadd.f32 %v9457, %v9649
  %v9651 = vpop.f32.mrb[0].mxu0
  %v9652 = vadd.f32 %v9459, %v9651
  %9653 = vmatprep.mubr.bf16.mxu0 %v932
  %9654 = vmatmul.mubr.bf16.gmra.mrb[0].mxu0 %v931
  %v9655 = vpop.f32.mrb[0].mxu0
  %v9656 = vadd.f32 %v9463, %v9655
  %v9657 = vpop.f32.mrb[0].mxu0
  %v9658 = vadd.f32 %v9465, %v9657
  %v9659 = vpop.f32.mrb[0].mxu0
  %v9660 = vadd.f32 %v9467, %v9659
  %v9661 = vpop.f32.mrb[0].mxu0
  %v9662 = vadd.f32 %v9469, %v9661
  %9663 = vmatprep.mubr.bf16.mxu0 %v942
  %9664 = vmatmul.mubr.bf16.gmra.mrb[0].mxu0 %v941
  %v9665 = vpop.f32.mrb[0].mxu0
  %v9666 = vadd.f32 %v9473, %v9665
  %v9667 = vpop.f32.mrb[0].mxu0
  %v9668 = vadd.f32 %v9475, %v9667
  %v9669 = vpop.f32.mrb[0].mxu0
  %v9670 = vadd.f32 %v9477, %v9669
  %v9671 = vpop.f32.mrb[0].mxu0
  %v9672 = vadd.f32 %v9479, %v9671
  %9673 = vmatprep.mubr.bf16.mxu0 %v952
  %9674 = vmatmul.mubr.bf16.gmra.mrb[0].mxu0 %v951
  %v9675 = vpop.f32.mrb[0].mxu0
  %v9676 = vadd.f32 %v9483, %v9675
  %v9677 = vpop.f32.mrb[0].mxu0
  %v9678 = vadd.f32 %v9485, %v9677
  %v9679 = vpop.f32.mrb[0].mxu0
  %v9680 = vadd.f32 %v9487, %v9679
  %v9681 = vpop.f32.mrb[0].mxu0
  %v9682 = vadd.f32 %v9489, %v9681
  %9683 = vmatprep.mubr.bf16.mxu0 %v962
  %9684 = vmatmul.mubr.bf16.gmra.mrb[0].mxu0 %v961
  %v9685 = vpop.f32.mrb[0].mxu0
  %v9686 = vadd.f32 %v9493, %v9685
  %v9687 = vpop.f32.mrb[0].mxu0
  %v9688 = vadd.f32 %v9495, %v9687
  %v9689 = vpop.f32.mrb[0].mxu0
  %v9690 = vadd.f32 %v9497, %v9689
  %v9691 = vpop.f32.mrb[0].mxu0
  %v9692 = vadd.f32 %v9499, %v9691
  %9693 = vmatprep.mubr.bf16.mxu0 %v972
  %9694 = vmatmul.mubr.bf16.gmra.mrb[0].mxu0 %v971
  %v9695 = vpop.f32.mrb[0].mxu0
  %v9696 = vadd.f32 %v9503, %v9695
  %v9697 = vpop.f32.mrb[0].mxu0
  %v9698 = vadd.f32 %v9505, %v9697
  %v9699 = vpop.f32.mrb[0].mxu0
  %v9700 = vadd.f32 %v9507, %v9699
  %v9701 = vpop.f32.mrb[0].mxu0
  %v9702 = vadd.f32 %v9509, %v9701
  %9703 = vmatprep.mubr.bf16.mxu0 %v982
  %9704 = vmatmul.mubr.bf16.gmra.mrb[0].mxu0 %v981
  %v9705 = vpop.f32.mrb[0].mxu0
  %v9706 = vadd.f32 %v9513, %v9705
  %v9707 = vpop.f32.mrb[0].mxu0
  %v9708 = vadd.f32 %v9515, %v9707
  %v9709 = vpop.f32.mrb[0].mxu0
  %v9710 = vadd.f32 %v9517, %v9709
  %v9711 = vpop.f32.mrb[0].mxu0
  %v9712 = vadd.f32 %v9519, %v9711
  %9713 = vmatprep.mubr.bf16.mxu0 %v992
  %9714 = vmatmul.mubr.bf16.gmra.mrb[0].mxu0 %v991
  %v9715 = vpop.f32.mrb[0].mxu0
  %v9716 = vadd.f32 %v9523, %v9715
  %v9717 = vpop.f32.mrb[0].mxu0
  %v9718 = vadd.f32 %v9525, %v9717
  %v9719 = vpop.f32.mrb[0].mxu0
  %v9720 = vadd.f32 %v9527, %v9719
  %v9721 = vpop.f32.mrb[0].mxu0
  %v9722 = vadd.f32 %v9529, %v9721
  %9723 = vdwg.mxu0
  %v9724 = vpack.c.bf16 %v9570, %v9566
  %v9725 = vpack.c.bf16 %v9572, %v9568
  %v9726 = vpack.c.bf16 %v9580, %v9576
  %v9727 = vpack.c.bf16 %v9582, %v9578
  %v9728 = vpack.c.bf16 %v9590, %v9586
  %v9729 = vpack.c.bf16 %v9592, %v9588
  %v9730 = vpack.c.bf16 %v9600, %v9596
  %v9731 = vpack.c.bf16 %v9602, %v9598
  %v9732 = vpack.c.bf16 %v9610, %v9606
  %v9733 = vpack.c.bf16 %v9612, %v9608
  %v9734 = vpack.c.bf16 %v9620, %v9616
  %v9735 = vpack.c.bf16 %v9622, %v9618
  %v9736 = vpack.c.bf16 %v9630, %v9626
  %v9737 = vpack.c.bf16 %v9632, %v9628
  %v9738 = vpack.c.bf16 %v9640, %v9636
  %v9739 = vpack.c.bf16 %v9642, %v9638
  %v9740 = vpack.c.bf16 %v9650, %v9646
  %v9741 = vpack.c.bf16 %v9652, %v9648
  %v9742 = vpack.c.bf16 %v9660, %v9656
  %v9743 = vpack.c.bf16 %v9662, %v9658
  %v9744 = vpack.c.bf16 %v9670, %v9666
  %v9745 = vpack.c.bf16 %v9672, %v9668
  %v9746 = vpack.c.bf16 %v9680, %v9676
  %v9747 = vpack.c.bf16 %v9682, %v9678
  %v9748 = vpack.c.bf16 %v9690, %v9686
  %v9749 = vpack.c.bf16 %v9692, %v9688
  %v9750 = vpack.c.bf16 %v9700, %v9696
  %v9751 = vpack.c.bf16 %v9702, %v9698
  %v9752 = vpack.c.bf16 %v9710, %v9706
  %v9753 = vpack.c.bf16 %v9712, %v9708
  %v9754 = vpack.c.bf16 %v9720, %v9716
  %v9755 = vpack.c.bf16 %v9722, %v9718
  %v9756 = vld [vmem:[%s3 + $0x180] sm:$0xf]
  %v9757 = vld [vmem:[%s3 + $0x184] sm:$0xf]
  %v9758 = vld [vmem:[%s3 + $0x188] sm:$0xf]
  %v9759 = vld [vmem:[%s3 + $0x18c] sm:$0xf]
  %v9760 = vld [vmem:[%s3 + $0x190] sm:$0xf]
  %v9761 = vld [vmem:[%s3 + $0x194] sm:$0xf]
  %v9762 = vld [vmem:[%s3 + $0x198] sm:$0xf]
  %v9763 = vld [vmem:[%s3 + $0x19c] sm:$0xf]
  %v9764 = vld [vmem:[%s3 + $0x1a0] sm:$0xf]
  %v9765 = vld [vmem:[%s3 + $0x1a4] sm:$0xf]
  %v9766 = vld [vmem:[%s3 + $0x1a8] sm:$0xf]
  %v9767 = vld [vmem:[%s3 + $0x1ac] sm:$0xf]
  %v9768 = vld [vmem:[%s3 + $0x1b0] sm:$0xf]
  %v9769 = vld [vmem:[%s3 + $0x1b4] sm:$0xf]
  %v9770 = vld [vmem:[%s3 + $0x1b8] sm:$0xf]
  %v9771 = vld [vmem:[%s3 + $0x1bc] sm:$0xf]
  %v9772 = vld [vmem:[%s3 + $0x1c0] sm:$0xf]
  %v9773 = vld [vmem:[%s3 + $0x1c4] sm:$0xf]
  %v9774 = vld [vmem:[%s3 + $0x1c8] sm:$0xf]
  %v9775 = vld [vmem:[%s3 + $0x1cc] sm:$0xf]
  %v9776 = vld [vmem:[%s3 + $0x1d0] sm:$0xf]
  %v9777 = vld [vmem:[%s3 + $0x1d4] sm:$0xf]
  %v9778 = vld [vmem:[%s3 + $0x1d8] sm:$0xf]
  %v9779 = vld [vmem:[%s3 + $0x1dc] sm:$0xf]
  %v9780 = vld [vmem:[%s3 + $0x1e0] sm:$0xf]
  %v9781 = vld [vmem:[%s3 + $0x1e4] sm:$0xf]
  %v9782 = vld [vmem:[%s3 + $0x1e8] sm:$0xf]
  %v9783 = vld [vmem:[%s3 + $0x1ec] sm:$0xf]
  %v9784 = vld [vmem:[%s3 + $0x1f0] sm:$0xf]
  %v9785 = vld [vmem:[%s3 + $0x1f4] sm:$0xf]
  %v9786 = vld [vmem:[%s3 + $0x1f8] sm:$0xf]
  %v9787 = vld [vmem:[%s3 + $0x1fc] sm:$0xf]
  %v9820 = vunpack.c.l.b16 %v9756
  %v9821 = vunpack.c.l.b16 %v9757
  %v9822 = vunpack.c.l.b16 %v9758
  %v9823 = vunpack.c.l.b16 %v9759
  %v9824 = vunpack.c.l.b16 %v9760
  %v9825 = vunpack.c.l.b16 %v9761
  %v9826 = vunpack.c.l.b16 %v9762
  %v9827 = vunpack.c.l.b16 %v9763
  %v9828 = vunpack.c.l.b16 %v9764
  %v9829 = vunpack.c.l.b16 %v9765
  %v9830 = vunpack.c.l.b16 %v9766
  %v9831 = vunpack.c.l.b16 %v9767
  %v9832 = vunpack.c.l.b16 %v9768
  %v9833 = vunpack.c.l.b16 %v9769
  %v9834 = vunpack.c.l.b16 %v9770
  %v9835 = vunpack.c.l.b16 %v9771
  %v9836 = vunpack.c.l.b16 %v9772
  %v9837 = vunpack.c.l.b16 %v9773
  %v9838 = vunpack.c.l.b16 %v9774
  %v9839 = vunpack.c.l.b16 %v9775
  %v9840 = vunpack.c.l.b16 %v9776
  %v9841 = vunpack.c.l.b16 %v9777
  %v9842 = vunpack.c.l.b16 %v9778
  %v9843 = vunpack.c.l.b16 %v9779
  %v9844 = vunpack.c.l.b16 %v9780
  %v9845 = vunpack.c.l.b16 %v9781
  %v9846 = vunpack.c.l.b16 %v9782
  %v9847 = vunpack.c.l.b16 %v9783
  %v9848 = vunpack.c.l.b16 %v9784
  %v9849 = vunpack.c.l.b16 %v9785
  %v9850 = vunpack.c.l.b16 %v9786
  %v9851 = vunpack.c.l.b16 %v9787
  %v9852 = vpack.c.b16 %v9821, %v9820
  %v9853 = vpack.c.b16 %v9823, %v9822
  %v9854 = vpack.c.b16 %v9825, %v9824
  %v9855 = vpack.c.b16 %v9827, %v9826
  %v9856 = vpack.c.b16 %v9829, %v9828
  %v9857 = vpack.c.b16 %v9831, %v9830
  %v9858 = vpack.c.b16 %v9833, %v9832
  %v9859 = vpack.c.b16 %v9835, %v9834
  %v9860 = vpack.c.b16 %v9837, %v9836
  %v9861 = vpack.c.b16 %v9839, %v9838
  %v9862 = vpack.c.b16 %v9841, %v9840
  %v9863 = vpack.c.b16 %v9843, %v9842
  %v9864 = vpack.c.b16 %v9845, %v9844
  %v9865 = vpack.c.b16 %v9847, %v9846
  %v9866 = vpack.c.b16 %v9849, %v9848
  %v9867 = vpack.c.b16 %v9851, %v9850
  %9884 = vmatprep.subr.bf16.mxu0 0
  %9885 = vmatpush1.bf16.msra.mxu0 %v9852
  %9886 = vmatprep.subr.bf16.mxu0 0
  %9887 = vmatpush1.bf16.msra.mxu0 %v9853
  %9888 = vmatprep.subr.bf16.mxu0 0
  %9889 = vmatpush1.bf16.msra.mxu0 %v9854
  %9890 = vmatprep.subr.bf16.mxu0 0
  %9891 = vmatpush1.bf16.msra.mxu0 %v9855
  %9892 = vmatprep.subr.bf16.mxu0 0
  %9893 = vmatpush1.bf16.msra.mxu0 %v9856
  %9894 = vmatprep.subr.bf16.mxu0 0
  %9895 = vmatpush1.bf16.msra.mxu0 %v9857
  %9896 = vmatprep.subr.bf16.mxu0 0
  %9897 = vmatpush1.bf16.msra.mxu0 %v9858
  %9898 = vmatprep.subr.bf16.mxu0 0
  %9899 = vmatpush1.bf16.msra.mxu0 %v9859
  %9900 = vmatprep.subr.bf16.mxu0 0
  %9901 = vmatpush1.bf16.msra.mxu0 %v9860
  %9902 = vmatprep.subr.bf16.mxu0 0
  %9903 = vmatpush1.bf16.msra.mxu0 %v9861
  %9904 = vmatprep.subr.bf16.mxu0 0
  %9905 = vmatpush1.bf16.msra.mxu0 %v9862
  %9906 = vmatprep.subr.bf16.mxu0 0
  %9907 = vmatpush1.bf16.msra.mxu0 %v9863
  %9908 = vmatprep.subr.bf16.mxu0 0
  %9909 = vmatpush1.bf16.msra.mxu0 %v9864
  %9910 = vmatprep.subr.bf16.mxu0 0
  %9911 = vmatpush1.bf16.msra.mxu0 %v9865
  %9912 = vmatprep.subr.bf16.mxu0 0
  %9913 = vmatpush1.bf16.msra.mxu0 %v9866
  %9914 = vmatprep.subr.bf16.mxu0 0
  %9915 = vmatpush1.bf16.msra.mxu0 %v9867
  %9916 = vmatprep.mubr.bf16.mxu0 %v9725
  %9917 = vmatmul.mubr.bf16.gmra.mrb[0].mxu0 %v9724
  %v9918 = vpop.f32.mrb[0].mxu0
  %v9919 = vadd.f32 0.0, %v9918
  %v9920 = vpop.f32.mrb[0].mxu0
  %v9921 = vpop.f32.mrb[0].mxu0
  %v9922 = vadd.f32 0.0, %v9921
  %v9923 = vpop.f32.mrb[0].mxu0
  %9924 = vmatprep.mubr.bf16.mxu0 %v9727
  %9925 = vmatmul.mubr.bf16.gmra.mrb[0].mxu0 %v9726
  %v9926 = vpop.f32.mrb[0].mxu0
  %v9927 = vadd.f32 0.0, %v9926
  %v9928 = vpop.f32.mrb[0].mxu0
  %v9929 = vpop.f32.mrb[0].mxu0
  %v9930 = vadd.f32 0.0, %v9929
  %v9931 = vpop.f32.mrb[0].mxu0
  %9932 = vmatprep.mubr.bf16.mxu0 %v9729
  %9933 = vmatmul.mubr.bf16.gmra.mrb[0].mxu0 %v9728
  %v9934 = vpop.f32.mrb[0].mxu0
  %v9935 = vadd.f32 0.0, %v9934
  %v9936 = vpop.f32.mrb[0].mxu0
  %v9937 = vpop.f32.mrb[0].mxu0
  %v9938 = vadd.f32 0.0, %v9937
  %v9939 = vpop.f32.mrb[0].mxu0
  %9940 = vmatprep.mubr.bf16.mxu0 %v9731
  %9941 = vmatmul.mubr.bf16.gmra.mrb[0].mxu0 %v9730
  %v9942 = vpop.f32.mrb[0].mxu0
  %v9943 = vadd.f32 0.0, %v9942
  %v9944 = vpop.f32.mrb[0].mxu0
  %v9945 = vpop.f32.mrb[0].mxu0
  %v9946 = vadd.f32 0.0, %v9945
  %v9947 = vpop.f32.mrb[0].mxu0
  %9948 = vmatprep.mubr.bf16.mxu0 %v9733
  %9949 = vmatmul.mubr.bf16.gmra.mrb[0].mxu0 %v9732
  %v9950 = vpop.f32.mrb[0].mxu0
  %v9951 = vadd.f32 0.0, %v9950
  %v9952 = vpop.f32.mrb[0].mxu0
  %v9953 = vpop.f32.mrb[0].mxu0
  %v9954 = vadd.f32 0.0, %v9953
  %v9955 = vpop.f32.mrb[0].mxu0
  %9956 = vmatprep.mubr.bf16.mxu0 %v9735
  %9957 = vmatmul.mubr.bf16.gmra.mrb[0].mxu0 %v9734
  %v9958 = vpop.f32.mrb[0].mxu0
  %v9959 = vadd.f32 0.0, %v9958
  %v9960 = vpop.f32.mrb[0].mxu0
  %v9961 = vpop.f32.mrb[0].mxu0
  %v9962 = vadd.f32 0.0, %v9961
  %v9963 = vpop.f32.mrb[0].mxu0
  %9964 = vmatprep.mubr.bf16.mxu0 %v9737
  %9965 = vmatmul.mubr.bf16.gmra.mrb[0].mxu0 %v9736
  %v9966 = vpop.f32.mrb[0].mxu0
  %v9967 = vadd.f32 0.0, %v9966
  %v9968 = vpop.f32.mrb[0].mxu0
  %v9969 = vpop.f32.mrb[0].mxu0
  %v9970 = vadd.f32 0.0, %v9969
  %v9971 = vpop.f32.mrb[0].mxu0
  %9972 = vmatprep.mubr.bf16.mxu0 %v9739
  %9973 = vmatmul.mubr.bf16.gmra.mrb[0].mxu0 %v9738
  %v9974 = vpop.f32.mrb[0].mxu0
  %v9975 = vadd.f32 0.0, %v9974
  %v9976 = vpop.f32.mrb[0].mxu0
  %v9977 = vpop.f32.mrb[0].mxu0
  %v9978 = vadd.f32 0.0, %v9977
  %v9979 = vpop.f32.mrb[0].mxu0
  %9980 = vmatprep.mubr.bf16.mxu0 %v9741
  %9981 = vmatmul.mubr.bf16.gmra.mrb[0].mxu0 %v9740
  %v9982 = vpop.f32.mrb[0].mxu0
  %v9983 = vadd.f32 0.0, %v9982
  %v9984 = vpop.f32.mrb[0].mxu0
  %v9985 = vpop.f32.mrb[0].mxu0
  %v9986 = vadd.f32 0.0, %v9985
  %v9987 = vpop.f32.mrb[0].mxu0
  %9988 = vmatprep.mubr.bf16.mxu0 %v9743
  %9989 = vmatmul.mubr.bf16.gmra.mrb[0].mxu0 %v9742
  %v9990 = vpop.f32.mrb[0].mxu0
  %v9991 = vadd.f32 0.0, %v9990
  %v9992 = vpop.f32.mrb[0].mxu0
  %v9993 = vpop.f32.mrb[0].mxu0
  %v9994 = vadd.f32 0.0, %v9993
  %v9995 = vpop.f32.mrb[0].mxu0
  %9996 = vmatprep.mubr.bf16.mxu0 %v9745
  %9997 = vmatmul.mubr.bf16.gmra.mrb[0].mxu0 %v9744
  %v9998 = vpop.f32.mrb[0].mxu0
  %v9999 = vadd.f32 0.0, %v9998
  %v10000 = vpop.f32.mrb[0].mxu0
  %v10001 = vpop.f32.mrb[0].mxu0
  %v10002 = vadd.f32 0.0, %v10001
  %v10003 = vpop.f32.mrb[0].mxu0
  %10004 = vmatprep.mubr.bf16.mxu0 %v9747
  %10005 = vmatmul.mubr.bf16.gmra.mrb[0].mxu0 %v9746
  %v10006 = vpop.f32.mrb[0].mxu0
  %v10007 = vadd.f32 0.0, %v10006
  %v10008 = vpop.f32.mrb[0].mxu0
  %v10009 = vpop.f32.mrb[0].mxu0
  %v10010 = vadd.f32 0.0, %v10009
  %v10011 = vpop.f32.mrb[0].mxu0
  %10012 = vmatprep.mubr.bf16.mxu0 %v9749
  %10013 = vmatmul.mubr.bf16.gmra.mrb[0].mxu0 %v9748
  %v10014 = vpop.f32.mrb[0].mxu0
  %v10015 = vadd.f32 0.0, %v10014
  %v10016 = vpop.f32.mrb[0].mxu0
  %v10017 = vpop.f32.mrb[0].mxu0
  %v10018 = vadd.f32 0.0, %v10017
  %v10019 = vpop.f32.mrb[0].mxu0
  %10020 = vmatprep.mubr.bf16.mxu0 %v9751
  %10021 = vmatmul.mubr.bf16.gmra.mrb[0].mxu0 %v9750
  %v10022 = vpop.f32.mrb[0].mxu0
  %v10023 = vadd.f32 0.0, %v10022
  %v10024 = vpop.f32.mrb[0].mxu0
  %v10025 = vpop.f32.mrb[0].mxu0
  %v10026 = vadd.f32 0.0, %v10025
  %v10027 = vpop.f32.mrb[0].mxu0
  %10028 = vmatprep.mubr.bf16.mxu0 %v9753
  %10029 = vmatmul.mubr.bf16.gmra.mrb[0].mxu0 %v9752
  %v10030 = vpop.f32.mrb[0].mxu0
  %v10031 = vadd.f32 0.0, %v10030
  %v10032 = vpop.f32.mrb[0].mxu0
  %v10033 = vpop.f32.mrb[0].mxu0
  %v10034 = vadd.f32 0.0, %v10033
  %v10035 = vpop.f32.mrb[0].mxu0
  %10036 = vmatprep.mubr.bf16.mxu0 %v9755
  %10037 = vmatmul.mubr.bf16.gmra.mrb[0].mxu0 %v9754
  %v10038 = vpop.f32.mrb[0].mxu0
  %v10039 = vadd.f32 0.0, %v10038
  %v10040 = vpop.f32.mrb[0].mxu0
  %v10041 = vpop.f32.mrb[0].mxu0
  %v10042 = vadd.f32 0.0, %v10041
  %v10043 = vpop.f32.mrb[0].mxu0
  %10044 = vdwg.mxu0
  %v10045 = vadd.f32 %v7755, %v9919
  %v10046 = vadd.f32 %v7756, %v9922
  %v10047 = vadd.f32 %v7757, %v9927
  %v10048 = vadd.f32 %v7758, %v9930
  %v10049 = vadd.f32 %v7759, %v9935
  %v10050 = vadd.f32 %v7760, %v9938
  %v10051 = vadd.f32 %v7761, %v9943
  %v10052 = vadd.f32 %v7762, %v9946
  %v10053 = vadd.f32 %v7763, %v9951
  %v10054 = vadd.f32 %v7764, %v9954
  %v10055 = vadd.f32 %v7765, %v9959
  %v10056 = vadd.f32 %v7766, %v9962
  %v10057 = vadd.f32 %v7767, %v9967
  %v10058 = vadd.f32 %v7768, %v9970
  %v10059 = vadd.f32 %v7769, %v9975
  %v10060 = vadd.f32 %v7770, %v9978
  %v10061 = vadd.f32 %v7771, %v9983
  %v10062 = vadd.f32 %v7772, %v9986
  %v10063 = vadd.f32 %v7773, %v9991
  %v10064 = vadd.f32 %v7774, %v9994
  %v10065 = vadd.f32 %v7775, %v9999
  %v10066 = vadd.f32 %v7776, %v10002
  %v10067 = vadd.f32 %v7777, %v10007
  %v10068 = vadd.f32 %v7778, %v10010
  %v10069 = vadd.f32 %v7779, %v10015
  %v10070 = vadd.f32 %v7780, %v10018
  %v10071 = vadd.f32 %v7781, %v10023
  %v10072 = vadd.f32 %v7782, %v10026
  %v10073 = vadd.f32 %v7783, %v10031
  %v10074 = vadd.f32 %v7784, %v10034
  %v10075 = vadd.f32 %v7785, %v10039
  %v10076 = vadd.f32 %v7786, %v10042
  %v10077 = vld [vmem:[%s1 + $0x20] sm:$0xff]
  %v10078 = vld [vmem:[%s1 + $0x48] sm:$0xff]
  %v10079 = vld [vmem:[%s1 + $0x70] sm:$0xff]
  %v10080 = vld [vmem:[%s1 + $0x98] sm:$0xff]
  %v10081 = vld [vmem:[%s1 + $0xc0] sm:$0xff]
  %v10082 = vld [vmem:[%s1 + $0xe8] sm:$0xff]
  %v10083 = vld [vmem:[%s1 + $0x110] sm:$0xff]
  %v10084 = vld [vmem:[%s1 + $0x138] sm:$0xff]
  %v10085 = vld [vmem:[%s1 + $0x160] sm:$0xff]
  %v10086 = vld [vmem:[%s1 + $0x188] sm:$0xff]
  %v10087 = vld [vmem:[%s1 + $0x1b0] sm:$0xff]
  %v10088 = vld [vmem:[%s1 + $0x1d8] sm:$0xff]
  %v10089 = vld [vmem:[%s1 + $0x200] sm:$0xff]
  %v10090 = vld [vmem:[%s1 + $0x228] sm:$0xff]
  %v10091 = vld [vmem:[%s1 + $0x250] sm:$0xff]
  %v10092 = vld [vmem:[%s1 + $0x278] sm:$0xff]
  %v10093 = vld [vmem:[%s1 + $0x2a0] sm:$0xff]
  %v10094 = vld [vmem:[%s1 + $0x2c8] sm:$0xff]
  %v10095 = vld [vmem:[%s1 + $0x2f0] sm:$0xff]
  %v10096 = vld [vmem:[%s1 + $0x318] sm:$0xff]
  %v10097 = vld [vmem:[%s1 + $0x340] sm:$0xff]
  %v10098 = vld [vmem:[%s1 + $0x368] sm:$0xff]
  %v10099 = vld [vmem:[%s1 + $0x390] sm:$0xff]
  %v10100 = vld [vmem:[%s1 + $0x3b8] sm:$0xff]
  %v10101 = vld [vmem:[%s1 + $0x3e0] sm:$0xff]
  %v10102 = vld [vmem:[%s1 + $0x408] sm:$0xff]
  %v10103 = vld [vmem:[%s1 + $0x430] sm:$0xff]
  %v10104 = vld [vmem:[%s1 + $0x458] sm:$0xff]
  %v10105 = vld [vmem:[%s1 + $0x480] sm:$0xff]
  %v10106 = vld [vmem:[%s1 + $0x4a8] sm:$0xff]
  %v10107 = vld [vmem:[%s1 + $0x4d0] sm:$0xff]
  %v10108 = vld [vmem:[%s1 + $0x4f8] sm:$0xff]
  %v10109 = vld [vmem:[%s1 + $0x520] sm:$0xff]
  %v10110 = vld [vmem:[%s1 + $0x548] sm:$0xff]
  %v10111 = vld [vmem:[%s1 + $0x570] sm:$0xff]
  %v10112 = vld [vmem:[%s1 + $0x598] sm:$0xff]
  %v10113 = vld [vmem:[%s1 + $0x5c0] sm:$0xff]
  %v10114 = vld [vmem:[%s1 + $0x5e8] sm:$0xff]
  %v10115 = vld [vmem:[%s1 + $0x610] sm:$0xff]
  %v10116 = vld [vmem:[%s1 + $0x638] sm:$0xff]
  %v10117 = vld [vmem:[%s1 + $0x660] sm:$0xff]
  %v10118 = vld [vmem:[%s1 + $0x688] sm:$0xff]
  %v10119 = vld [vmem:[%s1 + $0x6b0] sm:$0xff]
  %v10120 = vld [vmem:[%s1 + $0x6d8] sm:$0xff]
  %v10121 = vld [vmem:[%s1 + $0x700] sm:$0xff]
  %v10122 = vld [vmem:[%s1 + $0x728] sm:$0xff]
  %v10123 = vld [vmem:[%s1 + $0x750] sm:$0xff]
  %v10124 = vld [vmem:[%s1 + $0x778] sm:$0xff]
  %v10125 = vld [vmem:[%s1 + $0x7a0] sm:$0xff]
  %v10126 = vld [vmem:[%s1 + $0x7c8] sm:$0xff]
  %v10127 = vld [vmem:[%s1 + $0x7f0] sm:$0xff]
  %v10128 = vld [vmem:[%s1 + $0x818] sm:$0xff]
  %v10129 = vld [vmem:[%s1 + $0x840] sm:$0xff]
  %v10130 = vld [vmem:[%s1 + $0x868] sm:$0xff]
  %v10131 = vld [vmem:[%s1 + $0x890] sm:$0xff]
  %v10132 = vld [vmem:[%s1 + $0x8b8] sm:$0xff]
  %v10133 = vld [vmem:[%s1 + $0x8e0] sm:$0xff]
  %v10134 = vld [vmem:[%s1 + $0x908] sm:$0xff]
  %v10135 = vld [vmem:[%s1 + $0x930] sm:$0xff]
  %v10136 = vld [vmem:[%s1 + $0x958] sm:$0xff]
  %v10137 = vld [vmem:[%s1 + $0x980] sm:$0xff]
  %v10138 = vld [vmem:[%s1 + $0x9a8] sm:$0xff]
  %v10139 = vld [vmem:[%s1 + $0x9d0] sm:$0xff]
  %v10140 = vld [vmem:[%s1 + $0x9f8] sm:$0xff]
  %v10141 = vld [vmem:[%s1 + $0xa20] sm:$0xff]
  %v10142 = vld [vmem:[%s1 + $0xa48] sm:$0xff]
  %v10143 = vld [vmem:[%s1 + $0xa70] sm:$0xff]
  %v10144 = vld [vmem:[%s1 + $0xa98] sm:$0xff]
  %v10145 = vld [vmem:[%s1 + $0xac0] sm:$0xff]
  %v10146 = vld [vmem:[%s1 + $0xae8] sm:$0xff]
  %v10147 = vld [vmem:[%s1 + $0xb10] sm:$0xff]
  %v10148 = vld [vmem:[%s1 + $0xb38] sm:$0xff]
  %v10149 = vld [vmem:[%s1 + $0xb60] sm:$0xff]
  %v10150 = vld [vmem:[%s1 + $0xb88] sm:$0xff]
  %v10151 = vld [vmem:[%s1 + $0xbb0] sm:$0xff]
  %v10152 = vld [vmem:[%s1 + $0xbd8] sm:$0xff]
  %v10153 = vld [vmem:[%s1 + $0xc00] sm:$0xff]
  %v10154 = vld [vmem:[%s1 + $0xc28] sm:$0xff]
  %v10155 = vld [vmem:[%s1 + $0xc50] sm:$0xff]
  %v10156 = vld [vmem:[%s1 + $0xc78] sm:$0xff]
  %v10157 = vld [vmem:[%s1 + $0xca0] sm:$0xff]
  %v10158 = vld [vmem:[%s1 + $0xcc8] sm:$0xff]
  %v10159 = vld [vmem:[%s1 + $0xcf0] sm:$0xff]
  %v10160 = vld [vmem:[%s1 + $0xd18] sm:$0xff]
  %v10161 = vld [vmem:[%s1 + $0xd40] sm:$0xff]
  %v10162 = vld [vmem:[%s1 + $0xd68] sm:$0xff]
  %v10163 = vld [vmem:[%s1 + $0xd90] sm:$0xff]
  %v10164 = vld [vmem:[%s1 + $0xdb8] sm:$0xff]
  %v10165 = vld [vmem:[%s1 + $0xde0] sm:$0xff]
  %v10166 = vld [vmem:[%s1 + $0xe08] sm:$0xff]
  %v10167 = vld [vmem:[%s1 + $0xe30] sm:$0xff]
  %v10168 = vld [vmem:[%s1 + $0xe58] sm:$0xff]
  %v10169 = vld [vmem:[%s1 + $0xe80] sm:$0xff]
  %v10170 = vld [vmem:[%s1 + $0xea8] sm:$0xff]
  %v10171 = vld [vmem:[%s1 + $0xed0] sm:$0xff]
  %v10172 = vld [vmem:[%s1 + $0xef8] sm:$0xff]
  %v10173 = vld [vmem:[%s1 + $0xf20] sm:$0xff]
  %v10174 = vld [vmem:[%s1 + $0xf48] sm:$0xff]
  %v10175 = vld [vmem:[%s1 + $0xf70] sm:$0xff]
  %v10176 = vld [vmem:[%s1 + $0xf98] sm:$0xff]
  %v10177 = vld [vmem:[%s1 + $0xfc0] sm:$0xff]
  %v10178 = vld [vmem:[%s1 + $0xfe8] sm:$0xff]
  %v10179 = vld [vmem:[%s1 + $0x1010] sm:$0xff]
  %v10180 = vld [vmem:[%s1 + $0x1038] sm:$0xff]
  %v10181 = vld [vmem:[%s1 + $0x1060] sm:$0xff]
  %v10182 = vld [vmem:[%s1 + $0x1088] sm:$0xff]
  %v10183 = vld [vmem:[%s1 + $0x10b0] sm:$0xff]
  %v10184 = vld [vmem:[%s1 + $0x10d8] sm:$0xff]
  %v10185 = vld [vmem:[%s1 + $0x1100] sm:$0xff]
  %v10186 = vld [vmem:[%s1 + $0x1128] sm:$0xff]
  %v10187 = vld [vmem:[%s1 + $0x1150] sm:$0xff]
  %v10188 = vld [vmem:[%s1 + $0x1178] sm:$0xff]
  %v10189 = vld [vmem:[%s1 + $0x11a0] sm:$0xff]
  %v10190 = vld [vmem:[%s1 + $0x11c8] sm:$0xff]
  %v10191 = vld [vmem:[%s1 + $0x11f0] sm:$0xff]
  %v10192 = vld [vmem:[%s1 + $0x1218] sm:$0xff]
  %v10193 = vld [vmem:[%s1 + $0x1240] sm:$0xff]
  %v10194 = vld [vmem:[%s1 + $0x1268] sm:$0xff]
  %v10195 = vld [vmem:[%s1 + $0x1290] sm:$0xff]
  %v10196 = vld [vmem:[%s1 + $0x12b8] sm:$0xff]
  %v10197 = vld [vmem:[%s1 + $0x12e0] sm:$0xff]
  %v10198 = vld [vmem:[%s1 + $0x1308] sm:$0xff]
  %v10199 = vld [vmem:[%s1 + $0x1330] sm:$0xff]
  %v10200 = vld [vmem:[%s1 + $0x1358] sm:$0xff]
  %v10201 = vld [vmem:[%s1 + $0x1380] sm:$0xff]
  %v10202 = vld [vmem:[%s1 + $0x13a8] sm:$0xff]
  %v10203 = vld [vmem:[%s1 + $0x13d0] sm:$0xff]
  %v10204 = vld [vmem:[%s1 + $0x13f8] sm:$0xff]
  %v10205 = vld [vmem:[%s1 + $0x1420] sm:$0xff]
  %v10206 = vld [vmem:[%s1 + $0x1448] sm:$0xff]
  %v10207 = vld [vmem:[%s1 + $0x1470] sm:$0xff]
  %v10208 = vld [vmem:[%s1 + $0x1498] sm:$0xff]
  %v10209 = vld [vmem:[%s1 + $0x14c0] sm:$0xff]
  %v10210 = vld [vmem:[%s1 + $0x14e8] sm:$0xff]
  %v10211 = vld [vmem:[%s1 + $0x1510] sm:$0xff]
  %v10212 = vld [vmem:[%s1 + $0x1538] sm:$0xff]
  %v10213 = vld [vmem:[%s1 + $0x1560] sm:$0xff]
  %v10214 = vld [vmem:[%s1 + $0x1588] sm:$0xff]
  %v10215 = vld [vmem:[%s1 + $0x15b0] sm:$0xff]
  %v10216 = vld [vmem:[%s1 + $0x15d8] sm:$0xff]
  %v10217 = vld [vmem:[%s1 + $0x1600] sm:$0xff]
  %v10218 = vld [vmem:[%s1 + $0x1628] sm:$0xff]
  %v10219 = vld [vmem:[%s1 + $0x1650] sm:$0xff]
  %v10220 = vld [vmem:[%s1 + $0x1678] sm:$0xff]
  %v10221 = vld [vmem:[%s1 + $0x16a0] sm:$0xff]
  %v10222 = vld [vmem:[%s1 + $0x16c8] sm:$0xff]
  %v10223 = vld [vmem:[%s1 + $0x16f0] sm:$0xff]
  %v10224 = vld [vmem:[%s1 + $0x1718] sm:$0xff]
  %v10225 = vld [vmem:[%s1 + $0x1740] sm:$0xff]
  %v10226 = vld [vmem:[%s1 + $0x1768] sm:$0xff]
  %v10227 = vld [vmem:[%s1 + $0x1790] sm:$0xff]
  %v10228 = vld [vmem:[%s1 + $0x17b8] sm:$0xff]
  %v10229 = vld [vmem:[%s1 + $0x17e0] sm:$0xff]
  %v10230 = vld [vmem:[%s1 + $0x1808] sm:$0xff]
  %v10231 = vld [vmem:[%s1 + $0x1830] sm:$0xff]
  %v10232 = vld [vmem:[%s1 + $0x1858] sm:$0xff]
  %v10233 = vld [vmem:[%s1 + $0x1880] sm:$0xff]
  %v10234 = vld [vmem:[%s1 + $0x18a8] sm:$0xff]
  %v10235 = vld [vmem:[%s1 + $0x18d0] sm:$0xff]
  %v10236 = vld [vmem:[%s1 + $0x18f8] sm:$0xff]
  %v10237 = vld [vmem:[%s2 + $0x8] sm:$0x3]
  %v10239 = vlaneseq
  %v10240 = vshrl.u32 %v10239, 7
  %v10241 = vsub.s32 0, %v10240
  %v10242 = vrot.slane %v10237, %v10241
  %v10243 = vlaneseq
  %v10244 = vshrl.u32 %v10243, 7
  %v10245 = vsub.s32 1, %v10244
  %v10246 = vrot.slane %v10237, %v10245
  %v10409 = vunpack.c.l.b16 %v10077
  %v10410 = vunpack.c.h.b16 %v10077
  %v10411 = vunpack.c.l.b16 %v10078
  %v10412 = vunpack.c.h.b16 %v10078
  %v10413 = vunpack.c.l.b16 %v10079
  %v10414 = vunpack.c.h.b16 %v10079
  %v10415 = vunpack.c.l.b16 %v10080
  %v10416 = vunpack.c.h.b16 %v10080
  %v10417 = vunpack.c.l.b16 %v10081
  %v10418 = vunpack.c.h.b16 %v10081
  %v10419 = vunpack.c.l.b16 %v10082
  %v10420 = vunpack.c.h.b16 %v10082
  %v10421 = vunpack.c.l.b16 %v10083
  %v10422 = vunpack.c.h.b16 %v10083
  %v10423 = vunpack.c.l.b16 %v10084
  %v10424 = vunpack.c.h.b16 %v10084
  %v10425 = vunpack.c.l.b16 %v10085
  %v10426 = vunpack.c.h.b16 %v10085
  %v10427 = vunpack.c.l.b16 %v10086
  %v10428 = vunpack.c.h.b16 %v10086
  %v10429 = vunpack.c.l.b16 %v10087
  %v10430 = vunpack.c.h.b16 %v10087
  %v10431 = vunpack.c.l.b16 %v10088
  %v10432 = vunpack.c.h.b16 %v10088
  %v10433 = vunpack.c.l.b16 %v10089
  %v10434 = vunpack.c.h.b16 %v10089
  %v10435 = vunpack.c.l.b16 %v10090
  %v10436 = vunpack.c.h.b16 %v10090
  %v10437 = vunpack.c.l.b16 %v10091
  %v10438 = vunpack.c.h.b16 %v10091
  %v10439 = vunpack.c.l.b16 %v10092
  %v10440 = vunpack.c.h.b16 %v10092
  %v10441 = vunpack.c.l.b16 %v10093
  %v10442 = vunpack.c.h.b16 %v10093
  %v10443 = vunpack.c.l.b16 %v10094
  %v10444 = vunpack.c.h.b16 %v10094
  %v10445 = vunpack.c.l.b16 %v10095
  %v10446 = vunpack.c.h.b16 %v10095
  %v10447 = vunpack.c.l.b16 %v10096
  %v10448 = vunpack.c.h.b16 %v10096
  %v10449 = vunpack.c.l.b16 %v10097
  %v10450 = vunpack.c.h.b16 %v10097
  %v10451 = vunpack.c.l.b16 %v10098
  %v10452 = vunpack.c.h.b16 %v10098
  %v10453 = vunpack.c.l.b16 %v10099
  %v10454 = vunpack.c.h.b16 %v10099
  %v10455 = vunpack.c.l.b16 %v10100
  %v10456 = vunpack.c.h.b16 %v10100
  %v10457 = vunpack.c.l.b16 %v10101
  %v10458 = vunpack.c.h.b16 %v10101
  %v10459 = vunpack.c.l.b16 %v10102
  %v10460 = vunpack.c.h.b16 %v10102
  %v10461 = vunpack.c.l.b16 %v10103
  %v10462 = vunpack.c.h.b16 %v10103
  %v10463 = vunpack.c.l.b16 %v10104
  %v10464 = vunpack.c.h.b16 %v10104
  %v10465 = vunpack.c.l.b16 %v10105
  %v10466 = vunpack.c.h.b16 %v10105
  %v10467 = vunpack.c.l.b16 %v10106
  %v10468 = vunpack.c.h.b16 %v10106
  %v10469 = vunpack.c.l.b16 %v10107
  %v10470 = vunpack.c.h.b16 %v10107
  %v10471 = vunpack.c.l.b16 %v10108
  %v10472 = vunpack.c.h.b16 %v10108
  %v10473 = vunpack.c.l.b16 %v10109
  %v10474 = vunpack.c.h.b16 %v10109
  %v10475 = vunpack.c.l.b16 %v10110
  %v10476 = vunpack.c.h.b16 %v10110
  %v10477 = vunpack.c.l.b16 %v10111
  %v10478 = vunpack.c.h.b16 %v10111
  %v10479 = vunpack.c.l.b16 %v10112
  %v10480 = vunpack.c.h.b16 %v10112
  %v10481 = vunpack.c.l.b16 %v10113
  %v10482 = vunpack.c.h.b16 %v10113
  %v10483 = vunpack.c.l.b16 %v10114
  %v10484 = vunpack.c.h.b16 %v10114
  %v10485 = vunpack.c.l.b16 %v10115
  %v10486 = vunpack.c.h.b16 %v10115
  %v10487 = vunpack.c.l.b16 %v10116
  %v10488 = vunpack.c.h.b16 %v10116
  %v10489 = vunpack.c.l.b16 %v10117
  %v10490 = vunpack.c.h.b16 %v10117
  %v10491 = vunpack.c.l.b16 %v10118
  %v10492 = vunpack.c.h.b16 %v10118
  %v10493 = vunpack.c.l.b16 %v10119
  %v10494 = vunpack.c.h.b16 %v10119
  %v10495 = vunpack.c.l.b16 %v10120
  %v10496 = vunpack.c.h.b16 %v10120
  %v10497 = vunpack.c.l.b16 %v10121
  %v10498 = vunpack.c.h.b16 %v10121
  %v10499 = vunpack.c.l.b16 %v10122
  %v10500 = vunpack.c.h.b16 %v10122
  %v10501 = vunpack.c.l.b16 %v10123
  %v10502 = vunpack.c.h.b16 %v10123
  %v10503 = vunpack.c.l.b16 %v10124
  %v10504 = vunpack.c.h.b16 %v10124
  %v10505 = vunpack.c.l.b16 %v10125
  %v10506 = vunpack.c.h.b16 %v10125
  %v10507 = vunpack.c.l.b16 %v10126
  %v10508 = vunpack.c.h.b16 %v10126
  %v10509 = vunpack.c.l.b16 %v10127
  %v10510 = vunpack.c.h.b16 %v10127
  %v10511 = vunpack.c.l.b16 %v10128
  %v10512 = vunpack.c.h.b16 %v10128
  %v10513 = vunpack.c.l.b16 %v10129
  %v10514 = vunpack.c.h.b16 %v10129
  %v10515 = vunpack.c.l.b16 %v10130
  %v10516 = vunpack.c.h.b16 %v10130
  %v10517 = vunpack.c.l.b16 %v10131
  %v10518 = vunpack.c.h.b16 %v10131
  %v10519 = vunpack.c.l.b16 %v10132
  %v10520 = vunpack.c.h.b16 %v10132
  %v10521 = vunpack.c.l.b16 %v10133
  %v10522 = vunpack.c.h.b16 %v10133
  %v10523 = vunpack.c.l.b16 %v10134
  %v10524 = vunpack.c.h.b16 %v10134
  %v10525 = vunpack.c.l.b16 %v10135
  %v10526 = vunpack.c.h.b16 %v10135
  %v10527 = vunpack.c.l.b16 %v10136
  %v10528 = vunpack.c.h.b16 %v10136
  %v10529 = vunpack.c.l.b16 %v10137
  %v10530 = vunpack.c.h.b16 %v10137
  %v10531 = vunpack.c.l.b16 %v10138
  %v10532 = vunpack.c.h.b16 %v10138
  %v10533 = vunpack.c.l.b16 %v10139
  %v10534 = vunpack.c.h.b16 %v10139
  %v10535 = vunpack.c.l.b16 %v10140
  %v10536 = vunpack.c.h.b16 %v10140
  %v10537 = vunpack.c.l.b16 %v10141
  %v10538 = vunpack.c.h.b16 %v10141
  %v10539 = vunpack.c.l.b16 %v10142
  %v10540 = vunpack.c.h.b16 %v10142
  %v10541 = vunpack.c.l.b16 %v10143
  %v10542 = vunpack.c.h.b16 %v10143
  %v10543 = vunpack.c.l.b16 %v10144
  %v10544 = vunpack.c.h.b16 %v10144
  %v10545 = vunpack.c.l.b16 %v10145
  %v10546 = vunpack.c.h.b16 %v10145
  %v10547 = vunpack.c.l.b16 %v10146
  %v10548 = vunpack.c.h.b16 %v10146
  %v10549 = vunpack.c.l.b16 %v10147
  %v10550 = vunpack.c.h.b16 %v10147
  %v10551 = vunpack.c.l.b16 %v10148
  %v10552 = vunpack.c.h.b16 %v10148
  %v10553 = vunpack.c.l.b16 %v10149
  %v10554 = vunpack.c.h.b16 %v10149
  %v10555 = vunpack.c.l.b16 %v10150
  %v10556 = vunpack.c.h.b16 %v10150
  %v10557 = vunpack.c.l.b16 %v10151
  %v10558 = vunpack.c.h.b16 %v10151
  %v10559 = vunpack.c.l.b16 %v10152
  %v10560 = vunpack.c.h.b16 %v10152
  %v10561 = vunpack.c.l.b16 %v10153
  %v10562 = vunpack.c.h.b16 %v10153
  %v10563 = vunpack.c.l.b16 %v10154
  %v10564 = vunpack.c.h.b16 %v10154
  %v10565 = vunpack.c.l.b16 %v10155
  %v10566 = vunpack.c.h.b16 %v10155
  %v10567 = vunpack.c.l.b16 %v10156
  %v10568 = vunpack.c.h.b16 %v10156
  %v10569 = vunpack.c.l.b16 %v10157
  %v10570 = vunpack.c.h.b16 %v10157
  %v10571 = vunpack.c.l.b16 %v10158
  %v10572 = vunpack.c.h.b16 %v10158
  %v10573 = vunpack.c.l.b16 %v10159
  %v10574 = vunpack.c.h.b16 %v10159
  %v10575 = vunpack.c.l.b16 %v10160
  %v10576 = vunpack.c.h.b16 %v10160
  %v10577 = vunpack.c.l.b16 %v10161
  %v10578 = vunpack.c.h.b16 %v10161
  %v10579 = vunpack.c.l.b16 %v10162
  %v10580 = vunpack.c.h.b16 %v10162
  %v10581 = vunpack.c.l.b16 %v10163
  %v10582 = vunpack.c.h.b16 %v10163
  %v10583 = vunpack.c.l.b16 %v10164
  %v10584 = vunpack.c.h.b16 %v10164
  %v10585 = vunpack.c.l.b16 %v10165
  %v10586 = vunpack.c.h.b16 %v10165
  %v10587 = vunpack.c.l.b16 %v10166
  %v10588 = vunpack.c.h.b16 %v10166
  %v10589 = vunpack.c.l.b16 %v10167
  %v10590 = vunpack.c.h.b16 %v10167
  %v10591 = vunpack.c.l.b16 %v10168
  %v10592 = vunpack.c.h.b16 %v10168
  %v10593 = vunpack.c.l.b16 %v10169
  %v10594 = vunpack.c.h.b16 %v10169
  %v10595 = vunpack.c.l.b16 %v10170
  %v10596 = vunpack.c.h.b16 %v10170
  %v10597 = vunpack.c.l.b16 %v10171
  %v10598 = vunpack.c.h.b16 %v10171
  %v10599 = vunpack.c.l.b16 %v10172
  %v10600 = vunpack.c.h.b16 %v10172
  %v10601 = vunpack.c.l.b16 %v10173
  %v10602 = vunpack.c.h.b16 %v10173
  %v10603 = vunpack.c.l.b16 %v10174
  %v10604 = vunpack.c.h.b16 %v10174
  %v10605 = vunpack.c.l.b16 %v10175
  %v10606 = vunpack.c.h.b16 %v10175
  %v10607 = vunpack.c.l.b16 %v10176
  %v10608 = vunpack.c.h.b16 %v10176
  %v10609 = vunpack.c.l.b16 %v10177
  %v10610 = vunpack.c.h.b16 %v10177
  %v10611 = vunpack.c.l.b16 %v10178
  %v10612 = vunpack.c.h.b16 %v10178
  %v10613 = vunpack.c.l.b16 %v10179
  %v10614 = vunpack.c.h.b16 %v10179
  %v10615 = vunpack.c.l.b16 %v10180
  %v10616 = vunpack.c.h.b16 %v10180
  %v10617 = vunpack.c.l.b16 %v10181
  %v10618 = vunpack.c.h.b16 %v10181
  %v10619 = vunpack.c.l.b16 %v10182
  %v10620 = vunpack.c.h.b16 %v10182
  %v10621 = vunpack.c.l.b16 %v10183
  %v10622 = vunpack.c.h.b16 %v10183
  %v10623 = vunpack.c.l.b16 %v10184
  %v10624 = vunpack.c.h.b16 %v10184
  %v10625 = vunpack.c.l.b16 %v10185
  %v10626 = vunpack.c.h.b16 %v10185
  %v10627 = vunpack.c.l.b16 %v10186
  %v10628 = vunpack.c.h.b16 %v10186
  %v10629 = vunpack.c.l.b16 %v10187
  %v10630 = vunpack.c.h.b16 %v10187
  %v10631 = vunpack.c.l.b16 %v10188
  %v10632 = vunpack.c.h.b16 %v10188
  %v10633 = vunpack.c.l.b16 %v10189
  %v10634 = vunpack.c.h.b16 %v10189
  %v10635 = vunpack.c.l.b16 %v10190
  %v10636 = vunpack.c.h.b16 %v10190
  %v10637 = vunpack.c.l.b16 %v10191
  %v10638 = vunpack.c.h.b16 %v10191
  %v10639 = vunpack.c.l.b16 %v10192
  %v10640 = vunpack.c.h.b16 %v10192
  %v10641 = vunpack.c.l.b16 %v10193
  %v10642 = vunpack.c.h.b16 %v10193
  %v10643 = vunpack.c.l.b16 %v10194
  %v10644 = vunpack.c.h.b16 %v10194
  %v10645 = vunpack.c.l.b16 %v10195
  %v10646 = vunpack.c.h.b16 %v10195
  %v10647 = vunpack.c.l.b16 %v10196
  %v10648 = vunpack.c.h.b16 %v10196
  %v10649 = vunpack.c.l.b16 %v10197
  %v10650 = vunpack.c.h.b16 %v10197
  %v10651 = vunpack.c.l.b16 %v10198
  %v10652 = vunpack.c.h.b16 %v10198
  %v10653 = vunpack.c.l.b16 %v10199
  %v10654 = vunpack.c.h.b16 %v10199
  %v10655 = vunpack.c.l.b16 %v10200
  %v10656 = vunpack.c.h.b16 %v10200
  %v10657 = vunpack.c.l.b16 %v10201
  %v10658 = vunpack.c.h.b16 %v10201
  %v10659 = vunpack.c.l.b16 %v10202
  %v10660 = vunpack.c.h.b16 %v10202
  %v10661 = vunpack.c.l.b16 %v10203
  %v10662 = vunpack.c.h.b16 %v10203
  %v10663 = vunpack.c.l.b16 %v10204
  %v10664 = vunpack.c.h.b16 %v10204
  %v10665 = vunpack.c.l.b16 %v10205
  %v10666 = vunpack.c.h.b16 %v10205
  %v10667 = vunpack.c.l.b16 %v10206
  %v10668 = vunpack.c.h.b16 %v10206
  %v10669 = vunpack.c.l.b16 %v10207
  %v10670 = vunpack.c.h.b16 %v10207
  %v10671 = vunpack.c.l.b16 %v10208
  %v10672 = vunpack.c.h.b16 %v10208
  %v10673 = vunpack.c.l.b16 %v10209
  %v10674 = vunpack.c.h.b16 %v10209
  %v10675 = vunpack.c.l.b16 %v10210
  %v10676 = vunpack.c.h.b16 %v10210
  %v10677 = vunpack.c.l.b16 %v10211
  %v10678 = vunpack.c.h.b16 %v10211
  %v10679 = vunpack.c.l.b16 %v10212
  %v10680 = vunpack.c.h.b16 %v10212
  %v10681 = vunpack.c.l.b16 %v10213
  %v10682 = vunpack.c.h.b16 %v10213
  %v10683 = vunpack.c.l.b16 %v10214
  %v10684 = vunpack.c.h.b16 %v10214
  %v10685 = vunpack.c.l.b16 %v10215
  %v10686 = vunpack.c.h.b16 %v10215
  %v10687 = vunpack.c.l.b16 %v10216
  %v10688 = vunpack.c.h.b16 %v10216
  %v10689 = vunpack.c.l.b16 %v10217
  %v10690 = vunpack.c.h.b16 %v10217
  %v10691 = vunpack.c.l.b16 %v10218
  %v10692 = vunpack.c.h.b16 %v10218
  %v10693 = vunpack.c.l.b16 %v10219
  %v10694 = vunpack.c.h.b16 %v10219
  %v10695 = vunpack.c.l.b16 %v10220
  %v10696 = vunpack.c.h.b16 %v10220
  %v10697 = vunpack.c.l.b16 %v10221
  %v10698 = vunpack.c.h.b16 %v10221
  %v10699 = vunpack.c.l.b16 %v10222
  %v10700 = vunpack.c.h.b16 %v10222
  %v10701 = vunpack.c.l.b16 %v10223
  %v10702 = vunpack.c.h.b16 %v10223
  %v10703 = vunpack.c.l.b16 %v10224
  %v10704 = vunpack.c.h.b16 %v10224
  %v10705 = vunpack.c.l.b16 %v10225
  %v10706 = vunpack.c.h.b16 %v10225
  %v10707 = vunpack.c.l.b16 %v10226
  %v10708 = vunpack.c.h.b16 %v10226
  %v10709 = vunpack.c.l.b16 %v10227
  %v10710 = vunpack.c.h.b16 %v10227
  %v10711 = vunpack.c.l.b16 %v10228
  %v10712 = vunpack.c.h.b16 %v10228
  %v10713 = vunpack.c.l.b16 %v10229
  %v10714 = vunpack.c.h.b16 %v10229
  %v10715 = vunpack.c.l.b16 %v10230
  %v10716 = vunpack.c.h.b16 %v10230
  %v10717 = vunpack.c.l.b16 %v10231
  %v10718 = vunpack.c.h.b16 %v10231
  %v10719 = vunpack.c.l.b16 %v10232
  %v10720 = vunpack.c.h.b16 %v10232
  %v10721 = vunpack.c.l.b16 %v10233
  %v10722 = vunpack.c.h.b16 %v10233
  %v10723 = vunpack.c.l.b16 %v10234
  %v10724 = vunpack.c.h.b16 %v10234
  %v10725 = vunpack.c.l.b16 %v10235
  %v10726 = vunpack.c.h.b16 %v10235
  %v10727 = vunpack.c.l.b16 %v10236
  %v10728 = vunpack.c.h.b16 %v10236
  %v10729 = vpack.c.b16 %v10411, %v10409
  %v10730 = vpack.c.b16 %v10412, %v10410
  %v10731 = vpack.c.b16 %v10415, %v10413
  %v10732 = vpack.c.b16 %v10416, %v10414
  %v10733 = vpack.c.b16 %v10419, %v10417
  %v10734 = vpack.c.b16 %v10420, %v10418
  %v10735 = vpack.c.b16 %v10423, %v10421
  %v10736 = vpack.c.b16 %v10424, %v10422
  %v10737 = vpack.c.b16 %v10427, %v10425
  %v10738 = vpack.c.b16 %v10428, %v10426
  %v10739 = vpack.c.b16 %v10431, %v10429
  %v10740 = vpack.c.b16 %v10432, %v10430
  %v10741 = vpack.c.b16 %v10435, %v10433
  %v10742 = vpack.c.b16 %v10436, %v10434
  %v10743 = vpack.c.b16 %v10439, %v10437
  %v10744 = vpack.c.b16 %v10440, %v10438
  %v10745 = vpack.c.b16 %v10443, %v10441
  %v10746 = vpack.c.b16 %v10444, %v10442
  %v10747 = vpack.c.b16 %v10447, %v10445
  %v10748 = vpack.c.b16 %v10448, %v10446
  %v10749 = vpack.c.b16 %v10451, %v10449
  %v10750 = vpack.c.b16 %v10452, %v10450
  %v10751 = vpack.c.b16 %v10455, %v10453
  %v10752 = vpack.c.b16 %v10456, %v10454
  %v10753 = vpack.c.b16 %v10459, %v10457
  %v10754 = vpack.c.b16 %v10460, %v10458
  %v10755 = vpack.c.b16 %v10463, %v10461
  %v10756 = vpack.c.b16 %v10464, %v10462
  %v10757 = vpack.c.b16 %v10467, %v10465
  %v10758 = vpack.c.b16 %v10468, %v10466
  %v10759 = vpack.c.b16 %v10471, %v10469
  %v10760 = vpack.c.b16 %v10472, %v10470
  %v10761 = vpack.c.b16 %v10475, %v10473
  %v10762 = vpack.c.b16 %v10476, %v10474
  %v10763 = vpack.c.b16 %v10479, %v10477
  %v10764 = vpack.c.b16 %v10480, %v10478
  %v10765 = vpack.c.b16 %v10483, %v10481
  %v10766 = vpack.c.b16 %v10484, %v10482
  %v10767 = vpack.c.b16 %v10487, %v10485
  %v10768 = vpack.c.b16 %v10488, %v10486
  %v10769 = vpack.c.b16 %v10491, %v10489
  %v10770 = vpack.c.b16 %v10492, %v10490
  %v10771 = vpack.c.b16 %v10495, %v10493
  %v10772 = vpack.c.b16 %v10496, %v10494
  %v10773 = vpack.c.b16 %v10499, %v10497
  %v10774 = vpack.c.b16 %v10500, %v10498
  %v10775 = vpack.c.b16 %v10503, %v10501
  %v10776 = vpack.c.b16 %v10504, %v10502
  %v10777 = vpack.c.b16 %v10507, %v10505
  %v10778 = vpack.c.b16 %v10508, %v10506
  %v10779 = vpack.c.b16 %v10511, %v10509
  %v10780 = vpack.c.b16 %v10512, %v10510
  %v10781 = vpack.c.b16 %v10515, %v10513
  %v10782 = vpack.c.b16 %v10516, %v10514
  %v10783 = vpack.c.b16 %v10519, %v10517
  %v10784 = vpack.c.b16 %v10520, %v10518
  %v10785 = vpack.c.b16 %v10523, %v10521
  %v10786 = vpack.c.b16 %v10524, %v10522
  %v10787 = vpack.c.b16 %v10527, %v10525
  %v10788 = vpack.c.b16 %v10528, %v10526
  %v10789 = vpack.c.b16 %v10531, %v10529
  %v10790 = vpack.c.b16 %v10532, %v10530
  %v10791 = vpack.c.b16 %v10535, %v10533
  %v10792 = vpack.c.b16 %v10536, %v10534
  %v10793 = vpack.c.b16 %v10539, %v10537
  %v10794 = vpack.c.b16 %v10540, %v10538
  %v10795 = vpack.c.b16 %v10543, %v10541
  %v10796 = vpack.c.b16 %v10544, %v10542
  %v10797 = vpack.c.b16 %v10547, %v10545
  %v10798 = vpack.c.b16 %v10548, %v10546
  %v10799 = vpack.c.b16 %v10551, %v10549
  %v10800 = vpack.c.b16 %v10552, %v10550
  %v10801 = vpack.c.b16 %v10555, %v10553
  %v10802 = vpack.c.b16 %v10556, %v10554
  %v10803 = vpack.c.b16 %v10559, %v10557
  %v10804 = vpack.c.b16 %v10560, %v10558
  %v10805 = vpack.c.b16 %v10563, %v10561
  %v10806 = vpack.c.b16 %v10564, %v10562
  %v10807 = vpack.c.b16 %v10567, %v10565
  %v10808 = vpack.c.b16 %v10568, %v10566
  %v10809 = vpack.c.b16 %v10571, %v10569
  %v10810 = vpack.c.b16 %v10572, %v10570
  %v10811 = vpack.c.b16 %v10575, %v10573
  %v10812 = vpack.c.b16 %v10576, %v10574
  %v10813 = vpack.c.b16 %v10579, %v10577
  %v10814 = vpack.c.b16 %v10580, %v10578
  %v10815 = vpack.c.b16 %v10583, %v10581
  %v10816 = vpack.c.b16 %v10584, %v10582
  %v10817 = vpack.c.b16 %v10587, %v10585
  %v10818 = vpack.c.b16 %v10588, %v10586
  %v10819 = vpack.c.b16 %v10591, %v10589
  %v10820 = vpack.c.b16 %v10592, %v10590
  %v10821 = vpack.c.b16 %v10595, %v10593
  %v10822 = vpack.c.b16 %v10596, %v10594
  %v10823 = vpack.c.b16 %v10599, %v10597
  %v10824 = vpack.c.b16 %v10600, %v10598
  %v10825 = vpack.c.b16 %v10603, %v10601
  %v10826 = vpack.c.b16 %v10604, %v10602
  %v10827 = vpack.c.b16 %v10607, %v10605
  %v10828 = vpack.c.b16 %v10608, %v10606
  %v10829 = vpack.c.b16 %v10611, %v10609
  %v10830 = vpack.c.b16 %v10612, %v10610
  %v10831 = vpack.c.b16 %v10615, %v10613
  %v10832 = vpack.c.b16 %v10616, %v10614
  %v10833 = vpack.c.b16 %v10619, %v10617
  %v10834 = vpack.c.b16 %v10620, %v10618
  %v10835 = vpack.c.b16 %v10623, %v10621
  %v10836 = vpack.c.b16 %v10624, %v10622
  %v10837 = vpack.c.b16 %v10627, %v10625
  %v10838 = vpack.c.b16 %v10628, %v10626
  %v10839 = vpack.c.b16 %v10631, %v10629
  %v10840 = vpack.c.b16 %v10632, %v10630
  %v10841 = vpack.c.b16 %v10635, %v10633
  %v10842 = vpack.c.b16 %v10636, %v10634
  %v10843 = vpack.c.b16 %v10639, %v10637
  %v10844 = vpack.c.b16 %v10640, %v10638
  %v10845 = vpack.c.b16 %v10643, %v10641
  %v10846 = vpack.c.b16 %v10644, %v10642
  %v10847 = vpack.c.b16 %v10647, %v10645
  %v10848 = vpack.c.b16 %v10648, %v10646
  %v10849 = vpack.c.b16 %v10651, %v10649
  %v10850 = vpack.c.b16 %v10652, %v10650
  %v10851 = vpack.c.b16 %v10655, %v10653
  %v10852 = vpack.c.b16 %v10656, %v10654
  %v10853 = vpack.c.b16 %v10659, %v10657
  %v10854 = vpack.c.b16 %v10660, %v10658
  %v10855 = vpack.c.b16 %v10663, %v10661
  %v10856 = vpack.c.b16 %v10664, %v10662
  %v10857 = vpack.c.b16 %v10667, %v10665
  %v10858 = vpack.c.b16 %v10668, %v10666
  %v10859 = vpack.c.b16 %v10671, %v10669
  %v10860 = vpack.c.b16 %v10672, %v10670
  %v10861 = vpack.c.b16 %v10675, %v10673
  %v10862 = vpack.c.b16 %v10676, %v10674
  %v10863 = vpack.c.b16 %v10679, %v10677
  %v10864 = vpack.c.b16 %v10680, %v10678
  %v10865 = vpack.c.b16 %v10683, %v10681
  %v10866 = vpack.c.b16 %v10684, %v10682
  %v10867 = vpack.c.b16 %v10687, %v10685
  %v10868 = vpack.c.b16 %v10688, %v10686
  %v10869 = vpack.c.b16 %v10691, %v10689
  %v10870 = vpack.c.b16 %v10692, %v10690
  %v10871 = vpack.c.b16 %v10695, %v10693
  %v10872 = vpack.c.b16 %v10696, %v10694
  %v10873 = vpack.c.b16 %v10699, %v10697
  %v10874 = vpack.c.b16 %v10700, %v10698
  %v10875 = vpack.c.b16 %v10703, %v10701
  %v10876 = vpack.c.b16 %v10704, %v10702
  %v10877 = vpack.c.b16 %v10707, %v10705
  %v10878 = vpack.c.b16 %v10708, %v10706
  %v10879 = vpack.c.b16 %v10711, %v10709
  %v10880 = vpack.c.b16 %v10712, %v10710
  %v10881 = vpack.c.b16 %v10715, %v10713
  %v10882 = vpack.c.b16 %v10716, %v10714
  %v10883 = vpack.c.b16 %v10719, %v10717
  %v10884 = vpack.c.b16 %v10720, %v10718
  %v10885 = vpack.c.b16 %v10723, %v10721
  %v10886 = vpack.c.b16 %v10724, %v10722
  %v10887 = vpack.c.b16 %v10727, %v10725
  %v10888 = vpack.c.b16 %v10728, %v10726
  %11049 = vmatprep.subr.bf16.mxu0 %v10730
  %11050 = vmatpush1.bf16.msra.mxu0 %v10729
  %11051 = vmatprep.subr.bf16.mxu0 %v10732
  %11052 = vmatpush1.bf16.msra.mxu0 %v10731
  %11053 = vmatprep.subr.bf16.mxu0 %v10734
  %11054 = vmatpush1.bf16.msra.mxu0 %v10733
  %11055 = vmatprep.subr.bf16.mxu0 %v10736
  %11056 = vmatpush1.bf16.msra.mxu0 %v10735
  %11057 = vmatprep.subr.bf16.mxu0 %v10738
  %11058 = vmatpush1.bf16.msra.mxu0 %v10737
  %11059 = vmatprep.subr.bf16.mxu0 %v10740
  %11060 = vmatpush1.bf16.msra.mxu0 %v10739
  %11061 = vmatprep.subr.bf16.mxu0 %v10742
  %11062 = vmatpush1.bf16.msra.mxu0 %v10741
  %11063 = vmatprep.subr.bf16.mxu0 %v10744
  %11064 = vmatpush1.bf16.msra.mxu0 %v10743
  %11065 = vmatprep.subr.bf16.mxu0 %v10746
  %11066 = vmatpush1.bf16.msra.mxu0 %v10745
  %11067 = vmatprep.subr.bf16.mxu0 %v10748
  %11068 = vmatpush1.bf16.msra.mxu0 %v10747
  %11069 = vmatprep.subr.bf16.mxu0 %v10750
  %11070 = vmatpush1.bf16.msra.mxu0 %v10749
  %11071 = vmatprep.subr.bf16.mxu0 %v10752
  %11072 = vmatpush1.bf16.msra.mxu0 %v10751
  %11073 = vmatprep.subr.bf16.mxu0 %v10754
  %11074 = vmatpush1.bf16.msra.mxu0 %v10753
  %11075 = vmatprep.subr.bf16.mxu0 %v10756
  %11076 = vmatpush1.bf16.msra.mxu0 %v10755
  %11077 = vmatprep.subr.bf16.mxu0 %v10758
  %11078 = vmatpush1.bf16.msra.mxu0 %v10757
  %11079 = vmatprep.subr.bf16.mxu0 %v10760
  %11080 = vmatpush1.bf16.msra.mxu0 %v10759
  %11081 = vmatprep.mubr.bf16.mxu0 %v834
  %11082 = vmatmul.mubr.bf16.gmra.mrb[0].mxu0 %v833
  %v11083 = vpop.f32.mrb[0].mxu0
  %v11084 = vadd.f32 %v10242, %v11083
  %v11085 = vpop.f32.mrb[0].mxu0
  %v11086 = vadd.f32 %v10246, %v11085
  %v11087 = vpop.f32.mrb[0].mxu0
  %v11088 = vadd.f32 %v10242, %v11087
  %v11089 = vpop.f32.mrb[0].mxu0
  %v11090 = vadd.f32 %v10246, %v11089
  %11091 = vmatprep.mubr.bf16.mxu0 %v844
  %11092 = vmatmul.mubr.bf16.gmra.mrb[0].mxu0 %v843
  %v11093 = vpop.f32.mrb[0].mxu0
  %v11094 = vadd.f32 %v10242, %v11093
  %v11095 = vpop.f32.mrb[0].mxu0
  %v11096 = vadd.f32 %v10246, %v11095
  %v11097 = vpop.f32.mrb[0].mxu0
  %v11098 = vadd.f32 %v10242, %v11097
  %v11099 = vpop.f32.mrb[0].mxu0
  %v11100 = vadd.f32 %v10246, %v11099
  %11101 = vmatprep.mubr.bf16.mxu0 %v854
  %11102 = vmatmul.mubr.bf16.gmra.mrb[0].mxu0 %v853
  %v11103 = vpop.f32.mrb[0].mxu0
  %v11104 = vadd.f32 %v10242, %v11103
  %v11105 = vpop.f32.mrb[0].mxu0
  %v11106 = vadd.f32 %v10246, %v11105
  %v11107 = vpop.f32.mrb[0].mxu0
  %v11108 = vadd.f32 %v10242, %v11107
  %v11109 = vpop.f32.mrb[0].mxu0
  %v11110 = vadd.f32 %v10246, %v11109
  %11111 = vmatprep.mubr.bf16.mxu0 %v864
  %11112 = vmatmul.mubr.bf16.gmra.mrb[0].mxu0 %v863
  %v11113 = vpop.f32.mrb[0].mxu0
  %v11114 = vadd.f32 %v10242, %v11113
  %v11115 = vpop.f32.mrb[0].mxu0
  %v11116 = vadd.f32 %v10246, %v11115
  %v11117 = vpop.f32.mrb[0].mxu0
  %v11118 = vadd.f32 %v10242, %v11117
  %v11119 = vpop.f32.mrb[0].mxu0
  %v11120 = vadd.f32 %v10246, %v11119
  %11121 = vmatprep.mubr.bf16.mxu0 %v874
  %11122 = vmatmul.mubr.bf16.gmra.mrb[0].mxu0 %v873
  %v11123 = vpop.f32.mrb[0].mxu0
  %v11124 = vadd.f32 %v10242, %v11123
  %v11125 = vpop.f32.mrb[0].mxu0
  %v11126 = vadd.f32 %v10246, %v11125
  %v11127 = vpop.f32.mrb[0].mxu0
  %v11128 = vadd.f32 %v10242, %v11127
  %v11129 = vpop.f32.mrb[0].mxu0
  %v11130 = vadd.f32 %v10246, %v11129
  %11131 = vmatprep.mubr.bf16.mxu0 %v884
  %11132 = vmatmul.mubr.bf16.gmra.mrb[0].mxu0 %v883
  %v11133 = vpop.f32.mrb[0].mxu0
  %v11134 = vadd.f32 %v10242, %v11133
  %v11135 = vpop.f32.mrb[0].mxu0
  %v11136 = vadd.f32 %v10246, %v11135
  %v11137 = vpop.f32.mrb[0].mxu0
  %v11138 = vadd.f32 %v10242, %v11137
  %v11139 = vpop.f32.mrb[0].mxu0
  %v11140 = vadd.f32 %v10246, %v11139
  %11141 = vmatprep.mubr.bf16.mxu0 %v894
  %11142 = vmatmul.mubr.bf16.gmra.mrb[0].mxu0 %v893
  %v11143 = vpop.f32.mrb[0].mxu0
  %v11144 = vadd.f32 %v10242, %v11143
  %v11145 = vpop.f32.mrb[0].mxu0
  %v11146 = vadd.f32 %v10246, %v11145
  %v11147 = vpop.f32.mrb[0].mxu0
  %v11148 = vadd.f32 %v10242, %v11147
  %v11149 = vpop.f32.mrb[0].mxu0
  %v11150 = vadd.f32 %v10246, %v11149
  %11151 = vmatprep.mubr.bf16.mxu0 %v904
  %11152 = vmatmul.mubr.bf16.gmra.mrb[0].mxu0 %v903
  %v11153 = vpop.f32.mrb[0].mxu0
  %v11154 = vadd.f32 %v10242, %v11153
  %v11155 = vpop.f32.mrb[0].mxu0
  %v11156 = vadd.f32 %v10246, %v11155
  %v11157 = vpop.f32.mrb[0].mxu0
  %v11158 = vadd.f32 %v10242, %v11157
  %v11159 = vpop.f32.mrb[0].mxu0
  %v11160 = vadd.f32 %v10246, %v11159
  %11161 = vmatprep.mubr.bf16.mxu0 %v914
  %11162 = vmatmul.mubr.bf16.gmra.mrb[0].mxu0 %v913
  %v11163 = vpop.f32.mrb[0].mxu0
  %v11164 = vadd.f32 %v10242, %v11163
  %v11165 = vpop.f32.mrb[0].mxu0
  %v11166 = vadd.f32 %v10246, %v11165
  %v11167 = vpop.f32.mrb[0].mxu0
  %v11168 = vadd.f32 %v10242, %v11167
  %v11169 = vpop.f32.mrb[0].mxu0
  %v11170 = vadd.f32 %v10246, %v11169
  %11171 = vmatprep.mubr.bf16.mxu0 %v924
  %11172 = vmatmul.mubr.bf16.gmra.mrb[0].mxu0 %v923
  %v11173 = vpop.f32.mrb[0].mxu0
  %v11174 = vadd.f32 %v10242, %v11173
  %v11175 = vpop.f32.mrb[0].mxu0
  %v11176 = vadd.f32 %v10246, %v11175
  %v11177 = vpop.f32.mrb[0].mxu0
  %v11178 = vadd.f32 %v10242, %v11177
  %v11179 = vpop.f32.mrb[0].mxu0
  %v11180 = vadd.f32 %v10246, %v11179
  %11181 = vmatprep.mubr.bf16.mxu0 %v934
  %11182 = vmatmul.mubr.bf16.gmra.mrb[0].mxu0 %v933
  %v11183 = vpop.f32.mrb[0].mxu0
  %v11184 = vadd.f32 %v10242, %v11183
  %v11185 = vpop.f32.mrb[0].mxu0
  %v11186 = vadd.f32 %v10246, %v11185
  %v11187 = vpop.f32.mrb[0].mxu0
  %v11188 = vadd.f32 %v10242, %v11187
  %v11189 = vpop.f32.mrb[0].mxu0
  %v11190 = vadd.f32 %v10246, %v11189
  %11191 = vmatprep.mubr.bf16.mxu0 %v944
  %11192 = vmatmul.mubr.bf16.gmra.mrb[0].mxu0 %v943
  %v11193 = vpop.f32.mrb[0].mxu0
  %v11194 = vadd.f32 %v10242, %v11193
  %v11195 = vpop.f32.mrb[0].mxu0
  %v11196 = vadd.f32 %v10246, %v11195
  %v11197 = vpop.f32.mrb[0].mxu0
  %v11198 = vadd.f32 %v10242, %v11197
  %v11199 = vpop.f32.mrb[0].mxu0
  %v11200 = vadd.f32 %v10246, %v11199
  %11201 = vmatprep.mubr.bf16.mxu0 %v954
  %11202 = vmatmul.mubr.bf16.gmra.mrb[0].mxu0 %v953
  %v11203 = vpop.f32.mrb[0].mxu0
  %v11204 = vadd.f32 %v10242, %v11203
  %v11205 = vpop.f32.mrb[0].mxu0
  %v11206 = vadd.f32 %v10246, %v11205
  %v11207 = vpop.f32.mrb[0].mxu0
  %v11208 = vadd.f32 %v10242, %v11207
  %v11209 = vpop.f32.mrb[0].mxu0
  %v11210 = vadd.f32 %v10246, %v11209
  %11211 = vmatprep.mubr.bf16.mxu0 %v964
  %11212 = vmatmul.mubr.bf16.gmra.mrb[0].mxu0 %v963
  %v11213 = vpop.f32.mrb[0].mxu0
  %v11214 = vadd.f32 %v10242, %v11213
  %v11215 = vpop.f32.mrb[0].mxu0
  %v11216 = vadd.f32 %v10246, %v11215
  %v11217 = vpop.f32.mrb[0].mxu0
  %v11218 = vadd.f32 %v10242, %v11217
  %v11219 = vpop.f32.mrb[0].mxu0
  %v11220 = vadd.f32 %v10246, %v11219
  %11221 = vmatprep.mubr.bf16.mxu0 %v974
  %11222 = vmatmul.mubr.bf16.gmra.mrb[0].mxu0 %v973
  %v11223 = vpop.f32.mrb[0].mxu0
  %v11224 = vadd.f32 %v10242, %v11223
  %v11225 = vpop.f32.mrb[0].mxu0
  %v11226 = vadd.f32 %v10246, %v11225
  %v11227 = vpop.f32.mrb[0].mxu0
  %v11228 = vadd.f32 %v10242, %v11227
  %v11229 = vpop.f32.mrb[0].mxu0
  %v11230 = vadd.f32 %v10246, %v11229
  %11231 = vmatprep.mubr.bf16.mxu0 %v984
  %11232 = vmatmul.mubr.bf16.gmra.mrb[0].mxu0 %v983
  %v11233 = vpop.f32.mrb[0].mxu0
  %v11234 = vadd.f32 %v10242, %v11233
  %v11235 = vpop.f32.mrb[0].mxu0
  %v11236 = vadd.f32 %v10246, %v11235
  %v11237 = vpop.f32.mrb[0].mxu0
  %v11238 = vadd.f32 %v10242, %v11237
  %v11239 = vpop.f32.mrb[0].mxu0
  %v11240 = vadd.f32 %v10246, %v11239
  %11241 = vdwg.mxu0
  %11242 = vmatprep.subr.bf16.mxu0 %v10762
  %11243 = vmatpush1.bf16.msra.mxu0 %v10761
  %11244 = vmatprep.subr.bf16.mxu0 %v10764
  %11245 = vmatpush1.bf16.msra.mxu0 %v10763
  %11246 = vmatprep.subr.bf16.mxu0 %v10766
  %11247 = vmatpush1.bf16.msra.mxu0 %v10765
  %11248 = vmatprep.subr.bf16.mxu0 %v10768
  %11249 = vmatpush1.bf16.msra.mxu0 %v10767
  %11250 = vmatprep.subr.bf16.mxu0 %v10770
  %11251 = vmatpush1.bf16.msra.mxu0 %v10769
  %11252 = vmatprep.subr.bf16.mxu0 %v10772
  %11253 = vmatpush1.bf16.msra.mxu0 %v10771
  %11254 = vmatprep.subr.bf16.mxu0 %v10774
  %11255 = vmatpush1.bf16.msra.mxu0 %v10773
  %11256 = vmatprep.subr.bf16.mxu0 %v10776
  %11257 = vmatpush1.bf16.msra.mxu0 %v10775
  %11258 = vmatprep.subr.bf16.mxu0 %v10778
  %11259 = vmatpush1.bf16.msra.mxu0 %v10777
  %11260 = vmatprep.subr.bf16.mxu0 %v10780
  %11261 = vmatpush1.bf16.msra.mxu0 %v10779
  %11262 = vmatprep.subr.bf16.mxu0 %v10782
  %11263 = vmatpush1.bf16.msra.mxu0 %v10781
  %11264 = vmatprep.subr.bf16.mxu0 %v10784
  %11265 = vmatpush1.bf16.msra.mxu0 %v10783
  %11266 = vmatprep.subr.bf16.mxu0 %v10786
  %11267 = vmatpush1.bf16.msra.mxu0 %v10785
  %11268 = vmatprep.subr.bf16.mxu0 %v10788
  %11269 = vmatpush1.bf16.msra.mxu0 %v10787
  %11270 = vmatprep.subr.bf16.mxu0 %v10790
  %11271 = vmatpush1.bf16.msra.mxu0 %v10789
  %11272 = vmatprep.subr.bf16.mxu0 %v10792
  %11273 = vmatpush1.bf16.msra.mxu0 %v10791
  %11274 = vmatprep.mubr.bf16.mxu0 %v836
  %11275 = vmatmul.mubr.bf16.gmra.mrb[0].mxu0 %v835
  %v11276 = vpop.f32.mrb[0].mxu0
  %v11277 = vadd.f32 %v11084, %v11276
  %v11278 = vpop.f32.mrb[0].mxu0
  %v11279 = vadd.f32 %v11086, %v11278
  %v11280 = vpop.f32.mrb[0].mxu0
  %v11281 = vadd.f32 %v11088, %v11280
  %v11282 = vpop.f32.mrb[0].mxu0
  %v11283 = vadd.f32 %v11090, %v11282
  %11284 = vmatprep.mubr.bf16.mxu0 %v846
  %11285 = vmatmul.mubr.bf16.gmra.mrb[0].mxu0 %v845
  %v11286 = vpop.f32.mrb[0].mxu0
  %v11287 = vadd.f32 %v11094, %v11286
  %v11288 = vpop.f32.mrb[0].mxu0
  %v11289 = vadd.f32 %v11096, %v11288
  %v11290 = vpop.f32.mrb[0].mxu0
  %v11291 = vadd.f32 %v11098, %v11290
  %v11292 = vpop.f32.mrb[0].mxu0
  %v11293 = vadd.f32 %v11100, %v11292
  %11294 = vmatprep.mubr.bf16.mxu0 %v856
  %11295 = vmatmul.mubr.bf16.gmra.mrb[0].mxu0 %v855
  %v11296 = vpop.f32.mrb[0].mxu0
  %v11297 = vadd.f32 %v11104, %v11296
  %v11298 = vpop.f32.mrb[0].mxu0
  %v11299 = vadd.f32 %v11106, %v11298
  %v11300 = vpop.f32.mrb[0].mxu0
  %v11301 = vadd.f32 %v11108, %v11300
  %v11302 = vpop.f32.mrb[0].mxu0
  %v11303 = vadd.f32 %v11110, %v11302
  %11304 = vmatprep.mubr.bf16.mxu0 %v866
  %11305 = vmatmul.mubr.bf16.gmra.mrb[0].mxu0 %v865
  %v11306 = vpop.f32.mrb[0].mxu0
  %v11307 = vadd.f32 %v11114, %v11306
  %v11308 = vpop.f32.mrb[0].mxu0
  %v11309 = vadd.f32 %v11116, %v11308
  %v11310 = vpop.f32.mrb[0].mxu0
  %v11311 = vadd.f32 %v11118, %v11310
  %v11312 = vpop.f32.mrb[0].mxu0
  %v11313 = vadd.f32 %v11120, %v11312
  %11314 = vmatprep.mubr.bf16.mxu0 %v876
  %11315 = vmatmul.mubr.bf16.gmra.mrb[0].mxu0 %v875
  %v11316 = vpop.f32.mrb[0].mxu0
  %v11317 = vadd.f32 %v11124, %v11316
  %v11318 = vpop.f32.mrb[0].mxu0
  %v11319 = vadd.f32 %v11126, %v11318
  %v11320 = vpop.f32.mrb[0].mxu0
  %v11321 = vadd.f32 %v11128, %v11320
  %v11322 = vpop.f32.mrb[0].mxu0
  %v11323 = vadd.f32 %v11130, %v11322
  %11324 = vmatprep.mubr.bf16.mxu0 %v886
  %11325 = vmatmul.mubr.bf16.gmra.mrb[0].mxu0 %v885
  %v11326 = vpop.f32.mrb[0].mxu0
  %v11327 = vadd.f32 %v11134, %v11326
  %v11328 = vpop.f32.mrb[0].mxu0
  %v11329 = vadd.f32 %v11136, %v11328
  %v11330 = vpop.f32.mrb[0].mxu0
  %v11331 = vadd.f32 %v11138, %v11330
  %v11332 = vpop.f32.mrb[0].mxu0
  %v11333 = vadd.f32 %v11140, %v11332
  %11334 = vmatprep.mubr.bf16.mxu0 %v896
  %11335 = vmatmul.mubr.bf16.gmra.mrb[0].mxu0 %v895
  %v11336 = vpop.f32.mrb[0].mxu0
  %v11337 = vadd.f32 %v11144, %v11336
  %v11338 = vpop.f32.mrb[0].mxu0
  %v11339 = vadd.f32 %v11146, %v11338
  %v11340 = vpop.f32.mrb[0].mxu0
  %v11341 = vadd.f32 %v11148, %v11340
  %v11342 = vpop.f32.mrb[0].mxu0
  %v11343 = vadd.f32 %v11150, %v11342
  %11344 = vmatprep.mubr.bf16.mxu0 %v906
  %11345 = vmatmul.mubr.bf16.gmra.mrb[0].mxu0 %v905
  %v11346 = vpop.f32.mrb[0].mxu0
  %v11347 = vadd.f32 %v11154, %v11346
  %v11348 = vpop.f32.mrb[0].mxu0
  %v11349 = vadd.f32 %v11156, %v11348
  %v11350 = vpop.f32.mrb[0].mxu0
  %v11351 = vadd.f32 %v11158, %v11350
  %v11352 = vpop.f32.mrb[0].mxu0
  %v11353 = vadd.f32 %v11160, %v11352
  %11354 = vmatprep.mubr.bf16.mxu0 %v916
  %11355 = vmatmul.mubr.bf16.gmra.mrb[0].mxu0 %v915
  %v11356 = vpop.f32.mrb[0].mxu0
  %v11357 = vadd.f32 %v11164, %v11356
  %v11358 = vpop.f32.mrb[0].mxu0
  %v11359 = vadd.f32 %v11166, %v11358
  %v11360 = vpop.f32.mrb[0].mxu0
  %v11361 = vadd.f32 %v11168, %v11360
  %v11362 = vpop.f32.mrb[0].mxu0
  %v11363 = vadd.f32 %v11170, %v11362
  %11364 = vmatprep.mubr.bf16.mxu0 %v926
  %11365 = vmatmul.mubr.bf16.gmra.mrb[0].mxu0 %v925
  %v11366 = vpop.f32.mrb[0].mxu0
  %v11367 = vadd.f32 %v11174, %v11366
  %v11368 = vpop.f32.mrb[0].mxu0
  %v11369 = vadd.f32 %v11176, %v11368
  %v11370 = vpop.f32.mrb[0].mxu0
  %v11371 = vadd.f32 %v11178, %v11370
  %v11372 = vpop.f32.mrb[0].mxu0
  %v11373 = vadd.f32 %v11180, %v11372
  %11374 = vmatprep.mubr.bf16.mxu0 %v936
  %11375 = vmatmul.mubr.bf16.gmra.mrb[0].mxu0 %v935
  %v11376 = vpop.f32.mrb[0].mxu0
  %v11377 = vadd.f32 %v11184, %v11376
  %v11378 = vpop.f32.mrb[0].mxu0
  %v11379 = vadd.f32 %v11186, %v11378
  %v11380 = vpop.f32.mrb[0].mxu0
  %v11381 = vadd.f32 %v11188, %v11380
  %v11382 = vpop.f32.mrb[0].mxu0
  %v11383 = vadd.f32 %v11190, %v11382
  %11384 = vmatprep.mubr.bf16.mxu0 %v946
  %11385 = vmatmul.mubr.bf16.gmra.mrb[0].mxu0 %v945
  %v11386 = vpop.f32.mrb[0].mxu0
  %v11387 = vadd.f32 %v11194, %v11386
  %v11388 = vpop.f32.mrb[0].mxu0
  %v11389 = vadd.f32 %v11196, %v11388
  %v11390 = vpop.f32.mrb[0].mxu0
  %v11391 = vadd.f32 %v11198, %v11390
  %v11392 = vpop.f32.mrb[0].mxu0
  %v11393 = vadd.f32 %v11200, %v11392
  %11394 = vmatprep.mubr.bf16.mxu0 %v956
  %11395 = vmatmul.mubr.bf16.gmra.mrb[0].mxu0 %v955
  %v11396 = vpop.f32.mrb[0].mxu0
  %v11397 = vadd.f32 %v11204, %v11396
  %v11398 = vpop.f32.mrb[0].mxu0
  %v11399 = vadd.f32 %v11206, %v11398
  %v11400 = vpop.f32.mrb[0].mxu0
  %v11401 = vadd.f32 %v11208, %v11400
  %v11402 = vpop.f32.mrb[0].mxu0
  %v11403 = vadd.f32 %v11210, %v11402
  %11404 = vmatprep.mubr.bf16.mxu0 %v966
  %11405 = vmatmul.mubr.bf16.gmra.mrb[0].mxu0 %v965
  %v11406 = vpop.f32.mrb[0].mxu0
  %v11407 = vadd.f32 %v11214, %v11406
  %v11408 = vpop.f32.mrb[0].mxu0
  %v11409 = vadd.f32 %v11216, %v11408
  %v11410 = vpop.f32.mrb[0].mxu0
  %v11411 = vadd.f32 %v11218, %v11410
  %v11412 = vpop.f32.mrb[0].mxu0
  %v11413 = vadd.f32 %v11220, %v11412
  %11414 = vmatprep.mubr.bf16.mxu0 %v976
  %11415 = vmatmul.mubr.bf16.gmra.mrb[0].mxu0 %v975
  %v11416 = vpop.f32.mrb[0].mxu0
  %v11417 = vadd.f32 %v11224, %v11416
  %v11418 = vpop.f32.mrb[0].mxu0
  %v11419 = vadd.f32 %v11226, %v11418
  %v11420 = vpop.f32.mrb[0].mxu0
  %v11421 = vadd.f32 %v11228, %v11420
  %v11422 = vpop.f32.mrb[0].mxu0
  %v11423 = vadd.f32 %v11230, %v11422
  %11424 = vmatprep.mubr.bf16.mxu0 %v986
  %11425 = vmatmul.mubr.bf16.gmra.mrb[0].mxu0 %v985
  %v11426 = vpop.f32.mrb[0].mxu0
  %v11427 = vadd.f32 %v11234, %v11426
  %v11428 = vpop.f32.mrb[0].mxu0
  %v11429 = vadd.f32 %v11236, %v11428
  %v11430 = vpop.f32.mrb[0].mxu0
  %v11431 = vadd.f32 %v11238, %v11430
  %v11432 = vpop.f32.mrb[0].mxu0
  %v11433 = vadd.f32 %v11240, %v11432
  %11434 = vdwg.mxu0
  %11435 = vmatprep.subr.bf16.mxu0 %v10794
  %11436 = vmatpush1.bf16.msra.mxu0 %v10793
  %11437 = vmatprep.subr.bf16.mxu0 %v10796
  %11438 = vmatpush1.bf16.msra.mxu0 %v10795
  %11439 = vmatprep.subr.bf16.mxu0 %v10798
  %11440 = vmatpush1.bf16.msra.mxu0 %v10797
  %11441 = vmatprep.subr.bf16.mxu0 %v10800
  %11442 = vmatpush1.bf16.msra.mxu0 %v10799
  %11443 = vmatprep.subr.bf16.mxu0 %v10802
  %11444 = vmatpush1.bf16.msra.mxu0 %v10801
  %11445 = vmatprep.subr.bf16.mxu0 %v10804
  %11446 = vmatpush1.bf16.msra.mxu0 %v10803
  %11447 = vmatprep.subr.bf16.mxu0 %v10806
  %11448 = vmatpush1.bf16.msra.mxu0 %v10805
  %11449 = vmatprep.subr.bf16.mxu0 %v10808
  %11450 = vmatpush1.bf16.msra.mxu0 %v10807
  %11451 = vmatprep.subr.bf16.mxu0 %v10810
  %11452 = vmatpush1.bf16.msra.mxu0 %v10809
  %11453 = vmatprep.subr.bf16.mxu0 %v10812
  %11454 = vmatpush1.bf16.msra.mxu0 %v10811
  %11455 = vmatprep.subr.bf16.mxu0 %v10814
  %11456 = vmatpush1.bf16.msra.mxu0 %v10813
  %11457 = vmatprep.subr.bf16.mxu0 %v10816
  %11458 = vmatpush1.bf16.msra.mxu0 %v10815
  %11459 = vmatprep.subr.bf16.mxu0 %v10818
  %11460 = vmatpush1.bf16.msra.mxu0 %v10817
  %11461 = vmatprep.subr.bf16.mxu0 %v10820
  %11462 = vmatpush1.bf16.msra.mxu0 %v10819
  %11463 = vmatprep.subr.bf16.mxu0 %v10822
  %11464 = vmatpush1.bf16.msra.mxu0 %v10821
  %11465 = vmatprep.subr.bf16.mxu0 %v10824
  %11466 = vmatpush1.bf16.msra.mxu0 %v10823
  %11467 = vmatprep.mubr.bf16.mxu0 %v838
  %11468 = vmatmul.mubr.bf16.gmra.mrb[0].mxu0 %v837
  %v11469 = vpop.f32.mrb[0].mxu0
  %v11470 = vadd.f32 %v11277, %v11469
  %v11471 = vpop.f32.mrb[0].mxu0
  %v11472 = vadd.f32 %v11279, %v11471
  %v11473 = vpop.f32.mrb[0].mxu0
  %v11474 = vadd.f32 %v11281, %v11473
  %v11475 = vpop.f32.mrb[0].mxu0
  %v11476 = vadd.f32 %v11283, %v11475
  %11477 = vmatprep.mubr.bf16.mxu0 %v848
  %11478 = vmatmul.mubr.bf16.gmra.mrb[0].mxu0 %v847
  %v11479 = vpop.f32.mrb[0].mxu0
  %v11480 = vadd.f32 %v11287, %v11479
  %v11481 = vpop.f32.mrb[0].mxu0
  %v11482 = vadd.f32 %v11289, %v11481
  %v11483 = vpop.f32.mrb[0].mxu0
  %v11484 = vadd.f32 %v11291, %v11483
  %v11485 = vpop.f32.mrb[0].mxu0
  %v11486 = vadd.f32 %v11293, %v11485
  %11487 = vmatprep.mubr.bf16.mxu0 %v858
  %11488 = vmatmul.mubr.bf16.gmra.mrb[0].mxu0 %v857
  %v11489 = vpop.f32.mrb[0].mxu0
  %v11490 = vadd.f32 %v11297, %v11489
  %v11491 = vpop.f32.mrb[0].mxu0
  %v11492 = vadd.f32 %v11299, %v11491
  %v11493 = vpop.f32.mrb[0].mxu0
  %v11494 = vadd.f32 %v11301, %v11493
  %v11495 = vpop.f32.mrb[0].mxu0
  %v11496 = vadd.f32 %v11303, %v11495
  %11497 = vmatprep.mubr.bf16.mxu0 %v868
  %11498 = vmatmul.mubr.bf16.gmra.mrb[0].mxu0 %v867
  %v11499 = vpop.f32.mrb[0].mxu0
  %v11500 = vadd.f32 %v11307, %v11499
  %v11501 = vpop.f32.mrb[0].mxu0
  %v11502 = vadd.f32 %v11309, %v11501
  %v11503 = vpop.f32.mrb[0].mxu0
  %v11504 = vadd.f32 %v11311, %v11503
  %v11505 = vpop.f32.mrb[0].mxu0
  %v11506 = vadd.f32 %v11313, %v11505
  %11507 = vmatprep.mubr.bf16.mxu0 %v878
  %11508 = vmatmul.mubr.bf16.gmra.mrb[0].mxu0 %v877
  %v11509 = vpop.f32.mrb[0].mxu0
  %v11510 = vadd.f32 %v11317, %v11509
  %v11511 = vpop.f32.mrb[0].mxu0
  %v11512 = vadd.f32 %v11319, %v11511
  %v11513 = vpop.f32.mrb[0].mxu0
  %v11514 = vadd.f32 %v11321, %v11513
  %v11515 = vpop.f32.mrb[0].mxu0
  %v11516 = vadd.f32 %v11323, %v11515
  %11517 = vmatprep.mubr.bf16.mxu0 %v888
  %11518 = vmatmul.mubr.bf16.gmra.mrb[0].mxu0 %v887
  %v11519 = vpop.f32.mrb[0].mxu0
  %v11520 = vadd.f32 %v11327, %v11519
  %v11521 = vpop.f32.mrb[0].mxu0
  %v11522 = vadd.f32 %v11329, %v11521
  %v11523 = vpop.f32.mrb[0].mxu0
  %v11524 = vadd.f32 %v11331, %v11523
  %v11525 = vpop.f32.mrb[0].mxu0
  %v11526 = vadd.f32 %v11333, %v11525
  %11527 = vmatprep.mubr.bf16.mxu0 %v898
  %11528 = vmatmul.mubr.bf16.gmra.mrb[0].mxu0 %v897
  %v11529 = vpop.f32.mrb[0].mxu0
  %v11530 = vadd.f32 %v11337, %v11529
  %v11531 = vpop.f32.mrb[0].mxu0
  %v11532 = vadd.f32 %v11339, %v11531
  %v11533 = vpop.f32.mrb[0].mxu0
  %v11534 = vadd.f32 %v11341, %v11533
  %v11535 = vpop.f32.mrb[0].mxu0
  %v11536 = vadd.f32 %v11343, %v11535
  %11537 = vmatprep.mubr.bf16.mxu0 %v908
  %11538 = vmatmul.mubr.bf16.gmra.mrb[0].mxu0 %v907
  %v11539 = vpop.f32.mrb[0].mxu0
  %v11540 = vadd.f32 %v11347, %v11539
  %v11541 = vpop.f32.mrb[0].mxu0
  %v11542 = vadd.f32 %v11349, %v11541
  %v11543 = vpop.f32.mrb[0].mxu0
  %v11544 = vadd.f32 %v11351, %v11543
  %v11545 = vpop.f32.mrb[0].mxu0
  %v11546 = vadd.f32 %v11353, %v11545
  %11547 = vmatprep.mubr.bf16.mxu0 %v918
  %11548 = vmatmul.mubr.bf16.gmra.mrb[0].mxu0 %v917
  %v11549 = vpop.f32.mrb[0].mxu0
  %v11550 = vadd.f32 %v11357, %v11549
  %v11551 = vpop.f32.mrb[0].mxu0
  %v11552 = vadd.f32 %v11359, %v11551
  %v11553 = vpop.f32.mrb[0].mxu0
  %v11554 = vadd.f32 %v11361, %v11553
  %v11555 = vpop.f32.mrb[0].mxu0
  %v11556 = vadd.f32 %v11363, %v11555
  %11557 = vmatprep.mubr.bf16.mxu0 %v928
  %11558 = vmatmul.mubr.bf16.gmra.mrb[0].mxu0 %v927
  %v11559 = vpop.f32.mrb[0].mxu0
  %v11560 = vadd.f32 %v11367, %v11559
  %v11561 = vpop.f32.mrb[0].mxu0
  %v11562 = vadd.f32 %v11369, %v11561
  %v11563 = vpop.f32.mrb[0].mxu0
  %v11564 = vadd.f32 %v11371, %v11563
  %v11565 = vpop.f32.mrb[0].mxu0
  %v11566 = vadd.f32 %v11373, %v11565
  %11567 = vmatprep.mubr.bf16.mxu0 %v938
  %11568 = vmatmul.mubr.bf16.gmra.mrb[0].mxu0 %v937
  %v11569 = vpop.f32.mrb[0].mxu0
  %v11570 = vadd.f32 %v11377, %v11569
  %v11571 = vpop.f32.mrb[0].mxu0
  %v11572 = vadd.f32 %v11379, %v11571
  %v11573 = vpop.f32.mrb[0].mxu0
  %v11574 = vadd.f32 %v11381, %v11573
  %v11575 = vpop.f32.mrb[0].mxu0
  %v11576 = vadd.f32 %v11383, %v11575
  %11577 = vmatprep.mubr.bf16.mxu0 %v948
  %11578 = vmatmul.mubr.bf16.gmra.mrb[0].mxu0 %v947
  %v11579 = vpop.f32.mrb[0].mxu0
  %v11580 = vadd.f32 %v11387, %v11579
  %v11581 = vpop.f32.mrb[0].mxu0
  %v11582 = vadd.f32 %v11389, %v11581
  %v11583 = vpop.f32.mrb[0].mxu0
  %v11584 = vadd.f32 %v11391, %v11583
  %v11585 = vpop.f32.mrb[0].mxu0
  %v11586 = vadd.f32 %v11393, %v11585
  %11587 = vmatprep.mubr.bf16.mxu0 %v958
  %11588 = vmatmul.mubr.bf16.gmra.mrb[0].mxu0 %v957
  %v11589 = vpop.f32.mrb[0].mxu0
  %v11590 = vadd.f32 %v11397, %v11589
  %v11591 = vpop.f32.mrb[0].mxu0
  %v11592 = vadd.f32 %v11399, %v11591
  %v11593 = vpop.f32.mrb[0].mxu0
  %v11594 = vadd.f32 %v11401, %v11593
  %v11595 = vpop.f32.mrb[0].mxu0
  %v11596 = vadd.f32 %v11403, %v11595
  %11597 = vmatprep.mubr.bf16.mxu0 %v968
  %11598 = vmatmul.mubr.bf16.gmra.mrb[0].mxu0 %v967
  %v11599 = vpop.f32.mrb[0].mxu0
  %v11600 = vadd.f32 %v11407, %v11599
  %v11601 = vpop.f32.mrb[0].mxu0
  %v11602 = vadd.f32 %v11409, %v11601
  %v11603 = vpop.f32.mrb[0].mxu0
  %v11604 = vadd.f32 %v11411, %v11603
  %v11605 = vpop.f32.mrb[0].mxu0
  %v11606 = vadd.f32 %v11413, %v11605
  %11607 = vmatprep.mubr.bf16.mxu0 %v978
  %11608 = vmatmul.mubr.bf16.gmra.mrb[0].mxu0 %v977
  %v11609 = vpop.f32.mrb[0].mxu0
  %v11610 = vadd.f32 %v11417, %v11609
  %v11611 = vpop.f32.mrb[0].mxu0
  %v11612 = vadd.f32 %v11419, %v11611
  %v11613 = vpop.f32.mrb[0].mxu0
  %v11614 = vadd.f32 %v11421, %v11613
  %v11615 = vpop.f32.mrb[0].mxu0
  %v11616 = vadd.f32 %v11423, %v11615
  %11617 = vmatprep.mubr.bf16.mxu0 %v988
  %11618 = vmatmul.mubr.bf16.gmra.mrb[0].mxu0 %v987
  %v11619 = vpop.f32.mrb[0].mxu0
  %v11620 = vadd.f32 %v11427, %v11619
  %v11621 = vpop.f32.mrb[0].mxu0
  %v11622 = vadd.f32 %v11429, %v11621
  %v11623 = vpop.f32.mrb[0].mxu0
  %v11624 = vadd.f32 %v11431, %v11623
  %v11625 = vpop.f32.mrb[0].mxu0
  %v11626 = vadd.f32 %v11433, %v11625
  %11627 = vdwg.mxu0
  %11628 = vmatprep.subr.bf16.mxu0 %v10826
  %11629 = vmatpush1.bf16.msra.mxu0 %v10825
  %11630 = vmatprep.subr.bf16.mxu0 %v10828
  %11631 = vmatpush1.bf16.msra.mxu0 %v10827
  %11632 = vmatprep.subr.bf16.mxu0 %v10830
  %11633 = vmatpush1.bf16.msra.mxu0 %v10829
  %11634 = vmatprep.subr.bf16.mxu0 %v10832
  %11635 = vmatpush1.bf16.msra.mxu0 %v10831
  %11636 = vmatprep.subr.bf16.mxu0 %v10834
  %11637 = vmatpush1.bf16.msra.mxu0 %v10833
  %11638 = vmatprep.subr.bf16.mxu0 %v10836
  %11639 = vmatpush1.bf16.msra.mxu0 %v10835
  %11640 = vmatprep.subr.bf16.mxu0 %v10838
  %11641 = vmatpush1.bf16.msra.mxu0 %v10837
  %11642 = vmatprep.subr.bf16.mxu0 %v10840
  %11643 = vmatpush1.bf16.msra.mxu0 %v10839
  %11644 = vmatprep.subr.bf16.mxu0 %v10842
  %11645 = vmatpush1.bf16.msra.mxu0 %v10841
  %11646 = vmatprep.subr.bf16.mxu0 %v10844
  %11647 = vmatpush1.bf16.msra.mxu0 %v10843
  %11648 = vmatprep.subr.bf16.mxu0 %v10846
  %11649 = vmatpush1.bf16.msra.mxu0 %v10845
  %11650 = vmatprep.subr.bf16.mxu0 %v10848
  %11651 = vmatpush1.bf16.msra.mxu0 %v10847
  %11652 = vmatprep.subr.bf16.mxu0 %v10850
  %11653 = vmatpush1.bf16.msra.mxu0 %v10849
  %11654 = vmatprep.subr.bf16.mxu0 %v10852
  %11655 = vmatpush1.bf16.msra.mxu0 %v10851
  %11656 = vmatprep.subr.bf16.mxu0 %v10854
  %11657 = vmatpush1.bf16.msra.mxu0 %v10853
  %11658 = vmatprep.subr.bf16.mxu0 %v10856
  %11659 = vmatpush1.bf16.msra.mxu0 %v10855
  %11660 = vmatprep.mubr.bf16.mxu0 %v840
  %11661 = vmatmul.mubr.bf16.gmra.mrb[0].mxu0 %v839
  %v11662 = vpop.f32.mrb[0].mxu0
  %v11663 = vadd.f32 %v11470, %v11662
  %v11664 = vpop.f32.mrb[0].mxu0
  %v11665 = vadd.f32 %v11472, %v11664
  %v11666 = vpop.f32.mrb[0].mxu0
  %v11667 = vadd.f32 %v11474, %v11666
  %v11668 = vpop.f32.mrb[0].mxu0
  %v11669 = vadd.f32 %v11476, %v11668
  %11670 = vmatprep.mubr.bf16.mxu0 %v850
  %11671 = vmatmul.mubr.bf16.gmra.mrb[0].mxu0 %v849
  %v11672 = vpop.f32.mrb[0].mxu0
  %v11673 = vadd.f32 %v11480, %v11672
  %v11674 = vpop.f32.mrb[0].mxu0
  %v11675 = vadd.f32 %v11482, %v11674
  %v11676 = vpop.f32.mrb[0].mxu0
  %v11677 = vadd.f32 %v11484, %v11676
  %v11678 = vpop.f32.mrb[0].mxu0
  %v11679 = vadd.f32 %v11486, %v11678
  %11680 = vmatprep.mubr.bf16.mxu0 %v860
  %11681 = vmatmul.mubr.bf16.gmra.mrb[0].mxu0 %v859
  %v11682 = vpop.f32.mrb[0].mxu0
  %v11683 = vadd.f32 %v11490, %v11682
  %v11684 = vpop.f32.mrb[0].mxu0
  %v11685 = vadd.f32 %v11492, %v11684
  %v11686 = vpop.f32.mrb[0].mxu0
  %v11687 = vadd.f32 %v11494, %v11686
  %v11688 = vpop.f32.mrb[0].mxu0
  %v11689 = vadd.f32 %v11496, %v11688
  %11690 = vmatprep.mubr.bf16.mxu0 %v870
  %11691 = vmatmul.mubr.bf16.gmra.mrb[0].mxu0 %v869
  %v11692 = vpop.f32.mrb[0].mxu0
  %v11693 = vadd.f32 %v11500, %v11692
  %v11694 = vpop.f32.mrb[0].mxu0
  %v11695 = vadd.f32 %v11502, %v11694
  %v11696 = vpop.f32.mrb[0].mxu0
  %v11697 = vadd.f32 %v11504, %v11696
  %v11698 = vpop.f32.mrb[0].mxu0
  %v11699 = vadd.f32 %v11506, %v11698
  %11700 = vmatprep.mubr.bf16.mxu0 %v880
  %11701 = vmatmul.mubr.bf16.gmra.mrb[0].mxu0 %v879
  %v11702 = vpop.f32.mrb[0].mxu0
  %v11703 = vadd.f32 %v11510, %v11702
  %v11704 = vpop.f32.mrb[0].mxu0
  %v11705 = vadd.f32 %v11512, %v11704
  %v11706 = vpop.f32.mrb[0].mxu0
  %v11707 = vadd.f32 %v11514, %v11706
  %v11708 = vpop.f32.mrb[0].mxu0
  %v11709 = vadd.f32 %v11516, %v11708
  %11710 = vmatprep.mubr.bf16.mxu0 %v890
  %11711 = vmatmul.mubr.bf16.gmra.mrb[0].mxu0 %v889
  %v11712 = vpop.f32.mrb[0].mxu0
  %v11713 = vadd.f32 %v11520, %v11712
  %v11714 = vpop.f32.mrb[0].mxu0
  %v11715 = vadd.f32 %v11522, %v11714
  %v11716 = vpop.f32.mrb[0].mxu0
  %v11717 = vadd.f32 %v11524, %v11716
  %v11718 = vpop.f32.mrb[0].mxu0
  %v11719 = vadd.f32 %v11526, %v11718
  %11720 = vmatprep.mubr.bf16.mxu0 %v900
  %11721 = vmatmul.mubr.bf16.gmra.mrb[0].mxu0 %v899
  %v11722 = vpop.f32.mrb[0].mxu0
  %v11723 = vadd.f32 %v11530, %v11722
  %v11724 = vpop.f32.mrb[0].mxu0
  %v11725 = vadd.f32 %v11532, %v11724
  %v11726 = vpop.f32.mrb[0].mxu0
  %v11727 = vadd.f32 %v11534, %v11726
  %v11728 = vpop.f32.mrb[0].mxu0
  %v11729 = vadd.f32 %v11536, %v11728
  %11730 = vmatprep.mubr.bf16.mxu0 %v910
  %11731 = vmatmul.mubr.bf16.gmra.mrb[0].mxu0 %v909
  %v11732 = vpop.f32.mrb[0].mxu0
  %v11733 = vadd.f32 %v11540, %v11732
  %v11734 = vpop.f32.mrb[0].mxu0
  %v11735 = vadd.f32 %v11542, %v11734
  %v11736 = vpop.f32.mrb[0].mxu0
  %v11737 = vadd.f32 %v11544, %v11736
  %v11738 = vpop.f32.mrb[0].mxu0
  %v11739 = vadd.f32 %v11546, %v11738
  %11740 = vmatprep.mubr.bf16.mxu0 %v920
  %11741 = vmatmul.mubr.bf16.gmra.mrb[0].mxu0 %v919
  %v11742 = vpop.f32.mrb[0].mxu0
  %v11743 = vadd.f32 %v11550, %v11742
  %v11744 = vpop.f32.mrb[0].mxu0
  %v11745 = vadd.f32 %v11552, %v11744
  %v11746 = vpop.f32.mrb[0].mxu0
  %v11747 = vadd.f32 %v11554, %v11746
  %v11748 = vpop.f32.mrb[0].mxu0
  %v11749 = vadd.f32 %v11556, %v11748
  %11750 = vmatprep.mubr.bf16.mxu0 %v930
  %11751 = vmatmul.mubr.bf16.gmra.mrb[0].mxu0 %v929
  %v11752 = vpop.f32.mrb[0].mxu0
  %v11753 = vadd.f32 %v11560, %v11752
  %v11754 = vpop.f32.mrb[0].mxu0
  %v11755 = vadd.f32 %v11562, %v11754
  %v11756 = vpop.f32.mrb[0].mxu0
  %v11757 = vadd.f32 %v11564, %v11756
  %v11758 = vpop.f32.mrb[0].mxu0
  %v11759 = vadd.f32 %v11566, %v11758
  %11760 = vmatprep.mubr.bf16.mxu0 %v940
  %11761 = vmatmul.mubr.bf16.gmra.mrb[0].mxu0 %v939
  %v11762 = vpop.f32.mrb[0].mxu0
  %v11763 = vadd.f32 %v11570, %v11762
  %v11764 = vpop.f32.mrb[0].mxu0
  %v11765 = vadd.f32 %v11572, %v11764
  %v11766 = vpop.f32.mrb[0].mxu0
  %v11767 = vadd.f32 %v11574, %v11766
  %v11768 = vpop.f32.mrb[0].mxu0
  %v11769 = vadd.f32 %v11576, %v11768
  %11770 = vmatprep.mubr.bf16.mxu0 %v950
  %11771 = vmatmul.mubr.bf16.gmra.mrb[0].mxu0 %v949
  %v11772 = vpop.f32.mrb[0].mxu0
  %v11773 = vadd.f32 %v11580, %v11772
  %v11774 = vpop.f32.mrb[0].mxu0
  %v11775 = vadd.f32 %v11582, %v11774
  %v11776 = vpop.f32.mrb[0].mxu0
  %v11777 = vadd.f32 %v11584, %v11776
  %v11778 = vpop.f32.mrb[0].mxu0
  %v11779 = vadd.f32 %v11586, %v11778
  %11780 = vmatprep.mubr.bf16.mxu0 %v960
  %11781 = vmatmul.mubr.bf16.gmra.mrb[0].mxu0 %v959
  %v11782 = vpop.f32.mrb[0].mxu0
  %v11783 = vadd.f32 %v11590, %v11782
  %v11784 = vpop.f32.mrb[0].mxu0
  %v11785 = vadd.f32 %v11592, %v11784
  %v11786 = vpop.f32.mrb[0].mxu0
  %v11787 = vadd.f32 %v11594, %v11786
  %v11788 = vpop.f32.mrb[0].mxu0
  %v11789 = vadd.f32 %v11596, %v11788
  %11790 = vmatprep.mubr.bf16.mxu0 %v970
  %11791 = vmatmul.mubr.bf16.gmra.mrb[0].mxu0 %v969
  %v11792 = vpop.f32.mrb[0].mxu0
  %v11793 = vadd.f32 %v11600, %v11792
  %v11794 = vpop.f32.mrb[0].mxu0
  %v11795 = vadd.f32 %v11602, %v11794
  %v11796 = vpop.f32.mrb[0].mxu0
  %v11797 = vadd.f32 %v11604, %v11796
  %v11798 = vpop.f32.mrb[0].mxu0
  %v11799 = vadd.f32 %v11606, %v11798
  %11800 = vmatprep.mubr.bf16.mxu0 %v980
  %11801 = vmatmul.mubr.bf16.gmra.mrb[0].mxu0 %v979
  %v11802 = vpop.f32.mrb[0].mxu0
  %v11803 = vadd.f32 %v11610, %v11802
  %v11804 = vpop.f32.mrb[0].mxu0
  %v11805 = vadd.f32 %v11612, %v11804
  %v11806 = vpop.f32.mrb[0].mxu0
  %v11807 = vadd.f32 %v11614, %v11806
  %v11808 = vpop.f32.mrb[0].mxu0
  %v11809 = vadd.f32 %v11616, %v11808
  %11810 = vmatprep.mubr.bf16.mxu0 %v990
  %11811 = vmatmul.mubr.bf16.gmra.mrb[0].mxu0 %v989
  %v11812 = vpop.f32.mrb[0].mxu0
  %v11813 = vadd.f32 %v11620, %v11812
  %v11814 = vpop.f32.mrb[0].mxu0
  %v11815 = vadd.f32 %v11622, %v11814
  %v11816 = vpop.f32.mrb[0].mxu0
  %v11817 = vadd.f32 %v11624, %v11816
  %v11818 = vpop.f32.mrb[0].mxu0
  %v11819 = vadd.f32 %v11626, %v11818
  %11820 = vdwg.mxu0
  %11821 = vmatprep.subr.bf16.mxu0 %v10858
  %11822 = vmatpush1.bf16.msra.mxu0 %v10857
  %11823 = vmatprep.subr.bf16.mxu0 %v10860
  %11824 = vmatpush1.bf16.msra.mxu0 %v10859
  %11825 = vmatprep.subr.bf16.mxu0 %v10862
  %11826 = vmatpush1.bf16.msra.mxu0 %v10861
  %11827 = vmatprep.subr.bf16.mxu0 %v10864
  %11828 = vmatpush1.bf16.msra.mxu0 %v10863
  %11829 = vmatprep.subr.bf16.mxu0 %v10866
  %11830 = vmatpush1.bf16.msra.mxu0 %v10865
  %11831 = vmatprep.subr.bf16.mxu0 %v10868
  %11832 = vmatpush1.bf16.msra.mxu0 %v10867
  %11833 = vmatprep.subr.bf16.mxu0 %v10870
  %11834 = vmatpush1.bf16.msra.mxu0 %v10869
  %11835 = vmatprep.subr.bf16.mxu0 %v10872
  %11836 = vmatpush1.bf16.msra.mxu0 %v10871
  %11837 = vmatprep.subr.bf16.mxu0 %v10874
  %11838 = vmatpush1.bf16.msra.mxu0 %v10873
  %11839 = vmatprep.subr.bf16.mxu0 %v10876
  %11840 = vmatpush1.bf16.msra.mxu0 %v10875
  %11841 = vmatprep.subr.bf16.mxu0 %v10878
  %11842 = vmatpush1.bf16.msra.mxu0 %v10877
  %11843 = vmatprep.subr.bf16.mxu0 %v10880
  %11844 = vmatpush1.bf16.msra.mxu0 %v10879
  %11845 = vmatprep.subr.bf16.mxu0 %v10882
  %11846 = vmatpush1.bf16.msra.mxu0 %v10881
  %11847 = vmatprep.subr.bf16.mxu0 %v10884
  %11848 = vmatpush1.bf16.msra.mxu0 %v10883
  %11849 = vmatprep.subr.bf16.mxu0 %v10886
  %11850 = vmatpush1.bf16.msra.mxu0 %v10885
  %11851 = vmatprep.subr.bf16.mxu0 %v10888
  %11852 = vmatpush1.bf16.msra.mxu0 %v10887
  %11853 = vmatprep.mubr.bf16.mxu0 %v842
  %11854 = vmatmul.mubr.bf16.gmra.mrb[0].mxu0 %v841
  %v11855 = vpop.f32.mrb[0].mxu0
  %v11856 = vadd.f32 %v11663, %v11855
  %v11857 = vpop.f32.mrb[0].mxu0
  %v11858 = vadd.f32 %v11665, %v11857
  %v11859 = vpop.f32.mrb[0].mxu0
  %v11860 = vadd.f32 %v11667, %v11859
  %v11861 = vpop.f32.mrb[0].mxu0
  %v11862 = vadd.f32 %v11669, %v11861
  %11863 = vmatprep.mubr.bf16.mxu0 %v852
  %11864 = vmatmul.mubr.bf16.gmra.mrb[0].mxu0 %v851
  %v11865 = vpop.f32.mrb[0].mxu0
  %v11866 = vadd.f32 %v11673, %v11865
  %v11867 = vpop.f32.mrb[0].mxu0
  %v11868 = vadd.f32 %v11675, %v11867
  %v11869 = vpop.f32.mrb[0].mxu0
  %v11870 = vadd.f32 %v11677, %v11869
  %v11871 = vpop.f32.mrb[0].mxu0
  %v11872 = vadd.f32 %v11679, %v11871
  %11873 = vmatprep.mubr.bf16.mxu0 %v862
  %11874 = vmatmul.mubr.bf16.gmra.mrb[0].mxu0 %v861
  %v11875 = vpop.f32.mrb[0].mxu0
  %v11876 = vadd.f32 %v11683, %v11875
  %v11877 = vpop.f32.mrb[0].mxu0
  %v11878 = vadd.f32 %v11685, %v11877
  %v11879 = vpop.f32.mrb[0].mxu0
  %v11880 = vadd.f32 %v11687, %v11879
  %v11881 = vpop.f32.mrb[0].mxu0
  %v11882 = vadd.f32 %v11689, %v11881
  %11883 = vmatprep.mubr.bf16.mxu0 %v872
  %11884 = vmatmul.mubr.bf16.gmra.mrb[0].mxu0 %v871
  %v11885 = vpop.f32.mrb[0].mxu0
  %v11886 = vadd.f32 %v11693, %v11885
  %v11887 = vpop.f32.mrb[0].mxu0
  %v11888 = vadd.f32 %v11695, %v11887
  %v11889 = vpop.f32.mrb[0].mxu0
  %v11890 = vadd.f32 %v11697, %v11889
  %v11891 = vpop.f32.mrb[0].mxu0
  %v11892 = vadd.f32 %v11699, %v11891
  %11893 = vmatprep.mubr.bf16.mxu0 %v882
  %11894 = vmatmul.mubr.bf16.gmra.mrb[0].mxu0 %v881
  %v11895 = vpop.f32.mrb[0].mxu0
  %v11896 = vadd.f32 %v11703, %v11895
  %v11897 = vpop.f32.mrb[0].mxu0
  %v11898 = vadd.f32 %v11705, %v11897
  %v11899 = vpop.f32.mrb[0].mxu0
  %v11900 = vadd.f32 %v11707, %v11899
  %v11901 = vpop.f32.mrb[0].mxu0
  %v11902 = vadd.f32 %v11709, %v11901
  %11903 = vmatprep.mubr.bf16.mxu0 %v892
  %11904 = vmatmul.mubr.bf16.gmra.mrb[0].mxu0 %v891
  %v11905 = vpop.f32.mrb[0].mxu0
  %v11906 = vadd.f32 %v11713, %v11905
  %v11907 = vpop.f32.mrb[0].mxu0
  %v11908 = vadd.f32 %v11715, %v11907
  %v11909 = vpop.f32.mrb[0].mxu0
  %v11910 = vadd.f32 %v11717, %v11909
  %v11911 = vpop.f32.mrb[0].mxu0
  %v11912 = vadd.f32 %v11719, %v11911
  %11913 = vmatprep.mubr.bf16.mxu0 %v902
  %11914 = vmatmul.mubr.bf16.gmra.mrb[0].mxu0 %v901
  %v11915 = vpop.f32.mrb[0].mxu0
  %v11916 = vadd.f32 %v11723, %v11915
  %v11917 = vpop.f32.mrb[0].mxu0
  %v11918 = vadd.f32 %v11725, %v11917
  %v11919 = vpop.f32.mrb[0].mxu0
  %v11920 = vadd.f32 %v11727, %v11919
  %v11921 = vpop.f32.mrb[0].mxu0
  %v11922 = vadd.f32 %v11729, %v11921
  %11923 = vmatprep.mubr.bf16.mxu0 %v912
  %11924 = vmatmul.mubr.bf16.gmra.mrb[0].mxu0 %v911
  %v11925 = vpop.f32.mrb[0].mxu0
  %v11926 = vadd.f32 %v11733, %v11925
  %v11927 = vpop.f32.mrb[0].mxu0
  %v11928 = vadd.f32 %v11735, %v11927
  %v11929 = vpop.f32.mrb[0].mxu0
  %v11930 = vadd.f32 %v11737, %v11929
  %v11931 = vpop.f32.mrb[0].mxu0
  %v11932 = vadd.f32 %v11739, %v11931
  %11933 = vmatprep.mubr.bf16.mxu0 %v922
  %11934 = vmatmul.mubr.bf16.gmra.mrb[0].mxu0 %v921
  %v11935 = vpop.f32.mrb[0].mxu0
  %v11936 = vadd.f32 %v11743, %v11935
  %v11937 = vpop.f32.mrb[0].mxu0
  %v11938 = vadd.f32 %v11745, %v11937
  %v11939 = vpop.f32.mrb[0].mxu0
  %v11940 = vadd.f32 %v11747, %v11939
  %v11941 = vpop.f32.mrb[0].mxu0
  %v11942 = vadd.f32 %v11749, %v11941
  %11943 = vmatprep.mubr.bf16.mxu0 %v932
  %11944 = vmatmul.mubr.bf16.gmra.mrb[0].mxu0 %v931
  %v11945 = vpop.f32.mrb[0].mxu0
  %v11946 = vadd.f32 %v11753, %v11945
  %v11947 = vpop.f32.mrb[0].mxu0
  %v11948 = vadd.f32 %v11755, %v11947
  %v11949 = vpop.f32.mrb[0].mxu0
  %v11950 = vadd.f32 %v11757, %v11949
  %v11951 = vpop.f32.mrb[0].mxu0
  %v11952 = vadd.f32 %v11759, %v11951
  %11953 = vmatprep.mubr.bf16.mxu0 %v942
  %11954 = vmatmul.mubr.bf16.gmra.mrb[0].mxu0 %v941
  %v11955 = vpop.f32.mrb[0].mxu0
  %v11956 = vadd.f32 %v11763, %v11955
  %v11957 = vpop.f32.mrb[0].mxu0
  %v11958 = vadd.f32 %v11765, %v11957
  %v11959 = vpop.f32.mrb[0].mxu0
  %v11960 = vadd.f32 %v11767, %v11959
  %v11961 = vpop.f32.mrb[0].mxu0
  %v11962 = vadd.f32 %v11769, %v11961
  %11963 = vmatprep.mubr.bf16.mxu0 %v952
  %11964 = vmatmul.mubr.bf16.gmra.mrb[0].mxu0 %v951
  %v11965 = vpop.f32.mrb[0].mxu0
  %v11966 = vadd.f32 %v11773, %v11965
  %v11967 = vpop.f32.mrb[0].mxu0
  %v11968 = vadd.f32 %v11775, %v11967
  %v11969 = vpop.f32.mrb[0].mxu0
  %v11970 = vadd.f32 %v11777, %v11969
  %v11971 = vpop.f32.mrb[0].mxu0
  %v11972 = vadd.f32 %v11779, %v11971
  %11973 = vmatprep.mubr.bf16.mxu0 %v962
  %11974 = vmatmul.mubr.bf16.gmra.mrb[0].mxu0 %v961
  %v11975 = vpop.f32.mrb[0].mxu0
  %v11976 = vadd.f32 %v11783, %v11975
  %v11977 = vpop.f32.mrb[0].mxu0
  %v11978 = vadd.f32 %v11785, %v11977
  %v11979 = vpop.f32.mrb[0].mxu0
  %v11980 = vadd.f32 %v11787, %v11979
  %v11981 = vpop.f32.mrb[0].mxu0
  %v11982 = vadd.f32 %v11789, %v11981
  %11983 = vmatprep.mubr.bf16.mxu0 %v972
  %11984 = vmatmul.mubr.bf16.gmra.mrb[0].mxu0 %v971
  %v11985 = vpop.f32.mrb[0].mxu0
  %v11986 = vadd.f32 %v11793, %v11985
  %v11987 = vpop.f32.mrb[0].mxu0
  %v11988 = vadd.f32 %v11795, %v11987
  %v11989 = vpop.f32.mrb[0].mxu0
  %v11990 = vadd.f32 %v11797, %v11989
  %v11991 = vpop.f32.mrb[0].mxu0
  %v11992 = vadd.f32 %v11799, %v11991
  %11993 = vmatprep.mubr.bf16.mxu0 %v982
  %11994 = vmatmul.mubr.bf16.gmra.mrb[0].mxu0 %v981
  %v11995 = vpop.f32.mrb[0].mxu0
  %v11996 = vadd.f32 %v11803, %v11995
  %v11997 = vpop.f32.mrb[0].mxu0
  %v11998 = vadd.f32 %v11805, %v11997
  %v11999 = vpop.f32.mrb[0].mxu0
  %v12000 = vadd.f32 %v11807, %v11999
  %v12001 = vpop.f32.mrb[0].mxu0
  %v12002 = vadd.f32 %v11809, %v12001
  %12003 = vmatprep.mubr.bf16.mxu0 %v992
  %12004 = vmatmul.mubr.bf16.gmra.mrb[0].mxu0 %v991
  %v12005 = vpop.f32.mrb[0].mxu0
  %v12006 = vadd.f32 %v11813, %v12005
  %v12007 = vpop.f32.mrb[0].mxu0
  %v12008 = vadd.f32 %v11815, %v12007
  %v12009 = vpop.f32.mrb[0].mxu0
  %v12010 = vadd.f32 %v11817, %v12009
  %v12011 = vpop.f32.mrb[0].mxu0
  %v12012 = vadd.f32 %v11819, %v12011
  %12013 = vdwg.mxu0
  %v12014 = vpack.c.bf16 %v11860, %v11856
  %v12015 = vpack.c.bf16 %v11862, %v11858
  %v12016 = vpack.c.bf16 %v11870, %v11866
  %v12017 = vpack.c.bf16 %v11872, %v11868
  %v12018 = vpack.c.bf16 %v11880, %v11876
  %v12019 = vpack.c.bf16 %v11882, %v11878
  %v12020 = vpack.c.bf16 %v11890, %v11886
  %v12021 = vpack.c.bf16 %v11892, %v11888
  %v12022 = vpack.c.bf16 %v11900, %v11896
  %v12023 = vpack.c.bf16 %v11902, %v11898
  %v12024 = vpack.c.bf16 %v11910, %v11906
  %v12025 = vpack.c.bf16 %v11912, %v11908
  %v12026 = vpack.c.bf16 %v11920, %v11916
  %v12027 = vpack.c.bf16 %v11922, %v11918
  %v12028 = vpack.c.bf16 %v11930, %v11926
  %v12029 = vpack.c.bf16 %v11932, %v11928
  %v12030 = vpack.c.bf16 %v11940, %v11936
  %v12031 = vpack.c.bf16 %v11942, %v11938
  %v12032 = vpack.c.bf16 %v11950, %v11946
  %v12033 = vpack.c.bf16 %v11952, %v11948
  %v12034 = vpack.c.bf16 %v11960, %v11956
  %v12035 = vpack.c.bf16 %v11962, %v11958
  %v12036 = vpack.c.bf16 %v11970, %v11966
  %v12037 = vpack.c.bf16 %v11972, %v11968
  %v12038 = vpack.c.bf16 %v11980, %v11976
  %v12039 = vpack.c.bf16 %v11982, %v11978
  %v12040 = vpack.c.bf16 %v11990, %v11986
  %v12041 = vpack.c.bf16 %v11992, %v11988
  %v12042 = vpack.c.bf16 %v12000, %v11996
  %v12043 = vpack.c.bf16 %v12002, %v11998
  %v12044 = vpack.c.bf16 %v12010, %v12006
  %v12045 = vpack.c.bf16 %v12012, %v12008
  %v12046 = vld [vmem:[%s3 + $0x200] sm:$0xf]
  %v12047 = vld [vmem:[%s3 + $0x204] sm:$0xf]
  %v12048 = vld [vmem:[%s3 + $0x208] sm:$0xf]
  %v12049 = vld [vmem:[%s3 + $0x20c] sm:$0xf]
  %v12050 = vld [vmem:[%s3 + $0x210] sm:$0xf]
  %v12051 = vld [vmem:[%s3 + $0x214] sm:$0xf]
  %v12052 = vld [vmem:[%s3 + $0x218] sm:$0xf]
  %v12053 = vld [vmem:[%s3 + $0x21c] sm:$0xf]
  %v12054 = vld [vmem:[%s3 + $0x220] sm:$0xf]
  %v12055 = vld [vmem:[%s3 + $0x224] sm:$0xf]
  %v12056 = vld [vmem:[%s3 + $0x228] sm:$0xf]
  %v12057 = vld [vmem:[%s3 + $0x22c] sm:$0xf]
  %v12058 = vld [vmem:[%s3 + $0x230] sm:$0xf]
  %v12059 = vld [vmem:[%s3 + $0x234] sm:$0xf]
  %v12060 = vld [vmem:[%s3 + $0x238] sm:$0xf]
  %v12061 = vld [vmem:[%s3 + $0x23c] sm:$0xf]
  %v12062 = vld [vmem:[%s3 + $0x240] sm:$0xf]
  %v12063 = vld [vmem:[%s3 + $0x244] sm:$0xf]
  %v12064 = vld [vmem:[%s3 + $0x248] sm:$0xf]
  %v12065 = vld [vmem:[%s3 + $0x24c] sm:$0xf]
  %v12066 = vld [vmem:[%s3 + $0x250] sm:$0xf]
  %v12067 = vld [vmem:[%s3 + $0x254] sm:$0xf]
  %v12068 = vld [vmem:[%s3 + $0x258] sm:$0xf]
  %v12069 = vld [vmem:[%s3 + $0x25c] sm:$0xf]
  %v12070 = vld [vmem:[%s3 + $0x260] sm:$0xf]
  %v12071 = vld [vmem:[%s3 + $0x264] sm:$0xf]
  %v12072 = vld [vmem:[%s3 + $0x268] sm:$0xf]
  %v12073 = vld [vmem:[%s3 + $0x26c] sm:$0xf]
  %v12074 = vld [vmem:[%s3 + $0x270] sm:$0xf]
  %v12075 = vld [vmem:[%s3 + $0x274] sm:$0xf]
  %v12076 = vld [vmem:[%s3 + $0x278] sm:$0xf]
  %v12077 = vld [vmem:[%s3 + $0x27c] sm:$0xf]
  %v12110 = vunpack.c.l.b16 %v12046
  %v12111 = vunpack.c.l.b16 %v12047
  %v12112 = vunpack.c.l.b16 %v12048
  %v12113 = vunpack.c.l.b16 %v12049
  %v12114 = vunpack.c.l.b16 %v12050
  %v12115 = vunpack.c.l.b16 %v12051
  %v12116 = vunpack.c.l.b16 %v12052
  %v12117 = vunpack.c.l.b16 %v12053
  %v12118 = vunpack.c.l.b16 %v12054
  %v12119 = vunpack.c.l.b16 %v12055
  %v12120 = vunpack.c.l.b16 %v12056
  %v12121 = vunpack.c.l.b16 %v12057
  %v12122 = vunpack.c.l.b16 %v12058
  %v12123 = vunpack.c.l.b16 %v12059
  %v12124 = vunpack.c.l.b16 %v12060
  %v12125 = vunpack.c.l.b16 %v12061
  %v12126 = vunpack.c.l.b16 %v12062
  %v12127 = vunpack.c.l.b16 %v12063
  %v12128 = vunpack.c.l.b16 %v12064
  %v12129 = vunpack.c.l.b16 %v12065
  %v12130 = vunpack.c.l.b16 %v12066
  %v12131 = vunpack.c.l.b16 %v12067
  %v12132 = vunpack.c.l.b16 %v12068
  %v12133 = vunpack.c.l.b16 %v12069
  %v12134 = vunpack.c.l.b16 %v12070
  %v12135 = vunpack.c.l.b16 %v12071
  %v12136 = vunpack.c.l.b16 %v12072
  %v12137 = vunpack.c.l.b16 %v12073
  %v12138 = vunpack.c.l.b16 %v12074
  %v12139 = vunpack.c.l.b16 %v12075
  %v12140 = vunpack.c.l.b16 %v12076
  %v12141 = vunpack.c.l.b16 %v12077
  %v12142 = vpack.c.b16 %v12111, %v12110
  %v12143 = vpack.c.b16 %v12113, %v12112
  %v12144 = vpack.c.b16 %v12115, %v12114
  %v12145 = vpack.c.b16 %v12117, %v12116
  %v12146 = vpack.c.b16 %v12119, %v12118
  %v12147 = vpack.c.b16 %v12121, %v12120
  %v12148 = vpack.c.b16 %v12123, %v12122
  %v12149 = vpack.c.b16 %v12125, %v12124
  %v12150 = vpack.c.b16 %v12127, %v12126
  %v12151 = vpack.c.b16 %v12129, %v12128
  %v12152 = vpack.c.b16 %v12131, %v12130
  %v12153 = vpack.c.b16 %v12133, %v12132
  %v12154 = vpack.c.b16 %v12135, %v12134
  %v12155 = vpack.c.b16 %v12137, %v12136
  %v12156 = vpack.c.b16 %v12139, %v12138
  %v12157 = vpack.c.b16 %v12141, %v12140
  %12174 = vmatprep.subr.bf16.mxu0 0
  %12175 = vmatpush1.bf16.msra.mxu0 %v12142
  %12176 = vmatprep.subr.bf16.mxu0 0
  %12177 = vmatpush1.bf16.msra.mxu0 %v12143
  %12178 = vmatprep.subr.bf16.mxu0 0
  %12179 = vmatpush1.bf16.msra.mxu0 %v12144
  %12180 = vmatprep.subr.bf16.mxu0 0
  %12181 = vmatpush1.bf16.msra.mxu0 %v12145
  %12182 = vmatprep.subr.bf16.mxu0 0
  %12183 = vmatpush1.bf16.msra.mxu0 %v12146
  %12184 = vmatprep.subr.bf16.mxu0 0
  %12185 = vmatpush1.bf16.msra.mxu0 %v12147
  %12186 = vmatprep.subr.bf16.mxu0 0
  %12187 = vmatpush1.bf16.msra.mxu0 %v12148
  %12188 = vmatprep.subr.bf16.mxu0 0
  %12189 = vmatpush1.bf16.msra.mxu0 %v12149
  %12190 = vmatprep.subr.bf16.mxu0 0
  %12191 = vmatpush1.bf16.msra.mxu0 %v12150
  %12192 = vmatprep.subr.bf16.mxu0 0
  %12193 = vmatpush1.bf16.msra.mxu0 %v12151
  %12194 = vmatprep.subr.bf16.mxu0 0
  %12195 = vmatpush1.bf16.msra.mxu0 %v12152
  %12196 = vmatprep.subr.bf16.mxu0 0
  %12197 = vmatpush1.bf16.msra.mxu0 %v12153
  %12198 = vmatprep.subr.bf16.mxu0 0
  %12199 = vmatpush1.bf16.msra.mxu0 %v12154
  %12200 = vmatprep.subr.bf16.mxu0 0
  %12201 = vmatpush1.bf16.msra.mxu0 %v12155
  %12202 = vmatprep.subr.bf16.mxu0 0
  %12203 = vmatpush1.bf16.msra.mxu0 %v12156
  %12204 = vmatprep.subr.bf16.mxu0 0
  %12205 = vmatpush1.bf16.msra.mxu0 %v12157
  %12206 = vmatprep.mubr.bf16.mxu0 %v12015
  %12207 = vmatmul.mubr.bf16.gmra.mrb[0].mxu0 %v12014
  %v12208 = vpop.f32.mrb[0].mxu0
  %v12209 = vadd.f32 0.0, %v12208
  %v12210 = vpop.f32.mrb[0].mxu0
  %v12211 = vpop.f32.mrb[0].mxu0
  %v12212 = vadd.f32 0.0, %v12211
  %v12213 = vpop.f32.mrb[0].mxu0
  %12214 = vmatprep.mubr.bf16.mxu0 %v12017
  %12215 = vmatmul.mubr.bf16.gmra.mrb[0].mxu0 %v12016
  %v12216 = vpop.f32.mrb[0].mxu0
  %v12217 = vadd.f32 0.0, %v12216
  %v12218 = vpop.f32.mrb[0].mxu0
  %v12219 = vpop.f32.mrb[0].mxu0
  %v12220 = vadd.f32 0.0, %v12219
  %v12221 = vpop.f32.mrb[0].mxu0
  %12222 = vmatprep.mubr.bf16.mxu0 %v12019
  %12223 = vmatmul.mubr.bf16.gmra.mrb[0].mxu0 %v12018
  %v12224 = vpop.f32.mrb[0].mxu0
  %v12225 = vadd.f32 0.0, %v12224
  %v12226 = vpop.f32.mrb[0].mxu0
  %v12227 = vpop.f32.mrb[0].mxu0
  %v12228 = vadd.f32 0.0, %v12227
  %v12229 = vpop.f32.mrb[0].mxu0
  %12230 = vmatprep.mubr.bf16.mxu0 %v12021
  %12231 = vmatmul.mubr.bf16.gmra.mrb[0].mxu0 %v12020
  %v12232 = vpop.f32.mrb[0].mxu0
  %v12233 = vadd.f32 0.0, %v12232
  %v12234 = vpop.f32.mrb[0].mxu0
  %v12235 = vpop.f32.mrb[0].mxu0
  %v12236 = vadd.f32 0.0, %v12235
  %v12237 = vpop.f32.mrb[0].mxu0
  %12238 = vmatprep.mubr.bf16.mxu0 %v12023
  %12239 = vmatmul.mubr.bf16.gmra.mrb[0].mxu0 %v12022
  %v12240 = vpop.f32.mrb[0].mxu0
  %v12241 = vadd.f32 0.0, %v12240
  %v12242 = vpop.f32.mrb[0].mxu0
  %v12243 = vpop.f32.mrb[0].mxu0
  %v12244 = vadd.f32 0.0, %v12243
  %v12245 = vpop.f32.mrb[0].mxu0
  %12246 = vmatprep.mubr.bf16.mxu0 %v12025
  %12247 = vmatmul.mubr.bf16.gmra.mrb[0].mxu0 %v12024
  %v12248 = vpop.f32.mrb[0].mxu0
  %v12249 = vadd.f32 0.0, %v12248
  %v12250 = vpop.f32.mrb[0].mxu0
  %v12251 = vpop.f32.mrb[0].mxu0
  %v12252 = vadd.f32 0.0, %v12251
  %v12253 = vpop.f32.mrb[0].mxu0
  %12254 = vmatprep.mubr.bf16.mxu0 %v12027
  %12255 = vmatmul.mubr.bf16.gmra.mrb[0].mxu0 %v12026
  %v12256 = vpop.f32.mrb[0].mxu0
  %v12257 = vadd.f32 0.0, %v12256
  %v12258 = vpop.f32.mrb[0].mxu0
  %v12259 = vpop.f32.mrb[0].mxu0
  %v12260 = vadd.f32 0.0, %v12259
  %v12261 = vpop.f32.mrb[0].mxu0
  %12262 = vmatprep.mubr.bf16.mxu0 %v12029
  %12263 = vmatmul.mubr.bf16.gmra.mrb[0].mxu0 %v12028
  %v12264 = vpop.f32.mrb[0].mxu0
  %v12265 = vadd.f32 0.0, %v12264
  %v12266 = vpop.f32.mrb[0].mxu0
  %v12267 = vpop.f32.mrb[0].mxu0
  %v12268 = vadd.f32 0.0, %v12267
  %v12269 = vpop.f32.mrb[0].mxu0
  %12270 = vmatprep.mubr.bf16.mxu0 %v12031
  %12271 = vmatmul.mubr.bf16.gmra.mrb[0].mxu0 %v12030
  %v12272 = vpop.f32.mrb[0].mxu0
  %v12273 = vadd.f32 0.0, %v12272
  %v12274 = vpop.f32.mrb[0].mxu0
  %v12275 = vpop.f32.mrb[0].mxu0
  %v12276 = vadd.f32 0.0, %v12275
  %v12277 = vpop.f32.mrb[0].mxu0
  %12278 = vmatprep.mubr.bf16.mxu0 %v12033
  %12279 = vmatmul.mubr.bf16.gmra.mrb[0].mxu0 %v12032
  %v12280 = vpop.f32.mrb[0].mxu0
  %v12281 = vadd.f32 0.0, %v12280
  %v12282 = vpop.f32.mrb[0].mxu0
  %v12283 = vpop.f32.mrb[0].mxu0
  %v12284 = vadd.f32 0.0, %v12283
  %v12285 = vpop.f32.mrb[0].mxu0
  %12286 = vmatprep.mubr.bf16.mxu0 %v12035
  %12287 = vmatmul.mubr.bf16.gmra.mrb[0].mxu0 %v12034
  %v12288 = vpop.f32.mrb[0].mxu0
  %v12289 = vadd.f32 0.0, %v12288
  %v12290 = vpop.f32.mrb[0].mxu0
  %v12291 = vpop.f32.mrb[0].mxu0
  %v12292 = vadd.f32 0.0, %v12291
  %v12293 = vpop.f32.mrb[0].mxu0
  %12294 = vmatprep.mubr.bf16.mxu0 %v12037
  %12295 = vmatmul.mubr.bf16.gmra.mrb[0].mxu0 %v12036
  %v12296 = vpop.f32.mrb[0].mxu0
  %v12297 = vadd.f32 0.0, %v12296
  %v12298 = vpop.f32.mrb[0].mxu0
  %v12299 = vpop.f32.mrb[0].mxu0
  %v12300 = vadd.f32 0.0, %v12299
  %v12301 = vpop.f32.mrb[0].mxu0
  %12302 = vmatprep.mubr.bf16.mxu0 %v12039
  %12303 = vmatmul.mubr.bf16.gmra.mrb[0].mxu0 %v12038
  %v12304 = vpop.f32.mrb[0].mxu0
  %v12305 = vadd.f32 0.0, %v12304
  %v12306 = vpop.f32.mrb[0].mxu0
  %v12307 = vpop.f32.mrb[0].mxu0
  %v12308 = vadd.f32 0.0, %v12307
  %v12309 = vpop.f32.mrb[0].mxu0
  %12310 = vmatprep.mubr.bf16.mxu0 %v12041
  %12311 = vmatmul.mubr.bf16.gmra.mrb[0].mxu0 %v12040
  %v12312 = vpop.f32.mrb[0].mxu0
  %v12313 = vadd.f32 0.0, %v12312
  %v12314 = vpop.f32.mrb[0].mxu0
  %v12315 = vpop.f32.mrb[0].mxu0
  %v12316 = vadd.f32 0.0, %v12315
  %v12317 = vpop.f32.mrb[0].mxu0
  %12318 = vmatprep.mubr.bf16.mxu0 %v12043
  %12319 = vmatmul.mubr.bf16.gmra.mrb[0].mxu0 %v12042
  %v12320 = vpop.f32.mrb[0].mxu0
  %v12321 = vadd.f32 0.0, %v12320
  %v12322 = vpop.f32.mrb[0].mxu0
  %v12323 = vpop.f32.mrb[0].mxu0
  %v12324 = vadd.f32 0.0, %v12323
  %v12325 = vpop.f32.mrb[0].mxu0
  %12326 = vmatprep.mubr.bf16.mxu0 %v12045
  %12327 = vmatmul.mubr.bf16.gmra.mrb[0].mxu0 %v12044
  %v12328 = vpop.f32.mrb[0].mxu0
  %v12329 = vadd.f32 0.0, %v12328
  %v12330 = vpop.f32.mrb[0].mxu0
  %v12331 = vpop.f32.mrb[0].mxu0
  %v12332 = vadd.f32 0.0, %v12331
  %v12333 = vpop.f32.mrb[0].mxu0
  %12334 = vdwg.mxu0
  %v12335 = vadd.f32 %v10045, %v12209
  %v12336 = vadd.f32 %v10046, %v12212
  %v12337 = vadd.f32 %v10047, %v12217
  %v12338 = vadd.f32 %v10048, %v12220
  %v12339 = vadd.f32 %v10049, %v12225
  %v12340 = vadd.f32 %v10050, %v12228
  %v12341 = vadd.f32 %v10051, %v12233
  %v12342 = vadd.f32 %v10052, %v12236
  %v12343 = vadd.f32 %v10053, %v12241
  %v12344 = vadd.f32 %v10054, %v12244
  %v12345 = vadd.f32 %v10055, %v12249
  %v12346 = vadd.f32 %v10056, %v12252
  %v12347 = vadd.f32 %v10057, %v12257
  %v12348 = vadd.f32 %v10058, %v12260
  %v12349 = vadd.f32 %v10059, %v12265
  %v12350 = vadd.f32 %v10060, %v12268
  %v12351 = vadd.f32 %v10061, %v12273
  %v12352 = vadd.f32 %v10062, %v12276
  %v12353 = vadd.f32 %v10063, %v12281
  %v12354 = vadd.f32 %v10064, %v12284
  %v12355 = vadd.f32 %v10065, %v12289
  %v12356 = vadd.f32 %v10066, %v12292
  %v12357 = vadd.f32 %v10067, %v12297
  %v12358 = vadd.f32 %v10068, %v12300
  %v12359 = vadd.f32 %v10069, %v12305
  %v12360 = vadd.f32 %v10070, %v12308
  %v12361 = vadd.f32 %v10071, %v12313
  %v12362 = vadd.f32 %v10072, %v12316
  %v12363 = vadd.f32 %v10073, %v12321
  %v12364 = vadd.f32 %v10074, %v12324
  %v12365 = vadd.f32 %v10075, %v12329
  %v12366 = vadd.f32 %v10076, %v12332
  %v12367 = vld [vmem:[%s4] sm:$0x1]
  %v12369 = vlaneseq
  %v12370 = vshrl.u32 %v12369, 7
  %v12371 = vsub.s32 0, %v12370
  %v12372 = vrot.slane %v12367, %v12371
  %v12374 = vadd.f32 %v12335, %v12372
  %v12375 = vadd.f32 %v12336, %v12372
  %v12376 = vadd.f32 %v12337, %v12372
  %v12377 = vadd.f32 %v12338, %v12372
  %v12378 = vadd.f32 %v12339, %v12372
  %v12379 = vadd.f32 %v12340, %v12372
  %v12380 = vadd.f32 %v12341, %v12372
  %v12381 = vadd.f32 %v12342, %v12372
  %v12382 = vadd.f32 %v12343, %v12372
  %v12383 = vadd.f32 %v12344, %v12372
  %v12384 = vadd.f32 %v12345, %v12372
  %v12385 = vadd.f32 %v12346, %v12372
  %v12386 = vadd.f32 %v12347, %v12372
  %v12387 = vadd.f32 %v12348, %v12372
  %v12388 = vadd.f32 %v12349, %v12372
  %v12389 = vadd.f32 %v12350, %v12372
  %v12390 = vadd.f32 %v12351, %v12372
  %v12391 = vadd.f32 %v12352, %v12372
  %v12392 = vadd.f32 %v12353, %v12372
  %v12393 = vadd.f32 %v12354, %v12372
  %v12394 = vadd.f32 %v12355, %v12372
  %v12395 = vadd.f32 %v12356, %v12372
  %v12396 = vadd.f32 %v12357, %v12372
  %v12397 = vadd.f32 %v12358, %v12372
  %v12398 = vadd.f32 %v12359, %v12372
  %v12399 = vadd.f32 %v12360, %v12372
  %v12400 = vadd.f32 %v12361, %v12372
  %v12401 = vadd.f32 %v12362, %v12372
  %v12402 = vadd.f32 %v12363, %v12372
  %v12403 = vadd.f32 %v12364, %v12372
  %v12404 = vadd.f32 %v12365, %v12372
  %v12405 = vadd.f32 %v12366, %v12372
  %12406 = vst [vmem:[%s5] sm:$0xff] %v12374
  %12407 = vst [vmem:[%s5 + $0x8] sm:$0xff] %v12375
  %12408 = vst [vmem:[%s5 + $0x10] sm:$0xff] %v12376
  %12409 = vst [vmem:[%s5 + $0x18] sm:$0xff] %v12377
  %12410 = vst [vmem:[%s5 + $0x20] sm:$0xff] %v12378
  %12411 = vst [vmem:[%s5 + $0x28] sm:$0xff] %v12379
  %12412 = vst [vmem:[%s5 + $0x30] sm:$0xff] %v12380
  %12413 = vst [vmem:[%s5 + $0x38] sm:$0xff] %v12381
  %12414 = vst [vmem:[%s5 + $0x40] sm:$0xff] %v12382
  %12415 = vst [vmem:[%s5 + $0x48] sm:$0xff] %v12383
  %12416 = vst [vmem:[%s5 + $0x50] sm:$0xff] %v12384
  %12417 = vst [vmem:[%s5 + $0x58] sm:$0xff] %v12385
  %12418 = vst [vmem:[%s5 + $0x60] sm:$0xff] %v12386
  %12419 = vst [vmem:[%s5 + $0x68] sm:$0xff] %v12387
  %12420 = vst [vmem:[%s5 + $0x70] sm:$0xff] %v12388
  %12421 = vst [vmem:[%s5 + $0x78] sm:$0xff] %v12389
  %12422 = vst [vmem:[%s5 + $0x80] sm:$0xff] %v12390
  %12423 = vst [vmem:[%s5 + $0x88] sm:$0xff] %v12391
  %12424 = vst [vmem:[%s5 + $0x90] sm:$0xff] %v12392
  %12425 = vst [vmem:[%s5 + $0x98] sm:$0xff] %v12393
  %12426 = vst [vmem:[%s5 + $0xa0] sm:$0xff] %v12394
  %12427 = vst [vmem:[%s5 + $0xa8] sm:$0xff] %v12395
  %12428 = vst [vmem:[%s5 + $0xb0] sm:$0xff] %v12396
  %12429 = vst [vmem:[%s5 + $0xb8] sm:$0xff] %v12397
  %12430 = vst [vmem:[%s5 + $0xc0] sm:$0xff] %v12398
  %12431 = vst [vmem:[%s5 + $0xc8] sm:$0xff] %v12399
  %12432 = vst [vmem:[%s5 + $0xd0] sm:$0xff] %v12400
  %12433 = vst [vmem:[%s5 + $0xd8] sm:$0xff] %v12401
  %12434 = vst [vmem:[%s5 + $0xe0] sm:$0xff] %v12402
  %12435 = vst [vmem:[%s5 + $0xe8] sm:$0xff] %v12403
  %12436 = vst [vmem:[%s5 + $0xf0] sm:$0xff] %v12404
  %12437 = vst [vmem:[%s5 + $0xf8] sm:$0xff] %v12405
  // Predicated region
  $region22: #{simple_sae_forward.1} parent=0 // pred_check
    _
  $region23: #{simple_sae_forward.1} parent=0 // pred_check_branch
    %12439 = sbr.rel (0) target = $region25
  $region24: #{simple_sae_forward.1} parent=0 // pred_region
    _
  $region25: #{simple_sae_forward.1} parent=0 // pred_fallthru
    _
  // Predicated region
  $region26: #{simple_sae_forward.1} parent=0 // pred_check
    _
  $region27: #{simple_sae_forward.1} parent=0 // pred_check_branch
    %12441 = sbr.rel (0) target = $region29
  $region28: #{simple_sae_forward.1} parent=0 // pred_region
    _
  $region29: #{simple_sae_forward.1} parent=0 // pred_fallthru
    _

</llo_original>
